<compile_context>
chip_gen: v7x
topology: tpu7x:2x2x1
jax: 0.10.0
libtpu: 0.0.40
codegen_flags: <defaults>
</compile_context>

<pallas_src>
import functools

import jax
import jax.numpy as jnp
import numpy as np
from jax.experimental import pallas as pl
from jax.experimental.pallas import tpu as pltpu

EPS = 1e-5  # matches torch F.group_norm default


# --------------------------------------------------------------------------
# Capability probes / compiler params
# --------------------------------------------------------------------------
def _probe_kernel(x_ref, o_ref):
    o_ref[...] = x_ref[...]


def _probe_single_buffer_support():
    """Probe pl.Buffered(1) (single-buffered grid-invariant operands) once so
    we can fall back to default double-buffering on jax versions without it."""
    try:
        spec = pl.BlockSpec((8, 128), lambda i: (0, 0), pipeline_mode=pl.Buffered(1))
        out = pl.pallas_call(
            _probe_kernel,
            out_shape=jax.ShapeDtypeStruct((8, 128), jnp.float32),
            grid=(1,),
            in_specs=[spec],
            out_specs=pl.BlockSpec((8, 128), lambda i: (0, 0)),
        )(jnp.zeros((8, 128), jnp.float32))
        jax.block_until_ready(out)
        return True
    except Exception:
        return False


_SINGLE_BUFFER_CONSTS = _probe_single_buffer_support()


def _const_spec(block_shape):
    """BlockSpec for a grid-invariant input: constant index map, 1 buffer."""
    ndim = len(block_shape)
    index_map = lambda bi, _n=ndim: (0,) * _n
    if _SINGLE_BUFFER_CONSTS:
        return pl.BlockSpec(block_shape, index_map, pipeline_mode=pl.Buffered(1))
    return pl.BlockSpec(block_shape, index_map)


@functools.cache
def _vmem_limit_bytes():
    # ~75% of physical VMEM per generation (96 MiB on v5e/v6e, 48 MiB on v7x);
    # conservative 48 MiB fallback if the query is unavailable.
    try:
        cap = int(pltpu.get_tpu_info().vmem_capacity_bytes)
    except Exception:
        cap = 64 * 1024 * 1024
    return int(cap * 3 // 4)


def _compiler_params():
    return pltpu.CompilerParams(
        dimension_semantics=("parallel",),   # batch axis -> both TCs on v7x
        vmem_limit_bytes=_vmem_limit_bytes(),
    )


def _group_pool_matrix(channels, groups, hw):
    """(C, C) matrix P with P[c', c] = 1/(H*W*cpg) iff c and c' share a group.

    Per-channel sums @ P gives the per-channel group mean directly (no iota
    masks or in-kernel transposes).  Kept in f32 for statistic precision.
    """
    cpg = channels // groups
    gid = np.arange(channels) // cpg
    p = (gid[:, None] == gid[None, :]).astype(np.float32) / float(hw * cpg)
    return jnp.asarray(p)


# --------------------------------------------------------------------------
# In-kernel helpers
# --------------------------------------------------------------------------
def _gn_silu(x_ref, p_ref, g_ref):
    """GroupNorm (weight-only affine) + SiLU in f32.  Returns (H, W, C) f32."""
    xf = x_ref[0].astype(jnp.float32)                                   # (H, W, C)
    s = jnp.sum(jnp.sum(xf, axis=0), axis=0, keepdims=True)             # (1, C)
    ss = jnp.sum(jnp.sum(xf * xf, axis=0), axis=0, keepdims=True)       # (1, C)
    p = p_ref[...]                                                      # (C, C) f32
    mean_c = jnp.dot(s, p, preferred_element_type=jnp.float32)          # (1, C)
    ex2_c = jnp.dot(ss, p, preferred_element_type=jnp.float32)          # (1, C)
    # NOTE: single-pass E[x^2]-E[x]^2 in f32 (clamped); fine at these extents.
    var_c = jnp.maximum(ex2_c - mean_c * mean_c, 0.0)
    inv_c = jax.lax.rsqrt(var_c + EPS)
    scale = inv_c * g_ref[...].astype(jnp.float32)                      # (1, C)
    shift = -mean_c * scale
    y = xf * scale[None] + shift[None]
    return y * jax.nn.sigmoid(y)                                        # SiLU


def _conv3x3_folded(y, w3_ref, b_ref, slab_ref):
    """K = 3*Cin folded conv (requires Cin % 128 == 0).

    slab_ref: (H+2, W, 3*Cin) compute-dtype scratch; w3_ref: (3, 3*Cin, Cout).
    Returns the (H*W, Cout) f32 accumulator (bias added).
    """
    hp2, W, c3 = slab_ref.shape
    H = hp2 - 2
    C = c3 // 3
    Cout = w3_ref.shape[-1]
    cd = slab_ref.dtype

    yb = y.astype(cd)
    zcol = jnp.zeros((H, 1, C), cd)
    left = jnp.concatenate([zcol, yb[:, : W - 1, :]], axis=1)    # tap dw=0
    right = jnp.concatenate([yb[:, 1:, :], zcol], axis=1)        # tap dw=2

    # Only the 2 halo rows are re-zeroed each step; the interior stores below
    # cover everything else (column zeros are baked into left/right).
    zrow = jnp.zeros((1, W, c3), cd)
    slab_ref[0:1, :, :] = zrow
    slab_ref[H + 1 : H + 2, :, :] = zrow
    slab_ref[1 : H + 1, :, 0:C] = left
    slab_ref[1 : H + 1, :, C : 2 * C] = yb
    slab_ref[1 : H + 1, :, 2 * C : 3 * C] = right

    acc = jnp.zeros((H * W, Cout), jnp.float32)
    for dh in range(3):
        lhs = slab_ref[dh : dh + H, :, :].reshape(H * W, c3)     # tall 2-D LHS
        acc = acc + jnp.dot(lhs, w3_ref[dh], preferred_element_type=jnp.float32)
    return acc + b_ref[...].astype(jnp.float32)                  # (1, Cout) broadcast


def _conv3x3_taps(y, w_ref, b_ref, xp_ref):
    """Fallback 9-tap conv for Cin % 128 != 0 (hoisted W-shift, tall 2-D LHS).

    xp_ref: (H+2, W+2, Cin) zero-halo scratch; w_ref: (3, 3, Cin, Cout).
    Returns the (H*W, Cout) f32 accumulator (bias added).
    """
    hp2, wp2, C = xp_ref.shape
    H, W = hp2 - 2, wp2 - 2
    Cout = w_ref.shape[-1]
    cd = xp_ref.dtype

    yb = y.astype(cd)
    # Re-zero only the four 1-wide halo strips each step (interior is fully
    # overwritten); avoids a full-scratch vst pass per grid step.
    xp_ref[0:1, :, :] = jnp.zeros((1, wp2, C), cd)
    xp_ref[H + 1 : H + 2, :, :] = jnp.zeros((1, wp2, C), cd)
    xp_ref[1 : H + 1, 0:1, :] = jnp.zeros((H, 1, C), cd)
    xp_ref[1 : H + 1, W + 1 : W + 2, :] = jnp.zeros((H, 1, C), cd)
    xp_ref[1 : H + 1, 1 : W + 1, :] = yb

    acc = jnp.zeros((H * W, Cout), jnp.float32)
    for dw in range(3):
        win = xp_ref[:, dw : dw + W, :]                # W-shift done 3x, not 9x
        for dh in range(3):
            lhs = win[dh : dh + H].reshape(H * W, C)   # leading-dim slice only
            acc = acc + jnp.dot(lhs, w_ref[dh, dw],
                                preferred_element_type=jnp.float32)
    return acc + b_ref[...].astype(jnp.float32)


# --------------------------------------------------------------------------
# Kernels
# --------------------------------------------------------------------------
def _gn_silu_conv_kernel(x_ref, p_ref, g_ref, w_ref, b_ref, o_ref, pad_ref, *,
                         fold_w):
    _, H, W, Cout = o_ref.shape
    y = _gn_silu(x_ref, p_ref, g_ref)
    conv = _conv3x3_folded if fold_w else _conv3x3_taps
    acc = conv(y, w_ref, b_ref, pad_ref)
    o_ref[0] = acc.reshape(H, W, Cout).astype(o_ref.dtype)


def _gn_silu_conv_idadd_kernel(x_ref, p_ref, g_ref, w_ref, b_ref, res_ref,
                               o_ref, pad_ref, *, fold_w):
    _, H, W, Cout = o_ref.shape
    y = _gn_silu(x_ref, p_ref, g_ref)
    conv = _conv3x3_folded if fold_w else _conv3x3_taps
    acc = conv(y, w_ref, b_ref, pad_ref)
    out = acc.reshape(H, W, Cout) + res_ref[0].astype(jnp.float32)
    o_ref[0] = out.astype(o_ref.dtype)


def _gn_silu_conv_scadd_kernel(x_ref, p_ref, g_ref, w_ref, b_ref, res_ref,
                               scw_ref, scb_ref, o_ref, pad_ref, *, fold_w):
    _, H, W, Cout = o_ref.shape
    Cres = res_ref.shape[-1]
    y = _gn_silu(x_ref, p_ref, g_ref)
    conv = _conv3x3_folded if fold_w else _conv3x3_taps
    acc = conv(y, w_ref, b_ref, pad_ref)
    res2d = res_ref[0].astype(scw_ref.dtype).reshape(H * W, Cres)
    acc = acc + jnp.dot(res2d, scw_ref[...], preferred_element_type=jnp.float32)
    acc = acc + scb_ref[...].astype(jnp.float32)
    o_ref[0] = acc.reshape(H, W, Cout).astype(o_ref.dtype)


# --------------------------------------------------------------------------
# Wrappers (NHWC)
# --------------------------------------------------------------------------
def _conv_plumbing(w, Cin, Cout, H, W, conv_dtype):
    cd = jnp.dtype(conv_dtype)
    fold_w = (Cin % 128 == 0)
    if fold_w:
        wk = w.reshape(3, 3 * Cin, Cout).astype(cd)
        w_spec = _const_spec((3, 3 * Cin, Cout))
        pad_scratch = pltpu.VMEM((H + 2, W, 3 * Cin), cd)
    else:
        wk = w.astype(cd)
        w_spec = _const_spec((3, 3, Cin, Cout))
        pad_scratch = pltpu.VMEM((H + 2, W + 2, Cin), cd)
    return cd, fold_w, wk, w_spec, pad_scratch


def gn_silu_conv3x3(x, gamma, w, b, *, groups=32, conv_dtype=jnp.bfloat16):
    """Fused GroupNorm(groups, weight=gamma) -> SiLU -> Conv3x3 (SAME). NHWC."""
    B, H, W, Cin = x.shape
    Cout = w.shape[-1]
    assert Cin % groups == 0, (Cin, groups)
    p = _group_pool_matrix(Cin, groups, H * W)
    _, fold_w, wk, w_spec, pad_scratch = _conv_plumbing(w, Cin, Cout, H, W, conv_dtype)

    return pl.pallas_call(
        functools.partial(_gn_silu_conv_kernel, fold_w=fold_w),
        out_shape=jax.ShapeDtypeStruct((B, H, W, Cout), x.dtype),
        grid=(B,),
        in_specs=[
            pl.BlockSpec((1, H, W, Cin), lambda bi: (bi, 0, 0, 0)),
            _const_spec((Cin, Cin)),
            _const_spec((1, Cin)),
            w_spec,
            _const_spec((1, Cout)),
        ],
        out_specs=pl.BlockSpec((1, H, W, Cout), lambda bi: (bi, 0, 0, 0)),
        scratch_shapes=[pad_scratch],
        compiler_params=_compiler_params(),
    )(x, p, gamma.reshape(1, Cin), wk, b.reshape(1, Cout))


def gn_silu_conv3x3_add_shortcut(x, gamma, w, b, residual, sc_w=None, sc_b=None,
                                 *, groups=32, conv_dtype=jnp.bfloat16):
    """Fused GN -> SiLU -> Conv3x3, plus shortcut(residual) added in-kernel.

    shortcut = 1x1 conv (sc_w, sc_b) if provided, else identity.
    """
    B, H, W, Cin = x.shape
    Cout = w.shape[-1]
    Cres = residual.shape[-1]
    assert Cin % groups == 0, (Cin, groups)
    p = _group_pool_matrix(Cin, groups, H * W)
    cd, fold_w, wk, w_spec, pad_scratch = _conv_plumbing(w, Cin, Cout, H, W, conv_dtype)

    common_in = [
        pl.BlockSpec((1, H, W, Cin), lambda bi: (bi, 0, 0, 0)),
        _const_spec((Cin, Cin)),
        _const_spec((1, Cin)),
        w_spec,
        _const_spec((1, Cout)),
        pl.BlockSpec((1, H, W, Cres), lambda bi: (bi, 0, 0, 0)),
    ]
    out_spec = pl.BlockSpec((1, H, W, Cout), lambda bi: (bi, 0, 0, 0))
    out_shape = jax.ShapeDtypeStruct((B, H, W, Cout), x.dtype)
    args = (x, p, gamma.reshape(1, Cin), wk, b.reshape(1, Cout), residual)

    if sc_w is None:
        assert Cres == Cout, (
            "identity shortcut requires residual channels == out channels")
        return pl.pallas_call(
            functools.partial(_gn_silu_conv_idadd_kernel, fold_w=fold_w),
            out_shape=out_shape,
            grid=(B,),
            in_specs=common_in,
            out_specs=out_spec,
            scratch_shapes=[pad_scratch],
            compiler_params=_compiler_params(),
        )(*args)

    assert sc_w.shape == (Cres, Cout), sc_w.shape
    return pl.pallas_call(
        functools.partial(_gn_silu_conv_scadd_kernel, fold_w=fold_w),
        out_shape=out_shape,
        grid=(B,),
        in_specs=common_in + [_const_spec((Cres, Cout)), _const_spec((1, Cout))],
        out_specs=out_spec,
        scratch_shapes=[pad_scratch],
        compiler_params=_compiler_params(),
    )(*args, sc_w.astype(cd), sc_b.reshape(1, Cout))


# --------------------------------------------------------------------------
# ResidualBlock forward
# --------------------------------------------------------------------------
def residual_block_forward_nhwc(x, params, *, groups=32, conv_dtype=jnp.bfloat16):
    """NHWC in / NHWC out — preferred entry point for stacked blocks."""
    h = gn_silu_conv3x3(x, params["norm1"], params["conv1_w"], params["conv1_b"],
                        groups=groups, conv_dtype=conv_dtype)
    return gn_silu_conv3x3_add_shortcut(
        h, params["norm2"], params["conv2_w"], params["conv2_b"], x,
        params.get("sc_w"), params.get("sc_b"),
        groups=groups, conv_dtype=conv_dtype)


def residual_block_forward(x_nchw, params, *, groups=32, conv_dtype=jnp.bfloat16):
    # PyTorch-parity boundary (NCHW).  Chains of blocks should call
    # residual_block_forward_nhwc and stay NHWC end-to-end.
    x = jnp.transpose(x_nchw, (0, 2, 3, 1))
    out = residual_block_forward_nhwc(x, params, groups=groups, conv_dtype=conv_dtype)
    return jnp.transpose(out, (0, 3, 1, 2))


def init_residual_block_params(key, in_channels, out_channels,
                               use_conv_shortcut=False, dtype=jnp.float32):
    ks = jax.random.split(key, 8)
    p = {
        "norm1": jnp.ones((in_channels,), dtype)
                 + 0.1 * jax.random.normal(ks[0], (in_channels,), dtype),
        "conv1_w": 0.05 * jax.random.normal(ks[1], (3, 3, in_channels, out_channels), dtype),
        "conv1_b": 0.05 * jax.random.normal(ks[2], (out_channels,), dtype),
        "norm2": jnp.ones((out_channels,), dtype)
                 + 0.1 * jax.random.normal(ks[3], (out_channels,), dtype),
        "conv2_w": 0.05 * jax.random.normal(ks[4], (3, 3, out_channels, out_channels), dtype),
        "conv2_b": 0.05 * jax.random.normal(ks[5], (out_channels,), dtype),
    }
    if in_channels != out_channels or use_conv_shortcut:
        p["sc_w"] = 0.05 * jax.random.normal(ks[6], (in_channels, out_channels), dtype)
        p["sc_b"] = 0.05 * jax.random.normal(ks[7], (out_channels,), dtype)
    return p


# --------------------------------------------------------------------------
# Pure-JAX reference (correctness check); conv_dtype mirrors the kernel's
# MXU operand dtype so the bf16 path can be checked at a tight tolerance.
# --------------------------------------------------------------------------
def _ref_forward(x_nchw, params, *, groups=32, conv_dtype=jnp.float32):
    cd = jnp.dtype(conv_dtype)
    x = jnp.transpose(x_nchw, (0, 2, 3, 1)).astype(jnp.float32)

    def gn(v, w):
        B, H, W, C = v.shape
        vg = v.reshape(B, H, W, groups, C // groups)
        mean = vg.mean(axis=(1, 2, 4), keepdims=True)
        var = ((vg - mean) ** 2).mean(axis=(1, 2, 4), keepdims=True)
        vg = (vg - mean) / jnp.sqrt(var + EPS)
        return vg.reshape(B, H, W, C) * w

    def silu(v):
        return v * jax.nn.sigmoid(v)

    def conv(v, w, b):
        out = jax.lax.conv_general_dilated(
            v.astype(cd), w.astype(cd), (1, 1), "SAME",
            dimension_numbers=("NHWC", "HWIO", "NHWC"),
            preferred_element_type=jnp.float32)
        return out + b.astype(jnp.float32)

    h = conv(silu(gn(x, params["norm1"])), params["conv1_w"], params["conv1_b"])
    h = conv(silu(gn(h, params["norm2"])), params["conv2_w"], params["conv2_b"])
    res = x
    if "sc_w" in params:
        Cin, Cout = params["sc_w"].shape
        res = conv(res, params["sc_w"].reshape(1, 1, Cin, Cout), params["sc_b"])
    return jnp.transpose(h + res, (0, 3, 1, 2))


if __name__ == "__main__":
    key = jax.random.PRNGKey(0)
    kx1, kp1, kx2, kp2, kx3, kp3 = jax.random.split(key, 6)

    fwd_f32 = jax.jit(functools.partial(residual_block_forward, conv_dtype=jnp.float32))
    fwd_bf16 = jax.jit(functools.partial(residual_block_forward, conv_dtype=jnp.bfloat16))

    def check(out, ref, rtol, atol):
        np.testing.assert_allclose(np.asarray(out), np.asarray(ref),
                                   rtol=rtol, atol=atol)

    # Case 1: channel-changing block (1x1 conv shortcut), Cin=32 (9-tap path).
    # num_groups=32 requires C % 32 == 0, so 32 is the smallest valid width.
    B, Cin, Cout, H, W = 2, 32, 64, 16, 16
    x1 = jax.random.normal(kx1, (B, Cin, H, W), jnp.float32)          # NCHW, like PyTorch
    params1 = init_residual_block_params(kp1, Cin, Cout)
    out = jax.block_until_ready(fwd_f32(x1, params1))
    assert out.shape == (B, Cout, H, W), out.shape
    check(out, _ref_forward(x1, params1, conv_dtype=jnp.float32), 1e-4, 1e-4)
    out = jax.block_until_ready(fwd_bf16(x1, params1))
    check(out, _ref_forward(x1, params1, conv_dtype=jnp.bfloat16), 1e-2, 1e-2)

    # Case 2: identity-shortcut block, Cin == Cout == 32 (9-tap path, bf16).
    B2, C2, H2, W2 = 2, 32, 8, 8
    x2 = jax.random.normal(kx2, (B2, C2, H2, W2), jnp.float32)
    params2 = init_residual_block_params(kp2, C2, C2)
    out2 = jax.block_until_ready(fwd_bf16(x2, params2))
    assert out2.shape == (B2, C2, H2, W2), out2.shape
    check(out2, _ref_forward(x2, params2, conv_dtype=jnp.bfloat16), 1e-2, 1e-2)

    # Case 3: identity-shortcut block, Cin == Cout == 128 (K = 3*Cin folded path).
    B3, C3, H3, W3 = 2, 128, 8, 8
    x3 = jax.random.normal(kx3, (B3, C3, H3, W3), jnp.float32)
    params3 = init_residual_block_params(kp3, C3, C3)
    out3 = jax.block_until_ready(fwd_f32(x3, params3))
    assert out3.shape == (B3, C3, H3, W3), out3.shape
    check(out3, _ref_forward(x3, params3, conv_dtype=jnp.float32), 1e-4, 1e-4)
    out3 = jax.block_until_ready(fwd_bf16(x3, params3))
    check(out3, _ref_forward(x3, params3, conv_dtype=jnp.bfloat16), 1e-2, 1e-2)

    print("KERNEL_OK")
</pallas_src>

<mosaic_0001>
module attributes {stable_mosaic.version = 11 : i64} {
  func.func @_probe_kernel(%arg0: i32, %arg1: memref<8x128xf32, #tpu.memory_space<vmem>>, %arg2: memref<8x128xf32, #tpu.memory_space<vmem>>) attributes {dimension_semantics = [#tpu.dimension_semantics<arbitrary>], iteration_bounds = array<i64: 1>, scalar_prefetch = 0 : i64, scratch_operands = 0 : i64, tpu.core_type = #tpu.core_type<tc>, window_params = [{pipeline_mode = #tpu.pipeline_mode<synchronous>, transform_indices = @transform_0, window_bounds = array<i64: 8, 128>}, {pipeline_mode = #tpu.pipeline_mode<synchronous>, transform_indices = @transform_1, window_bounds = array<i64: 8, 128>}]} {
    %c0 = arith.constant 0 : index
    %c0_0 = arith.constant 0 : index
    %0 = vector.load %arg1[%c0, %c0_0] : memref<8x128xf32, #tpu.memory_space<vmem>>, vector<8x128xf32>
    %c0_1 = arith.constant 0 : index
    %c0_2 = arith.constant 0 : index
    %1 = vector.load %arg2[%c0_1, %c0_2] : memref<8x128xf32, #tpu.memory_space<vmem>>, vector<8x128xf32>
    tpu.vector_store %arg2[%c0_1, %c0_2], %0 {strides = array<i32>} : memref<8x128xf32, #tpu.memory_space<vmem>>, vector<8x128xf32>,
    return
  }
  func.func @transform_0(%arg0: i32) -> (i32, i32) {
    %c0_i32 = arith.constant 0 : i32
    %c0_i32_0 = arith.constant 0 : i32
    %c0_i32_1 = arith.constant 0 : i32
    return %c0_i32, %c0_i32_0 : i32, i32
  }
  func.func @transform_1(%arg0: i32) -> (i32, i32) {
    %c0_i32 = arith.constant 0 : i32
    %c0_i32_0 = arith.constant 0 : i32
    %c0_i32_1 = arith.constant 0 : i32
    return %c0_i32, %c0_i32_0 : i32, i32
  }
}

module attributes {stable_mosaic.version = 11 : i64} {
  func.func @_gn_silu_conv_scadd_kernel(%arg0: i32, %arg1: memref<1x16x16x64xf32, #tpu.memory_space<vmem>>, %arg2: memref<64x64xf32, #tpu.memory_space<vmem>>, %arg3: memref<1x64xf32, #tpu.memory_space<vmem>>, %arg4: memref<3x3x64x64xf32, #tpu.memory_space<vmem>>, %arg5: memref<1x64xf32, #tpu.memory_space<vmem>>, %arg6: memref<1x16x16x32xf32, #tpu.memory_space<vmem>>, %arg7: memref<32x64xf32, #tpu.memory_space<vmem>>, %arg8: memref<1x64xf32, #tpu.memory_space<vmem>>, %arg9: memref<1x16x16x64xf32, #tpu.memory_space<vmem>>, %arg10: memref<18x18x64xf32, #tpu.memory_space<vmem>>) attributes {dimension_semantics = [#tpu.dimension_semantics<parallel>], iteration_bounds = array<i64: 2>, scalar_prefetch = 0 : i64, scratch_operands = 1 : i64, tpu.core_type = #tpu.core_type<tc>, window_params = [{transform_indices = @transform_0, window_bounds = array<i64: 1, 16, 16, 64>}, {pipeline_mode = #tpu.pipeline_mode<synchronous>, transform_indices = @transform_1, window_bounds = array<i64: 64, 64>}, {pipeline_mode = #tpu.pipeline_mode<synchronous>, transform_indices = @transform_2, window_bounds = array<i64: 1, 64>}, {pipeline_mode = #tpu.pipeline_mode<synchronous>, transform_indices = @transform_3, window_bounds = array<i64: 3, 3, 64, 64>}, {pipeline_mode = #tpu.pipeline_mode<synchronous>, transform_indices = @transform_4, window_bounds = array<i64: 1, 64>}, {transform_indices = @transform_5, window_bounds = array<i64: 1, 16, 16, 32>}, {pipeline_mode = #tpu.pipeline_mode<synchronous>, transform_indices = @transform_6, window_bounds = array<i64: 32, 64>}, {pipeline_mode = #tpu.pipeline_mode<synchronous>, transform_indices = @transform_7, window_bounds = array<i64: 1, 64>}, {transform_indices = @transform_8, window_bounds = array<i64: 1, 16, 16, 64>}]} {
    %c0 = arith.constant 0 : index
    %c0_0 = arith.constant 0 : index
    %c0_1 = arith.constant 0 : index
    %c0_2 = arith.constant 0 : index
    %0 = vector.load %arg1[%c0, %c0_0, %c0_1, %c0_2] : memref<1x16x16x64xf32, #tpu.memory_space<vmem>>, vector<1x16x16x64xf32>
    %1 = vector.shape_cast %0 : vector<1x16x16x64xf32> to vector<16x16x64xf32>
    %cst = arith.constant dense<0.000000e+00> : vector<16x64xf32>
    %2 = vector.multi_reduction <add>, %1, %cst [0] : vector<16x16x64xf32> to vector<16x64xf32>
    %cst_3 = arith.constant dense<0.000000e+00> : vector<64xf32>
    %3 = vector.multi_reduction <add>, %2, %cst_3 [0] : vector<16x64xf32> to vector<64xf32>
    %4 = vector.shape_cast %3 : vector<64xf32> to vector<1x64xf32>
    %5 = arith.mulf %1, %1 : vector<16x16x64xf32>
    %cst_4 = arith.constant dense<0.000000e+00> : vector<16x64xf32>
    %6 = vector.multi_reduction <add>, %5, %cst_4 [0] : vector<16x16x64xf32> to vector<16x64xf32>
    %cst_5 = arith.constant dense<0.000000e+00> : vector<64xf32>
    %7 = vector.multi_reduction <add>, %6, %cst_5 [0] : vector<16x64xf32> to vector<64xf32>
    %8 = vector.shape_cast %7 : vector<64xf32> to vector<1x64xf32>
    %c0_6 = arith.constant 0 : index
    %c0_7 = arith.constant 0 : index
    %9 = vector.load %arg2[%c0_6, %c0_7] : memref<64x64xf32, #tpu.memory_space<vmem>>, vector<64x64xf32>
    %cst_8 = arith.constant dense<0.000000e+00> : vector<1x64xf32>
    %10 = tpu.matmul %4, %9, %cst_8 {dimension_numbers = #tpu.dot_dimension_numbers<[1], [0], [0], [1], [0, 0, 1, 1], [], []>} : vector<1x64xf32>, vector<64x64xf32>, vector<1x64xf32> -> vector<1x64xf32>
    %cst_9 = arith.constant dense<0.000000e+00> : vector<1x64xf32>
    %11 = tpu.matmul %8, %9, %cst_9 {dimension_numbers = #tpu.dot_dimension_numbers<[1], [0], [0], [1], [0, 0, 1, 1], [], []>} : vector<1x64xf32>, vector<64x64xf32>, vector<1x64xf32> -> vector<1x64xf32>
    %12 = arith.mulf %10, %10 : vector<1x64xf32>
    %13 = arith.subf %11, %12 : vector<1x64xf32>
    %cst_10 = arith.constant 0.000000e+00 : f32
    %14 = vector.broadcast %cst_10 : f32 to vector<1x64xf32>
    %15 = arith.maximumf %13, %14 : vector<1x64xf32>
    %cst_11 = arith.constant 9.99999974E-6 : f32
    %16 = vector.broadcast %cst_11 : f32 to vector<1x64xf32>
    %17 = arith.addf %15, %16 : vector<1x64xf32>
    %18 = math.rsqrt %17 : vector<1x64xf32>
    %c0_12 = arith.constant 0 : index
    %c0_13 = arith.constant 0 : index
    %19 = vector.load %arg3[%c0_12, %c0_13] : memref<1x64xf32, #tpu.memory_space<vmem>>, vector<1x64xf32>
    %20 = arith.mulf %18, %19 : vector<1x64xf32>
    %cst_14 = arith.constant 0.000000e+00 : f32
    %21 = vector.broadcast %cst_14 : f32 to vector<1x64xf32>
    %22 = arith.subf %21, %10 : vector<1x64xf32>
    %23 = arith.mulf %22, %20 : vector<1x64xf32>
    %24 = vector.shape_cast %20 : vector<1x64xf32> to vector<1x1x64xf32>
    %25 = vector.broadcast %24 : vector<1x1x64xf32> to vector<16x16x64xf32>
    %26 = arith.mulf %1, %25 : vector<16x16x64xf32>
    %27 = vector.shape_cast %23 : vector<1x64xf32> to vector<1x1x64xf32>
    %28 = vector.broadcast %27 : vector<1x1x64xf32> to vector<16x16x64xf32>
    %29 = arith.addf %26, %28 : vector<16x16x64xf32>
    %30 = arith.negf %29 : vector<16x16x64xf32>
    %31 = math.exp %30 : vector<16x16x64xf32>
    %cst_15 = arith.constant 1.000000e+00 : f32
    %32 = vector.broadcast %cst_15 : f32 to vector<16x16x64xf32>
    %33 = arith.addf %32, %31 : vector<16x16x64xf32>
    %34 = arith.divf %32, %33 : vector<16x16x64xf32>
    %35 = arith.mulf %29, %34 : vector<16x16x64xf32>
    %cst_16 = arith.constant 0.000000e+00 : f32
    %36 = vector.broadcast %cst_16 : f32 to vector<1x18x64xf32>
    %c0_17 = arith.constant 0 : index
    %c0_18 = arith.constant 0 : index
    %c0_19 = arith.constant 0 : index
    %37 = vector.load %arg10[%c0_17, %c0_18, %c0_19] : memref<18x18x64xf32, #tpu.memory_space<vmem>>, vector<1x18x64xf32>
    tpu.vector_store %arg10[%c0_17, %c0_18, %c0_19], %36 {strides = array<i32>} : memref<18x18x64xf32, #tpu.memory_space<vmem>>, vector<1x18x64xf32>,
    %cst_20 = arith.constant 0.000000e+00 : f32
    %38 = vector.broadcast %cst_20 : f32 to vector<1x18x64xf32>
    %c17 = arith.constant 17 : index
    %c0_21 = arith.constant 0 : index
    %c0_22 = arith.constant 0 : index
    %39 = vector.load %arg10[%c17, %c0_21, %c0_22] : memref<18x18x64xf32, #tpu.memory_space<vmem>>, vector<1x18x64xf32>
    tpu.vector_store %arg10[%c17, %c0_21, %c0_22], %38 {strides = array<i32>} : memref<18x18x64xf32, #tpu.memory_space<vmem>>, vector<1x18x64xf32>,
    %cst_23 = arith.constant 0.000000e+00 : f32
    %40 = vector.broadcast %cst_23 : f32 to vector<16x1x64xf32>
    %c1 = arith.constant 1 : index
    %c0_24 = arith.constant 0 : index
    %c0_25 = arith.constant 0 : index
    %41 = vector.load %arg10[%c1, %c0_24, %c0_25] : memref<18x18x64xf32, #tpu.memory_space<vmem>>, vector<16x1x64xf32>
    tpu.vector_store %arg10[%c1, %c0_24, %c0_25], %40 {strides = array<i32>} : memref<18x18x64xf32, #tpu.memory_space<vmem>>, vector<16x1x64xf32>,
    %cst_26 = arith.constant 0.000000e+00 : f32
    %42 = vector.broadcast %cst_26 : f32 to vector<16x1x64xf32>
    %c1_27 = arith.constant 1 : index
    %c17_28 = arith.constant 17 : index
    %c0_29 = arith.constant 0 : index
    %43 = vector.load %arg10[%c1_27, %c17_28, %c0_29] : memref<18x18x64xf32, #tpu.memory_space<vmem>>, vector<16x1x64xf32>
    tpu.vector_store %arg10[%c1_27, %c17_28, %c0_29], %42 {strides = array<i32>} : memref<18x18x64xf32, #tpu.memory_space<vmem>>, vector<16x1x64xf32>,
    %c1_30 = arith.constant 1 : index
    %c1_31 = arith.constant 1 : index
    %c0_32 = arith.constant 0 : index
    %44 = vector.load %arg10[%c1_30, %c1_31, %c0_32] : memref<18x18x64xf32, #tpu.memory_space<vmem>>, vector<16x16x64xf32>
    tpu.vector_store %arg10[%c1_30, %c1_31, %c0_32], %35 {strides = array<i32>} : memref<18x18x64xf32, #tpu.memory_space<vmem>>, vector<16x16x64xf32>,
    %cst_33 = arith.constant 0.000000e+00 : f32
    %45 = vector.broadcast %cst_33 : f32 to vector<256x64xf32>
    %c0_34 = arith.constant 0 : index
    %c0_35 = arith.constant 0 : index
    %c0_36 = arith.constant 0 : index
    %46 = vector.load %arg10[%c0_34, %c0_35, %c0_36] : memref<18x18x64xf32, #tpu.memory_space<vmem>>, vector<18x16x64xf32>
    %47 = vector.extract_strided_slice %46 {offsets = [0, 0, 0], sizes = [16, 16, 64], strides = [1, 1, 1]} : vector<18x16x64xf32> to vector<16x16x64xf32>
    %48 = vector.shape_cast %47 : vector<16x16x64xf32> to vector<256x64xf32>
    %c0_37 = arith.constant 0 : index
    %c0_38 = arith.constant 0 : index
    %c0_39 = arith.constant 0 : index
    %c0_40 = arith.constant 0 : index
    %49 = vector.load %arg4[%c0_37, %c0_38, %c0_39, %c0_40] : memref<3x3x64x64xf32, #tpu.memory_space<vmem>>, vector<1x1x64x64xf32>
    %50 = vector.shape_cast %49 : vector<1x1x64x64xf32> to vector<64x64xf32>
    %cst_41 = arith.constant dense<0.000000e+00> : vector<256x64xf32>
    %51 = tpu.matmul %48, %50, %cst_41 {dimension_numbers = #tpu.dot_dimension_numbers<[1], [0], [0], [1], [0, 0, 1, 1], [], []>} : vector<256x64xf32>, vector<64x64xf32>, vector<256x64xf32> -> vector<256x64xf32>
    %52 = arith.addf %45, %51 : vector<256x64xf32>
    %53 = vector.extract_strided_slice %46 {offsets = [1, 0, 0], sizes = [16, 16, 64], strides = [1, 1, 1]} : vector<18x16x64xf32> to vector<16x16x64xf32>
    %54 = vector.shape_cast %53 : vector<16x16x64xf32> to vector<256x64xf32>
    %c1_42 = arith.constant 1 : index
    %c0_43 = arith.constant 0 : index
    %c0_44 = arith.constant 0 : index
    %c0_45 = arith.constant 0 : index
    %55 = vector.load %arg4[%c1_42, %c0_43, %c0_44, %c0_45] : memref<3x3x64x64xf32, #tpu.memory_space<vmem>>, vector<1x1x64x64xf32>
    %56 = vector.shape_cast %55 : vector<1x1x64x64xf32> to vector<64x64xf32>
    %cst_46 = arith.constant dense<0.000000e+00> : vector<256x64xf32>
    %57 = tpu.matmul %54, %56, %cst_46 {dimension_numbers = #tpu.dot_dimension_numbers<[1], [0], [0], [1], [0, 0, 1, 1], [], []>} : vector<256x64xf32>, vector<64x64xf32>, vector<256x64xf32> -> vector<256x64xf32>
    %58 = arith.addf %52, %57 : vector<256x64xf32>
    %59 = vector.extract_strided_slice %46 {offsets = [2, 0, 0], sizes = [16, 16, 64], strides = [1, 1, 1]} : vector<18x16x64xf32> to vector<16x16x64xf32>
    %60 = vector.shape_cast %59 : vector<16x16x64xf32> to vector<256x64xf32>
    %c2 = arith.constant 2 : index
    %c0_47 = arith.constant 0 : index
    %c0_48 = arith.constant 0 : index
    %c0_49 = arith.constant 0 : index
    %61 = vector.load %arg4[%c2, %c0_47, %c0_48, %c0_49] : memref<3x3x64x64xf32, #tpu.memory_space<vmem>>, vector<1x1x64x64xf32>
    %62 = vector.shape_cast %61 : vector<1x1x64x64xf32> to vector<64x64xf32>
    %cst_50 = arith.constant dense<0.000000e+00> : vector<256x64xf32>
    %63 = tpu.matmul %60, %62, %cst_50 {dimension_numbers = #tpu.dot_dimension_numbers<[1], [0], [0], [1], [0, 0, 1, 1], [], []>} : vector<256x64xf32>, vector<64x64xf32>, vector<256x64xf32> -> vector<256x64xf32>
    %64 = arith.addf %58, %63 : vector<256x64xf32>
    %c0_51 = arith.constant 0 : index
    %c1_52 = arith.constant 1 : index
    %c0_53 = arith.constant 0 : index
    %65 = vector.load %arg10[%c0_51, %c1_52, %c0_53] : memref<18x18x64xf32, #tpu.memory_space<vmem>>, vector<18x16x64xf32>
    %66 = vector.extract_strided_slice %65 {offsets = [0, 0, 0], sizes = [16, 16, 64], strides = [1, 1, 1]} : vector<18x16x64xf32> to vector<16x16x64xf32>
    %67 = vector.shape_cast %66 : vector<16x16x64xf32> to vector<256x64xf32>
    %c0_54 = arith.constant 0 : index
    %c1_55 = arith.constant 1 : index
    %c0_56 = arith.constant 0 : index
    %c0_57 = arith.constant 0 : index
    %68 = vector.load %arg4[%c0_54, %c1_55, %c0_56, %c0_57] : memref<3x3x64x64xf32, #tpu.memory_space<vmem>>, vector<1x1x64x64xf32>
    %69 = vector.shape_cast %68 : vector<1x1x64x64xf32> to vector<64x64xf32>
    %cst_58 = arith.constant dense<0.000000e+00> : vector<256x64xf32>
    %70 = tpu.matmul %67, %69, %cst_58 {dimension_numbers = #tpu.dot_dimension_numbers<[1], [0], [0], [1], [0, 0, 1, 1], [], []>} : vector<256x64xf32>, vector<64x64xf32>, vector<256x64xf32> -> vector<256x64xf32>
    %71 = arith.addf %64, %70 : vector<256x64xf32>
    %72 = vector.extract_strided_slice %65 {offsets = [1, 0, 0], sizes = [16, 16, 64], strides = [1, 1, 1]} : vector<18x16x64xf32> to vector<16x16x64xf32>
    %73 = vector.shape_cast %72 : vector<16x16x64xf32> to vector<256x64xf32>
    %c1_59 = arith.constant 1 : index
    %c1_60 = arith.constant 1 : index
    %c0_61 = arith.constant 0 : index
    %c0_62 = arith.constant 0 : index
    %74 = vector.load %arg4[%c1_59, %c1_60, %c0_61, %c0_62] : memref<3x3x64x64xf32, #tpu.memory_space<vmem>>, vector<1x1x64x64xf32>
    %75 = vector.shape_cast %74 : vector<1x1x64x64xf32> to vector<64x64xf32>
    %cst_63 = arith.constant dense<0.000000e+00> : vector<256x64xf32>
    %76 = tpu.matmul %73, %75, %cst_63 {dimension_numbers = #tpu.dot_dimension_numbers<[1], [0], [0], [1], [0, 0, 1, 1], [], []>} : vector<256x64xf32>, vector<64x64xf32>, vector<256x64xf32> -> vector<256x64xf32>
    %77 = arith.addf %71, %76 : vector<256x64xf32>
    %78 = vector.extract_strided_slice %65 {offsets = [2, 0, 0], sizes = [16, 16, 64], strides = [1, 1, 1]} : vector<18x16x64xf32> to vector<16x16x64xf32>
    %79 = vector.shape_cast %78 : vector<16x16x64xf32> to vector<256x64xf32>
    %c2_64 = arith.constant 2 : index
    %c1_65 = arith.constant 1 : index
    %c0_66 = arith.constant 0 : index
    %c0_67 = arith.constant 0 : index
    %80 = vector.load %arg4[%c2_64, %c1_65, %c0_66, %c0_67] : memref<3x3x64x64xf32, #tpu.memory_space<vmem>>, vector<1x1x64x64xf32>
    %81 = vector.shape_cast %80 : vector<1x1x64x64xf32> to vector<64x64xf32>
    %cst_68 = arith.constant dense<0.000000e+00> : vector<256x64xf32>
    %82 = tpu.matmul %79, %81, %cst_68 {dimension_numbers = #tpu.dot_dimension_numbers<[1], [0], [0], [1], [0, 0, 1, 1], [], []>} : vector<256x64xf32>, vector<64x64xf32>, vector<256x64xf32> -> vector<256x64xf32>
    %83 = arith.addf %77, %82 : vector<256x64xf32>
    %c0_69 = arith.constant 0 : index
    %c2_70 = arith.constant 2 : index
    %c0_71 = arith.constant 0 : index
    %84 = vector.load %arg10[%c0_69, %c2_70, %c0_71] : memref<18x18x64xf32, #tpu.memory_space<vmem>>, vector<18x16x64xf32>
    %85 = vector.extract_strided_slice %84 {offsets = [0, 0, 0], sizes = [16, 16, 64], strides = [1, 1, 1]} : vector<18x16x64xf32> to vector<16x16x64xf32>
    %86 = vector.shape_cast %85 : vector<16x16x64xf32> to vector<256x64xf32>
    %c0_72 = arith.constant 0 : index
    %c2_73 = arith.constant 2 : index
    %c0_74 = arith.constant 0 : index
    %c0_75 = arith.constant 0 : index
    %87 = vector.load %arg4[%c0_72, %c2_73, %c0_74, %c0_75] : memref<3x3x64x64xf32, #tpu.memory_space<vmem>>, vector<1x1x64x64xf32>
    %88 = vector.shape_cast %87 : vector<1x1x64x64xf32> to vector<64x64xf32>
    %cst_76 = arith.constant dense<0.000000e+00> : vector<256x64xf32>
    %89 = tpu.matmul %86, %88, %cst_76 {dimension_numbers = #tpu.dot_dimension_numbers<[1], [0], [0], [1], [0, 0, 1, 1], [], []>} : vector<256x64xf32>, vector<64x64xf32>, vector<256x64xf32> -> vector<256x64xf32>
    %90 = arith.addf %83, %89 : vector<256x64xf32>
    %91 = vector.extract_strided_slice %84 {offsets = [1, 0, 0], sizes = [16, 16, 64], strides = [1, 1, 1]} : vector<18x16x64xf32> to vector<16x16x64xf32>
    %92 = vector.shape_cast %91 : vector<16x16x64xf32> to vector<256x64xf32>
    %c1_77 = arith.constant 1 : index
    %c2_78 = arith.constant 2 : index
    %c0_79 = arith.constant 0 : index
    %c0_80 = arith.constant 0 : index
    %93 = vector.load %arg4[%c1_77, %c2_78, %c0_79, %c0_80] : memref<3x3x64x64xf32, #tpu.memory_space<vmem>>, vector<1x1x64x64xf32>
    %94 = vector.shape_cast %93 : vector<1x1x64x64xf32> to vector<64x64xf32>
    %cst_81 = arith.constant dense<0.000000e+00> : vector<256x64xf32>
    %95 = tpu.matmul %92, %94, %cst_81 {dimension_numbers = #tpu.dot_dimension_numbers<[1], [0], [0], [1], [0, 0, 1, 1], [], []>} : vector<256x64xf32>, vector<64x64xf32>, vector<256x64xf32> -> vector<256x64xf32>
    %96 = arith.addf %90, %95 : vector<256x64xf32>
    %97 = vector.extract_strided_slice %84 {offsets = [2, 0, 0], sizes = [16, 16, 64], strides = [1, 1, 1]} : vector<18x16x64xf32> to vector<16x16x64xf32>
    %98 = vector.shape_cast %97 : vector<16x16x64xf32> to vector<256x64xf32>
    %c2_82 = arith.constant 2 : index
    %c2_83 = arith.constant 2 : index
    %c0_84 = arith.constant 0 : index
    %c0_85 = arith.constant 0 : index
    %99 = vector.load %arg4[%c2_82, %c2_83, %c0_84, %c0_85] : memref<3x3x64x64xf32, #tpu.memory_space<vmem>>, vector<1x1x64x64xf32>
    %100 = vector.shape_cast %99 : vector<1x1x64x64xf32> to vector<64x64xf32>
    %cst_86 = arith.constant dense<0.000000e+00> : vector<256x64xf32>
    %101 = tpu.matmul %98, %100, %cst_86 {dimension_numbers = #tpu.dot_dimension_numbers<[1], [0], [0], [1], [0, 0, 1, 1], [], []>} : vector<256x64xf32>, vector<64x64xf32>, vector<256x64xf32> -> vector<256x64xf32>
    %102 = arith.addf %96, %101 : vector<256x64xf32>
    %c0_87 = arith.constant 0 : index
    %c0_88 = arith.constant 0 : index
    %103 = vector.load %arg5[%c0_87, %c0_88] : memref<1x64xf32, #tpu.memory_space<vmem>>, vector<1x64xf32>
    %104 = vector.broadcast %103 : vector<1x64xf32> to vector<256x64xf32>
    %105 = arith.addf %102, %104 : vector<256x64xf32>
    %c0_89 = arith.constant 0 : index
    %c0_90 = arith.constant 0 : index
    %c0_91 = arith.constant 0 : index
    %c0_92 = arith.constant 0 : index
    %106 = vector.load %arg6[%c0_89, %c0_90, %c0_91, %c0_92] : memref<1x16x16x32xf32, #tpu.memory_space<vmem>>, vector<1x16x16x32xf32>
    %107 = vector.shape_cast %106 : vector<1x16x16x32xf32> to vector<16x16x32xf32>
    %108 = vector.shape_cast %107 : vector<16x16x32xf32> to vector<256x32xf32>
    %c0_93 = arith.constant 0 : index
    %c0_94 = arith.constant 0 : index
    %109 = vector.load %arg7[%c0_93, %c0_94] : memref<32x64xf32, #tpu.memory_space<vmem>>, vector<32x64xf32>
    %cst_95 = arith.constant dense<0.000000e+00> : vector<256x64xf32>
    %110 = tpu.matmul %108, %109, %cst_95 {dimension_numbers = #tpu.dot_dimension_numbers<[1], [0], [0], [1], [0, 0, 1, 1], [], []>} : vector<256x32xf32>, vector<32x64xf32>, vector<256x64xf32> -> vector<256x64xf32>
    %111 = arith.addf %105, %110 : vector<256x64xf32>
    %c0_96 = arith.constant 0 : index
    %c0_97 = arith.constant 0 : index
    %112 = vector.load %arg8[%c0_96, %c0_97] : memref<1x64xf32, #tpu.memory_space<vmem>>, vector<1x64xf32>
    %113 = vector.broadcast %112 : vector<1x64xf32> to vector<256x64xf32>
    %114 = arith.addf %111, %113 : vector<256x64xf32>
    %115 = vector.shape_cast %114 : vector<256x64xf32> to vector<16x16x64xf32>
    %c0_98 = arith.constant 0 : index
    %c0_99 = arith.constant 0 : index
    %c0_100 = arith.constant 0 : index
    %c0_101 = arith.constant 0 : index
    %116 = vector.load %arg9[%c0_98, %c0_99, %c0_100, %c0_101] : memref<1x16x16x64xf32, #tpu.memory_space<vmem>>, vector<1x16x16x64xf32>
    %117 = vector.shape_cast %116 : vector<1x16x16x64xf32> to vector<16x16x64xf32>
    %118 = vector.shape_cast %115 : vector<16x16x64xf32> to vector<1x16x16x64xf32>
    tpu.vector_store %arg9[%c0_98, %c0_99, %c0_100, %c0_101], %118 {strides = array<i32>} : memref<1x16x16x64xf32, #tpu.memory_space<vmem>>, vector<1x16x16x64xf32>,
    return
  }
  func.func @transform_0(%arg0: i32) -> (i32, i32, i32, i32) {
    %c0_i32 = arith.constant 0 : i32
    %c0_i32_0 = arith.constant 0 : i32
    %c0_i32_1 = arith.constant 0 : i32
    %c0_i32_2 = arith.constant 0 : i32
    return %arg0, %c0_i32, %c0_i32_0, %c0_i32_1 : i32, i32, i32, i32
  }
  func.func @transform_1(%arg0: i32) -> (i32, i32) {
    %c0_i32 = arith.constant 0 : i32
    %c0_i32_0 = arith.constant 0 : i32
    %c0_i32_1 = arith.constant 0 : i32
    return %c0_i32, %c0_i32_0 : i32, i32
  }
  func.func @transform_2(%arg0: i32) -> (i32, i32) {
    %c0_i32 = arith.constant 0 : i32
    %c0_i32_0 = arith.constant 0 : i32
    %c0_i32_1 = arith.constant 0 : i32
    return %c0_i32, %c0_i32_0 : i32, i32
  }
  func.func @transform_3(%arg0: i32) -> (i32, i32, i32, i32) {
    %c0_i32 = arith.constant 0 : i32
    %c0_i32_0 = arith.constant 0 : i32
    %c0_i32_1 = arith.constant 0 : i32
    %c0_i32_2 = arith.constant 0 : i32
    %c0_i32_3 = arith.constant 0 : i32
    return %c0_i32, %c0_i32_0, %c0_i32_1, %c0_i32_2 : i32, i32, i32, i32
  }
  func.func @transform_4(%arg0: i32) -> (i32, i32) {
    %c0_i32 = arith.constant 0 : i32
    %c0_i32_0 = arith.constant 0 : i32
    %c0_i32_1 = arith.constant 0 : i32
    return %c0_i32, %c0_i32_0 : i32, i32
  }
  func.func @transform_5(%arg0: i32) -> (i32, i32, i32, i32) {
    %c0_i32 = arith.constant 0 : i32
    %c0_i32_0 = arith.constant 0 : i32
    %c0_i32_1 = arith.constant 0 : i32
    %c0_i32_2 = arith.constant 0 : i32
    return %arg0, %c0_i32, %c0_i32_0, %c0_i32_1 : i32, i32, i32, i32
  }
  func.func @transform_6(%arg0: i32) -> (i32, i32) {
    %c0_i32 = arith.constant 0 : i32
    %c0_i32_0 = arith.constant 0 : i32
    %c0_i32_1 = arith.constant 0 : i32
    return %c0_i32, %c0_i32_0 : i32, i32
  }
  func.func @transform_7(%arg0: i32) -> (i32, i32) {
    %c0_i32 = arith.constant 0 : i32
    %c0_i32_0 = arith.constant 0 : i32
    %c0_i32_1 = arith.constant 0 : i32
    return %c0_i32, %c0_i32_0 : i32, i32
  }
  func.func @transform_8(%arg0: i32) -> (i32, i32, i32, i32) {
    %c0_i32 = arith.constant 0 : i32
    %c0_i32_0 = arith.constant 0 : i32
    %c0_i32_1 = arith.constant 0 : i32
    %c0_i32_2 = arith.constant 0 : i32
    return %arg0, %c0_i32, %c0_i32_0, %c0_i32_1 : i32, i32, i32, i32
  }
}

module attributes {stable_mosaic.version = 11 : i64} {
  func.func @_gn_silu_conv_kernel(%arg0: i32, %arg1: memref<1x16x16x32xf32, #tpu.memory_space<vmem>>, %arg2: memref<32x32xf32, #tpu.memory_space<vmem>>, %arg3: memref<1x32xf32, #tpu.memory_space<vmem>>, %arg4: memref<3x3x32x64xf32, #tpu.memory_space<vmem>>, %arg5: memref<1x64xf32, #tpu.memory_space<vmem>>, %arg6: memref<1x16x16x64xf32, #tpu.memory_space<vmem>>, %arg7: memref<18x18x32xf32, #tpu.memory_space<vmem>>) attributes {dimension_semantics = [#tpu.dimension_semantics<parallel>], iteration_bounds = array<i64: 2>, scalar_prefetch = 0 : i64, scratch_operands = 1 : i64, tpu.core_type = #tpu.core_type<tc>, window_params = [{transform_indices = @transform_0, window_bounds = array<i64: 1, 16, 16, 32>}, {pipeline_mode = #tpu.pipeline_mode<synchronous>, transform_indices = @transform_1, window_bounds = array<i64: 32, 32>}, {pipeline_mode = #tpu.pipeline_mode<synchronous>, transform_indices = @transform_2, window_bounds = array<i64: 1, 32>}, {pipeline_mode = #tpu.pipeline_mode<synchronous>, transform_indices = @transform_3, window_bounds = array<i64: 3, 3, 32, 64>}, {pipeline_mode = #tpu.pipeline_mode<synchronous>, transform_indices = @transform_4, window_bounds = array<i64: 1, 64>}, {transform_indices = @transform_5, window_bounds = array<i64: 1, 16, 16, 64>}]} {
    %c0 = arith.constant 0 : index
    %c0_0 = arith.constant 0 : index
    %c0_1 = arith.constant 0 : index
    %c0_2 = arith.constant 0 : index
    %0 = vector.load %arg1[%c0, %c0_0, %c0_1, %c0_2] : memref<1x16x16x32xf32, #tpu.memory_space<vmem>>, vector<1x16x16x32xf32>
    %1 = vector.shape_cast %0 : vector<1x16x16x32xf32> to vector<16x16x32xf32>
    %cst = arith.constant dense<0.000000e+00> : vector<16x32xf32>
    %2 = vector.multi_reduction <add>, %1, %cst [0] : vector<16x16x32xf32> to vector<16x32xf32>
    %cst_3 = arith.constant dense<0.000000e+00> : vector<32xf32>
    %3 = vector.multi_reduction <add>, %2, %cst_3 [0] : vector<16x32xf32> to vector<32xf32>
    %4 = vector.shape_cast %3 : vector<32xf32> to vector<1x32xf32>
    %5 = arith.mulf %1, %1 : vector<16x16x32xf32>
    %cst_4 = arith.constant dense<0.000000e+00> : vector<16x32xf32>
    %6 = vector.multi_reduction <add>, %5, %cst_4 [0] : vector<16x16x32xf32> to vector<16x32xf32>
    %cst_5 = arith.constant dense<0.000000e+00> : vector<32xf32>
    %7 = vector.multi_reduction <add>, %6, %cst_5 [0] : vector<16x32xf32> to vector<32xf32>
    %8 = vector.shape_cast %7 : vector<32xf32> to vector<1x32xf32>
    %c0_6 = arith.constant 0 : index
    %c0_7 = arith.constant 0 : index
    %9 = vector.load %arg2[%c0_6, %c0_7] : memref<32x32xf32, #tpu.memory_space<vmem>>, vector<32x32xf32>
    %cst_8 = arith.constant dense<0.000000e+00> : vector<1x32xf32>
    %10 = tpu.matmul %4, %9, %cst_8 {dimension_numbers = #tpu.dot_dimension_numbers<[1], [0], [0], [1], [0, 0, 1, 1], [], []>} : vector<1x32xf32>, vector<32x32xf32>, vector<1x32xf32> -> vector<1x32xf32>
    %cst_9 = arith.constant dense<0.000000e+00> : vector<1x32xf32>
    %11 = tpu.matmul %8, %9, %cst_9 {dimension_numbers = #tpu.dot_dimension_numbers<[1], [0], [0], [1], [0, 0, 1, 1], [], []>} : vector<1x32xf32>, vector<32x32xf32>, vector<1x32xf32> -> vector<1x32xf32>
    %12 = arith.mulf %10, %10 : vector<1x32xf32>
    %13 = arith.subf %11, %12 : vector<1x32xf32>
    %cst_10 = arith.constant 0.000000e+00 : f32
    %14 = vector.broadcast %cst_10 : f32 to vector<1x32xf32>
    %15 = arith.maximumf %13, %14 : vector<1x32xf32>
    %cst_11 = arith.constant 9.99999974E-6 : f32
    %16 = vector.broadcast %cst_11 : f32 to vector<1x32xf32>
    %17 = arith.addf %15, %16 : vector<1x32xf32>
    %18 = math.rsqrt %17 : vector<1x32xf32>
    %c0_12 = arith.constant 0 : index
    %c0_13 = arith.constant 0 : index
    %19 = vector.load %arg3[%c0_12, %c0_13] : memref<1x32xf32, #tpu.memory_space<vmem>>, vector<1x32xf32>
    %20 = arith.mulf %18, %19 : vector<1x32xf32>
    %cst_14 = arith.constant 0.000000e+00 : f32
    %21 = vector.broadcast %cst_14 : f32 to vector<1x32xf32>
    %22 = arith.subf %21, %10 : vector<1x32xf32>
    %23 = arith.mulf %22, %20 : vector<1x32xf32>
    %24 = vector.shape_cast %20 : vector<1x32xf32> to vector<1x1x32xf32>
    %25 = vector.broadcast %24 : vector<1x1x32xf32> to vector<16x16x32xf32>
    %26 = arith.mulf %1, %25 : vector<16x16x32xf32>
    %27 = vector.shape_cast %23 : vector<1x32xf32> to vector<1x1x32xf32>
    %28 = vector.broadcast %27 : vector<1x1x32xf32> to vector<16x16x32xf32>
    %29 = arith.addf %26, %28 : vector<16x16x32xf32>
    %30 = arith.negf %29 : vector<16x16x32xf32>
    %31 = math.exp %30 : vector<16x16x32xf32>
    %cst_15 = arith.constant 1.000000e+00 : f32
    %32 = vector.broadcast %cst_15 : f32 to vector<16x16x32xf32>
    %33 = arith.addf %32, %31 : vector<16x16x32xf32>
    %34 = arith.divf %32, %33 : vector<16x16x32xf32>
    %35 = arith.mulf %29, %34 : vector<16x16x32xf32>
    %cst_16 = arith.constant 0.000000e+00 : f32
    %36 = vector.broadcast %cst_16 : f32 to vector<1x18x32xf32>
    %c0_17 = arith.constant 0 : index
    %c0_18 = arith.constant 0 : index
    %c0_19 = arith.constant 0 : index
    %37 = vector.load %arg7[%c0_17, %c0_18, %c0_19] : memref<18x18x32xf32, #tpu.memory_space<vmem>>, vector<1x18x32xf32>
    tpu.vector_store %arg7[%c0_17, %c0_18, %c0_19], %36 {strides = array<i32>} : memref<18x18x32xf32, #tpu.memory_space<vmem>>, vector<1x18x32xf32>,
    %cst_20 = arith.constant 0.000000e+00 : f32
    %38 = vector.broadcast %cst_20 : f32 to vector<1x18x32xf32>
    %c17 = arith.constant 17 : index
    %c0_21 = arith.constant 0 : index
    %c0_22 = arith.constant 0 : index
    %39 = vector.load %arg7[%c17, %c0_21, %c0_22] : memref<18x18x32xf32, #tpu.memory_space<vmem>>, vector<1x18x32xf32>
    tpu.vector_store %arg7[%c17, %c0_21, %c0_22], %38 {strides = array<i32>} : memref<18x18x32xf32, #tpu.memory_space<vmem>>, vector<1x18x32xf32>,
    %cst_23 = arith.constant 0.000000e+00 : f32
    %40 = vector.broadcast %cst_23 : f32 to vector<16x1x32xf32>
    %c1 = arith.constant 1 : index
    %c0_24 = arith.constant 0 : index
    %c0_25 = arith.constant 0 : index
    %41 = vector.load %arg7[%c1, %c0_24, %c0_25] : memref<18x18x32xf32, #tpu.memory_space<vmem>>, vector<16x1x32xf32>
    tpu.vector_store %arg7[%c1, %c0_24, %c0_25], %40 {strides = array<i32>} : memref<18x18x32xf32, #tpu.memory_space<vmem>>, vector<16x1x32xf32>,
    %cst_26 = arith.constant 0.000000e+00 : f32
    %42 = vector.broadcast %cst_26 : f32 to vector<16x1x32xf32>
    %c1_27 = arith.constant 1 : index
    %c17_28 = arith.constant 17 : index
    %c0_29 = arith.constant 0 : index
    %43 = vector.load %arg7[%c1_27, %c17_28, %c0_29] : memref<18x18x32xf32, #tpu.memory_space<vmem>>, vector<16x1x32xf32>
    tpu.vector_store %arg7[%c1_27, %c17_28, %c0_29], %42 {strides = array<i32>} : memref<18x18x32xf32, #tpu.memory_space<vmem>>, vector<16x1x32xf32>,
    %c1_30 = arith.constant 1 : index
    %c1_31 = arith.constant 1 : index
    %c0_32 = arith.constant 0 : index
    %44 = vector.load %arg7[%c1_30, %c1_31, %c0_32] : memref<18x18x32xf32, #tpu.memory_space<vmem>>, vector<16x16x32xf32>
    tpu.vector_store %arg7[%c1_30, %c1_31, %c0_32], %35 {strides = array<i32>} : memref<18x18x32xf32, #tpu.memory_space<vmem>>, vector<16x16x32xf32>,
    %cst_33 = arith.constant 0.000000e+00 : f32
    %45 = vector.broadcast %cst_33 : f32 to vector<256x64xf32>
    %c0_34 = arith.constant 0 : index
    %c0_35 = arith.constant 0 : index
    %c0_36 = arith.constant 0 : index
    %46 = vector.load %arg7[%c0_34, %c0_35, %c0_36] : memref<18x18x32xf32, #tpu.memory_space<vmem>>, vector<18x16x32xf32>
    %47 = vector.extract_strided_slice %46 {offsets = [0, 0, 0], sizes = [16, 16, 32], strides = [1, 1, 1]} : vector<18x16x32xf32> to vector<16x16x32xf32>
    %48 = vector.shape_cast %47 : vector<16x16x32xf32> to vector<256x32xf32>
    %c0_37 = arith.constant 0 : index
    %c0_38 = arith.constant 0 : index
    %c0_39 = arith.constant 0 : index
    %c0_40 = arith.constant 0 : index
    %49 = vector.load %arg4[%c0_37, %c0_38, %c0_39, %c0_40] : memref<3x3x32x64xf32, #tpu.memory_space<vmem>>, vector<1x1x32x64xf32>
    %50 = vector.shape_cast %49 : vector<1x1x32x64xf32> to vector<32x64xf32>
    %cst_41 = arith.constant dense<0.000000e+00> : vector<256x64xf32>
    %51 = tpu.matmul %48, %50, %cst_41 {dimension_numbers = #tpu.dot_dimension_numbers<[1], [0], [0], [1], [0, 0, 1, 1], [], []>} : vector<256x32xf32>, vector<32x64xf32>, vector<256x64xf32> -> vector<256x64xf32>
    %52 = arith.addf %45, %51 : vector<256x64xf32>
    %53 = vector.extract_strided_slice %46 {offsets = [1, 0, 0], sizes = [16, 16, 32], strides = [1, 1, 1]} : vector<18x16x32xf32> to vector<16x16x32xf32>
    %54 = vector.shape_cast %53 : vector<16x16x32xf32> to vector<256x32xf32>
    %c1_42 = arith.constant 1 : index
    %c0_43 = arith.constant 0 : index
    %c0_44 = arith.constant 0 : index
    %c0_45 = arith.constant 0 : index
    %55 = vector.load %arg4[%c1_42, %c0_43, %c0_44, %c0_45] : memref<3x3x32x64xf32, #tpu.memory_space<vmem>>, vector<1x1x32x64xf32>
    %56 = vector.shape_cast %55 : vector<1x1x32x64xf32> to vector<32x64xf32>
    %cst_46 = arith.constant dense<0.000000e+00> : vector<256x64xf32>
    %57 = tpu.matmul %54, %56, %cst_46 {dimension_numbers = #tpu.dot_dimension_numbers<[1], [0], [0], [1], [0, 0, 1, 1], [], []>} : vector<256x32xf32>, vector<32x64xf32>, vector<256x64xf32> -> vector<256x64xf32>
    %58 = arith.addf %52, %57 : vector<256x64xf32>
    %59 = vector.extract_strided_slice %46 {offsets = [2, 0, 0], sizes = [16, 16, 32], strides = [1, 1, 1]} : vector<18x16x32xf32> to vector<16x16x32xf32>
    %60 = vector.shape_cast %59 : vector<16x16x32xf32> to vector<256x32xf32>
    %c2 = arith.constant 2 : index
    %c0_47 = arith.constant 0 : index
    %c0_48 = arith.constant 0 : index
    %c0_49 = arith.constant 0 : index
    %61 = vector.load %arg4[%c2, %c0_47, %c0_48, %c0_49] : memref<3x3x32x64xf32, #tpu.memory_space<vmem>>, vector<1x1x32x64xf32>
    %62 = vector.shape_cast %61 : vector<1x1x32x64xf32> to vector<32x64xf32>
    %cst_50 = arith.constant dense<0.000000e+00> : vector<256x64xf32>
    %63 = tpu.matmul %60, %62, %cst_50 {dimension_numbers = #tpu.dot_dimension_numbers<[1], [0], [0], [1], [0, 0, 1, 1], [], []>} : vector<256x32xf32>, vector<32x64xf32>, vector<256x64xf32> -> vector<256x64xf32>
    %64 = arith.addf %58, %63 : vector<256x64xf32>
    %c0_51 = arith.constant 0 : index
    %c1_52 = arith.constant 1 : index
    %c0_53 = arith.constant 0 : index
    %65 = vector.load %arg7[%c0_51, %c1_52, %c0_53] : memref<18x18x32xf32, #tpu.memory_space<vmem>>, vector<18x16x32xf32>
    %66 = vector.extract_strided_slice %65 {offsets = [0, 0, 0], sizes = [16, 16, 32], strides = [1, 1, 1]} : vector<18x16x32xf32> to vector<16x16x32xf32>
    %67 = vector.shape_cast %66 : vector<16x16x32xf32> to vector<256x32xf32>
    %c0_54 = arith.constant 0 : index
    %c1_55 = arith.constant 1 : index
    %c0_56 = arith.constant 0 : index
    %c0_57 = arith.constant 0 : index
    %68 = vector.load %arg4[%c0_54, %c1_55, %c0_56, %c0_57] : memref<3x3x32x64xf32, #tpu.memory_space<vmem>>, vector<1x1x32x64xf32>
    %69 = vector.shape_cast %68 : vector<1x1x32x64xf32> to vector<32x64xf32>
    %cst_58 = arith.constant dense<0.000000e+00> : vector<256x64xf32>
    %70 = tpu.matmul %67, %69, %cst_58 {dimension_numbers = #tpu.dot_dimension_numbers<[1], [0], [0], [1], [0, 0, 1, 1], [], []>} : vector<256x32xf32>, vector<32x64xf32>, vector<256x64xf32> -> vector<256x64xf32>
    %71 = arith.addf %64, %70 : vector<256x64xf32>
    %72 = vector.extract_strided_slice %65 {offsets = [1, 0, 0], sizes = [16, 16, 32], strides = [1, 1, 1]} : vector<18x16x32xf32> to vector<16x16x32xf32>
    %73 = vector.shape_cast %72 : vector<16x16x32xf32> to vector<256x32xf32>
    %c1_59 = arith.constant 1 : index
    %c1_60 = arith.constant 1 : index
    %c0_61 = arith.constant 0 : index
    %c0_62 = arith.constant 0 : index
    %74 = vector.load %arg4[%c1_59, %c1_60, %c0_61, %c0_62] : memref<3x3x32x64xf32, #tpu.memory_space<vmem>>, vector<1x1x32x64xf32>
    %75 = vector.shape_cast %74 : vector<1x1x32x64xf32> to vector<32x64xf32>
    %cst_63 = arith.constant dense<0.000000e+00> : vector<256x64xf32>
    %76 = tpu.matmul %73, %75, %cst_63 {dimension_numbers = #tpu.dot_dimension_numbers<[1], [0], [0], [1], [0, 0, 1, 1], [], []>} : vector<256x32xf32>, vector<32x64xf32>, vector<256x64xf32> -> vector<256x64xf32>
    %77 = arith.addf %71, %76 : vector<256x64xf32>
    %78 = vector.extract_strided_slice %65 {offsets = [2, 0, 0], sizes = [16, 16, 32], strides = [1, 1, 1]} : vector<18x16x32xf32> to vector<16x16x32xf32>
    %79 = vector.shape_cast %78 : vector<16x16x32xf32> to vector<256x32xf32>
    %c2_64 = arith.constant 2 : index
    %c1_65 = arith.constant 1 : index
    %c0_66 = arith.constant 0 : index
    %c0_67 = arith.constant 0 : index
    %80 = vector.load %arg4[%c2_64, %c1_65, %c0_66, %c0_67] : memref<3x3x32x64xf32, #tpu.memory_space<vmem>>, vector<1x1x32x64xf32>
    %81 = vector.shape_cast %80 : vector<1x1x32x64xf32> to vector<32x64xf32>
    %cst_68 = arith.constant dense<0.000000e+00> : vector<256x64xf32>
    %82 = tpu.matmul %79, %81, %cst_68 {dimension_numbers = #tpu.dot_dimension_numbers<[1], [0], [0], [1], [0, 0, 1, 1], [], []>} : vector<256x32xf32>, vector<32x64xf32>, vector<256x64xf32> -> vector<256x64xf32>
    %83 = arith.addf %77, %82 : vector<256x64xf32>
    %c0_69 = arith.constant 0 : index
    %c2_70 = arith.constant 2 : index
    %c0_71 = arith.constant 0 : index
    %84 = vector.load %arg7[%c0_69, %c2_70, %c0_71] : memref<18x18x32xf32, #tpu.memory_space<vmem>>, vector<18x16x32xf32>
    %85 = vector.extract_strided_slice %84 {offsets = [0, 0, 0], sizes = [16, 16, 32], strides = [1, 1, 1]} : vector<18x16x32xf32> to vector<16x16x32xf32>
    %86 = vector.shape_cast %85 : vector<16x16x32xf32> to vector<256x32xf32>
    %c0_72 = arith.constant 0 : index
    %c2_73 = arith.constant 2 : index
    %c0_74 = arith.constant 0 : index
    %c0_75 = arith.constant 0 : index
    %87 = vector.load %arg4[%c0_72, %c2_73, %c0_74, %c0_75] : memref<3x3x32x64xf32, #tpu.memory_space<vmem>>, vector<1x1x32x64xf32>
    %88 = vector.shape_cast %87 : vector<1x1x32x64xf32> to vector<32x64xf32>
    %cst_76 = arith.constant dense<0.000000e+00> : vector<256x64xf32>
    %89 = tpu.matmul %86, %88, %cst_76 {dimension_numbers = #tpu.dot_dimension_numbers<[1], [0], [0], [1], [0, 0, 1, 1], [], []>} : vector<256x32xf32>, vector<32x64xf32>, vector<256x64xf32> -> vector<256x64xf32>
    %90 = arith.addf %83, %89 : vector<256x64xf32>
    %91 = vector.extract_strided_slice %84 {offsets = [1, 0, 0], sizes = [16, 16, 32], strides = [1, 1, 1]} : vector<18x16x32xf32> to vector<16x16x32xf32>
    %92 = vector.shape_cast %91 : vector<16x16x32xf32> to vector<256x32xf32>
    %c1_77 = arith.constant 1 : index
    %c2_78 = arith.constant 2 : index
    %c0_79 = arith.constant 0 : index
    %c0_80 = arith.constant 0 : index
    %93 = vector.load %arg4[%c1_77, %c2_78, %c0_79, %c0_80] : memref<3x3x32x64xf32, #tpu.memory_space<vmem>>, vector<1x1x32x64xf32>
    %94 = vector.shape_cast %93 : vector<1x1x32x64xf32> to vector<32x64xf32>
    %cst_81 = arith.constant dense<0.000000e+00> : vector<256x64xf32>
    %95 = tpu.matmul %92, %94, %cst_81 {dimension_numbers = #tpu.dot_dimension_numbers<[1], [0], [0], [1], [0, 0, 1, 1], [], []>} : vector<256x32xf32>, vector<32x64xf32>, vector<256x64xf32> -> vector<256x64xf32>
    %96 = arith.addf %90, %95 : vector<256x64xf32>
    %97 = vector.extract_strided_slice %84 {offsets = [2, 0, 0], sizes = [16, 16, 32], strides = [1, 1, 1]} : vector<18x16x32xf32> to vector<16x16x32xf32>
    %98 = vector.shape_cast %97 : vector<16x16x32xf32> to vector<256x32xf32>
    %c2_82 = arith.constant 2 : index
    %c2_83 = arith.constant 2 : index
    %c0_84 = arith.constant 0 : index
    %c0_85 = arith.constant 0 : index
    %99 = vector.load %arg4[%c2_82, %c2_83, %c0_84, %c0_85] : memref<3x3x32x64xf32, #tpu.memory_space<vmem>>, vector<1x1x32x64xf32>
    %100 = vector.shape_cast %99 : vector<1x1x32x64xf32> to vector<32x64xf32>
    %cst_86 = arith.constant dense<0.000000e+00> : vector<256x64xf32>
    %101 = tpu.matmul %98, %100, %cst_86 {dimension_numbers = #tpu.dot_dimension_numbers<[1], [0], [0], [1], [0, 0, 1, 1], [], []>} : vector<256x32xf32>, vector<32x64xf32>, vector<256x64xf32> -> vector<256x64xf32>
    %102 = arith.addf %96, %101 : vector<256x64xf32>
    %c0_87 = arith.constant 0 : index
    %c0_88 = arith.constant 0 : index
    %103 = vector.load %arg5[%c0_87, %c0_88] : memref<1x64xf32, #tpu.memory_space<vmem>>, vector<1x64xf32>
    %104 = vector.broadcast %103 : vector<1x64xf32> to vector<256x64xf32>
    %105 = arith.addf %102, %104 : vector<256x64xf32>
    %106 = vector.shape_cast %105 : vector<256x64xf32> to vector<16x16x64xf32>
    %c0_89 = arith.constant 0 : index
    %c0_90 = arith.constant 0 : index
    %c0_91 = arith.constant 0 : index
    %c0_92 = arith.constant 0 : index
    %107 = vector.load %arg6[%c0_89, %c0_90, %c0_91, %c0_92] : memref<1x16x16x64xf32, #tpu.memory_space<vmem>>, vector<1x16x16x64xf32>
    %108 = vector.shape_cast %107 : vector<1x16x16x64xf32> to vector<16x16x64xf32>
    %109 = vector.shape_cast %106 : vector<16x16x64xf32> to vector<1x16x16x64xf32>
    tpu.vector_store %arg6[%c0_89, %c0_90, %c0_91, %c0_92], %109 {strides = array<i32>} : memref<1x16x16x64xf32, #tpu.memory_space<vmem>>, vector<1x16x16x64xf32>,
    return
  }
  func.func @transform_0(%arg0: i32) -> (i32, i32, i32, i32) {
    %c0_i32 = arith.constant 0 : i32
    %c0_i32_0 = arith.constant 0 : i32
    %c0_i32_1 = arith.constant 0 : i32
    %c0_i32_2 = arith.constant 0 : i32
    return %arg0, %c0_i32, %c0_i32_0, %c0_i32_1 : i32, i32, i32, i32
  }
  func.func @transform_1(%arg0: i32) -> (i32, i32) {
    %c0_i32 = arith.constant 0 : i32
    %c0_i32_0 = arith.constant 0 : i32
    %c0_i32_1 = arith.constant 0 : i32
    return %c0_i32, %c0_i32_0 : i32, i32
  }
  func.func @transform_2(%arg0: i32) -> (i32, i32) {
    %c0_i32 = arith.constant 0 : i32
    %c0_i32_0 = arith.constant 0 : i32
    %c0_i32_1 = arith.constant 0 : i32
    return %c0_i32, %c0_i32_0 : i32, i32
  }
  func.func @transform_3(%arg0: i32) -> (i32, i32, i32, i32) {
    %c0_i32 = arith.constant 0 : i32
    %c0_i32_0 = arith.constant 0 : i32
    %c0_i32_1 = arith.constant 0 : i32
    %c0_i32_2 = arith.constant 0 : i32
    %c0_i32_3 = arith.constant 0 : i32
    return %c0_i32, %c0_i32_0, %c0_i32_1, %c0_i32_2 : i32, i32, i32, i32
  }
  func.func @transform_4(%arg0: i32) -> (i32, i32) {
    %c0_i32 = arith.constant 0 : i32
    %c0_i32_0 = arith.constant 0 : i32
    %c0_i32_1 = arith.constant 0 : i32
    return %c0_i32, %c0_i32_0 : i32, i32
  }
  func.func @transform_5(%arg0: i32) -> (i32, i32, i32, i32) {
    %c0_i32 = arith.constant 0 : i32
    %c0_i32_0 = arith.constant 0 : i32
    %c0_i32_1 = arith.constant 0 : i32
    %c0_i32_2 = arith.constant 0 : i32
    return %arg0, %c0_i32, %c0_i32_0, %c0_i32_1 : i32, i32, i32, i32
  }
}

</mosaic_0001>

<llo_original>
// kernel: tpu_custom_call.1
$region0: #{tpu_custom_call.1}
  #allocation0 [shape = 'u32[]', space=smem, size = 0x4, offset = 0x4, fixed_abs, tag = 'smem constant byte address 0x4 - core index']
  #allocation1 [shape = 'u32[144,128]{1,0:T(1,128)}', space=vmem, size = 0x12000, scoped, tag = 'internal scratch']
  %s0 = inlined_call_operand.hbm [shape: f32[8,128], index: 0, kind: input, shape index: {}]
  %s1 = inlined_call_operand.hbm [shape: f32[8,128], index: 1, kind: output, shape index: {}]
  %s2 = sld [smem:[#allocation0]]
  $region18: #{tpu_custom_call.1} parent=0
    _
  %s4 = ssub.s32 1, %s2
  %s5 = scalar_select 0, %s4, %s2
  $region1: #{tpu_custom_call.1} parent=0
    #allocation2 [shape = 'u8[4096]{0}', space=vmem, size = 0x1000, scoped, tag = 'input window, operand 0, single buffered']
    #allocation3 [shape = 's32[1]{0}', space=sflag, size = 0x4, scoped, tag = 'scoped memory for tpu_custom_call.1']
    #allocation4 [shape = 's32[1]{0}', space=sflag, size = 0x4, scoped, tag = 'scoped memory for tpu_custom_call.1']
    #allocation5 [shape = 'u8[4096]{0}', space=vmem, size = 0x1000, scoped, tag = 'output window, operand 0, single buffered']
    %6 = vsyncpa [#allocation3], 0
    %7 = vsyncpa [#allocation4], 0
    // Predicated region
    $region2: #{tpu_custom_call.1} parent=1 // pred_check
      _
    $region3: #{tpu_custom_call.1} parent=1 // pred_check_branch
      %9 = sbr.rel (0) target = $region5
    $region4: #{tpu_custom_call.1} parent=1 // pred_region
      %s11 = ssub.s32 128, 128
      %12 = vsyncadd [#allocation3], %s11
      %s14 = sshll.u32 [#allocation2], 4
      %s15 = int_to_ptr.vmem [resolvable:$true] %s14
      %17 = dma.hbm_to_vmem [thread:$0]  %s0, 128, %s15, [#allocation3]
    $region5: #{tpu_custom_call.1} parent=1 // pred_fallthru
      _
    // Predicated region
    $region6: #{tpu_custom_call.1} parent=1 // pred_check
      _
    $region7: #{tpu_custom_call.1} parent=1 // pred_check_branch
      %19 = sbr.rel (0) target = $region9
    $region8: #{tpu_custom_call.1} parent=1 // pred_region
      %20 = dma.done [#allocation3], 128
    $region9: #{tpu_custom_call.1} parent=1 // pred_fallthru
      _
    %v21 = vld [vmem:[#allocation2] sm:$0xff]
    %22 = vst [vmem:[#allocation5] sm:$0xff] %v21
    // Predicated region
    $region10: #{tpu_custom_call.1} parent=1 // pred_check
      _
    $region11: #{tpu_custom_call.1} parent=1 // pred_check_branch
      %24 = sbr.rel (0) target = $region13
    $region12: #{tpu_custom_call.1} parent=1 // pred_region
      %s26 = ssub.s32 128, 128
      %27 = vsyncadd [#allocation4], %s26
      %s29 = sshll.u32 [#allocation5], 4
      %s30 = int_to_ptr.vmem [resolvable:$true] %s29
      %32 = dma.vmem_to_hbm [thread:$0]  %s30, 128, %s1, [#allocation4]
    $region13: #{tpu_custom_call.1} parent=1 // pred_fallthru
      _
    // Predicated region
    $region14: #{tpu_custom_call.1} parent=1 // pred_check
      _
    $region15: #{tpu_custom_call.1} parent=1 // pred_check_branch
      %34 = sbr.rel (0) target = $region17
    $region16: #{tpu_custom_call.1} parent=1 // pred_region
      %35 = dma.done [#allocation4], 128
    $region17: #{tpu_custom_call.1} parent=1 // pred_fallthru
      _
    %36 = vsyncpa [#allocation3], 1
    %37 = vsyncpa [#allocation4], 1

// kernel: residual_block_forward.2
$region0: #{residual_block_forward.2}
  #allocation0 [shape = 'u32[]', space=smem, size = 0x4, offset = 0x4, fixed_abs, tag = 'smem constant byte address 0x4 - core index']
  #allocation1 [shape = 'u32[144,128]{1,0:T(1,128)}', space=vmem, size = 0x12000, scoped, tag = 'internal scratch']
  #allocation2 [shape = 'f32[18,18,32]{2,1,0:T(8,128)}', space=vmem, size = 0x36000, scoped, tag = 'scratch operand']
  %s0 = inlined_call_operand.hbm [shape: f32[2,16,16,32], index: 0, kind: input, shape index: {}]
  %s1 = inlined_call_operand.vmem [shape: f32[32,32], index: 1, kind: input, shape index: {}]
  %s2 = inlined_call_operand.vmem [shape: f32[1,32], index: 2, kind: input, shape index: {}]
  %s3 = inlined_call_operand.hbm [shape: f32[3,3,32,64], index: 3, kind: input, shape index: {}]
  %s4 = inlined_call_operand.vmem [shape: f32[1,64], index: 4, kind: input, shape index: {}]
  %s5 = inlined_call_operand.vmem [shape: f32[2,16,16,64], index: 5, kind: output, shape index: {}]
  %s6 = sld [smem:[#allocation0]]
  $region61: #{residual_block_forward.2} parent=0
    _
  %s8 = ssub.s32 1, %s6
  %s9 = scalar_select 0, %s8, %s6
  $region1: #{residual_block_forward.2} parent=0
    #allocation3 [shape = 'u8[262144]{0}', space=vmem, size = 0x40000, scoped, tag = 'input window, operand 0']
    #allocation4 [shape = 's32[2]{0}', space=sflag, size = 0x8, scoped, tag = 'scoped memory for residual_block_forward.2']
    #allocation5 [shape = 'u8[147456]{0}', space=vmem, size = 0x24000, scoped, tag = 'input window, operand 3, single buffered']
    #allocation6 [shape = 's32[1]{0}', space=sflag, size = 0x4, scoped, tag = 'scoped memory for residual_block_forward.2']
    %10 = vsyncpa [#allocation4], 0
    %s11 = scalar_lea.sflag [#allocation4], 1
    %12 = vsyncpa %s11, 0
    %13 = vsyncpa [#allocation6], 0
    loop: start=0, step=1, limit=4
    $region2: #{residual_block_forward.2} parent=1 // loop_pre_header
      _
    $region3: #{residual_block_forward.2} parent=1 // loop_header
      %s15 = sphi 0, %s19
      %p16 = scmp.ge.s32.totalorder %s15, 4
      %s25 = sphi 0, %s27
      %s28 = sphi 0, %s25
      %s29 = sphi 0, %s28
      %s45 = sphi 0, %s29
      %s49 = sphi 0, %s49
      %s51 = sphi 0, %s49
      %s52 = sphi 0, %s51
      %s66 = sphi 0, %s52
      %s70 = sphi 0, %s70
      %s72 = sphi 0, %s70
      %s73 = sphi 0, %s72
      %s87 = sphi 0, %s73
      %s91 = sphi 0, %s91
      %s93 = sphi 0, %s91
      %s94 = sphi 0, %s93
      %s108 = sphi 0, %s94
      %s112 = sphi 0, %s112
      %s114 = sphi 0, %s112
      %s115 = sphi 0, %s114
      %s129 = sphi 0, %s115
      %s135 = sphi 0, %s137
      %s138 = sphi 0, %s135
      %s139 = sphi 0, %s138
      %s155 = sphi 0, %s139
    $region4: #{residual_block_forward.2} parent=1 // loop_header_branch
      %18 = sbr.rel (%p16) target = $region8
    $region5: #{residual_block_forward.2} parent=1 // loop_body
      %s20 = ssub.s32 %s15, 1
      %s21 = ssub.s32 %s15, 2
      %s22 = sadd.s32 %s15, 1
      %s23 = ssub.s32 %s15, %s22
      %p24 = scmp.eq.s32.totalorder %s23, 0
      %s26 = sadd.s32 %s25, 1
      %s27 = scalar_select %p24, %s25, %s26
      %p30 = pneg %p24
      %p31 = scmp.eq.s32.totalorder %s15, 1
      %p32 = por %p30, %p31
      %p33 = scmp.ne.s32.totalorder %s25, %s28
      %p34 = scmp.eq.s32.totalorder %s15, 0
      %p35 = por %p33, %p34
      %p36 = scmp.ne.s32.totalorder %s25, %s28
      %p37 = scmp.eq.s32.totalorder %s20, 1
      %p38 = por %p36, %p37
      %p39 = scmp.ne.s32.totalorder %s28, %s29
      %p40 = scmp.eq.s32.totalorder %s20, 0
      %p41 = por %p39, %p40
      %p42 = scmp.ne.s32.totalorder %s28, %s29
      %p43 = scmp.eq.s32.totalorder %s21, 1
      %p44 = por %p42, %p43
      %p46 = scmp.ne.s32.totalorder %s29, %s45
      %p47 = scmp.eq.s32.totalorder %s21, 0
      %p48 = por %p46, %p47
      %s50 = sadd.s32 %s49, 1
      %p53 = scmp.eq.s32.totalorder %s15, 1
      %p54 = scmp.ne.s32.totalorder %s49, %s51
      %p55 = scmp.eq.s32.totalorder %s15, 0
      %p56 = por %p54, %p55
      %p57 = scmp.ne.s32.totalorder %s49, %s51
      %p58 = scmp.eq.s32.totalorder %s20, 1
      %p59 = por %p57, %p58
      %p60 = scmp.ne.s32.totalorder %s51, %s52
      %p61 = scmp.eq.s32.totalorder %s20, 0
      %p62 = por %p60, %p61
      %p63 = scmp.ne.s32.totalorder %s51, %s52
      %p64 = scmp.eq.s32.totalorder %s21, 1
      %p65 = por %p63, %p64
      %p67 = scmp.ne.s32.totalorder %s52, %s66
      %p68 = scmp.eq.s32.totalorder %s21, 0
      %p69 = por %p67, %p68
      %s71 = sadd.s32 %s70, 1
      %p74 = scmp.eq.s32.totalorder %s15, 1
      %p75 = scmp.ne.s32.totalorder %s70, %s72
      %p76 = scmp.eq.s32.totalorder %s15, 0
      %p77 = por %p75, %p76
      %p78 = scmp.ne.s32.totalorder %s70, %s72
      %p79 = scmp.eq.s32.totalorder %s20, 1
      %p80 = por %p78, %p79
      %p81 = scmp.ne.s32.totalorder %s72, %s73
      %p82 = scmp.eq.s32.totalorder %s20, 0
      %p83 = por %p81, %p82
      %p84 = scmp.ne.s32.totalorder %s72, %s73
      %p85 = scmp.eq.s32.totalorder %s21, 1
      %p86 = por %p84, %p85
      %p88 = scmp.ne.s32.totalorder %s73, %s87
      %p89 = scmp.eq.s32.totalorder %s21, 0
      %p90 = por %p88, %p89
      %s92 = sadd.s32 %s91, 1
      %p95 = scmp.eq.s32.totalorder %s15, 1
      %p96 = scmp.ne.s32.totalorder %s91, %s93
      %p97 = scmp.eq.s32.totalorder %s15, 0
      %p98 = por %p96, %p97
      %p99 = scmp.ne.s32.totalorder %s91, %s93
      %p100 = scmp.eq.s32.totalorder %s20, 1
      %p101 = por %p99, %p100
      %p102 = scmp.ne.s32.totalorder %s93, %s94
      %p103 = scmp.eq.s32.totalorder %s20, 0
      %p104 = por %p102, %p103
      %p105 = scmp.ne.s32.totalorder %s93, %s94
      %p106 = scmp.eq.s32.totalorder %s21, 1
      %p107 = por %p105, %p106
      %p109 = scmp.ne.s32.totalorder %s94, %s108
      %p110 = scmp.eq.s32.totalorder %s21, 0
      %p111 = por %p109, %p110
      %s113 = sadd.s32 %s112, 1
      %p116 = scmp.eq.s32.totalorder %s15, 1
      %p117 = scmp.ne.s32.totalorder %s112, %s114
      %p118 = scmp.eq.s32.totalorder %s15, 0
      %p119 = por %p117, %p118
      %p120 = scmp.ne.s32.totalorder %s112, %s114
      %p121 = scmp.eq.s32.totalorder %s20, 1
      %p122 = por %p120, %p121
      %p123 = scmp.ne.s32.totalorder %s114, %s115
      %p124 = scmp.eq.s32.totalorder %s20, 0
      %p125 = por %p123, %p124
      %p126 = scmp.ne.s32.totalorder %s114, %s115
      %p127 = scmp.eq.s32.totalorder %s21, 1
      %p128 = por %p126, %p127
      %p130 = scmp.ne.s32.totalorder %s115, %s129
      %p131 = scmp.eq.s32.totalorder %s21, 0
      %p132 = por %p130, %p131
      %s133 = ssub.s32 %s15, %s22
      %p134 = scmp.eq.s32.totalorder %s133, 0
      %s136 = sadd.s32 %s135, 1
      %s137 = scalar_select %p134, %s135, %s136
      %p140 = pneg %p134
      %p141 = scmp.eq.s32.totalorder %s15, 1
      %p142 = por %p140, %p141
      %p143 = scmp.ne.s32.totalorder %s135, %s138
      %p144 = scmp.eq.s32.totalorder %s15, 0
      %p145 = por %p143, %p144
      %p146 = scmp.ne.s32.totalorder %s135, %s138
      %p147 = scmp.eq.s32.totalorder %s20, 1
      %p148 = por %p146, %p147
      %p149 = scmp.ne.s32.totalorder %s138, %s139
      %p150 = scmp.eq.s32.totalorder %s20, 0
      %p151 = por %p149, %p150
      %p152 = scmp.ne.s32.totalorder %s138, %s139
      %p153 = scmp.eq.s32.totalorder %s21, 1
      %p154 = por %p152, %p153
      %p156 = scmp.ne.s32.totalorder %s139, %s155
      %p157 = scmp.eq.s32.totalorder %s21, 0
      %p158 = por %p156, %p157
      %p159 = scmp.le.s32.totalorder 1, %s15
      %p160 = scmp.lt.s32.totalorder %s15, 3
      %p161 = pnand %p159, %p160
      %p162 = pneg %p161
      // Predicated region
      $region9: #{residual_block_forward.2} parent=5 // pred_check
        _
      $region10: #{residual_block_forward.2} parent=5 // pred_check_branch
        %164 = sbr.rel (%p161) target = $region12
      $region11: #{residual_block_forward.2} parent=5 // pred_region
        %s165 = ssub.s32 %s15, 1
        // Predicated region
        $region13: #{residual_block_forward.2} parent=11 // pred_check
          %p166 = pneg %p62
        $region14: #{residual_block_forward.2} parent=11 // pred_check_branch
          %168 = sbr.rel (%p166) target = $region16
        $region15: #{residual_block_forward.2} parent=11 // pred_region
          _
        $region16: #{residual_block_forward.2} parent=11 // pred_fallthru
          _
        // Predicated region
        $region17: #{residual_block_forward.2} parent=11 // pred_check
          %p169 = pneg %p83
        $region18: #{residual_block_forward.2} parent=11 // pred_check_branch
          %171 = sbr.rel (%p169) target = $region20
        $region19: #{residual_block_forward.2} parent=11 // pred_region
          _
        $region20: #{residual_block_forward.2} parent=11 // pred_fallthru
          _
        // Predicated region
        $region21: #{residual_block_forward.2} parent=11 // pred_check
          %p172 = pneg %p104
        $region22: #{residual_block_forward.2} parent=11 // pred_check_branch
          %174 = sbr.rel (%p172) target = $region24
        $region23: #{residual_block_forward.2} parent=11 // pred_region
          %s176 = ssub.s32 4608, 4608
          %177 = vsyncadd [#allocation6], %s176
          %s178 = sshll.u32 [#allocation5], 4
          %s179 = int_to_ptr.vmem [resolvable:$true] %s178
          %184 = dma.hbm_to_vmem [thread:$0]  %s3, 4608, %s179, [#allocation6], 128, 128, 8
        $region24: #{residual_block_forward.2} parent=11 // pred_fallthru
          _
        // Predicated region
        $region25: #{residual_block_forward.2} parent=11 // pred_check
          %p185 = pneg %p125
        $region26: #{residual_block_forward.2} parent=11 // pred_check_branch
          %187 = sbr.rel (%p185) target = $region28
        $region27: #{residual_block_forward.2} parent=11 // pred_region
          _
        $region28: #{residual_block_forward.2} parent=11 // pred_fallthru
          _
      $region12: #{residual_block_forward.2} parent=5 // pred_fallthru
        _
      %p188 = scmp.lt.s32.totalorder %s15, 2
      // Predicated region
      $region29: #{residual_block_forward.2} parent=5 // pred_check
        %p189 = pneg %p188
      $region30: #{residual_block_forward.2} parent=5 // pred_check_branch
        %191 = sbr.rel (%p189) target = $region32
      $region31: #{residual_block_forward.2} parent=5 // pred_region
        // Predicated region
        $region33: #{residual_block_forward.2} parent=31 // pred_check
          %p192 = pneg %p35
        $region34: #{residual_block_forward.2} parent=31 // pred_check_branch
          %194 = sbr.rel (%p192) target = $region36
        $region35: #{residual_block_forward.2} parent=31 // pred_region
          %s195 = sand.u32 %s25, 1
          %s196 = scalar_lea.sflag [#allocation4], %s195
          %s197 = sand.u32 %s25, 1
          %s198 = smul.addr %s197, 256
          %s199 = scalar_lea.vmem [#allocation3], %s198
          %s201 = ssub.s32 4096, 4096
          %202 = vsyncadd %s196, %s201
          %s203 = smul.addr %s15, 32
          %s204 = smul.addr %s203, 128
          %s205 = scalar_lea.hbm %s0, %s204
          %s206 = sshll.u32 %s199, 4
          %s207 = int_to_ptr.vmem [resolvable:$true] %s206
          %212 = dma.hbm_to_vmem [thread:$0]  %s205, 4096, %s207, %s196, 128, 128, 8
        $region36: #{residual_block_forward.2} parent=31 // pred_fallthru
          _
      $region32: #{residual_block_forward.2} parent=5 // pred_fallthru
        _
      %p213 = scmp.le.s32.totalorder 1, %s15
      %p214 = scmp.lt.s32.totalorder %s15, 3
      %p215 = pnand %p213, %p214
      %p216 = pneg %p215
      // Predicated region
      $region37: #{residual_block_forward.2} parent=5 // pred_check
        _
      $region38: #{residual_block_forward.2} parent=5 // pred_check_branch
        %218 = sbr.rel (%p215) target = $region40
      $region39: #{residual_block_forward.2} parent=5 // pred_region
        %s219 = ssub.s32 %s15, 1
        %s220 = sand.u32 %s28, 1
        %s221 = scalar_lea.sflag [#allocation4], %s220
        %s222 = sand.u32 %s28, 1
        %s223 = smul.addr %s222, 256
        %s224 = scalar_lea.vmem [#allocation3], %s223
        // Predicated region
        $region41: #{residual_block_forward.2} parent=39 // pred_check
          %p225 = pneg %p41
        $region42: #{residual_block_forward.2} parent=39 // pred_check_branch
          %227 = sbr.rel (%p225) target = $region44
        $region43: #{residual_block_forward.2} parent=39 // pred_region
          %228 = dma.done %s221, 4096
        $region44: #{residual_block_forward.2} parent=39 // pred_fallthru
          _
        // Predicated region
        $region45: #{residual_block_forward.2} parent=39 // pred_check
          %p229 = pneg %p104
        $region46: #{residual_block_forward.2} parent=39 // pred_check_branch
          %231 = sbr.rel (%p229) target = $region48
        $region47: #{residual_block_forward.2} parent=39 // pred_region
          %232 = dma.done [#allocation6], 4608
        $region48: #{residual_block_forward.2} parent=39 // pred_fallthru
          _
        %s233 = sand.u32 %s28, 1
        %s234 = scalar_lea.sflag [#allocation4], %s233
        %s235 = sand.u32 %s28, 1
        %s236 = smul.addr %s235, 256
        %s237 = scalar_lea.vmem [#allocation3], %s236
        %p238 = pneg %p41
        %p239 = pneg %p38
        %p240 = pneg %p62
        %p241 = pneg %p59
        %p242 = pneg %p83
        %p243 = pneg %p80
        %p244 = pneg %p104
        %p245 = pneg %p101
        %p246 = pneg %p125
        %p247 = pneg %p122
        %p248 = pneg %p151
        %p249 = pneg %p148
        %p250 = scmp.lt.s32.totalorder %s20, 1
        %s251 = scalar_select %p250, %s20, 1
        %s252 = smul.addr %s251, 32
        %s253 = smul.addr %s252, 8
        %s254 = scalar_lea.vmem %s5, %s253
        %p255 = scmp.lt.s32.totalorder %s20, 1
        %s256 = scalar_select %p255, %s20, 1
        %s257 = smul.addr %s256, 32
        %s258 = smul.addr %s257, 8
        %s259 = scalar_lea.vmem %s5, %s258
        %v260 = vld [vmem:[%s224] sm:$0xff]
        %v261 = vld [vmem:[%s224 + $0x8] sm:$0xff]
        %v262 = vld [vmem:[%s224 + $0x10] sm:$0xff]
        %v263 = vld [vmem:[%s224 + $0x18] sm:$0xff]
        %v264 = vld [vmem:[%s224 + $0x20] sm:$0xff]
        %v265 = vld [vmem:[%s224 + $0x28] sm:$0xff]
        %v266 = vld [vmem:[%s224 + $0x30] sm:$0xff]
        %v267 = vld [vmem:[%s224 + $0x38] sm:$0xff]
        %v268 = vld [vmem:[%s224 + $0x40] sm:$0xff]
        %v269 = vld [vmem:[%s224 + $0x48] sm:$0xff]
        %v270 = vld [vmem:[%s224 + $0x50] sm:$0xff]
        %v271 = vld [vmem:[%s224 + $0x58] sm:$0xff]
        %v272 = vld [vmem:[%s224 + $0x60] sm:$0xff]
        %v273 = vld [vmem:[%s224 + $0x68] sm:$0xff]
        %v274 = vld [vmem:[%s224 + $0x70] sm:$0xff]
        %v275 = vld [vmem:[%s224 + $0x78] sm:$0xff]
        %v276 = vld [vmem:[%s224 + $0x80] sm:$0xff]
        %v277 = vld [vmem:[%s224 + $0x88] sm:$0xff]
        %v278 = vld [vmem:[%s224 + $0x90] sm:$0xff]
        %v279 = vld [vmem:[%s224 + $0x98] sm:$0xff]
        %v280 = vld [vmem:[%s224 + $0xa0] sm:$0xff]
        %v281 = vld [vmem:[%s224 + $0xa8] sm:$0xff]
        %v282 = vld [vmem:[%s224 + $0xb0] sm:$0xff]
        %v283 = vld [vmem:[%s224 + $0xb8] sm:$0xff]
        %v284 = vld [vmem:[%s224 + $0xc0] sm:$0xff]
        %v285 = vld [vmem:[%s224 + $0xc8] sm:$0xff]
        %v286 = vld [vmem:[%s224 + $0xd0] sm:$0xff]
        %v287 = vld [vmem:[%s224 + $0xd8] sm:$0xff]
        %v288 = vld [vmem:[%s224 + $0xe0] sm:$0xff]
        %v289 = vld [vmem:[%s224 + $0xe8] sm:$0xff]
        %v290 = vld [vmem:[%s224 + $0xf0] sm:$0xff]
        %v291 = vld [vmem:[%s224 + $0xf8] sm:$0xff]
        %vm292 = vcmask 261120
        %v293 = vsel %vm292, %v260, 0.0
        %v294 = vsel %vm292, %v262, 0.0
        %v295 = vadd.f32 %v293, %v294
        %v296 = vsel %vm292, %v264, 0.0
        %v297 = vadd.f32 %v295, %v296
        %v298 = vsel %vm292, %v266, 0.0
        %v299 = vadd.f32 %v297, %v298
        %v300 = vsel %vm292, %v268, 0.0
        %v301 = vadd.f32 %v299, %v300
        %v302 = vsel %vm292, %v270, 0.0
        %v303 = vadd.f32 %v301, %v302
        %v304 = vsel %vm292, %v272, 0.0
        %v305 = vadd.f32 %v303, %v304
        %v306 = vsel %vm292, %v274, 0.0
        %v307 = vadd.f32 %v305, %v306
        %v308 = vsel %vm292, %v276, 0.0
        %v309 = vadd.f32 %v307, %v308
        %v310 = vsel %vm292, %v278, 0.0
        %v311 = vadd.f32 %v309, %v310
        %v312 = vsel %vm292, %v280, 0.0
        %v313 = vadd.f32 %v311, %v312
        %v314 = vsel %vm292, %v282, 0.0
        %v315 = vadd.f32 %v313, %v314
        %v316 = vsel %vm292, %v284, 0.0
        %v317 = vadd.f32 %v315, %v316
        %v318 = vsel %vm292, %v286, 0.0
        %v319 = vadd.f32 %v317, %v318
        %v320 = vsel %vm292, %v288, 0.0
        %v321 = vadd.f32 %v319, %v320
        %v322 = vsel %vm292, %v290, 0.0
        %v323 = vadd.f32 %v321, %v322
        %v324 = vsel %vm292, %v261, 0.0
        %v325 = vsel %vm292, %v263, 0.0
        %v326 = vadd.f32 %v324, %v325
        %v327 = vsel %vm292, %v265, 0.0
        %v328 = vadd.f32 %v326, %v327
        %v329 = vsel %vm292, %v267, 0.0
        %v330 = vadd.f32 %v328, %v329
        %v331 = vsel %vm292, %v269, 0.0
        %v332 = vadd.f32 %v330, %v331
        %v333 = vsel %vm292, %v271, 0.0
        %v334 = vadd.f32 %v332, %v333
        %v335 = vsel %vm292, %v273, 0.0
        %v336 = vadd.f32 %v334, %v335
        %v337 = vsel %vm292, %v275, 0.0
        %v338 = vadd.f32 %v336, %v337
        %v339 = vsel %vm292, %v277, 0.0
        %v340 = vadd.f32 %v338, %v339
        %v341 = vsel %vm292, %v279, 0.0
        %v342 = vadd.f32 %v340, %v341
        %v343 = vsel %vm292, %v281, 0.0
        %v344 = vadd.f32 %v342, %v343
        %v345 = vsel %vm292, %v283, 0.0
        %v346 = vadd.f32 %v344, %v345
        %v347 = vsel %vm292, %v285, 0.0
        %v348 = vadd.f32 %v346, %v347
        %v349 = vsel %vm292, %v287, 0.0
        %v350 = vadd.f32 %v348, %v349
        %v351 = vsel %vm292, %v289, 0.0
        %v352 = vadd.f32 %v350, %v351
        %v353 = vsel %vm292, %v291, 0.0
        %v354 = vadd.f32 %v352, %v353
        %v355 = vsel %vm292, %v323, 0.0
        %v356 = vsel %vm292, %v354, 0.0
        %v357 = vadd.f32 %v355, %v356
        %v358 = vrot.slane %v357, 4
        %v359 = vadd.f32 %v357, %v358
        %v360 = vrot.slane %v359, 2
        %v361 = vadd.f32 %v359, %v360
        %v362 = vrot.slane %v361, 1
        %v363 = vadd.f32 %v361, %v362
        %v364 = vmul.f32 %v260, %v260
        %v365 = vmul.f32 %v261, %v261
        %v366 = vmul.f32 %v262, %v262
        %v367 = vmul.f32 %v263, %v263
        %v368 = vmul.f32 %v264, %v264
        %v369 = vmul.f32 %v265, %v265
        %v370 = vmul.f32 %v266, %v266
        %v371 = vmul.f32 %v267, %v267
        %v372 = vmul.f32 %v268, %v268
        %v373 = vmul.f32 %v269, %v269
        %v374 = vmul.f32 %v270, %v270
        %v375 = vmul.f32 %v271, %v271
        %v376 = vmul.f32 %v272, %v272
        %v377 = vmul.f32 %v273, %v273
        %v378 = vmul.f32 %v274, %v274
        %v379 = vmul.f32 %v275, %v275
        %v380 = vmul.f32 %v276, %v276
        %v381 = vmul.f32 %v277, %v277
        %v382 = vmul.f32 %v278, %v278
        %v383 = vmul.f32 %v279, %v279
        %v384 = vmul.f32 %v280, %v280
        %v385 = vmul.f32 %v281, %v281
        %v386 = vmul.f32 %v282, %v282
        %v387 = vmul.f32 %v283, %v283
        %v388 = vmul.f32 %v284, %v284
        %v389 = vmul.f32 %v285, %v285
        %v390 = vmul.f32 %v286, %v286
        %v391 = vmul.f32 %v287, %v287
        %v392 = vmul.f32 %v288, %v288
        %v393 = vmul.f32 %v289, %v289
        %v394 = vmul.f32 %v290, %v290
        %v395 = vmul.f32 %v291, %v291
        %v396 = vsel %vm292, %v364, 0.0
        %v397 = vsel %vm292, %v366, 0.0
        %v398 = vadd.f32 %v396, %v397
        %v399 = vsel %vm292, %v368, 0.0
        %v400 = vadd.f32 %v398, %v399
        %v401 = vsel %vm292, %v370, 0.0
        %v402 = vadd.f32 %v400, %v401
        %v403 = vsel %vm292, %v372, 0.0
        %v404 = vadd.f32 %v402, %v403
        %v405 = vsel %vm292, %v374, 0.0
        %v406 = vadd.f32 %v404, %v405
        %v407 = vsel %vm292, %v376, 0.0
        %v408 = vadd.f32 %v406, %v407
        %v409 = vsel %vm292, %v378, 0.0
        %v410 = vadd.f32 %v408, %v409
        %v411 = vsel %vm292, %v380, 0.0
        %v412 = vadd.f32 %v410, %v411
        %v413 = vsel %vm292, %v382, 0.0
        %v414 = vadd.f32 %v412, %v413
        %v415 = vsel %vm292, %v384, 0.0
        %v416 = vadd.f32 %v414, %v415
        %v417 = vsel %vm292, %v386, 0.0
        %v418 = vadd.f32 %v416, %v417
        %v419 = vsel %vm292, %v388, 0.0
        %v420 = vadd.f32 %v418, %v419
        %v421 = vsel %vm292, %v390, 0.0
        %v422 = vadd.f32 %v420, %v421
        %v423 = vsel %vm292, %v392, 0.0
        %v424 = vadd.f32 %v422, %v423
        %v425 = vsel %vm292, %v394, 0.0
        %v426 = vadd.f32 %v424, %v425
        %v427 = vsel %vm292, %v365, 0.0
        %v428 = vsel %vm292, %v367, 0.0
        %v429 = vadd.f32 %v427, %v428
        %v430 = vsel %vm292, %v369, 0.0
        %v431 = vadd.f32 %v429, %v430
        %v432 = vsel %vm292, %v371, 0.0
        %v433 = vadd.f32 %v431, %v432
        %v434 = vsel %vm292, %v373, 0.0
        %v435 = vadd.f32 %v433, %v434
        %v436 = vsel %vm292, %v375, 0.0
        %v437 = vadd.f32 %v435, %v436
        %v438 = vsel %vm292, %v377, 0.0
        %v439 = vadd.f32 %v437, %v438
        %v440 = vsel %vm292, %v379, 0.0
        %v441 = vadd.f32 %v439, %v440
        %v442 = vsel %vm292, %v381, 0.0
        %v443 = vadd.f32 %v441, %v442
        %v444 = vsel %vm292, %v383, 0.0
        %v445 = vadd.f32 %v443, %v444
        %v446 = vsel %vm292, %v385, 0.0
        %v447 = vadd.f32 %v445, %v446
        %v448 = vsel %vm292, %v387, 0.0
        %v449 = vadd.f32 %v447, %v448
        %v450 = vsel %vm292, %v389, 0.0
        %v451 = vadd.f32 %v449, %v450
        %v452 = vsel %vm292, %v391, 0.0
        %v453 = vadd.f32 %v451, %v452
        %v454 = vsel %vm292, %v393, 0.0
        %v455 = vadd.f32 %v453, %v454
        %v456 = vsel %vm292, %v395, 0.0
        %v457 = vadd.f32 %v455, %v456
        %v458 = vsel %vm292, %v426, 0.0
        %v459 = vsel %vm292, %v457, 0.0
        %v460 = vadd.f32 %v458, %v459
        %v461 = vrot.slane %v460, 4
        %v462 = vadd.f32 %v460, %v461
        %v463 = vrot.slane %v462, 2
        %v464 = vadd.f32 %v462, %v463
        %v465 = vrot.slane %v464, 1
        %v466 = vadd.f32 %v464, %v465
        %v467 = vld [vmem:[%s1] sm:$0xff]
        %v468 = vld [vmem:[%s1 + $0x8] sm:$0xff]
        %v469 = vld [vmem:[%s1 + $0x10] sm:$0xff]
        %v470 = vld [vmem:[%s1 + $0x18] sm:$0xff]
        %v472 = vsel %vm292, %v363, 0
        %474 = vmatprep.subr.mxu0 0.0
        %475 = vmatpush1.msra.mxu0 %v467
        %476 = vmatprep.subr.mxu0 0.0
        %477 = vmatpush1.msra.mxu0 %v468
        %478 = vmatprep.subr.mxu0 0.0
        %479 = vmatpush1.msra.mxu0 %v469
        %480 = vmatprep.subr.mxu0 0.0
        %481 = vmatpush1.msra.mxu0 %v470
        %482 = vmatprep.subr.mxu0 0.0
        %483 = vmatpush1.msra.mxu0 0.0
        %484 = vmatprep.subr.mxu0 0.0
        %485 = vmatpush1.msra.mxu0 0.0
        %486 = vmatprep.subr.mxu0 0.0
        %487 = vmatpush1.msra.mxu0 0.0
        %488 = vmatprep.subr.mxu0 0.0
        %489 = vmatpush1.msra.mxu0 0.0
        %490 = vmatprep.subr.mxu0 0.0
        %491 = vmatpush1.msra.mxu0 0.0
        %492 = vmatprep.subr.mxu0 0.0
        %493 = vmatpush1.msra.mxu0 0.0
        %494 = vmatprep.subr.mxu0 0.0
        %495 = vmatpush1.msra.mxu0 0.0
        %496 = vmatprep.subr.mxu0 0.0
        %497 = vmatpush1.msra.mxu0 0.0
        %498 = vmatprep.subr.mxu0 0.0
        %499 = vmatpush1.msra.mxu0 0.0
        %500 = vmatprep.subr.mxu0 0.0
        %501 = vmatpush1.msra.mxu0 0.0
        %502 = vmatprep.subr.mxu0 0.0
        %503 = vmatpush1.msra.mxu0 0.0
        %504 = vmatprep.subr.mxu0 0.0
        %505 = vmatpush1.msra.mxu0 0.0
        %506 = vmatprep.subr.mxu0 0.0
        %507 = vmatpush1.msra.mxu0 0.0
        %508 = vmatprep.subr.mxu0 0.0
        %509 = vmatpush1.msra.mxu0 0.0
        %510 = vmatprep.subr.mxu0 0.0
        %511 = vmatpush1.msra.mxu0 0.0
        %512 = vmatprep.subr.mxu0 0.0
        %513 = vmatpush1.msra.mxu0 0.0
        %514 = vmatprep.subr.mxu0 0.0
        %515 = vmatpush1.msra.mxu0 0.0
        %516 = vmatprep.subr.mxu0 0.0
        %517 = vmatpush1.msra.mxu0 0.0
        %518 = vmatprep.subr.mxu0 0.0
        %519 = vmatpush1.msra.mxu0 0.0
        %520 = vmatprep.subr.mxu0 0.0
        %521 = vmatpush1.msra.mxu0 0.0
        %522 = vmatprep.subr.mxu0 0.0
        %523 = vmatpush1.msra.mxu0 0.0
        %524 = vmatprep.subr.mxu0 0.0
        %525 = vmatpush1.msra.mxu0 0.0
        %526 = vmatprep.subr.mxu0 0.0
        %527 = vmatpush1.msra.mxu0 0.0
        %528 = vmatprep.subr.mxu0 0.0
        %529 = vmatpush1.msra.mxu0 0.0
        %530 = vmatprep.subr.mxu0 0.0
        %531 = vmatpush1.msra.mxu0 0.0
        %532 = vmatprep.subr.mxu0 0.0
        %533 = vmatpush1.msra.mxu0 0.0
        %534 = vmatprep.subr.mxu0 0.0
        %535 = vmatpush1.msra.mxu0 0.0
        %536 = vmatprep.subr.mxu0 0.0
        %537 = vmatpush1.msra.mxu0 0.0
        %538 = vmatprep.mubr.f32.mxu0 0.0
        %539 = vmatmul.mubr.f32.gmra.mrb[0].mxu0 %v472
        %v540 = vpop.f32.mrb[0].mxu0
        %v541 = vadd.f32 0.0, %v540
        %v542 = vpop.f32.mrb[0].mxu0
        %543 = vdwg.mxu0
        %v545 = vsel %vm292, %v466, 0
        %547 = vmatprep.subr.mxu0 0.0
        %548 = vmatpush1.msra.mxu0 %v467
        %549 = vmatprep.subr.mxu0 0.0
        %550 = vmatpush1.msra.mxu0 %v468
        %551 = vmatprep.subr.mxu0 0.0
        %552 = vmatpush1.msra.mxu0 %v469
        %553 = vmatprep.subr.mxu0 0.0
        %554 = vmatpush1.msra.mxu0 %v470
        %555 = vmatprep.subr.mxu0 0.0
        %556 = vmatpush1.msra.mxu0 0.0
        %557 = vmatprep.subr.mxu0 0.0
        %558 = vmatpush1.msra.mxu0 0.0
        %559 = vmatprep.subr.mxu0 0.0
        %560 = vmatpush1.msra.mxu0 0.0
        %561 = vmatprep.subr.mxu0 0.0
        %562 = vmatpush1.msra.mxu0 0.0
        %563 = vmatprep.subr.mxu0 0.0
        %564 = vmatpush1.msra.mxu0 0.0
        %565 = vmatprep.subr.mxu0 0.0
        %566 = vmatpush1.msra.mxu0 0.0
        %567 = vmatprep.subr.mxu0 0.0
        %568 = vmatpush1.msra.mxu0 0.0
        %569 = vmatprep.subr.mxu0 0.0
        %570 = vmatpush1.msra.mxu0 0.0
        %571 = vmatprep.subr.mxu0 0.0
        %572 = vmatpush1.msra.mxu0 0.0
        %573 = vmatprep.subr.mxu0 0.0
        %574 = vmatpush1.msra.mxu0 0.0
        %575 = vmatprep.subr.mxu0 0.0
        %576 = vmatpush1.msra.mxu0 0.0
        %577 = vmatprep.subr.mxu0 0.0
        %578 = vmatpush1.msra.mxu0 0.0
        %579 = vmatprep.subr.mxu0 0.0
        %580 = vmatpush1.msra.mxu0 0.0
        %581 = vmatprep.subr.mxu0 0.0
        %582 = vmatpush1.msra.mxu0 0.0
        %583 = vmatprep.subr.mxu0 0.0
        %584 = vmatpush1.msra.mxu0 0.0
        %585 = vmatprep.subr.mxu0 0.0
        %586 = vmatpush1.msra.mxu0 0.0
        %587 = vmatprep.subr.mxu0 0.0
        %588 = vmatpush1.msra.mxu0 0.0
        %589 = vmatprep.subr.mxu0 0.0
        %590 = vmatpush1.msra.mxu0 0.0
        %591 = vmatprep.subr.mxu0 0.0
        %592 = vmatpush1.msra.mxu0 0.0
        %593 = vmatprep.subr.mxu0 0.0
        %594 = vmatpush1.msra.mxu0 0.0
        %595 = vmatprep.subr.mxu0 0.0
        %596 = vmatpush1.msra.mxu0 0.0
        %597 = vmatprep.subr.mxu0 0.0
        %598 = vmatpush1.msra.mxu0 0.0
        %599 = vmatprep.subr.mxu0 0.0
        %600 = vmatpush1.msra.mxu0 0.0
        %601 = vmatprep.subr.mxu0 0.0
        %602 = vmatpush1.msra.mxu0 0.0
        %603 = vmatprep.subr.mxu0 0.0
        %604 = vmatpush1.msra.mxu0 0.0
        %605 = vmatprep.subr.mxu0 0.0
        %606 = vmatpush1.msra.mxu0 0.0
        %607 = vmatprep.subr.mxu0 0.0
        %608 = vmatpush1.msra.mxu0 0.0
        %609 = vmatprep.subr.mxu0 0.0
        %610 = vmatpush1.msra.mxu0 0.0
        %611 = vmatprep.mubr.f32.mxu0 0.0
        %612 = vmatmul.mubr.f32.gmra.mrb[0].mxu0 %v545
        %v613 = vpop.f32.mrb[0].mxu0
        %v614 = vadd.f32 0.0, %v613
        %v615 = vpop.f32.mrb[0].mxu0
        %616 = vdwg.mxu0
        %v617 = vmul.f32 %v541, %v541
        %v618 = vsub.f32 %v614, %v617
        %v619 = vmax.f32 %v618, 0.0
        %v620 = vadd.f32 %v619, 1e-05
        %v621 = vrsqrt.pop %v620
        %v622 = vld [vmem:[%s2] sm:$0x1]
        %v623 = vmul.f32 %v621, %v622
        %v624 = vsub.f32 0.0, %v541
        %v625 = vmul.f32 %v624, %v623
        %v626 = vlaneseq
        %v627 = vshrl.u32 %v626, 7
        %v628 = vsub.s32 0, %v627
        %v629 = vrot.slane %v623, %v628
        %v630 = vmul.f32 %v260, %v629
        %v631 = vmul.f32 %v261, %v629
        %v632 = vmul.f32 %v262, %v629
        %v633 = vmul.f32 %v263, %v629
        %v634 = vmul.f32 %v264, %v629
        %v635 = vmul.f32 %v265, %v629
        %v636 = vmul.f32 %v266, %v629
        %v637 = vmul.f32 %v267, %v629
        %v638 = vmul.f32 %v268, %v629
        %v639 = vmul.f32 %v269, %v629
        %v640 = vmul.f32 %v270, %v629
        %v641 = vmul.f32 %v271, %v629
        %v642 = vmul.f32 %v272, %v629
        %v643 = vmul.f32 %v273, %v629
        %v644 = vmul.f32 %v274, %v629
        %v645 = vmul.f32 %v275, %v629
        %v646 = vmul.f32 %v276, %v629
        %v647 = vmul.f32 %v277, %v629
        %v648 = vmul.f32 %v278, %v629
        %v649 = vmul.f32 %v279, %v629
        %v650 = vmul.f32 %v280, %v629
        %v651 = vmul.f32 %v281, %v629
        %v652 = vmul.f32 %v282, %v629
        %v653 = vmul.f32 %v283, %v629
        %v654 = vmul.f32 %v284, %v629
        %v655 = vmul.f32 %v285, %v629
        %v656 = vmul.f32 %v286, %v629
        %v657 = vmul.f32 %v287, %v629
        %v658 = vmul.f32 %v288, %v629
        %v659 = vmul.f32 %v289, %v629
        %v660 = vmul.f32 %v290, %v629
        %v661 = vmul.f32 %v291, %v629
        %v662 = vlaneseq
        %v663 = vshrl.u32 %v662, 7
        %v664 = vsub.s32 0, %v663
        %v665 = vrot.slane %v625, %v664
        %v666 = vadd.f32 %v630, %v665
        %v667 = vadd.f32 %v631, %v665
        %v668 = vadd.f32 %v632, %v665
        %v669 = vadd.f32 %v633, %v665
        %v670 = vadd.f32 %v634, %v665
        %v671 = vadd.f32 %v635, %v665
        %v672 = vadd.f32 %v636, %v665
        %v673 = vadd.f32 %v637, %v665
        %v674 = vadd.f32 %v638, %v665
        %v675 = vadd.f32 %v639, %v665
        %v676 = vadd.f32 %v640, %v665
        %v677 = vadd.f32 %v641, %v665
        %v678 = vadd.f32 %v642, %v665
        %v679 = vadd.f32 %v643, %v665
        %v680 = vadd.f32 %v644, %v665
        %v681 = vadd.f32 %v645, %v665
        %v682 = vadd.f32 %v646, %v665
        %v683 = vadd.f32 %v647, %v665
        %v684 = vadd.f32 %v648, %v665
        %v685 = vadd.f32 %v649, %v665
        %v686 = vadd.f32 %v650, %v665
        %v687 = vadd.f32 %v651, %v665
        %v688 = vadd.f32 %v652, %v665
        %v689 = vadd.f32 %v653, %v665
        %v690 = vadd.f32 %v654, %v665
        %v691 = vadd.f32 %v655, %v665
        %v692 = vadd.f32 %v656, %v665
        %v693 = vadd.f32 %v657, %v665
        %v694 = vadd.f32 %v658, %v665
        %v695 = vadd.f32 %v659, %v665
        %v696 = vadd.f32 %v660, %v665
        %v697 = vadd.f32 %v661, %v665
        %v698 = vxor.u32 %v666, 2147483648
        %v699 = vxor.u32 %v667, 2147483648
        %v700 = vxor.u32 %v668, 2147483648
        %v701 = vxor.u32 %v669, 2147483648
        %v702 = vxor.u32 %v670, 2147483648
        %v703 = vxor.u32 %v671, 2147483648
        %v704 = vxor.u32 %v672, 2147483648
        %v705 = vxor.u32 %v673, 2147483648
        %v706 = vxor.u32 %v674, 2147483648
        %v707 = vxor.u32 %v675, 2147483648
        %v708 = vxor.u32 %v676, 2147483648
        %v709 = vxor.u32 %v677, 2147483648
        %v710 = vxor.u32 %v678, 2147483648
        %v711 = vxor.u32 %v679, 2147483648
        %v712 = vxor.u32 %v680, 2147483648
        %v713 = vxor.u32 %v681, 2147483648
        %v714 = vxor.u32 %v682, 2147483648
        %v715 = vxor.u32 %v683, 2147483648
        %v716 = vxor.u32 %v684, 2147483648
        %v717 = vxor.u32 %v685, 2147483648
        %v718 = vxor.u32 %v686, 2147483648
        %v719 = vxor.u32 %v687, 2147483648
        %v720 = vxor.u32 %v688, 2147483648
        %v721 = vxor.u32 %v689, 2147483648
        %v722 = vxor.u32 %v690, 2147483648
        %v723 = vxor.u32 %v691, 2147483648
        %v724 = vxor.u32 %v692, 2147483648
        %v725 = vxor.u32 %v693, 2147483648
        %v726 = vxor.u32 %v694, 2147483648
        %v727 = vxor.u32 %v695, 2147483648
        %v728 = vxor.u32 %v696, 2147483648
        %v729 = vxor.u32 %v697, 2147483648
        %v730 = vmul.f32 %v698, 1.442695
        %v731 = vpow.pop %v730
        %v732 = vmul.f32 %v699, 1.442695
        %v733 = vpow.pop %v732
        %v734 = vmul.f32 %v700, 1.442695
        %v735 = vpow.pop %v734
        %v736 = vmul.f32 %v701, 1.442695
        %v737 = vpow.pop %v736
        %v738 = vmul.f32 %v702, 1.442695
        %v739 = vpow.pop %v738
        %v740 = vmul.f32 %v703, 1.442695
        %v741 = vpow.pop %v740
        %v742 = vmul.f32 %v704, 1.442695
        %v743 = vpow.pop %v742
        %v744 = vmul.f32 %v705, 1.442695
        %v745 = vpow.pop %v744
        %v746 = vmul.f32 %v706, 1.442695
        %v747 = vpow.pop %v746
        %v748 = vmul.f32 %v707, 1.442695
        %v749 = vpow.pop %v748
        %v750 = vmul.f32 %v708, 1.442695
        %v751 = vpow.pop %v750
        %v752 = vmul.f32 %v709, 1.442695
        %v753 = vpow.pop %v752
        %v754 = vmul.f32 %v710, 1.442695
        %v755 = vpow.pop %v754
        %v756 = vmul.f32 %v711, 1.442695
        %v757 = vpow.pop %v756
        %v758 = vmul.f32 %v712, 1.442695
        %v759 = vpow.pop %v758
        %v760 = vmul.f32 %v713, 1.442695
        %v761 = vpow.pop %v760
        %v762 = vmul.f32 %v714, 1.442695
        %v763 = vpow.pop %v762
        %v764 = vmul.f32 %v715, 1.442695
        %v765 = vpow.pop %v764
        %v766 = vmul.f32 %v716, 1.442695
        %v767 = vpow.pop %v766
        %v768 = vmul.f32 %v717, 1.442695
        %v769 = vpow.pop %v768
        %v770 = vmul.f32 %v718, 1.442695
        %v771 = vpow.pop %v770
        %v772 = vmul.f32 %v719, 1.442695
        %v773 = vpow.pop %v772
        %v774 = vmul.f32 %v720, 1.442695
        %v775 = vpow.pop %v774
        %v776 = vmul.f32 %v721, 1.442695
        %v777 = vpow.pop %v776
        %v778 = vmul.f32 %v722, 1.442695
        %v779 = vpow.pop %v778
        %v780 = vmul.f32 %v723, 1.442695
        %v781 = vpow.pop %v780
        %v782 = vmul.f32 %v724, 1.442695
        %v783 = vpow.pop %v782
        %v784 = vmul.f32 %v725, 1.442695
        %v785 = vpow.pop %v784
        %v786 = vmul.f32 %v726, 1.442695
        %v787 = vpow.pop %v786
        %v788 = vmul.f32 %v727, 1.442695
        %v789 = vpow.pop %v788
        %v790 = vmul.f32 %v728, 1.442695
        %v791 = vpow.pop %v790
        %v792 = vmul.f32 %v729, 1.442695
        %v793 = vpow.pop %v792
        %v794 = vadd.f32 %v731, 1.0
        %v795 = vadd.f32 %v733, 1.0
        %v796 = vadd.f32 %v735, 1.0
        %v797 = vadd.f32 %v737, 1.0
        %v798 = vadd.f32 %v739, 1.0
        %v799 = vadd.f32 %v741, 1.0
        %v800 = vadd.f32 %v743, 1.0
        %v801 = vadd.f32 %v745, 1.0
        %v802 = vadd.f32 %v747, 1.0
        %v803 = vadd.f32 %v749, 1.0
        %v804 = vadd.f32 %v751, 1.0
        %v805 = vadd.f32 %v753, 1.0
        %v806 = vadd.f32 %v755, 1.0
        %v807 = vadd.f32 %v757, 1.0
        %v808 = vadd.f32 %v759, 1.0
        %v809 = vadd.f32 %v761, 1.0
        %v810 = vadd.f32 %v763, 1.0
        %v811 = vadd.f32 %v765, 1.0
        %v812 = vadd.f32 %v767, 1.0
        %v813 = vadd.f32 %v769, 1.0
        %v814 = vadd.f32 %v771, 1.0
        %v815 = vadd.f32 %v773, 1.0
        %v816 = vadd.f32 %v775, 1.0
        %v817 = vadd.f32 %v777, 1.0
        %v818 = vadd.f32 %v779, 1.0
        %v819 = vadd.f32 %v781, 1.0
        %v820 = vadd.f32 %v783, 1.0
        %v821 = vadd.f32 %v785, 1.0
        %v822 = vadd.f32 %v787, 1.0
        %v823 = vadd.f32 %v789, 1.0
        %v824 = vadd.f32 %v791, 1.0
        %v825 = vadd.f32 %v793, 1.0
        %v826 = vrcp.pop %v794
        %v827 = vmul.f32 1.0, %v826
        %v828 = vrcp.pop %v795
        %v829 = vmul.f32 1.0, %v828
        %v830 = vrcp.pop %v796
        %v831 = vmul.f32 1.0, %v830
        %v832 = vrcp.pop %v797
        %v833 = vmul.f32 1.0, %v832
        %v834 = vrcp.pop %v798
        %v835 = vmul.f32 1.0, %v834
        %v836 = vrcp.pop %v799
        %v837 = vmul.f32 1.0, %v836
        %v838 = vrcp.pop %v800
        %v839 = vmul.f32 1.0, %v838
        %v840 = vrcp.pop %v801
        %v841 = vmul.f32 1.0, %v840
        %v842 = vrcp.pop %v802
        %v843 = vmul.f32 1.0, %v842
        %v844 = vrcp.pop %v803
        %v845 = vmul.f32 1.0, %v844
        %v846 = vrcp.pop %v804
        %v847 = vmul.f32 1.0, %v846
        %v848 = vrcp.pop %v805
        %v849 = vmul.f32 1.0, %v848
        %v850 = vrcp.pop %v806
        %v851 = vmul.f32 1.0, %v850
        %v852 = vrcp.pop %v807
        %v853 = vmul.f32 1.0, %v852
        %v854 = vrcp.pop %v808
        %v855 = vmul.f32 1.0, %v854
        %v856 = vrcp.pop %v809
        %v857 = vmul.f32 1.0, %v856
        %v858 = vrcp.pop %v810
        %v859 = vmul.f32 1.0, %v858
        %v860 = vrcp.pop %v811
        %v861 = vmul.f32 1.0, %v860
        %v862 = vrcp.pop %v812
        %v863 = vmul.f32 1.0, %v862
        %v864 = vrcp.pop %v813
        %v865 = vmul.f32 1.0, %v864
        %v866 = vrcp.pop %v814
        %v867 = vmul.f32 1.0, %v866
        %v868 = vrcp.pop %v815
        %v869 = vmul.f32 1.0, %v868
        %v870 = vrcp.pop %v816
        %v871 = vmul.f32 1.0, %v870
        %v872 = vrcp.pop %v817
        %v873 = vmul.f32 1.0, %v872
        %v874 = vrcp.pop %v818
        %v875 = vmul.f32 1.0, %v874
        %v876 = vrcp.pop %v819
        %v877 = vmul.f32 1.0, %v876
        %v878 = vrcp.pop %v820
        %v879 = vmul.f32 1.0, %v878
        %v880 = vrcp.pop %v821
        %v881 = vmul.f32 1.0, %v880
        %v882 = vrcp.pop %v822
        %v883 = vmul.f32 1.0, %v882
        %v884 = vrcp.pop %v823
        %v885 = vmul.f32 1.0, %v884
        %v886 = vrcp.pop %v824
        %v887 = vmul.f32 1.0, %v886
        %v888 = vrcp.pop %v825
        %v889 = vmul.f32 1.0, %v888
        %v890 = vmul.f32 %v666, %v827
        %v891 = vmul.f32 %v667, %v829
        %v892 = vmul.f32 %v668, %v831
        %v893 = vmul.f32 %v669, %v833
        %v894 = vmul.f32 %v670, %v835
        %v895 = vmul.f32 %v671, %v837
        %v896 = vmul.f32 %v672, %v839
        %v897 = vmul.f32 %v673, %v841
        %v898 = vmul.f32 %v674, %v843
        %v899 = vmul.f32 %v675, %v845
        %v900 = vmul.f32 %v676, %v847
        %v901 = vmul.f32 %v677, %v849
        %v902 = vmul.f32 %v678, %v851
        %v903 = vmul.f32 %v679, %v853
        %v904 = vmul.f32 %v680, %v855
        %v905 = vmul.f32 %v681, %v857
        %v906 = vmul.f32 %v682, %v859
        %v907 = vmul.f32 %v683, %v861
        %v908 = vmul.f32 %v684, %v863
        %v909 = vmul.f32 %v685, %v865
        %v910 = vmul.f32 %v686, %v867
        %v911 = vmul.f32 %v687, %v869
        %v912 = vmul.f32 %v688, %v871
        %v913 = vmul.f32 %v689, %v873
        %v914 = vmul.f32 %v690, %v875
        %v915 = vmul.f32 %v691, %v877
        %v916 = vmul.f32 %v692, %v879
        %v917 = vmul.f32 %v693, %v881
        %v918 = vmul.f32 %v694, %v883
        %v919 = vmul.f32 %v695, %v885
        %v920 = vmul.f32 %v696, %v887
        %v921 = vmul.f32 %v697, %v889
        %922 = vst.msk [vmem:[#allocation2] sm:$0xff] %vm292, 0.0
        %923 = vst.msk [vmem:[#allocation2 + $0x8] sm:$0xff] %vm292, 0.0
        %vm924 = vcmask 254976
        %925 = vst.msk [vmem:[#allocation2 + $0x10] sm:$0x3] %vm924, 0.0
        %s926 = scalar_lea.vmem [#allocation2], 408
        %927 = vst.msk [vmem:[%s926] sm:$0xff] %vm292, 0.0
        %928 = vst.msk [vmem:[%s926 + $0x8] sm:$0xff] %vm292, 0.0
        %929 = vst.msk [vmem:[%s926 + $0x10] sm:$0x3] %vm924, 0.0
        %s930 = scalar_lea.vmem [#allocation2], 24
        %vm931 = vcmask 253952
        %932 = vst.msk [vmem:[%s930] sm:$0x1] %vm931, 0.0
        %933 = vst.msk [vmem:[%s930 + $0x18] sm:$0x1] %vm931, 0.0
        %934 = vst.msk [vmem:[%s930 + $0x30] sm:$0x1] %vm931, 0.0
        %935 = vst.msk [vmem:[%s930 + $0x48] sm:$0x1] %vm931, 0.0
        %936 = vst.msk [vmem:[%s930 + $0x60] sm:$0x1] %vm931, 0.0
        %937 = vst.msk [vmem:[%s930 + $0x78] sm:$0x1] %vm931, 0.0
        %938 = vst.msk [vmem:[%s930 + $0x90] sm:$0x1] %vm931, 0.0
        %939 = vst.msk [vmem:[%s930 + $0xa8] sm:$0x1] %vm931, 0.0
        %940 = vst.msk [vmem:[%s930 + $0xc0] sm:$0x1] %vm931, 0.0
        %941 = vst.msk [vmem:[%s930 + $0xd8] sm:$0x1] %vm931, 0.0
        %942 = vst.msk [vmem:[%s930 + $0xf0] sm:$0x1] %vm931, 0.0
        %943 = vst.msk [vmem:[%s930 + $0x108] sm:$0x1] %vm931, 0.0
        %944 = vst.msk [vmem:[%s930 + $0x120] sm:$0x1] %vm931, 0.0
        %945 = vst.msk [vmem:[%s930 + $0x138] sm:$0x1] %vm931, 0.0
        %946 = vst.msk [vmem:[%s930 + $0x150] sm:$0x1] %vm931, 0.0
        %947 = vst.msk [vmem:[%s930 + $0x168] sm:$0x1] %vm931, 0.0
        %948 = vst.msk [vmem:[%s930 + $0x11] sm:$0x1] %vm931, 0.0
        %949 = vst.msk [vmem:[%s930 + $0x29] sm:$0x1] %vm931, 0.0
        %950 = vst.msk [vmem:[%s930 + $0x41] sm:$0x1] %vm931, 0.0
        %951 = vst.msk [vmem:[%s930 + $0x59] sm:$0x1] %vm931, 0.0
        %952 = vst.msk [vmem:[%s930 + $0x71] sm:$0x1] %vm931, 0.0
        %953 = vst.msk [vmem:[%s930 + $0x89] sm:$0x1] %vm931, 0.0
        %954 = vst.msk [vmem:[%s930 + $0xa1] sm:$0x1] %vm931, 0.0
        %955 = vst.msk [vmem:[%s930 + $0xb9] sm:$0x1] %vm931, 0.0
        %956 = vst.msk [vmem:[%s930 + $0xd1] sm:$0x1] %vm931, 0.0
        %957 = vst.msk [vmem:[%s930 + $0xe9] sm:$0x1] %vm931, 0.0
        %958 = vst.msk [vmem:[%s930 + $0x101] sm:$0x1] %vm931, 0.0
        %959 = vst.msk [vmem:[%s930 + $0x119] sm:$0x1] %vm931, 0.0
        %960 = vst.msk [vmem:[%s930 + $0x131] sm:$0x1] %vm931, 0.0
        %961 = vst.msk [vmem:[%s930 + $0x149] sm:$0x1] %vm931, 0.0
        %962 = vst.msk [vmem:[%s930 + $0x161] sm:$0x1] %vm931, 0.0
        %963 = vst.msk [vmem:[%s930 + $0x179] sm:$0x1] %vm931, 0.0
        %964 = vst.msk [vmem:[%s930 + $0x1] sm:$0xff] %vm292, %v890
        %965 = vst.msk [vmem:[%s930 + $0x9] sm:$0xff] %vm292, %v891
        %966 = vst.msk [vmem:[%s930 + $0x19] sm:$0xff] %vm292, %v892
        %967 = vst.msk [vmem:[%s930 + $0x21] sm:$0xff] %vm292, %v893
        %968 = vst.msk [vmem:[%s930 + $0x31] sm:$0xff] %vm292, %v894
        %969 = vst.msk [vmem:[%s930 + $0x39] sm:$0xff] %vm292, %v895
        %970 = vst.msk [vmem:[%s930 + $0x49] sm:$0xff] %vm292, %v896
        %971 = vst.msk [vmem:[%s930 + $0x51] sm:$0xff] %vm292, %v897
        %972 = vst.msk [vmem:[%s930 + $0x61] sm:$0xff] %vm292, %v898
        %973 = vst.msk [vmem:[%s930 + $0x69] sm:$0xff] %vm292, %v899
        %974 = vst.msk [vmem:[%s930 + $0x79] sm:$0xff] %vm292, %v900
        %975 = vst.msk [vmem:[%s930 + $0x81] sm:$0xff] %vm292, %v901
        %976 = vst.msk [vmem:[%s930 + $0x91] sm:$0xff] %vm292, %v902
        %977 = vst.msk [vmem:[%s930 + $0x99] sm:$0xff] %vm292, %v903
        %978 = vst.msk [vmem:[%s930 + $0xa9] sm:$0xff] %vm292, %v904
        %979 = vst.msk [vmem:[%s930 + $0xb1] sm:$0xff] %vm292, %v905
        %980 = vst.msk [vmem:[%s930 + $0xc1] sm:$0xff] %vm292, %v906
        %981 = vst.msk [vmem:[%s930 + $0xc9] sm:$0xff] %vm292, %v907
        %982 = vst.msk [vmem:[%s930 + $0xd9] sm:$0xff] %vm292, %v908
        %983 = vst.msk [vmem:[%s930 + $0xe1] sm:$0xff] %vm292, %v909
        %984 = vst.msk [vmem:[%s930 + $0xf1] sm:$0xff] %vm292, %v910
        %985 = vst.msk [vmem:[%s930 + $0xf9] sm:$0xff] %vm292, %v911
        %986 = vst.msk [vmem:[%s930 + $0x109] sm:$0xff] %vm292, %v912
        %987 = vst.msk [vmem:[%s930 + $0x111] sm:$0xff] %vm292, %v913
        %988 = vst.msk [vmem:[%s930 + $0x121] sm:$0xff] %vm292, %v914
        %989 = vst.msk [vmem:[%s930 + $0x129] sm:$0xff] %vm292, %v915
        %990 = vst.msk [vmem:[%s930 + $0x139] sm:$0xff] %vm292, %v916
        %991 = vst.msk [vmem:[%s930 + $0x141] sm:$0xff] %vm292, %v917
        %992 = vst.msk [vmem:[%s930 + $0x151] sm:$0xff] %vm292, %v918
        %993 = vst.msk [vmem:[%s930 + $0x159] sm:$0xff] %vm292, %v919
        %994 = vst.msk [vmem:[%s930 + $0x169] sm:$0xff] %vm292, %v920
        %995 = vst.msk [vmem:[%s930 + $0x171] sm:$0xff] %vm292, %v921
        %v996 = vld [vmem:[#allocation2] sm:$0xff]
        %v997 = vld [vmem:[#allocation2 + $0x8] sm:$0xff]
        %v998 = vld [vmem:[#allocation2 + $0x18] sm:$0xff]
        %v999 = vld [vmem:[#allocation2 + $0x20] sm:$0xff]
        %v1000 = vld [vmem:[#allocation2 + $0x30] sm:$0xff]
        %v1001 = vld [vmem:[#allocation2 + $0x38] sm:$0xff]
        %v1002 = vld [vmem:[#allocation2 + $0x48] sm:$0xff]
        %v1003 = vld [vmem:[#allocation2 + $0x50] sm:$0xff]
        %v1004 = vld [vmem:[#allocation2 + $0x60] sm:$0xff]
        %v1005 = vld [vmem:[#allocation2 + $0x68] sm:$0xff]
        %v1006 = vld [vmem:[#allocation2 + $0x78] sm:$0xff]
        %v1007 = vld [vmem:[#allocation2 + $0x80] sm:$0xff]
        %v1008 = vld [vmem:[#allocation2 + $0x90] sm:$0xff]
        %v1009 = vld [vmem:[#allocation2 + $0x98] sm:$0xff]
        %v1010 = vld [vmem:[#allocation2 + $0xa8] sm:$0xff]
        %v1011 = vld [vmem:[#allocation2 + $0xb0] sm:$0xff]
        %v1012 = vld [vmem:[#allocation2 + $0xc0] sm:$0xff]
        %v1013 = vld [vmem:[#allocation2 + $0xc8] sm:$0xff]
        %v1014 = vld [vmem:[#allocation2 + $0xd8] sm:$0xff]
        %v1015 = vld [vmem:[#allocation2 + $0xe0] sm:$0xff]
        %v1016 = vld [vmem:[#allocation2 + $0xf0] sm:$0xff]
        %v1017 = vld [vmem:[#allocation2 + $0xf8] sm:$0xff]
        %v1018 = vld [vmem:[#allocation2 + $0x108] sm:$0xff]
        %v1019 = vld [vmem:[#allocation2 + $0x110] sm:$0xff]
        %v1020 = vld [vmem:[#allocation2 + $0x120] sm:$0xff]
        %v1021 = vld [vmem:[#allocation2 + $0x128] sm:$0xff]
        %v1022 = vld [vmem:[#allocation2 + $0x138] sm:$0xff]
        %v1023 = vld [vmem:[#allocation2 + $0x140] sm:$0xff]
        %v1024 = vld [vmem:[#allocation2 + $0x150] sm:$0xff]
        %v1025 = vld [vmem:[#allocation2 + $0x158] sm:$0xff]
        %v1026 = vld [vmem:[#allocation2 + $0x168] sm:$0xff]
        %v1027 = vld [vmem:[#allocation2 + $0x170] sm:$0xff]
        %v1028 = vld [vmem:[#allocation2 + $0x180] sm:$0xff]
        %v1029 = vld [vmem:[#allocation2 + $0x188] sm:$0xff]
        %v1030 = vld [vmem:[#allocation2 + $0x198] sm:$0xff]
        %v1031 = vld [vmem:[#allocation2 + $0x1a0] sm:$0xff]
        %v1032 = vld [vmem:[#allocation5] sm:$0xff]
        %v1033 = vld [vmem:[#allocation5 + $0x8] sm:$0xff]
        %v1034 = vld [vmem:[#allocation5 + $0x10] sm:$0xff]
        %v1035 = vld [vmem:[#allocation5 + $0x18] sm:$0xff]
        %s1036 = scalar_lea.vmem [#allocation5], 96
        %v1037 = vld [vmem:[%s1036] sm:$0xff]
        %v1038 = vld [vmem:[%s1036 + $0x8] sm:$0xff]
        %v1039 = vld [vmem:[%s1036 + $0x10] sm:$0xff]
        %v1040 = vld [vmem:[%s1036 + $0x18] sm:$0xff]
        %v1042 = vsel %vm292, %v998, 0
        %v1045 = vsel %vm292, %v999, 0
        %v1048 = vsel %vm292, %v1000, 0
        %v1051 = vsel %vm292, %v1001, 0
        %v1054 = vsel %vm292, %v1002, 0
        %v1057 = vsel %vm292, %v1003, 0
        %v1060 = vsel %vm292, %v1004, 0
        %v1063 = vsel %vm292, %v1005, 0
        %v1066 = vsel %vm292, %v1006, 0
        %v1069 = vsel %vm292, %v1007, 0
        %v1072 = vsel %vm292, %v1008, 0
        %v1075 = vsel %vm292, %v1009, 0
        %v1078 = vsel %vm292, %v1010, 0
        %v1081 = vsel %vm292, %v1011, 0
        %v1084 = vsel %vm292, %v1012, 0
        %v1087 = vsel %vm292, %v1013, 0
        %v1090 = vsel %vm292, %v1014, 0
        %v1093 = vsel %vm292, %v1015, 0
        %v1096 = vsel %vm292, %v1016, 0
        %v1099 = vsel %vm292, %v1017, 0
        %v1102 = vsel %vm292, %v1018, 0
        %v1105 = vsel %vm292, %v1019, 0
        %v1108 = vsel %vm292, %v1020, 0
        %v1111 = vsel %vm292, %v1021, 0
        %v1114 = vsel %vm292, %v1022, 0
        %v1117 = vsel %vm292, %v1023, 0
        %v1120 = vsel %vm292, %v1024, 0
        %v1123 = vsel %vm292, %v1025, 0
        %v1126 = vsel %vm292, %v1026, 0
        %v1129 = vsel %vm292, %v1027, 0
        %v1132 = vsel %vm292, %v1028, 0
        %v1135 = vsel %vm292, %v1029, 0
        %1137 = vmatprep.subr.mxu0 0.0
        %1138 = vmatpush1.msra.mxu0 %v1037
        %1139 = vmatprep.subr.mxu0 0.0
        %1140 = vmatpush1.msra.mxu0 %v1038
        %1141 = vmatprep.subr.mxu0 0.0
        %1142 = vmatpush1.msra.mxu0 %v1039
        %1143 = vmatprep.subr.mxu0 0.0
        %1144 = vmatpush1.msra.mxu0 %v1040
        %1145 = vmatprep.subr.mxu0 0.0
        %1146 = vmatpush1.msra.mxu0 0.0
        %1147 = vmatprep.subr.mxu0 0.0
        %1148 = vmatpush1.msra.mxu0 0.0
        %1149 = vmatprep.subr.mxu0 0.0
        %1150 = vmatpush1.msra.mxu0 0.0
        %1151 = vmatprep.subr.mxu0 0.0
        %1152 = vmatpush1.msra.mxu0 0.0
        %1153 = vmatprep.subr.mxu0 0.0
        %1154 = vmatpush1.msra.mxu0 0.0
        %1155 = vmatprep.subr.mxu0 0.0
        %1156 = vmatpush1.msra.mxu0 0.0
        %1157 = vmatprep.subr.mxu0 0.0
        %1158 = vmatpush1.msra.mxu0 0.0
        %1159 = vmatprep.subr.mxu0 0.0
        %1160 = vmatpush1.msra.mxu0 0.0
        %1161 = vmatprep.subr.mxu0 0.0
        %1162 = vmatpush1.msra.mxu0 0.0
        %1163 = vmatprep.subr.mxu0 0.0
        %1164 = vmatpush1.msra.mxu0 0.0
        %1165 = vmatprep.subr.mxu0 0.0
        %1166 = vmatpush1.msra.mxu0 0.0
        %1167 = vmatprep.subr.mxu0 0.0
        %1168 = vmatpush1.msra.mxu0 0.0
        %1169 = vmatprep.subr.mxu0 0.0
        %1170 = vmatpush1.msra.mxu0 0.0
        %1171 = vmatprep.subr.mxu0 0.0
        %1172 = vmatpush1.msra.mxu0 0.0
        %1173 = vmatprep.subr.mxu0 0.0
        %1174 = vmatpush1.msra.mxu0 0.0
        %1175 = vmatprep.subr.mxu0 0.0
        %1176 = vmatpush1.msra.mxu0 0.0
        %1177 = vmatprep.subr.mxu0 0.0
        %1178 = vmatpush1.msra.mxu0 0.0
        %1179 = vmatprep.subr.mxu0 0.0
        %1180 = vmatpush1.msra.mxu0 0.0
        %1181 = vmatprep.subr.mxu0 0.0
        %1182 = vmatpush1.msra.mxu0 0.0
        %1183 = vmatprep.subr.mxu0 0.0
        %1184 = vmatpush1.msra.mxu0 0.0
        %1185 = vmatprep.subr.mxu0 0.0
        %1186 = vmatpush1.msra.mxu0 0.0
        %1187 = vmatprep.subr.mxu0 0.0
        %1188 = vmatpush1.msra.mxu0 0.0
        %1189 = vmatprep.subr.mxu0 0.0
        %1190 = vmatpush1.msra.mxu0 0.0
        %1191 = vmatprep.subr.mxu0 0.0
        %1192 = vmatpush1.msra.mxu0 0.0
        %1193 = vmatprep.subr.mxu0 0.0
        %1194 = vmatpush1.msra.mxu0 0.0
        %1195 = vmatprep.subr.mxu0 0.0
        %1196 = vmatpush1.msra.mxu0 0.0
        %1197 = vmatprep.subr.mxu0 0.0
        %1198 = vmatpush1.msra.mxu0 0.0
        %1199 = vmatprep.subr.mxu0 0.0
        %1200 = vmatpush1.msra.mxu0 0.0
        %1201 = vmatprep.mubr.f32.mxu0 0.0
        %1202 = vmatmul.mubr.f32.gmra.mrb[0].mxu0 %v1042
        %v1203 = vpop.f32.mrb[0].mxu0
        %v1204 = vadd.f32 0.0, %v1203
        %v1205 = vpop.f32.mrb[0].mxu0
        %1206 = vmatprep.mubr.f32.mxu0 0.0
        %1207 = vmatmul.mubr.f32.gmra.mrb[0].mxu0 %v1045
        %v1208 = vpop.f32.mrb[0].mxu0
        %v1209 = vadd.f32 0.0, %v1208
        %v1210 = vpop.f32.mrb[0].mxu0
        %1211 = vmatprep.mubr.f32.mxu0 0.0
        %1212 = vmatmul.mubr.f32.gmra.mrb[0].mxu0 %v1048
        %v1213 = vpop.f32.mrb[0].mxu0
        %v1214 = vadd.f32 0.0, %v1213
        %v1215 = vpop.f32.mrb[0].mxu0
        %1216 = vmatprep.mubr.f32.mxu0 0.0
        %1217 = vmatmul.mubr.f32.gmra.mrb[0].mxu0 %v1051
        %v1218 = vpop.f32.mrb[0].mxu0
        %v1219 = vadd.f32 0.0, %v1218
        %v1220 = vpop.f32.mrb[0].mxu0
        %1221 = vmatprep.mubr.f32.mxu0 0.0
        %1222 = vmatmul.mubr.f32.gmra.mrb[0].mxu0 %v1054
        %v1223 = vpop.f32.mrb[0].mxu0
        %v1224 = vadd.f32 0.0, %v1223
        %v1225 = vpop.f32.mrb[0].mxu0
        %1226 = vmatprep.mubr.f32.mxu0 0.0
        %1227 = vmatmul.mubr.f32.gmra.mrb[0].mxu0 %v1057
        %v1228 = vpop.f32.mrb[0].mxu0
        %v1229 = vadd.f32 0.0, %v1228
        %v1230 = vpop.f32.mrb[0].mxu0
        %1231 = vmatprep.mubr.f32.mxu0 0.0
        %1232 = vmatmul.mubr.f32.gmra.mrb[0].mxu0 %v1060
        %v1233 = vpop.f32.mrb[0].mxu0
        %v1234 = vadd.f32 0.0, %v1233
        %v1235 = vpop.f32.mrb[0].mxu0
        %1236 = vmatprep.mubr.f32.mxu0 0.0
        %1237 = vmatmul.mubr.f32.gmra.mrb[0].mxu0 %v1063
        %v1238 = vpop.f32.mrb[0].mxu0
        %v1239 = vadd.f32 0.0, %v1238
        %v1240 = vpop.f32.mrb[0].mxu0
        %1241 = vmatprep.mubr.f32.mxu0 0.0
        %1242 = vmatmul.mubr.f32.gmra.mrb[0].mxu0 %v1066
        %v1243 = vpop.f32.mrb[0].mxu0
        %v1244 = vadd.f32 0.0, %v1243
        %v1245 = vpop.f32.mrb[0].mxu0
        %1246 = vmatprep.mubr.f32.mxu0 0.0
        %1247 = vmatmul.mubr.f32.gmra.mrb[0].mxu0 %v1069
        %v1248 = vpop.f32.mrb[0].mxu0
        %v1249 = vadd.f32 0.0, %v1248
        %v1250 = vpop.f32.mrb[0].mxu0
        %1251 = vmatprep.mubr.f32.mxu0 0.0
        %1252 = vmatmul.mubr.f32.gmra.mrb[0].mxu0 %v1072
        %v1253 = vpop.f32.mrb[0].mxu0
        %v1254 = vadd.f32 0.0, %v1253
        %v1255 = vpop.f32.mrb[0].mxu0
        %1256 = vmatprep.mubr.f32.mxu0 0.0
        %1257 = vmatmul.mubr.f32.gmra.mrb[0].mxu0 %v1075
        %v1258 = vpop.f32.mrb[0].mxu0
        %v1259 = vadd.f32 0.0, %v1258
        %v1260 = vpop.f32.mrb[0].mxu0
        %1261 = vmatprep.mubr.f32.mxu0 0.0
        %1262 = vmatmul.mubr.f32.gmra.mrb[0].mxu0 %v1078
        %v1263 = vpop.f32.mrb[0].mxu0
        %v1264 = vadd.f32 0.0, %v1263
        %v1265 = vpop.f32.mrb[0].mxu0
        %1266 = vmatprep.mubr.f32.mxu0 0.0
        %1267 = vmatmul.mubr.f32.gmra.mrb[0].mxu0 %v1081
        %v1268 = vpop.f32.mrb[0].mxu0
        %v1269 = vadd.f32 0.0, %v1268
        %v1270 = vpop.f32.mrb[0].mxu0
        %1271 = vmatprep.mubr.f32.mxu0 0.0
        %1272 = vmatmul.mubr.f32.gmra.mrb[0].mxu0 %v1084
        %v1273 = vpop.f32.mrb[0].mxu0
        %v1274 = vadd.f32 0.0, %v1273
        %v1275 = vpop.f32.mrb[0].mxu0
        %1276 = vmatprep.mubr.f32.mxu0 0.0
        %1277 = vmatmul.mubr.f32.gmra.mrb[0].mxu0 %v1087
        %v1278 = vpop.f32.mrb[0].mxu0
        %v1279 = vadd.f32 0.0, %v1278
        %v1280 = vpop.f32.mrb[0].mxu0
        %1281 = vmatprep.mubr.f32.mxu0 0.0
        %1282 = vmatmul.mubr.f32.gmra.mrb[0].mxu0 %v1090
        %v1283 = vpop.f32.mrb[0].mxu0
        %v1284 = vadd.f32 0.0, %v1283
        %v1285 = vpop.f32.mrb[0].mxu0
        %1286 = vmatprep.mubr.f32.mxu0 0.0
        %1287 = vmatmul.mubr.f32.gmra.mrb[0].mxu0 %v1093
        %v1288 = vpop.f32.mrb[0].mxu0
        %v1289 = vadd.f32 0.0, %v1288
        %v1290 = vpop.f32.mrb[0].mxu0
        %1291 = vmatprep.mubr.f32.mxu0 0.0
        %1292 = vmatmul.mubr.f32.gmra.mrb[0].mxu0 %v1096
        %v1293 = vpop.f32.mrb[0].mxu0
        %v1294 = vadd.f32 0.0, %v1293
        %v1295 = vpop.f32.mrb[0].mxu0
        %1296 = vmatprep.mubr.f32.mxu0 0.0
        %1297 = vmatmul.mubr.f32.gmra.mrb[0].mxu0 %v1099
        %v1298 = vpop.f32.mrb[0].mxu0
        %v1299 = vadd.f32 0.0, %v1298
        %v1300 = vpop.f32.mrb[0].mxu0
        %1301 = vmatprep.mubr.f32.mxu0 0.0
        %1302 = vmatmul.mubr.f32.gmra.mrb[0].mxu0 %v1102
        %v1303 = vpop.f32.mrb[0].mxu0
        %v1304 = vadd.f32 0.0, %v1303
        %v1305 = vpop.f32.mrb[0].mxu0
        %1306 = vmatprep.mubr.f32.mxu0 0.0
        %1307 = vmatmul.mubr.f32.gmra.mrb[0].mxu0 %v1105
        %v1308 = vpop.f32.mrb[0].mxu0
        %v1309 = vadd.f32 0.0, %v1308
        %v1310 = vpop.f32.mrb[0].mxu0
        %1311 = vmatprep.mubr.f32.mxu0 0.0
        %1312 = vmatmul.mubr.f32.gmra.mrb[0].mxu0 %v1108
        %v1313 = vpop.f32.mrb[0].mxu0
        %v1314 = vadd.f32 0.0, %v1313
        %v1315 = vpop.f32.mrb[0].mxu0
        %1316 = vmatprep.mubr.f32.mxu0 0.0
        %1317 = vmatmul.mubr.f32.gmra.mrb[0].mxu0 %v1111
        %v1318 = vpop.f32.mrb[0].mxu0
        %v1319 = vadd.f32 0.0, %v1318
        %v1320 = vpop.f32.mrb[0].mxu0
        %1321 = vmatprep.mubr.f32.mxu0 0.0
        %1322 = vmatmul.mubr.f32.gmra.mrb[0].mxu0 %v1114
        %v1323 = vpop.f32.mrb[0].mxu0
        %v1324 = vadd.f32 0.0, %v1323
        %v1325 = vpop.f32.mrb[0].mxu0
        %1326 = vmatprep.mubr.f32.mxu0 0.0
        %1327 = vmatmul.mubr.f32.gmra.mrb[0].mxu0 %v1117
        %v1328 = vpop.f32.mrb[0].mxu0
        %v1329 = vadd.f32 0.0, %v1328
        %v1330 = vpop.f32.mrb[0].mxu0
        %1331 = vmatprep.mubr.f32.mxu0 0.0
        %1332 = vmatmul.mubr.f32.gmra.mrb[0].mxu0 %v1120
        %v1333 = vpop.f32.mrb[0].mxu0
        %v1334 = vadd.f32 0.0, %v1333
        %v1335 = vpop.f32.mrb[0].mxu0
        %1336 = vmatprep.mubr.f32.mxu0 0.0
        %1337 = vmatmul.mubr.f32.gmra.mrb[0].mxu0 %v1123
        %v1338 = vpop.f32.mrb[0].mxu0
        %v1339 = vadd.f32 0.0, %v1338
        %v1340 = vpop.f32.mrb[0].mxu0
        %1341 = vmatprep.mubr.f32.mxu0 0.0
        %1342 = vmatmul.mubr.f32.gmra.mrb[0].mxu0 %v1126
        %v1343 = vpop.f32.mrb[0].mxu0
        %v1344 = vadd.f32 0.0, %v1343
        %v1345 = vpop.f32.mrb[0].mxu0
        %1346 = vmatprep.mubr.f32.mxu0 0.0
        %1347 = vmatmul.mubr.f32.gmra.mrb[0].mxu0 %v1129
        %v1348 = vpop.f32.mrb[0].mxu0
        %v1349 = vadd.f32 0.0, %v1348
        %v1350 = vpop.f32.mrb[0].mxu0
        %1351 = vmatprep.mubr.f32.mxu0 0.0
        %1352 = vmatmul.mubr.f32.gmra.mrb[0].mxu0 %v1132
        %v1353 = vpop.f32.mrb[0].mxu0
        %v1354 = vadd.f32 0.0, %v1353
        %v1355 = vpop.f32.mrb[0].mxu0
        %1356 = vmatprep.mubr.f32.mxu0 0.0
        %1357 = vmatmul.mubr.f32.gmra.mrb[0].mxu0 %v1135
        %v1358 = vpop.f32.mrb[0].mxu0
        %v1359 = vadd.f32 0.0, %v1358
        %v1360 = vpop.f32.mrb[0].mxu0
        %1361 = vdwg.mxu0
        %v1363 = vsel %vm292, %v996, 0
        %v1366 = vsel %vm292, %v997, 0
        %1368 = vmatprep.subr.mxu0 0.0
        %1369 = vmatpush1.msra.mxu0 %v1032
        %1370 = vmatprep.subr.mxu0 0.0
        %1371 = vmatpush1.msra.mxu0 %v1033
        %1372 = vmatprep.subr.mxu0 0.0
        %1373 = vmatpush1.msra.mxu0 %v1034
        %1374 = vmatprep.subr.mxu0 0.0
        %1375 = vmatpush1.msra.mxu0 %v1035
        %1376 = vmatprep.subr.mxu0 0.0
        %1377 = vmatpush1.msra.mxu0 0.0
        %1378 = vmatprep.subr.mxu0 0.0
        %1379 = vmatpush1.msra.mxu0 0.0
        %1380 = vmatprep.subr.mxu0 0.0
        %1381 = vmatpush1.msra.mxu0 0.0
        %1382 = vmatprep.subr.mxu0 0.0
        %1383 = vmatpush1.msra.mxu0 0.0
        %1384 = vmatprep.subr.mxu0 0.0
        %1385 = vmatpush1.msra.mxu0 0.0
        %1386 = vmatprep.subr.mxu0 0.0
        %1387 = vmatpush1.msra.mxu0 0.0
        %1388 = vmatprep.subr.mxu0 0.0
        %1389 = vmatpush1.msra.mxu0 0.0
        %1390 = vmatprep.subr.mxu0 0.0
        %1391 = vmatpush1.msra.mxu0 0.0
        %1392 = vmatprep.subr.mxu0 0.0
        %1393 = vmatpush1.msra.mxu0 0.0
        %1394 = vmatprep.subr.mxu0 0.0
        %1395 = vmatpush1.msra.mxu0 0.0
        %1396 = vmatprep.subr.mxu0 0.0
        %1397 = vmatpush1.msra.mxu0 0.0
        %1398 = vmatprep.subr.mxu0 0.0
        %1399 = vmatpush1.msra.mxu0 0.0
        %1400 = vmatprep.subr.mxu0 0.0
        %1401 = vmatpush1.msra.mxu0 0.0
        %1402 = vmatprep.subr.mxu0 0.0
        %1403 = vmatpush1.msra.mxu0 0.0
        %1404 = vmatprep.subr.mxu0 0.0
        %1405 = vmatpush1.msra.mxu0 0.0
        %1406 = vmatprep.subr.mxu0 0.0
        %1407 = vmatpush1.msra.mxu0 0.0
        %1408 = vmatprep.subr.mxu0 0.0
        %1409 = vmatpush1.msra.mxu0 0.0
        %1410 = vmatprep.subr.mxu0 0.0
        %1411 = vmatpush1.msra.mxu0 0.0
        %1412 = vmatprep.subr.mxu0 0.0
        %1413 = vmatpush1.msra.mxu0 0.0
        %1414 = vmatprep.subr.mxu0 0.0
        %1415 = vmatpush1.msra.mxu0 0.0
        %1416 = vmatprep.subr.mxu0 0.0
        %1417 = vmatpush1.msra.mxu0 0.0
        %1418 = vmatprep.subr.mxu0 0.0
        %1419 = vmatpush1.msra.mxu0 0.0
        %1420 = vmatprep.subr.mxu0 0.0
        %1421 = vmatpush1.msra.mxu0 0.0
        %1422 = vmatprep.subr.mxu0 0.0
        %1423 = vmatpush1.msra.mxu0 0.0
        %1424 = vmatprep.subr.mxu0 0.0
        %1425 = vmatpush1.msra.mxu0 0.0
        %1426 = vmatprep.subr.mxu0 0.0
        %1427 = vmatpush1.msra.mxu0 0.0
        %1428 = vmatprep.subr.mxu0 0.0
        %1429 = vmatpush1.msra.mxu0 0.0
        %1430 = vmatprep.subr.mxu0 0.0
        %1431 = vmatpush1.msra.mxu0 0.0
        %1432 = vmatprep.mubr.f32.mxu0 0.0
        %1433 = vmatmul.mubr.f32.gmra.mrb[0].mxu0 %v1363
        %v1434 = vpop.f32.mrb[0].mxu0
        %v1435 = vadd.f32 %v1204, %v1434
        %v1436 = vpop.f32.mrb[0].mxu0
        %1437 = vmatprep.mubr.f32.mxu0 0.0
        %1438 = vmatmul.mubr.f32.gmra.mrb[0].mxu0 %v1366
        %v1439 = vpop.f32.mrb[0].mxu0
        %v1440 = vadd.f32 %v1209, %v1439
        %v1441 = vpop.f32.mrb[0].mxu0
        %1442 = vmatprep.mubr.f32.mxu0 0.0
        %1443 = vmatmul.mubr.f32.gmra.mrb[0].mxu0 %v1042
        %v1444 = vpop.f32.mrb[0].mxu0
        %v1445 = vadd.f32 %v1214, %v1444
        %v1446 = vpop.f32.mrb[0].mxu0
        %1447 = vmatprep.mubr.f32.mxu0 0.0
        %1448 = vmatmul.mubr.f32.gmra.mrb[0].mxu0 %v1045
        %v1449 = vpop.f32.mrb[0].mxu0
        %v1450 = vadd.f32 %v1219, %v1449
        %v1451 = vpop.f32.mrb[0].mxu0
        %1452 = vmatprep.mubr.f32.mxu0 0.0
        %1453 = vmatmul.mubr.f32.gmra.mrb[0].mxu0 %v1048
        %v1454 = vpop.f32.mrb[0].mxu0
        %v1455 = vadd.f32 %v1224, %v1454
        %v1456 = vpop.f32.mrb[0].mxu0
        %1457 = vmatprep.mubr.f32.mxu0 0.0
        %1458 = vmatmul.mubr.f32.gmra.mrb[0].mxu0 %v1051
        %v1459 = vpop.f32.mrb[0].mxu0
        %v1460 = vadd.f32 %v1229, %v1459
        %v1461 = vpop.f32.mrb[0].mxu0
        %1462 = vmatprep.mubr.f32.mxu0 0.0
        %1463 = vmatmul.mubr.f32.gmra.mrb[0].mxu0 %v1054
        %v1464 = vpop.f32.mrb[0].mxu0
        %v1465 = vadd.f32 %v1234, %v1464
        %v1466 = vpop.f32.mrb[0].mxu0
        %1467 = vmatprep.mubr.f32.mxu0 0.0
        %1468 = vmatmul.mubr.f32.gmra.mrb[0].mxu0 %v1057
        %v1469 = vpop.f32.mrb[0].mxu0
        %v1470 = vadd.f32 %v1239, %v1469
        %v1471 = vpop.f32.mrb[0].mxu0
        %1472 = vmatprep.mubr.f32.mxu0 0.0
        %1473 = vmatmul.mubr.f32.gmra.mrb[0].mxu0 %v1060
        %v1474 = vpop.f32.mrb[0].mxu0
        %v1475 = vadd.f32 %v1244, %v1474
        %v1476 = vpop.f32.mrb[0].mxu0
        %1477 = vmatprep.mubr.f32.mxu0 0.0
        %1478 = vmatmul.mubr.f32.gmra.mrb[0].mxu0 %v1063
        %v1479 = vpop.f32.mrb[0].mxu0
        %v1480 = vadd.f32 %v1249, %v1479
        %v1481 = vpop.f32.mrb[0].mxu0
        %1482 = vmatprep.mubr.f32.mxu0 0.0
        %1483 = vmatmul.mubr.f32.gmra.mrb[0].mxu0 %v1066
        %v1484 = vpop.f32.mrb[0].mxu0
        %v1485 = vadd.f32 %v1254, %v1484
        %v1486 = vpop.f32.mrb[0].mxu0
        %1487 = vmatprep.mubr.f32.mxu0 0.0
        %1488 = vmatmul.mubr.f32.gmra.mrb[0].mxu0 %v1069
        %v1489 = vpop.f32.mrb[0].mxu0
        %v1490 = vadd.f32 %v1259, %v1489
        %v1491 = vpop.f32.mrb[0].mxu0
        %1492 = vmatprep.mubr.f32.mxu0 0.0
        %1493 = vmatmul.mubr.f32.gmra.mrb[0].mxu0 %v1072
        %v1494 = vpop.f32.mrb[0].mxu0
        %v1495 = vadd.f32 %v1264, %v1494
        %v1496 = vpop.f32.mrb[0].mxu0
        %1497 = vmatprep.mubr.f32.mxu0 0.0
        %1498 = vmatmul.mubr.f32.gmra.mrb[0].mxu0 %v1075
        %v1499 = vpop.f32.mrb[0].mxu0
        %v1500 = vadd.f32 %v1269, %v1499
        %v1501 = vpop.f32.mrb[0].mxu0
        %1502 = vmatprep.mubr.f32.mxu0 0.0
        %1503 = vmatmul.mubr.f32.gmra.mrb[0].mxu0 %v1078
        %v1504 = vpop.f32.mrb[0].mxu0
        %v1505 = vadd.f32 %v1274, %v1504
        %v1506 = vpop.f32.mrb[0].mxu0
        %1507 = vmatprep.mubr.f32.mxu0 0.0
        %1508 = vmatmul.mubr.f32.gmra.mrb[0].mxu0 %v1081
        %v1509 = vpop.f32.mrb[0].mxu0
        %v1510 = vadd.f32 %v1279, %v1509
        %v1511 = vpop.f32.mrb[0].mxu0
        %1512 = vmatprep.mubr.f32.mxu0 0.0
        %1513 = vmatmul.mubr.f32.gmra.mrb[0].mxu0 %v1084
        %v1514 = vpop.f32.mrb[0].mxu0
        %v1515 = vadd.f32 %v1284, %v1514
        %v1516 = vpop.f32.mrb[0].mxu0
        %1517 = vmatprep.mubr.f32.mxu0 0.0
        %1518 = vmatmul.mubr.f32.gmra.mrb[0].mxu0 %v1087
        %v1519 = vpop.f32.mrb[0].mxu0
        %v1520 = vadd.f32 %v1289, %v1519
        %v1521 = vpop.f32.mrb[0].mxu0
        %1522 = vmatprep.mubr.f32.mxu0 0.0
        %1523 = vmatmul.mubr.f32.gmra.mrb[0].mxu0 %v1090
        %v1524 = vpop.f32.mrb[0].mxu0
        %v1525 = vadd.f32 %v1294, %v1524
        %v1526 = vpop.f32.mrb[0].mxu0
        %1527 = vmatprep.mubr.f32.mxu0 0.0
        %1528 = vmatmul.mubr.f32.gmra.mrb[0].mxu0 %v1093
        %v1529 = vpop.f32.mrb[0].mxu0
        %v1530 = vadd.f32 %v1299, %v1529
        %v1531 = vpop.f32.mrb[0].mxu0
        %1532 = vmatprep.mubr.f32.mxu0 0.0
        %1533 = vmatmul.mubr.f32.gmra.mrb[0].mxu0 %v1096
        %v1534 = vpop.f32.mrb[0].mxu0
        %v1535 = vadd.f32 %v1304, %v1534
        %v1536 = vpop.f32.mrb[0].mxu0
        %1537 = vmatprep.mubr.f32.mxu0 0.0
        %1538 = vmatmul.mubr.f32.gmra.mrb[0].mxu0 %v1099
        %v1539 = vpop.f32.mrb[0].mxu0
        %v1540 = vadd.f32 %v1309, %v1539
        %v1541 = vpop.f32.mrb[0].mxu0
        %1542 = vmatprep.mubr.f32.mxu0 0.0
        %1543 = vmatmul.mubr.f32.gmra.mrb[0].mxu0 %v1102
        %v1544 = vpop.f32.mrb[0].mxu0
        %v1545 = vadd.f32 %v1314, %v1544
        %v1546 = vpop.f32.mrb[0].mxu0
        %1547 = vmatprep.mubr.f32.mxu0 0.0
        %1548 = vmatmul.mubr.f32.gmra.mrb[0].mxu0 %v1105
        %v1549 = vpop.f32.mrb[0].mxu0
        %v1550 = vadd.f32 %v1319, %v1549
        %v1551 = vpop.f32.mrb[0].mxu0
        %1552 = vmatprep.mubr.f32.mxu0 0.0
        %1553 = vmatmul.mubr.f32.gmra.mrb[0].mxu0 %v1108
        %v1554 = vpop.f32.mrb[0].mxu0
        %v1555 = vadd.f32 %v1324, %v1554
        %v1556 = vpop.f32.mrb[0].mxu0
        %1557 = vmatprep.mubr.f32.mxu0 0.0
        %1558 = vmatmul.mubr.f32.gmra.mrb[0].mxu0 %v1111
        %v1559 = vpop.f32.mrb[0].mxu0
        %v1560 = vadd.f32 %v1329, %v1559
        %v1561 = vpop.f32.mrb[0].mxu0
        %1562 = vmatprep.mubr.f32.mxu0 0.0
        %1563 = vmatmul.mubr.f32.gmra.mrb[0].mxu0 %v1114
        %v1564 = vpop.f32.mrb[0].mxu0
        %v1565 = vadd.f32 %v1334, %v1564
        %v1566 = vpop.f32.mrb[0].mxu0
        %1567 = vmatprep.mubr.f32.mxu0 0.0
        %1568 = vmatmul.mubr.f32.gmra.mrb[0].mxu0 %v1117
        %v1569 = vpop.f32.mrb[0].mxu0
        %v1570 = vadd.f32 %v1339, %v1569
        %v1571 = vpop.f32.mrb[0].mxu0
        %1572 = vmatprep.mubr.f32.mxu0 0.0
        %1573 = vmatmul.mubr.f32.gmra.mrb[0].mxu0 %v1120
        %v1574 = vpop.f32.mrb[0].mxu0
        %v1575 = vadd.f32 %v1344, %v1574
        %v1576 = vpop.f32.mrb[0].mxu0
        %1577 = vmatprep.mubr.f32.mxu0 0.0
        %1578 = vmatmul.mubr.f32.gmra.mrb[0].mxu0 %v1123
        %v1579 = vpop.f32.mrb[0].mxu0
        %v1580 = vadd.f32 %v1349, %v1579
        %v1581 = vpop.f32.mrb[0].mxu0
        %1582 = vmatprep.mubr.f32.mxu0 0.0
        %1583 = vmatmul.mubr.f32.gmra.mrb[0].mxu0 %v1126
        %v1584 = vpop.f32.mrb[0].mxu0
        %v1585 = vadd.f32 %v1354, %v1584
        %v1586 = vpop.f32.mrb[0].mxu0
        %1587 = vmatprep.mubr.f32.mxu0 0.0
        %1588 = vmatmul.mubr.f32.gmra.mrb[0].mxu0 %v1129
        %v1589 = vpop.f32.mrb[0].mxu0
        %v1590 = vadd.f32 %v1359, %v1589
        %v1591 = vpop.f32.mrb[0].mxu0
        %1592 = vdwg.mxu0
        %s1593 = scalar_lea.vmem [#allocation5], 192
        %v1594 = vld [vmem:[%s1593] sm:$0xff]
        %v1595 = vld [vmem:[%s1593 + $0x8] sm:$0xff]
        %v1596 = vld [vmem:[%s1593 + $0x10] sm:$0xff]
        %v1597 = vld [vmem:[%s1593 + $0x18] sm:$0xff]
        %v1599 = vsel %vm292, %v1030, 0
        %v1602 = vsel %vm292, %v1031, 0
        %1604 = vmatprep.subr.mxu0 0.0
        %1605 = vmatpush1.msra.mxu0 %v1594
        %1606 = vmatprep.subr.mxu0 0.0
        %1607 = vmatpush1.msra.mxu0 %v1595
        %1608 = vmatprep.subr.mxu0 0.0
        %1609 = vmatpush1.msra.mxu0 %v1596
        %1610 = vmatprep.subr.mxu0 0.0
        %1611 = vmatpush1.msra.mxu0 %v1597
        %1612 = vmatprep.subr.mxu0 0.0
        %1613 = vmatpush1.msra.mxu0 0.0
        %1614 = vmatprep.subr.mxu0 0.0
        %1615 = vmatpush1.msra.mxu0 0.0
        %1616 = vmatprep.subr.mxu0 0.0
        %1617 = vmatpush1.msra.mxu0 0.0
        %1618 = vmatprep.subr.mxu0 0.0
        %1619 = vmatpush1.msra.mxu0 0.0
        %1620 = vmatprep.subr.mxu0 0.0
        %1621 = vmatpush1.msra.mxu0 0.0
        %1622 = vmatprep.subr.mxu0 0.0
        %1623 = vmatpush1.msra.mxu0 0.0
        %1624 = vmatprep.subr.mxu0 0.0
        %1625 = vmatpush1.msra.mxu0 0.0
        %1626 = vmatprep.subr.mxu0 0.0
        %1627 = vmatpush1.msra.mxu0 0.0
        %1628 = vmatprep.subr.mxu0 0.0
        %1629 = vmatpush1.msra.mxu0 0.0
        %1630 = vmatprep.subr.mxu0 0.0
        %1631 = vmatpush1.msra.mxu0 0.0
        %1632 = vmatprep.subr.mxu0 0.0
        %1633 = vmatpush1.msra.mxu0 0.0
        %1634 = vmatprep.subr.mxu0 0.0
        %1635 = vmatpush1.msra.mxu0 0.0
        %1636 = vmatprep.subr.mxu0 0.0
        %1637 = vmatpush1.msra.mxu0 0.0
        %1638 = vmatprep.subr.mxu0 0.0
        %1639 = vmatpush1.msra.mxu0 0.0
        %1640 = vmatprep.subr.mxu0 0.0
        %1641 = vmatpush1.msra.mxu0 0.0
        %1642 = vmatprep.subr.mxu0 0.0
        %1643 = vmatpush1.msra.mxu0 0.0
        %1644 = vmatprep.subr.mxu0 0.0
        %1645 = vmatpush1.msra.mxu0 0.0
        %1646 = vmatprep.subr.mxu0 0.0
        %1647 = vmatpush1.msra.mxu0 0.0
        %1648 = vmatprep.subr.mxu0 0.0
        %1649 = vmatpush1.msra.mxu0 0.0
        %1650 = vmatprep.subr.mxu0 0.0
        %1651 = vmatpush1.msra.mxu0 0.0
        %1652 = vmatprep.subr.mxu0 0.0
        %1653 = vmatpush1.msra.mxu0 0.0
        %1654 = vmatprep.subr.mxu0 0.0
        %1655 = vmatpush1.msra.mxu0 0.0
        %1656 = vmatprep.subr.mxu0 0.0
        %1657 = vmatpush1.msra.mxu0 0.0
        %1658 = vmatprep.subr.mxu0 0.0
        %1659 = vmatpush1.msra.mxu0 0.0
        %1660 = vmatprep.subr.mxu0 0.0
        %1661 = vmatpush1.msra.mxu0 0.0
        %1662 = vmatprep.subr.mxu0 0.0
        %1663 = vmatpush1.msra.mxu0 0.0
        %1664 = vmatprep.subr.mxu0 0.0
        %1665 = vmatpush1.msra.mxu0 0.0
        %1666 = vmatprep.subr.mxu0 0.0
        %1667 = vmatpush1.msra.mxu0 0.0
        %1668 = vmatprep.mubr.f32.mxu0 0.0
        %1669 = vmatmul.mubr.f32.gmra.mrb[0].mxu0 %v1048
        %v1670 = vpop.f32.mrb[0].mxu0
        %v1671 = vadd.f32 0.0, %v1670
        %v1672 = vpop.f32.mrb[0].mxu0
        %1673 = vmatprep.mubr.f32.mxu0 0.0
        %1674 = vmatmul.mubr.f32.gmra.mrb[0].mxu0 %v1051
        %v1675 = vpop.f32.mrb[0].mxu0
        %v1676 = vadd.f32 0.0, %v1675
        %v1677 = vpop.f32.mrb[0].mxu0
        %1678 = vmatprep.mubr.f32.mxu0 0.0
        %1679 = vmatmul.mubr.f32.gmra.mrb[0].mxu0 %v1054
        %v1680 = vpop.f32.mrb[0].mxu0
        %v1681 = vadd.f32 0.0, %v1680
        %v1682 = vpop.f32.mrb[0].mxu0
        %1683 = vmatprep.mubr.f32.mxu0 0.0
        %1684 = vmatmul.mubr.f32.gmra.mrb[0].mxu0 %v1057
        %v1685 = vpop.f32.mrb[0].mxu0
        %v1686 = vadd.f32 0.0, %v1685
        %v1687 = vpop.f32.mrb[0].mxu0
        %1688 = vmatprep.mubr.f32.mxu0 0.0
        %1689 = vmatmul.mubr.f32.gmra.mrb[0].mxu0 %v1060
        %v1690 = vpop.f32.mrb[0].mxu0
        %v1691 = vadd.f32 0.0, %v1690
        %v1692 = vpop.f32.mrb[0].mxu0
        %1693 = vmatprep.mubr.f32.mxu0 0.0
        %1694 = vmatmul.mubr.f32.gmra.mrb[0].mxu0 %v1063
        %v1695 = vpop.f32.mrb[0].mxu0
        %v1696 = vadd.f32 0.0, %v1695
        %v1697 = vpop.f32.mrb[0].mxu0
        %1698 = vmatprep.mubr.f32.mxu0 0.0
        %1699 = vmatmul.mubr.f32.gmra.mrb[0].mxu0 %v1066
        %v1700 = vpop.f32.mrb[0].mxu0
        %v1701 = vadd.f32 0.0, %v1700
        %v1702 = vpop.f32.mrb[0].mxu0
        %1703 = vmatprep.mubr.f32.mxu0 0.0
        %1704 = vmatmul.mubr.f32.gmra.mrb[0].mxu0 %v1069
        %v1705 = vpop.f32.mrb[0].mxu0
        %v1706 = vadd.f32 0.0, %v1705
        %v1707 = vpop.f32.mrb[0].mxu0
        %1708 = vmatprep.mubr.f32.mxu0 0.0
        %1709 = vmatmul.mubr.f32.gmra.mrb[0].mxu0 %v1072
        %v1710 = vpop.f32.mrb[0].mxu0
        %v1711 = vadd.f32 0.0, %v1710
        %v1712 = vpop.f32.mrb[0].mxu0
        %1713 = vmatprep.mubr.f32.mxu0 0.0
        %1714 = vmatmul.mubr.f32.gmra.mrb[0].mxu0 %v1075
        %v1715 = vpop.f32.mrb[0].mxu0
        %v1716 = vadd.f32 0.0, %v1715
        %v1717 = vpop.f32.mrb[0].mxu0
        %1718 = vmatprep.mubr.f32.mxu0 0.0
        %1719 = vmatmul.mubr.f32.gmra.mrb[0].mxu0 %v1078
        %v1720 = vpop.f32.mrb[0].mxu0
        %v1721 = vadd.f32 0.0, %v1720
        %v1722 = vpop.f32.mrb[0].mxu0
        %1723 = vmatprep.mubr.f32.mxu0 0.0
        %1724 = vmatmul.mubr.f32.gmra.mrb[0].mxu0 %v1081
        %v1725 = vpop.f32.mrb[0].mxu0
        %v1726 = vadd.f32 0.0, %v1725
        %v1727 = vpop.f32.mrb[0].mxu0
        %1728 = vmatprep.mubr.f32.mxu0 0.0
        %1729 = vmatmul.mubr.f32.gmra.mrb[0].mxu0 %v1084
        %v1730 = vpop.f32.mrb[0].mxu0
        %v1731 = vadd.f32 0.0, %v1730
        %v1732 = vpop.f32.mrb[0].mxu0
        %1733 = vmatprep.mubr.f32.mxu0 0.0
        %1734 = vmatmul.mubr.f32.gmra.mrb[0].mxu0 %v1087
        %v1735 = vpop.f32.mrb[0].mxu0
        %v1736 = vadd.f32 0.0, %v1735
        %v1737 = vpop.f32.mrb[0].mxu0
        %1738 = vmatprep.mubr.f32.mxu0 0.0
        %1739 = vmatmul.mubr.f32.gmra.mrb[0].mxu0 %v1090
        %v1740 = vpop.f32.mrb[0].mxu0
        %v1741 = vadd.f32 0.0, %v1740
        %v1742 = vpop.f32.mrb[0].mxu0
        %1743 = vmatprep.mubr.f32.mxu0 0.0
        %1744 = vmatmul.mubr.f32.gmra.mrb[0].mxu0 %v1093
        %v1745 = vpop.f32.mrb[0].mxu0
        %v1746 = vadd.f32 0.0, %v1745
        %v1747 = vpop.f32.mrb[0].mxu0
        %1748 = vmatprep.mubr.f32.mxu0 0.0
        %1749 = vmatmul.mubr.f32.gmra.mrb[0].mxu0 %v1096
        %v1750 = vpop.f32.mrb[0].mxu0
        %v1751 = vadd.f32 0.0, %v1750
        %v1752 = vpop.f32.mrb[0].mxu0
        %1753 = vmatprep.mubr.f32.mxu0 0.0
        %1754 = vmatmul.mubr.f32.gmra.mrb[0].mxu0 %v1099
        %v1755 = vpop.f32.mrb[0].mxu0
        %v1756 = vadd.f32 0.0, %v1755
        %v1757 = vpop.f32.mrb[0].mxu0
        %1758 = vmatprep.mubr.f32.mxu0 0.0
        %1759 = vmatmul.mubr.f32.gmra.mrb[0].mxu0 %v1102
        %v1760 = vpop.f32.mrb[0].mxu0
        %v1761 = vadd.f32 0.0, %v1760
        %v1762 = vpop.f32.mrb[0].mxu0
        %1763 = vmatprep.mubr.f32.mxu0 0.0
        %1764 = vmatmul.mubr.f32.gmra.mrb[0].mxu0 %v1105
        %v1765 = vpop.f32.mrb[0].mxu0
        %v1766 = vadd.f32 0.0, %v1765
        %v1767 = vpop.f32.mrb[0].mxu0
        %1768 = vmatprep.mubr.f32.mxu0 0.0
        %1769 = vmatmul.mubr.f32.gmra.mrb[0].mxu0 %v1108
        %v1770 = vpop.f32.mrb[0].mxu0
        %v1771 = vadd.f32 0.0, %v1770
        %v1772 = vpop.f32.mrb[0].mxu0
        %1773 = vmatprep.mubr.f32.mxu0 0.0
        %1774 = vmatmul.mubr.f32.gmra.mrb[0].mxu0 %v1111
        %v1775 = vpop.f32.mrb[0].mxu0
        %v1776 = vadd.f32 0.0, %v1775
        %v1777 = vpop.f32.mrb[0].mxu0
        %1778 = vmatprep.mubr.f32.mxu0 0.0
        %1779 = vmatmul.mubr.f32.gmra.mrb[0].mxu0 %v1114
        %v1780 = vpop.f32.mrb[0].mxu0
        %v1781 = vadd.f32 0.0, %v1780
        %v1782 = vpop.f32.mrb[0].mxu0
        %1783 = vmatprep.mubr.f32.mxu0 0.0
        %1784 = vmatmul.mubr.f32.gmra.mrb[0].mxu0 %v1117
        %v1785 = vpop.f32.mrb[0].mxu0
        %v1786 = vadd.f32 0.0, %v1785
        %v1787 = vpop.f32.mrb[0].mxu0
        %1788 = vmatprep.mubr.f32.mxu0 0.0
        %1789 = vmatmul.mubr.f32.gmra.mrb[0].mxu0 %v1120
        %v1790 = vpop.f32.mrb[0].mxu0
        %v1791 = vadd.f32 0.0, %v1790
        %v1792 = vpop.f32.mrb[0].mxu0
        %1793 = vmatprep.mubr.f32.mxu0 0.0
        %1794 = vmatmul.mubr.f32.gmra.mrb[0].mxu0 %v1123
        %v1795 = vpop.f32.mrb[0].mxu0
        %v1796 = vadd.f32 0.0, %v1795
        %v1797 = vpop.f32.mrb[0].mxu0
        %1798 = vmatprep.mubr.f32.mxu0 0.0
        %1799 = vmatmul.mubr.f32.gmra.mrb[0].mxu0 %v1126
        %v1800 = vpop.f32.mrb[0].mxu0
        %v1801 = vadd.f32 0.0, %v1800
        %v1802 = vpop.f32.mrb[0].mxu0
        %1803 = vmatprep.mubr.f32.mxu0 0.0
        %1804 = vmatmul.mubr.f32.gmra.mrb[0].mxu0 %v1129
        %v1805 = vpop.f32.mrb[0].mxu0
        %v1806 = vadd.f32 0.0, %v1805
        %v1807 = vpop.f32.mrb[0].mxu0
        %1808 = vmatprep.mubr.f32.mxu0 0.0
        %1809 = vmatmul.mubr.f32.gmra.mrb[0].mxu0 %v1132
        %v1810 = vpop.f32.mrb[0].mxu0
        %v1811 = vadd.f32 0.0, %v1810
        %v1812 = vpop.f32.mrb[0].mxu0
        %1813 = vmatprep.mubr.f32.mxu0 0.0
        %1814 = vmatmul.mubr.f32.gmra.mrb[0].mxu0 %v1135
        %v1815 = vpop.f32.mrb[0].mxu0
        %v1816 = vadd.f32 0.0, %v1815
        %v1817 = vpop.f32.mrb[0].mxu0
        %1818 = vmatprep.mubr.f32.mxu0 0.0
        %1819 = vmatmul.mubr.f32.gmra.mrb[0].mxu0 %v1599
        %v1820 = vpop.f32.mrb[0].mxu0
        %v1821 = vadd.f32 0.0, %v1820
        %v1822 = vpop.f32.mrb[0].mxu0
        %1823 = vmatprep.mubr.f32.mxu0 0.0
        %1824 = vmatmul.mubr.f32.gmra.mrb[0].mxu0 %v1602
        %v1825 = vpop.f32.mrb[0].mxu0
        %v1826 = vadd.f32 0.0, %v1825
        %v1827 = vpop.f32.mrb[0].mxu0
        %1828 = vdwg.mxu0
        %v1829 = vadd.f32 %v1435, %v1671
        %v1830 = vadd.f32 %v1440, %v1676
        %v1831 = vadd.f32 %v1445, %v1681
        %v1832 = vadd.f32 %v1450, %v1686
        %v1833 = vadd.f32 %v1455, %v1691
        %v1834 = vadd.f32 %v1460, %v1696
        %v1835 = vadd.f32 %v1465, %v1701
        %v1836 = vadd.f32 %v1470, %v1706
        %v1837 = vadd.f32 %v1475, %v1711
        %v1838 = vadd.f32 %v1480, %v1716
        %v1839 = vadd.f32 %v1485, %v1721
        %v1840 = vadd.f32 %v1490, %v1726
        %v1841 = vadd.f32 %v1495, %v1731
        %v1842 = vadd.f32 %v1500, %v1736
        %v1843 = vadd.f32 %v1505, %v1741
        %v1844 = vadd.f32 %v1510, %v1746
        %v1845 = vadd.f32 %v1515, %v1751
        %v1846 = vadd.f32 %v1520, %v1756
        %v1847 = vadd.f32 %v1525, %v1761
        %v1848 = vadd.f32 %v1530, %v1766
        %v1849 = vadd.f32 %v1535, %v1771
        %v1850 = vadd.f32 %v1540, %v1776
        %v1851 = vadd.f32 %v1545, %v1781
        %v1852 = vadd.f32 %v1550, %v1786
        %v1853 = vadd.f32 %v1555, %v1791
        %v1854 = vadd.f32 %v1560, %v1796
        %v1855 = vadd.f32 %v1565, %v1801
        %v1856 = vadd.f32 %v1570, %v1806
        %v1857 = vadd.f32 %v1575, %v1811
        %v1858 = vadd.f32 %v1580, %v1816
        %v1859 = vadd.f32 %v1585, %v1821
        %v1860 = vadd.f32 %v1590, %v1826
        %v1861 = vld [vmem:[#allocation2 + $0x1] sm:$0xff]
        %v1862 = vld [vmem:[#allocation2 + $0x9] sm:$0xff]
        %v1863 = vld [vmem:[#allocation2 + $0x19] sm:$0xff]
        %v1864 = vld [vmem:[#allocation2 + $0x21] sm:$0xff]
        %v1865 = vld [vmem:[#allocation2 + $0x31] sm:$0xff]
        %v1866 = vld [vmem:[#allocation2 + $0x39] sm:$0xff]
        %v1867 = vld [vmem:[#allocation2 + $0x49] sm:$0xff]
        %v1868 = vld [vmem:[#allocation2 + $0x51] sm:$0xff]
        %v1869 = vld [vmem:[#allocation2 + $0x61] sm:$0xff]
        %v1870 = vld [vmem:[#allocation2 + $0x69] sm:$0xff]
        %v1871 = vld [vmem:[#allocation2 + $0x79] sm:$0xff]
        %v1872 = vld [vmem:[#allocation2 + $0x81] sm:$0xff]
        %v1873 = vld [vmem:[#allocation2 + $0x91] sm:$0xff]
        %v1874 = vld [vmem:[#allocation2 + $0x99] sm:$0xff]
        %v1875 = vld [vmem:[#allocation2 + $0xa9] sm:$0xff]
        %v1876 = vld [vmem:[#allocation2 + $0xb1] sm:$0xff]
        %v1877 = vld [vmem:[#allocation2 + $0xc1] sm:$0xff]
        %v1878 = vld [vmem:[#allocation2 + $0xc9] sm:$0xff]
        %v1879 = vld [vmem:[#allocation2 + $0xd9] sm:$0xff]
        %v1880 = vld [vmem:[#allocation2 + $0xe1] sm:$0xff]
        %v1881 = vld [vmem:[#allocation2 + $0xf1] sm:$0xff]
        %v1882 = vld [vmem:[#allocation2 + $0xf9] sm:$0xff]
        %v1883 = vld [vmem:[#allocation2 + $0x109] sm:$0xff]
        %v1884 = vld [vmem:[#allocation2 + $0x111] sm:$0xff]
        %v1885 = vld [vmem:[#allocation2 + $0x121] sm:$0xff]
        %v1886 = vld [vmem:[#allocation2 + $0x129] sm:$0xff]
        %v1887 = vld [vmem:[#allocation2 + $0x139] sm:$0xff]
        %v1888 = vld [vmem:[#allocation2 + $0x141] sm:$0xff]
        %v1889 = vld [vmem:[#allocation2 + $0x151] sm:$0xff]
        %v1890 = vld [vmem:[#allocation2 + $0x159] sm:$0xff]
        %v1891 = vld [vmem:[#allocation2 + $0x169] sm:$0xff]
        %v1892 = vld [vmem:[#allocation2 + $0x171] sm:$0xff]
        %v1893 = vld [vmem:[#allocation2 + $0x181] sm:$0xff]
        %v1894 = vld [vmem:[#allocation2 + $0x189] sm:$0xff]
        %v1895 = vld [vmem:[#allocation2 + $0x199] sm:$0xff]
        %v1896 = vld [vmem:[#allocation2 + $0x1a1] sm:$0xff]
        %s1897 = scalar_lea.vmem [#allocation5], 32
        %v1898 = vld [vmem:[%s1897] sm:$0xff]
        %v1899 = vld [vmem:[%s1897 + $0x8] sm:$0xff]
        %v1900 = vld [vmem:[%s1897 + $0x10] sm:$0xff]
        %v1901 = vld [vmem:[%s1897 + $0x18] sm:$0xff]
        %v1903 = vsel %vm292, %v1861, 0
        %v1906 = vsel %vm292, %v1862, 0
        %v1909 = vsel %vm292, %v1863, 0
        %v1912 = vsel %vm292, %v1864, 0
        %v1915 = vsel %vm292, %v1865, 0
        %v1918 = vsel %vm292, %v1866, 0
        %v1921 = vsel %vm292, %v1867, 0
        %v1924 = vsel %vm292, %v1868, 0
        %v1927 = vsel %vm292, %v1869, 0
        %v1930 = vsel %vm292, %v1870, 0
        %v1933 = vsel %vm292, %v1871, 0
        %v1936 = vsel %vm292, %v1872, 0
        %v1939 = vsel %vm292, %v1873, 0
        %v1942 = vsel %vm292, %v1874, 0
        %v1945 = vsel %vm292, %v1875, 0
        %v1948 = vsel %vm292, %v1876, 0
        %v1951 = vsel %vm292, %v1877, 0
        %v1954 = vsel %vm292, %v1878, 0
        %v1957 = vsel %vm292, %v1879, 0
        %v1960 = vsel %vm292, %v1880, 0
        %v1963 = vsel %vm292, %v1881, 0
        %v1966 = vsel %vm292, %v1882, 0
        %v1969 = vsel %vm292, %v1883, 0
        %v1972 = vsel %vm292, %v1884, 0
        %v1975 = vsel %vm292, %v1885, 0
        %v1978 = vsel %vm292, %v1886, 0
        %v1981 = vsel %vm292, %v1887, 0
        %v1984 = vsel %vm292, %v1888, 0
        %v1987 = vsel %vm292, %v1889, 0
        %v1990 = vsel %vm292, %v1890, 0
        %v1993 = vsel %vm292, %v1891, 0
        %v1996 = vsel %vm292, %v1892, 0
        %1998 = vmatprep.subr.mxu0 0.0
        %1999 = vmatpush1.msra.mxu0 %v1898
        %2000 = vmatprep.subr.mxu0 0.0
        %2001 = vmatpush1.msra.mxu0 %v1899
        %2002 = vmatprep.subr.mxu0 0.0
        %2003 = vmatpush1.msra.mxu0 %v1900
        %2004 = vmatprep.subr.mxu0 0.0
        %2005 = vmatpush1.msra.mxu0 %v1901
        %2006 = vmatprep.subr.mxu0 0.0
        %2007 = vmatpush1.msra.mxu0 0.0
        %2008 = vmatprep.subr.mxu0 0.0
        %2009 = vmatpush1.msra.mxu0 0.0
        %2010 = vmatprep.subr.mxu0 0.0
        %2011 = vmatpush1.msra.mxu0 0.0
        %2012 = vmatprep.subr.mxu0 0.0
        %2013 = vmatpush1.msra.mxu0 0.0
        %2014 = vmatprep.subr.mxu0 0.0
        %2015 = vmatpush1.msra.mxu0 0.0
        %2016 = vmatprep.subr.mxu0 0.0
        %2017 = vmatpush1.msra.mxu0 0.0
        %2018 = vmatprep.subr.mxu0 0.0
        %2019 = vmatpush1.msra.mxu0 0.0
        %2020 = vmatprep.subr.mxu0 0.0
        %2021 = vmatpush1.msra.mxu0 0.0
        %2022 = vmatprep.subr.mxu0 0.0
        %2023 = vmatpush1.msra.mxu0 0.0
        %2024 = vmatprep.subr.mxu0 0.0
        %2025 = vmatpush1.msra.mxu0 0.0
        %2026 = vmatprep.subr.mxu0 0.0
        %2027 = vmatpush1.msra.mxu0 0.0
        %2028 = vmatprep.subr.mxu0 0.0
        %2029 = vmatpush1.msra.mxu0 0.0
        %2030 = vmatprep.subr.mxu0 0.0
        %2031 = vmatpush1.msra.mxu0 0.0
        %2032 = vmatprep.subr.mxu0 0.0
        %2033 = vmatpush1.msra.mxu0 0.0
        %2034 = vmatprep.subr.mxu0 0.0
        %2035 = vmatpush1.msra.mxu0 0.0
        %2036 = vmatprep.subr.mxu0 0.0
        %2037 = vmatpush1.msra.mxu0 0.0
        %2038 = vmatprep.subr.mxu0 0.0
        %2039 = vmatpush1.msra.mxu0 0.0
        %2040 = vmatprep.subr.mxu0 0.0
        %2041 = vmatpush1.msra.mxu0 0.0
        %2042 = vmatprep.subr.mxu0 0.0
        %2043 = vmatpush1.msra.mxu0 0.0
        %2044 = vmatprep.subr.mxu0 0.0
        %2045 = vmatpush1.msra.mxu0 0.0
        %2046 = vmatprep.subr.mxu0 0.0
        %2047 = vmatpush1.msra.mxu0 0.0
        %2048 = vmatprep.subr.mxu0 0.0
        %2049 = vmatpush1.msra.mxu0 0.0
        %2050 = vmatprep.subr.mxu0 0.0
        %2051 = vmatpush1.msra.mxu0 0.0
        %2052 = vmatprep.subr.mxu0 0.0
        %2053 = vmatpush1.msra.mxu0 0.0
        %2054 = vmatprep.subr.mxu0 0.0
        %2055 = vmatpush1.msra.mxu0 0.0
        %2056 = vmatprep.subr.mxu0 0.0
        %2057 = vmatpush1.msra.mxu0 0.0
        %2058 = vmatprep.subr.mxu0 0.0
        %2059 = vmatpush1.msra.mxu0 0.0
        %2060 = vmatprep.subr.mxu0 0.0
        %2061 = vmatpush1.msra.mxu0 0.0
        %2062 = vmatprep.mubr.f32.mxu0 0.0
        %2063 = vmatmul.mubr.f32.gmra.mrb[0].mxu0 %v1903
        %v2064 = vpop.f32.mrb[0].mxu0
        %v2065 = vadd.f32 0.0, %v2064
        %v2066 = vpop.f32.mrb[0].mxu0
        %2067 = vmatprep.mubr.f32.mxu0 0.0
        %2068 = vmatmul.mubr.f32.gmra.mrb[0].mxu0 %v1906
        %v2069 = vpop.f32.mrb[0].mxu0
        %v2070 = vadd.f32 0.0, %v2069
        %v2071 = vpop.f32.mrb[0].mxu0
        %2072 = vmatprep.mubr.f32.mxu0 0.0
        %2073 = vmatmul.mubr.f32.gmra.mrb[0].mxu0 %v1909
        %v2074 = vpop.f32.mrb[0].mxu0
        %v2075 = vadd.f32 0.0, %v2074
        %v2076 = vpop.f32.mrb[0].mxu0
        %2077 = vmatprep.mubr.f32.mxu0 0.0
        %2078 = vmatmul.mubr.f32.gmra.mrb[0].mxu0 %v1912
        %v2079 = vpop.f32.mrb[0].mxu0
        %v2080 = vadd.f32 0.0, %v2079
        %v2081 = vpop.f32.mrb[0].mxu0
        %2082 = vmatprep.mubr.f32.mxu0 0.0
        %2083 = vmatmul.mubr.f32.gmra.mrb[0].mxu0 %v1915
        %v2084 = vpop.f32.mrb[0].mxu0
        %v2085 = vadd.f32 0.0, %v2084
        %v2086 = vpop.f32.mrb[0].mxu0
        %2087 = vmatprep.mubr.f32.mxu0 0.0
        %2088 = vmatmul.mubr.f32.gmra.mrb[0].mxu0 %v1918
        %v2089 = vpop.f32.mrb[0].mxu0
        %v2090 = vadd.f32 0.0, %v2089
        %v2091 = vpop.f32.mrb[0].mxu0
        %2092 = vmatprep.mubr.f32.mxu0 0.0
        %2093 = vmatmul.mubr.f32.gmra.mrb[0].mxu0 %v1921
        %v2094 = vpop.f32.mrb[0].mxu0
        %v2095 = vadd.f32 0.0, %v2094
        %v2096 = vpop.f32.mrb[0].mxu0
        %2097 = vmatprep.mubr.f32.mxu0 0.0
        %2098 = vmatmul.mubr.f32.gmra.mrb[0].mxu0 %v1924
        %v2099 = vpop.f32.mrb[0].mxu0
        %v2100 = vadd.f32 0.0, %v2099
        %v2101 = vpop.f32.mrb[0].mxu0
        %2102 = vmatprep.mubr.f32.mxu0 0.0
        %2103 = vmatmul.mubr.f32.gmra.mrb[0].mxu0 %v1927
        %v2104 = vpop.f32.mrb[0].mxu0
        %v2105 = vadd.f32 0.0, %v2104
        %v2106 = vpop.f32.mrb[0].mxu0
        %2107 = vmatprep.mubr.f32.mxu0 0.0
        %2108 = vmatmul.mubr.f32.gmra.mrb[0].mxu0 %v1930
        %v2109 = vpop.f32.mrb[0].mxu0
        %v2110 = vadd.f32 0.0, %v2109
        %v2111 = vpop.f32.mrb[0].mxu0
        %2112 = vmatprep.mubr.f32.mxu0 0.0
        %2113 = vmatmul.mubr.f32.gmra.mrb[0].mxu0 %v1933
        %v2114 = vpop.f32.mrb[0].mxu0
        %v2115 = vadd.f32 0.0, %v2114
        %v2116 = vpop.f32.mrb[0].mxu0
        %2117 = vmatprep.mubr.f32.mxu0 0.0
        %2118 = vmatmul.mubr.f32.gmra.mrb[0].mxu0 %v1936
        %v2119 = vpop.f32.mrb[0].mxu0
        %v2120 = vadd.f32 0.0, %v2119
        %v2121 = vpop.f32.mrb[0].mxu0
        %2122 = vmatprep.mubr.f32.mxu0 0.0
        %2123 = vmatmul.mubr.f32.gmra.mrb[0].mxu0 %v1939
        %v2124 = vpop.f32.mrb[0].mxu0
        %v2125 = vadd.f32 0.0, %v2124
        %v2126 = vpop.f32.mrb[0].mxu0
        %2127 = vmatprep.mubr.f32.mxu0 0.0
        %2128 = vmatmul.mubr.f32.gmra.mrb[0].mxu0 %v1942
        %v2129 = vpop.f32.mrb[0].mxu0
        %v2130 = vadd.f32 0.0, %v2129
        %v2131 = vpop.f32.mrb[0].mxu0
        %2132 = vmatprep.mubr.f32.mxu0 0.0
        %2133 = vmatmul.mubr.f32.gmra.mrb[0].mxu0 %v1945
        %v2134 = vpop.f32.mrb[0].mxu0
        %v2135 = vadd.f32 0.0, %v2134
        %v2136 = vpop.f32.mrb[0].mxu0
        %2137 = vmatprep.mubr.f32.mxu0 0.0
        %2138 = vmatmul.mubr.f32.gmra.mrb[0].mxu0 %v1948
        %v2139 = vpop.f32.mrb[0].mxu0
        %v2140 = vadd.f32 0.0, %v2139
        %v2141 = vpop.f32.mrb[0].mxu0
        %2142 = vmatprep.mubr.f32.mxu0 0.0
        %2143 = vmatmul.mubr.f32.gmra.mrb[0].mxu0 %v1951
        %v2144 = vpop.f32.mrb[0].mxu0
        %v2145 = vadd.f32 0.0, %v2144
        %v2146 = vpop.f32.mrb[0].mxu0
        %2147 = vmatprep.mubr.f32.mxu0 0.0
        %2148 = vmatmul.mubr.f32.gmra.mrb[0].mxu0 %v1954
        %v2149 = vpop.f32.mrb[0].mxu0
        %v2150 = vadd.f32 0.0, %v2149
        %v2151 = vpop.f32.mrb[0].mxu0
        %2152 = vmatprep.mubr.f32.mxu0 0.0
        %2153 = vmatmul.mubr.f32.gmra.mrb[0].mxu0 %v1957
        %v2154 = vpop.f32.mrb[0].mxu0
        %v2155 = vadd.f32 0.0, %v2154
        %v2156 = vpop.f32.mrb[0].mxu0
        %2157 = vmatprep.mubr.f32.mxu0 0.0
        %2158 = vmatmul.mubr.f32.gmra.mrb[0].mxu0 %v1960
        %v2159 = vpop.f32.mrb[0].mxu0
        %v2160 = vadd.f32 0.0, %v2159
        %v2161 = vpop.f32.mrb[0].mxu0
        %2162 = vmatprep.mubr.f32.mxu0 0.0
        %2163 = vmatmul.mubr.f32.gmra.mrb[0].mxu0 %v1963
        %v2164 = vpop.f32.mrb[0].mxu0
        %v2165 = vadd.f32 0.0, %v2164
        %v2166 = vpop.f32.mrb[0].mxu0
        %2167 = vmatprep.mubr.f32.mxu0 0.0
        %2168 = vmatmul.mubr.f32.gmra.mrb[0].mxu0 %v1966
        %v2169 = vpop.f32.mrb[0].mxu0
        %v2170 = vadd.f32 0.0, %v2169
        %v2171 = vpop.f32.mrb[0].mxu0
        %2172 = vmatprep.mubr.f32.mxu0 0.0
        %2173 = vmatmul.mubr.f32.gmra.mrb[0].mxu0 %v1969
        %v2174 = vpop.f32.mrb[0].mxu0
        %v2175 = vadd.f32 0.0, %v2174
        %v2176 = vpop.f32.mrb[0].mxu0
        %2177 = vmatprep.mubr.f32.mxu0 0.0
        %2178 = vmatmul.mubr.f32.gmra.mrb[0].mxu0 %v1972
        %v2179 = vpop.f32.mrb[0].mxu0
        %v2180 = vadd.f32 0.0, %v2179
        %v2181 = vpop.f32.mrb[0].mxu0
        %2182 = vmatprep.mubr.f32.mxu0 0.0
        %2183 = vmatmul.mubr.f32.gmra.mrb[0].mxu0 %v1975
        %v2184 = vpop.f32.mrb[0].mxu0
        %v2185 = vadd.f32 0.0, %v2184
        %v2186 = vpop.f32.mrb[0].mxu0
        %2187 = vmatprep.mubr.f32.mxu0 0.0
        %2188 = vmatmul.mubr.f32.gmra.mrb[0].mxu0 %v1978
        %v2189 = vpop.f32.mrb[0].mxu0
        %v2190 = vadd.f32 0.0, %v2189
        %v2191 = vpop.f32.mrb[0].mxu0
        %2192 = vmatprep.mubr.f32.mxu0 0.0
        %2193 = vmatmul.mubr.f32.gmra.mrb[0].mxu0 %v1981
        %v2194 = vpop.f32.mrb[0].mxu0
        %v2195 = vadd.f32 0.0, %v2194
        %v2196 = vpop.f32.mrb[0].mxu0
        %2197 = vmatprep.mubr.f32.mxu0 0.0
        %2198 = vmatmul.mubr.f32.gmra.mrb[0].mxu0 %v1984
        %v2199 = vpop.f32.mrb[0].mxu0
        %v2200 = vadd.f32 0.0, %v2199
        %v2201 = vpop.f32.mrb[0].mxu0
        %2202 = vmatprep.mubr.f32.mxu0 0.0
        %2203 = vmatmul.mubr.f32.gmra.mrb[0].mxu0 %v1987
        %v2204 = vpop.f32.mrb[0].mxu0
        %v2205 = vadd.f32 0.0, %v2204
        %v2206 = vpop.f32.mrb[0].mxu0
        %2207 = vmatprep.mubr.f32.mxu0 0.0
        %2208 = vmatmul.mubr.f32.gmra.mrb[0].mxu0 %v1990
        %v2209 = vpop.f32.mrb[0].mxu0
        %v2210 = vadd.f32 0.0, %v2209
        %v2211 = vpop.f32.mrb[0].mxu0
        %2212 = vmatprep.mubr.f32.mxu0 0.0
        %2213 = vmatmul.mubr.f32.gmra.mrb[0].mxu0 %v1993
        %v2214 = vpop.f32.mrb[0].mxu0
        %v2215 = vadd.f32 0.0, %v2214
        %v2216 = vpop.f32.mrb[0].mxu0
        %2217 = vmatprep.mubr.f32.mxu0 0.0
        %2218 = vmatmul.mubr.f32.gmra.mrb[0].mxu0 %v1996
        %v2219 = vpop.f32.mrb[0].mxu0
        %v2220 = vadd.f32 0.0, %v2219
        %v2221 = vpop.f32.mrb[0].mxu0
        %2222 = vdwg.mxu0
        %v2223 = vadd.f32 %v1829, %v2065
        %v2224 = vadd.f32 %v1830, %v2070
        %v2225 = vadd.f32 %v1831, %v2075
        %v2226 = vadd.f32 %v1832, %v2080
        %v2227 = vadd.f32 %v1833, %v2085
        %v2228 = vadd.f32 %v1834, %v2090
        %v2229 = vadd.f32 %v1835, %v2095
        %v2230 = vadd.f32 %v1836, %v2100
        %v2231 = vadd.f32 %v1837, %v2105
        %v2232 = vadd.f32 %v1838, %v2110
        %v2233 = vadd.f32 %v1839, %v2115
        %v2234 = vadd.f32 %v1840, %v2120
        %v2235 = vadd.f32 %v1841, %v2125
        %v2236 = vadd.f32 %v1842, %v2130
        %v2237 = vadd.f32 %v1843, %v2135
        %v2238 = vadd.f32 %v1844, %v2140
        %v2239 = vadd.f32 %v1845, %v2145
        %v2240 = vadd.f32 %v1846, %v2150
        %v2241 = vadd.f32 %v1847, %v2155
        %v2242 = vadd.f32 %v1848, %v2160
        %v2243 = vadd.f32 %v1849, %v2165
        %v2244 = vadd.f32 %v1850, %v2170
        %v2245 = vadd.f32 %v1851, %v2175
        %v2246 = vadd.f32 %v1852, %v2180
        %v2247 = vadd.f32 %v1853, %v2185
        %v2248 = vadd.f32 %v1854, %v2190
        %v2249 = vadd.f32 %v1855, %v2195
        %v2250 = vadd.f32 %v1856, %v2200
        %v2251 = vadd.f32 %v1857, %v2205
        %v2252 = vadd.f32 %v1858, %v2210
        %v2253 = vadd.f32 %v1859, %v2215
        %v2254 = vadd.f32 %v1860, %v2220
        %s2255 = scalar_lea.vmem [#allocation5], 128
        %v2256 = vld [vmem:[%s2255] sm:$0xff]
        %v2257 = vld [vmem:[%s2255 + $0x8] sm:$0xff]
        %v2258 = vld [vmem:[%s2255 + $0x10] sm:$0xff]
        %v2259 = vld [vmem:[%s2255 + $0x18] sm:$0xff]
        %v2261 = vsel %vm292, %v1893, 0
        %v2264 = vsel %vm292, %v1894, 0
        %2266 = vmatprep.subr.mxu0 0.0
        %2267 = vmatpush1.msra.mxu0 %v2256
        %2268 = vmatprep.subr.mxu0 0.0
        %2269 = vmatpush1.msra.mxu0 %v2257
        %2270 = vmatprep.subr.mxu0 0.0
        %2271 = vmatpush1.msra.mxu0 %v2258
        %2272 = vmatprep.subr.mxu0 0.0
        %2273 = vmatpush1.msra.mxu0 %v2259
        %2274 = vmatprep.subr.mxu0 0.0
        %2275 = vmatpush1.msra.mxu0 0.0
        %2276 = vmatprep.subr.mxu0 0.0
        %2277 = vmatpush1.msra.mxu0 0.0
        %2278 = vmatprep.subr.mxu0 0.0
        %2279 = vmatpush1.msra.mxu0 0.0
        %2280 = vmatprep.subr.mxu0 0.0
        %2281 = vmatpush1.msra.mxu0 0.0
        %2282 = vmatprep.subr.mxu0 0.0
        %2283 = vmatpush1.msra.mxu0 0.0
        %2284 = vmatprep.subr.mxu0 0.0
        %2285 = vmatpush1.msra.mxu0 0.0
        %2286 = vmatprep.subr.mxu0 0.0
        %2287 = vmatpush1.msra.mxu0 0.0
        %2288 = vmatprep.subr.mxu0 0.0
        %2289 = vmatpush1.msra.mxu0 0.0
        %2290 = vmatprep.subr.mxu0 0.0
        %2291 = vmatpush1.msra.mxu0 0.0
        %2292 = vmatprep.subr.mxu0 0.0
        %2293 = vmatpush1.msra.mxu0 0.0
        %2294 = vmatprep.subr.mxu0 0.0
        %2295 = vmatpush1.msra.mxu0 0.0
        %2296 = vmatprep.subr.mxu0 0.0
        %2297 = vmatpush1.msra.mxu0 0.0
        %2298 = vmatprep.subr.mxu0 0.0
        %2299 = vmatpush1.msra.mxu0 0.0
        %2300 = vmatprep.subr.mxu0 0.0
        %2301 = vmatpush1.msra.mxu0 0.0
        %2302 = vmatprep.subr.mxu0 0.0
        %2303 = vmatpush1.msra.mxu0 0.0
        %2304 = vmatprep.subr.mxu0 0.0
        %2305 = vmatpush1.msra.mxu0 0.0
        %2306 = vmatprep.subr.mxu0 0.0
        %2307 = vmatpush1.msra.mxu0 0.0
        %2308 = vmatprep.subr.mxu0 0.0
        %2309 = vmatpush1.msra.mxu0 0.0
        %2310 = vmatprep.subr.mxu0 0.0
        %2311 = vmatpush1.msra.mxu0 0.0
        %2312 = vmatprep.subr.mxu0 0.0
        %2313 = vmatpush1.msra.mxu0 0.0
        %2314 = vmatprep.subr.mxu0 0.0
        %2315 = vmatpush1.msra.mxu0 0.0
        %2316 = vmatprep.subr.mxu0 0.0
        %2317 = vmatpush1.msra.mxu0 0.0
        %2318 = vmatprep.subr.mxu0 0.0
        %2319 = vmatpush1.msra.mxu0 0.0
        %2320 = vmatprep.subr.mxu0 0.0
        %2321 = vmatpush1.msra.mxu0 0.0
        %2322 = vmatprep.subr.mxu0 0.0
        %2323 = vmatpush1.msra.mxu0 0.0
        %2324 = vmatprep.subr.mxu0 0.0
        %2325 = vmatpush1.msra.mxu0 0.0
        %2326 = vmatprep.subr.mxu0 0.0
        %2327 = vmatpush1.msra.mxu0 0.0
        %2328 = vmatprep.subr.mxu0 0.0
        %2329 = vmatpush1.msra.mxu0 0.0
        %2330 = vmatprep.mubr.f32.mxu0 0.0
        %2331 = vmatmul.mubr.f32.gmra.mrb[0].mxu0 %v1909
        %v2332 = vpop.f32.mrb[0].mxu0
        %v2333 = vadd.f32 0.0, %v2332
        %v2334 = vpop.f32.mrb[0].mxu0
        %2335 = vmatprep.mubr.f32.mxu0 0.0
        %2336 = vmatmul.mubr.f32.gmra.mrb[0].mxu0 %v1912
        %v2337 = vpop.f32.mrb[0].mxu0
        %v2338 = vadd.f32 0.0, %v2337
        %v2339 = vpop.f32.mrb[0].mxu0
        %2340 = vmatprep.mubr.f32.mxu0 0.0
        %2341 = vmatmul.mubr.f32.gmra.mrb[0].mxu0 %v1915
        %v2342 = vpop.f32.mrb[0].mxu0
        %v2343 = vadd.f32 0.0, %v2342
        %v2344 = vpop.f32.mrb[0].mxu0
        %2345 = vmatprep.mubr.f32.mxu0 0.0
        %2346 = vmatmul.mubr.f32.gmra.mrb[0].mxu0 %v1918
        %v2347 = vpop.f32.mrb[0].mxu0
        %v2348 = vadd.f32 0.0, %v2347
        %v2349 = vpop.f32.mrb[0].mxu0
        %2350 = vmatprep.mubr.f32.mxu0 0.0
        %2351 = vmatmul.mubr.f32.gmra.mrb[0].mxu0 %v1921
        %v2352 = vpop.f32.mrb[0].mxu0
        %v2353 = vadd.f32 0.0, %v2352
        %v2354 = vpop.f32.mrb[0].mxu0
        %2355 = vmatprep.mubr.f32.mxu0 0.0
        %2356 = vmatmul.mubr.f32.gmra.mrb[0].mxu0 %v1924
        %v2357 = vpop.f32.mrb[0].mxu0
        %v2358 = vadd.f32 0.0, %v2357
        %v2359 = vpop.f32.mrb[0].mxu0
        %2360 = vmatprep.mubr.f32.mxu0 0.0
        %2361 = vmatmul.mubr.f32.gmra.mrb[0].mxu0 %v1927
        %v2362 = vpop.f32.mrb[0].mxu0
        %v2363 = vadd.f32 0.0, %v2362
        %v2364 = vpop.f32.mrb[0].mxu0
        %2365 = vmatprep.mubr.f32.mxu0 0.0
        %2366 = vmatmul.mubr.f32.gmra.mrb[0].mxu0 %v1930
        %v2367 = vpop.f32.mrb[0].mxu0
        %v2368 = vadd.f32 0.0, %v2367
        %v2369 = vpop.f32.mrb[0].mxu0
        %2370 = vmatprep.mubr.f32.mxu0 0.0
        %2371 = vmatmul.mubr.f32.gmra.mrb[0].mxu0 %v1933
        %v2372 = vpop.f32.mrb[0].mxu0
        %v2373 = vadd.f32 0.0, %v2372
        %v2374 = vpop.f32.mrb[0].mxu0
        %2375 = vmatprep.mubr.f32.mxu0 0.0
        %2376 = vmatmul.mubr.f32.gmra.mrb[0].mxu0 %v1936
        %v2377 = vpop.f32.mrb[0].mxu0
        %v2378 = vadd.f32 0.0, %v2377
        %v2379 = vpop.f32.mrb[0].mxu0
        %2380 = vmatprep.mubr.f32.mxu0 0.0
        %2381 = vmatmul.mubr.f32.gmra.mrb[0].mxu0 %v1939
        %v2382 = vpop.f32.mrb[0].mxu0
        %v2383 = vadd.f32 0.0, %v2382
        %v2384 = vpop.f32.mrb[0].mxu0
        %2385 = vmatprep.mubr.f32.mxu0 0.0
        %2386 = vmatmul.mubr.f32.gmra.mrb[0].mxu0 %v1942
        %v2387 = vpop.f32.mrb[0].mxu0
        %v2388 = vadd.f32 0.0, %v2387
        %v2389 = vpop.f32.mrb[0].mxu0
        %2390 = vmatprep.mubr.f32.mxu0 0.0
        %2391 = vmatmul.mubr.f32.gmra.mrb[0].mxu0 %v1945
        %v2392 = vpop.f32.mrb[0].mxu0
        %v2393 = vadd.f32 0.0, %v2392
        %v2394 = vpop.f32.mrb[0].mxu0
        %2395 = vmatprep.mubr.f32.mxu0 0.0
        %2396 = vmatmul.mubr.f32.gmra.mrb[0].mxu0 %v1948
        %v2397 = vpop.f32.mrb[0].mxu0
        %v2398 = vadd.f32 0.0, %v2397
        %v2399 = vpop.f32.mrb[0].mxu0
        %2400 = vmatprep.mubr.f32.mxu0 0.0
        %2401 = vmatmul.mubr.f32.gmra.mrb[0].mxu0 %v1951
        %v2402 = vpop.f32.mrb[0].mxu0
        %v2403 = vadd.f32 0.0, %v2402
        %v2404 = vpop.f32.mrb[0].mxu0
        %2405 = vmatprep.mubr.f32.mxu0 0.0
        %2406 = vmatmul.mubr.f32.gmra.mrb[0].mxu0 %v1954
        %v2407 = vpop.f32.mrb[0].mxu0
        %v2408 = vadd.f32 0.0, %v2407
        %v2409 = vpop.f32.mrb[0].mxu0
        %2410 = vmatprep.mubr.f32.mxu0 0.0
        %2411 = vmatmul.mubr.f32.gmra.mrb[0].mxu0 %v1957
        %v2412 = vpop.f32.mrb[0].mxu0
        %v2413 = vadd.f32 0.0, %v2412
        %v2414 = vpop.f32.mrb[0].mxu0
        %2415 = vmatprep.mubr.f32.mxu0 0.0
        %2416 = vmatmul.mubr.f32.gmra.mrb[0].mxu0 %v1960
        %v2417 = vpop.f32.mrb[0].mxu0
        %v2418 = vadd.f32 0.0, %v2417
        %v2419 = vpop.f32.mrb[0].mxu0
        %2420 = vmatprep.mubr.f32.mxu0 0.0
        %2421 = vmatmul.mubr.f32.gmra.mrb[0].mxu0 %v1963
        %v2422 = vpop.f32.mrb[0].mxu0
        %v2423 = vadd.f32 0.0, %v2422
        %v2424 = vpop.f32.mrb[0].mxu0
        %2425 = vmatprep.mubr.f32.mxu0 0.0
        %2426 = vmatmul.mubr.f32.gmra.mrb[0].mxu0 %v1966
        %v2427 = vpop.f32.mrb[0].mxu0
        %v2428 = vadd.f32 0.0, %v2427
        %v2429 = vpop.f32.mrb[0].mxu0
        %2430 = vmatprep.mubr.f32.mxu0 0.0
        %2431 = vmatmul.mubr.f32.gmra.mrb[0].mxu0 %v1969
        %v2432 = vpop.f32.mrb[0].mxu0
        %v2433 = vadd.f32 0.0, %v2432
        %v2434 = vpop.f32.mrb[0].mxu0
        %2435 = vmatprep.mubr.f32.mxu0 0.0
        %2436 = vmatmul.mubr.f32.gmra.mrb[0].mxu0 %v1972
        %v2437 = vpop.f32.mrb[0].mxu0
        %v2438 = vadd.f32 0.0, %v2437
        %v2439 = vpop.f32.mrb[0].mxu0
        %2440 = vmatprep.mubr.f32.mxu0 0.0
        %2441 = vmatmul.mubr.f32.gmra.mrb[0].mxu0 %v1975
        %v2442 = vpop.f32.mrb[0].mxu0
        %v2443 = vadd.f32 0.0, %v2442
        %v2444 = vpop.f32.mrb[0].mxu0
        %2445 = vmatprep.mubr.f32.mxu0 0.0
        %2446 = vmatmul.mubr.f32.gmra.mrb[0].mxu0 %v1978
        %v2447 = vpop.f32.mrb[0].mxu0
        %v2448 = vadd.f32 0.0, %v2447
        %v2449 = vpop.f32.mrb[0].mxu0
        %2450 = vmatprep.mubr.f32.mxu0 0.0
        %2451 = vmatmul.mubr.f32.gmra.mrb[0].mxu0 %v1981
        %v2452 = vpop.f32.mrb[0].mxu0
        %v2453 = vadd.f32 0.0, %v2452
        %v2454 = vpop.f32.mrb[0].mxu0
        %2455 = vmatprep.mubr.f32.mxu0 0.0
        %2456 = vmatmul.mubr.f32.gmra.mrb[0].mxu0 %v1984
        %v2457 = vpop.f32.mrb[0].mxu0
        %v2458 = vadd.f32 0.0, %v2457
        %v2459 = vpop.f32.mrb[0].mxu0
        %2460 = vmatprep.mubr.f32.mxu0 0.0
        %2461 = vmatmul.mubr.f32.gmra.mrb[0].mxu0 %v1987
        %v2462 = vpop.f32.mrb[0].mxu0
        %v2463 = vadd.f32 0.0, %v2462
        %v2464 = vpop.f32.mrb[0].mxu0
        %2465 = vmatprep.mubr.f32.mxu0 0.0
        %2466 = vmatmul.mubr.f32.gmra.mrb[0].mxu0 %v1990
        %v2467 = vpop.f32.mrb[0].mxu0
        %v2468 = vadd.f32 0.0, %v2467
        %v2469 = vpop.f32.mrb[0].mxu0
        %2470 = vmatprep.mubr.f32.mxu0 0.0
        %2471 = vmatmul.mubr.f32.gmra.mrb[0].mxu0 %v1993
        %v2472 = vpop.f32.mrb[0].mxu0
        %v2473 = vadd.f32 0.0, %v2472
        %v2474 = vpop.f32.mrb[0].mxu0
        %2475 = vmatprep.mubr.f32.mxu0 0.0
        %2476 = vmatmul.mubr.f32.gmra.mrb[0].mxu0 %v1996
        %v2477 = vpop.f32.mrb[0].mxu0
        %v2478 = vadd.f32 0.0, %v2477
        %v2479 = vpop.f32.mrb[0].mxu0
        %2480 = vmatprep.mubr.f32.mxu0 0.0
        %2481 = vmatmul.mubr.f32.gmra.mrb[0].mxu0 %v2261
        %v2482 = vpop.f32.mrb[0].mxu0
        %v2483 = vadd.f32 0.0, %v2482
        %v2484 = vpop.f32.mrb[0].mxu0
        %2485 = vmatprep.mubr.f32.mxu0 0.0
        %2486 = vmatmul.mubr.f32.gmra.mrb[0].mxu0 %v2264
        %v2487 = vpop.f32.mrb[0].mxu0
        %v2488 = vadd.f32 0.0, %v2487
        %v2489 = vpop.f32.mrb[0].mxu0
        %2490 = vdwg.mxu0
        %v2491 = vadd.f32 %v2223, %v2333
        %v2492 = vadd.f32 %v2224, %v2338
        %v2493 = vadd.f32 %v2225, %v2343
        %v2494 = vadd.f32 %v2226, %v2348
        %v2495 = vadd.f32 %v2227, %v2353
        %v2496 = vadd.f32 %v2228, %v2358
        %v2497 = vadd.f32 %v2229, %v2363
        %v2498 = vadd.f32 %v2230, %v2368
        %v2499 = vadd.f32 %v2231, %v2373
        %v2500 = vadd.f32 %v2232, %v2378
        %v2501 = vadd.f32 %v2233, %v2383
        %v2502 = vadd.f32 %v2234, %v2388
        %v2503 = vadd.f32 %v2235, %v2393
        %v2504 = vadd.f32 %v2236, %v2398
        %v2505 = vadd.f32 %v2237, %v2403
        %v2506 = vadd.f32 %v2238, %v2408
        %v2507 = vadd.f32 %v2239, %v2413
        %v2508 = vadd.f32 %v2240, %v2418
        %v2509 = vadd.f32 %v2241, %v2423
        %v2510 = vadd.f32 %v2242, %v2428
        %v2511 = vadd.f32 %v2243, %v2433
        %v2512 = vadd.f32 %v2244, %v2438
        %v2513 = vadd.f32 %v2245, %v2443
        %v2514 = vadd.f32 %v2246, %v2448
        %v2515 = vadd.f32 %v2247, %v2453
        %v2516 = vadd.f32 %v2248, %v2458
        %v2517 = vadd.f32 %v2249, %v2463
        %v2518 = vadd.f32 %v2250, %v2468
        %v2519 = vadd.f32 %v2251, %v2473
        %v2520 = vadd.f32 %v2252, %v2478
        %v2521 = vadd.f32 %v2253, %v2483
        %v2522 = vadd.f32 %v2254, %v2488
        %s2523 = scalar_lea.vmem [#allocation5], 224
        %v2524 = vld [vmem:[%s2523] sm:$0xff]
        %v2525 = vld [vmem:[%s2523 + $0x8] sm:$0xff]
        %v2526 = vld [vmem:[%s2523 + $0x10] sm:$0xff]
        %v2527 = vld [vmem:[%s2523 + $0x18] sm:$0xff]
        %v2529 = vsel %vm292, %v1895, 0
        %v2532 = vsel %vm292, %v1896, 0
        %2534 = vmatprep.subr.mxu0 0.0
        %2535 = vmatpush1.msra.mxu0 %v2524
        %2536 = vmatprep.subr.mxu0 0.0
        %2537 = vmatpush1.msra.mxu0 %v2525
        %2538 = vmatprep.subr.mxu0 0.0
        %2539 = vmatpush1.msra.mxu0 %v2526
        %2540 = vmatprep.subr.mxu0 0.0
        %2541 = vmatpush1.msra.mxu0 %v2527
        %2542 = vmatprep.subr.mxu0 0.0
        %2543 = vmatpush1.msra.mxu0 0.0
        %2544 = vmatprep.subr.mxu0 0.0
        %2545 = vmatpush1.msra.mxu0 0.0
        %2546 = vmatprep.subr.mxu0 0.0
        %2547 = vmatpush1.msra.mxu0 0.0
        %2548 = vmatprep.subr.mxu0 0.0
        %2549 = vmatpush1.msra.mxu0 0.0
        %2550 = vmatprep.subr.mxu0 0.0
        %2551 = vmatpush1.msra.mxu0 0.0
        %2552 = vmatprep.subr.mxu0 0.0
        %2553 = vmatpush1.msra.mxu0 0.0
        %2554 = vmatprep.subr.mxu0 0.0
        %2555 = vmatpush1.msra.mxu0 0.0
        %2556 = vmatprep.subr.mxu0 0.0
        %2557 = vmatpush1.msra.mxu0 0.0
        %2558 = vmatprep.subr.mxu0 0.0
        %2559 = vmatpush1.msra.mxu0 0.0
        %2560 = vmatprep.subr.mxu0 0.0
        %2561 = vmatpush1.msra.mxu0 0.0
        %2562 = vmatprep.subr.mxu0 0.0
        %2563 = vmatpush1.msra.mxu0 0.0
        %2564 = vmatprep.subr.mxu0 0.0
        %2565 = vmatpush1.msra.mxu0 0.0
        %2566 = vmatprep.subr.mxu0 0.0
        %2567 = vmatpush1.msra.mxu0 0.0
        %2568 = vmatprep.subr.mxu0 0.0
        %2569 = vmatpush1.msra.mxu0 0.0
        %2570 = vmatprep.subr.mxu0 0.0
        %2571 = vmatpush1.msra.mxu0 0.0
        %2572 = vmatprep.subr.mxu0 0.0
        %2573 = vmatpush1.msra.mxu0 0.0
        %2574 = vmatprep.subr.mxu0 0.0
        %2575 = vmatpush1.msra.mxu0 0.0
        %2576 = vmatprep.subr.mxu0 0.0
        %2577 = vmatpush1.msra.mxu0 0.0
        %2578 = vmatprep.subr.mxu0 0.0
        %2579 = vmatpush1.msra.mxu0 0.0
        %2580 = vmatprep.subr.mxu0 0.0
        %2581 = vmatpush1.msra.mxu0 0.0
        %2582 = vmatprep.subr.mxu0 0.0
        %2583 = vmatpush1.msra.mxu0 0.0
        %2584 = vmatprep.subr.mxu0 0.0
        %2585 = vmatpush1.msra.mxu0 0.0
        %2586 = vmatprep.subr.mxu0 0.0
        %2587 = vmatpush1.msra.mxu0 0.0
        %2588 = vmatprep.subr.mxu0 0.0
        %2589 = vmatpush1.msra.mxu0 0.0
        %2590 = vmatprep.subr.mxu0 0.0
        %2591 = vmatpush1.msra.mxu0 0.0
        %2592 = vmatprep.subr.mxu0 0.0
        %2593 = vmatpush1.msra.mxu0 0.0
        %2594 = vmatprep.subr.mxu0 0.0
        %2595 = vmatpush1.msra.mxu0 0.0
        %2596 = vmatprep.subr.mxu0 0.0
        %2597 = vmatpush1.msra.mxu0 0.0
        %2598 = vmatprep.mubr.f32.mxu0 0.0
        %2599 = vmatmul.mubr.f32.gmra.mrb[0].mxu0 %v1915
        %v2600 = vpop.f32.mrb[0].mxu0
        %v2601 = vadd.f32 0.0, %v2600
        %v2602 = vpop.f32.mrb[0].mxu0
        %2603 = vmatprep.mubr.f32.mxu0 0.0
        %2604 = vmatmul.mubr.f32.gmra.mrb[0].mxu0 %v1918
        %v2605 = vpop.f32.mrb[0].mxu0
        %v2606 = vadd.f32 0.0, %v2605
        %v2607 = vpop.f32.mrb[0].mxu0
        %2608 = vmatprep.mubr.f32.mxu0 0.0
        %2609 = vmatmul.mubr.f32.gmra.mrb[0].mxu0 %v1921
        %v2610 = vpop.f32.mrb[0].mxu0
        %v2611 = vadd.f32 0.0, %v2610
        %v2612 = vpop.f32.mrb[0].mxu0
        %2613 = vmatprep.mubr.f32.mxu0 0.0
        %2614 = vmatmul.mubr.f32.gmra.mrb[0].mxu0 %v1924
        %v2615 = vpop.f32.mrb[0].mxu0
        %v2616 = vadd.f32 0.0, %v2615
        %v2617 = vpop.f32.mrb[0].mxu0
        %2618 = vmatprep.mubr.f32.mxu0 0.0
        %2619 = vmatmul.mubr.f32.gmra.mrb[0].mxu0 %v1927
        %v2620 = vpop.f32.mrb[0].mxu0
        %v2621 = vadd.f32 0.0, %v2620
        %v2622 = vpop.f32.mrb[0].mxu0
        %2623 = vmatprep.mubr.f32.mxu0 0.0
        %2624 = vmatmul.mubr.f32.gmra.mrb[0].mxu0 %v1930
        %v2625 = vpop.f32.mrb[0].mxu0
        %v2626 = vadd.f32 0.0, %v2625
        %v2627 = vpop.f32.mrb[0].mxu0
        %2628 = vmatprep.mubr.f32.mxu0 0.0
        %2629 = vmatmul.mubr.f32.gmra.mrb[0].mxu0 %v1933
        %v2630 = vpop.f32.mrb[0].mxu0
        %v2631 = vadd.f32 0.0, %v2630
        %v2632 = vpop.f32.mrb[0].mxu0
        %2633 = vmatprep.mubr.f32.mxu0 0.0
        %2634 = vmatmul.mubr.f32.gmra.mrb[0].mxu0 %v1936
        %v2635 = vpop.f32.mrb[0].mxu0
        %v2636 = vadd.f32 0.0, %v2635
        %v2637 = vpop.f32.mrb[0].mxu0
        %2638 = vmatprep.mubr.f32.mxu0 0.0
        %2639 = vmatmul.mubr.f32.gmra.mrb[0].mxu0 %v1939
        %v2640 = vpop.f32.mrb[0].mxu0
        %v2641 = vadd.f32 0.0, %v2640
        %v2642 = vpop.f32.mrb[0].mxu0
        %2643 = vmatprep.mubr.f32.mxu0 0.0
        %2644 = vmatmul.mubr.f32.gmra.mrb[0].mxu0 %v1942
        %v2645 = vpop.f32.mrb[0].mxu0
        %v2646 = vadd.f32 0.0, %v2645
        %v2647 = vpop.f32.mrb[0].mxu0
        %2648 = vmatprep.mubr.f32.mxu0 0.0
        %2649 = vmatmul.mubr.f32.gmra.mrb[0].mxu0 %v1945
        %v2650 = vpop.f32.mrb[0].mxu0
        %v2651 = vadd.f32 0.0, %v2650
        %v2652 = vpop.f32.mrb[0].mxu0
        %2653 = vmatprep.mubr.f32.mxu0 0.0
        %2654 = vmatmul.mubr.f32.gmra.mrb[0].mxu0 %v1948
        %v2655 = vpop.f32.mrb[0].mxu0
        %v2656 = vadd.f32 0.0, %v2655
        %v2657 = vpop.f32.mrb[0].mxu0
        %2658 = vmatprep.mubr.f32.mxu0 0.0
        %2659 = vmatmul.mubr.f32.gmra.mrb[0].mxu0 %v1951
        %v2660 = vpop.f32.mrb[0].mxu0
        %v2661 = vadd.f32 0.0, %v2660
        %v2662 = vpop.f32.mrb[0].mxu0
        %2663 = vmatprep.mubr.f32.mxu0 0.0
        %2664 = vmatmul.mubr.f32.gmra.mrb[0].mxu0 %v1954
        %v2665 = vpop.f32.mrb[0].mxu0
        %v2666 = vadd.f32 0.0, %v2665
        %v2667 = vpop.f32.mrb[0].mxu0
        %2668 = vmatprep.mubr.f32.mxu0 0.0
        %2669 = vmatmul.mubr.f32.gmra.mrb[0].mxu0 %v1957
        %v2670 = vpop.f32.mrb[0].mxu0
        %v2671 = vadd.f32 0.0, %v2670
        %v2672 = vpop.f32.mrb[0].mxu0
        %2673 = vmatprep.mubr.f32.mxu0 0.0
        %2674 = vmatmul.mubr.f32.gmra.mrb[0].mxu0 %v1960
        %v2675 = vpop.f32.mrb[0].mxu0
        %v2676 = vadd.f32 0.0, %v2675
        %v2677 = vpop.f32.mrb[0].mxu0
        %2678 = vmatprep.mubr.f32.mxu0 0.0
        %2679 = vmatmul.mubr.f32.gmra.mrb[0].mxu0 %v1963
        %v2680 = vpop.f32.mrb[0].mxu0
        %v2681 = vadd.f32 0.0, %v2680
        %v2682 = vpop.f32.mrb[0].mxu0
        %2683 = vmatprep.mubr.f32.mxu0 0.0
        %2684 = vmatmul.mubr.f32.gmra.mrb[0].mxu0 %v1966
        %v2685 = vpop.f32.mrb[0].mxu0
        %v2686 = vadd.f32 0.0, %v2685
        %v2687 = vpop.f32.mrb[0].mxu0
        %2688 = vmatprep.mubr.f32.mxu0 0.0
        %2689 = vmatmul.mubr.f32.gmra.mrb[0].mxu0 %v1969
        %v2690 = vpop.f32.mrb[0].mxu0
        %v2691 = vadd.f32 0.0, %v2690
        %v2692 = vpop.f32.mrb[0].mxu0
        %2693 = vmatprep.mubr.f32.mxu0 0.0
        %2694 = vmatmul.mubr.f32.gmra.mrb[0].mxu0 %v1972
        %v2695 = vpop.f32.mrb[0].mxu0
        %v2696 = vadd.f32 0.0, %v2695
        %v2697 = vpop.f32.mrb[0].mxu0
        %2698 = vmatprep.mubr.f32.mxu0 0.0
        %2699 = vmatmul.mubr.f32.gmra.mrb[0].mxu0 %v1975
        %v2700 = vpop.f32.mrb[0].mxu0
        %v2701 = vadd.f32 0.0, %v2700
        %v2702 = vpop.f32.mrb[0].mxu0
        %2703 = vmatprep.mubr.f32.mxu0 0.0
        %2704 = vmatmul.mubr.f32.gmra.mrb[0].mxu0 %v1978
        %v2705 = vpop.f32.mrb[0].mxu0
        %v2706 = vadd.f32 0.0, %v2705
        %v2707 = vpop.f32.mrb[0].mxu0
        %2708 = vmatprep.mubr.f32.mxu0 0.0
        %2709 = vmatmul.mubr.f32.gmra.mrb[0].mxu0 %v1981
        %v2710 = vpop.f32.mrb[0].mxu0
        %v2711 = vadd.f32 0.0, %v2710
        %v2712 = vpop.f32.mrb[0].mxu0
        %2713 = vmatprep.mubr.f32.mxu0 0.0
        %2714 = vmatmul.mubr.f32.gmra.mrb[0].mxu0 %v1984
        %v2715 = vpop.f32.mrb[0].mxu0
        %v2716 = vadd.f32 0.0, %v2715
        %v2717 = vpop.f32.mrb[0].mxu0
        %2718 = vmatprep.mubr.f32.mxu0 0.0
        %2719 = vmatmul.mubr.f32.gmra.mrb[0].mxu0 %v1987
        %v2720 = vpop.f32.mrb[0].mxu0
        %v2721 = vadd.f32 0.0, %v2720
        %v2722 = vpop.f32.mrb[0].mxu0
        %2723 = vmatprep.mubr.f32.mxu0 0.0
        %2724 = vmatmul.mubr.f32.gmra.mrb[0].mxu0 %v1990
        %v2725 = vpop.f32.mrb[0].mxu0
        %v2726 = vadd.f32 0.0, %v2725
        %v2727 = vpop.f32.mrb[0].mxu0
        %2728 = vmatprep.mubr.f32.mxu0 0.0
        %2729 = vmatmul.mubr.f32.gmra.mrb[0].mxu0 %v1993
        %v2730 = vpop.f32.mrb[0].mxu0
        %v2731 = vadd.f32 0.0, %v2730
        %v2732 = vpop.f32.mrb[0].mxu0
        %2733 = vmatprep.mubr.f32.mxu0 0.0
        %2734 = vmatmul.mubr.f32.gmra.mrb[0].mxu0 %v1996
        %v2735 = vpop.f32.mrb[0].mxu0
        %v2736 = vadd.f32 0.0, %v2735
        %v2737 = vpop.f32.mrb[0].mxu0
        %2738 = vmatprep.mubr.f32.mxu0 0.0
        %2739 = vmatmul.mubr.f32.gmra.mrb[0].mxu0 %v2261
        %v2740 = vpop.f32.mrb[0].mxu0
        %v2741 = vadd.f32 0.0, %v2740
        %v2742 = vpop.f32.mrb[0].mxu0
        %2743 = vmatprep.mubr.f32.mxu0 0.0
        %2744 = vmatmul.mubr.f32.gmra.mrb[0].mxu0 %v2264
        %v2745 = vpop.f32.mrb[0].mxu0
        %v2746 = vadd.f32 0.0, %v2745
        %v2747 = vpop.f32.mrb[0].mxu0
        %2748 = vmatprep.mubr.f32.mxu0 0.0
        %2749 = vmatmul.mubr.f32.gmra.mrb[0].mxu0 %v2529
        %v2750 = vpop.f32.mrb[0].mxu0
        %v2751 = vadd.f32 0.0, %v2750
        %v2752 = vpop.f32.mrb[0].mxu0
        %2753 = vmatprep.mubr.f32.mxu0 0.0
        %2754 = vmatmul.mubr.f32.gmra.mrb[0].mxu0 %v2532
        %v2755 = vpop.f32.mrb[0].mxu0
        %v2756 = vadd.f32 0.0, %v2755
        %v2757 = vpop.f32.mrb[0].mxu0
        %2758 = vdwg.mxu0
        %v2759 = vadd.f32 %v2491, %v2601
        %v2760 = vadd.f32 %v2492, %v2606
        %v2761 = vadd.f32 %v2493, %v2611
        %v2762 = vadd.f32 %v2494, %v2616
        %v2763 = vadd.f32 %v2495, %v2621
        %v2764 = vadd.f32 %v2496, %v2626
        %v2765 = vadd.f32 %v2497, %v2631
        %v2766 = vadd.f32 %v2498, %v2636
        %v2767 = vadd.f32 %v2499, %v2641
        %v2768 = vadd.f32 %v2500, %v2646
        %v2769 = vadd.f32 %v2501, %v2651
        %v2770 = vadd.f32 %v2502, %v2656
        %v2771 = vadd.f32 %v2503, %v2661
        %v2772 = vadd.f32 %v2504, %v2666
        %v2773 = vadd.f32 %v2505, %v2671
        %v2774 = vadd.f32 %v2506, %v2676
        %v2775 = vadd.f32 %v2507, %v2681
        %v2776 = vadd.f32 %v2508, %v2686
        %v2777 = vadd.f32 %v2509, %v2691
        %v2778 = vadd.f32 %v2510, %v2696
        %v2779 = vadd.f32 %v2511, %v2701
        %v2780 = vadd.f32 %v2512, %v2706
        %v2781 = vadd.f32 %v2513, %v2711
        %v2782 = vadd.f32 %v2514, %v2716
        %v2783 = vadd.f32 %v2515, %v2721
        %v2784 = vadd.f32 %v2516, %v2726
        %v2785 = vadd.f32 %v2517, %v2731
        %v2786 = vadd.f32 %v2518, %v2736
        %v2787 = vadd.f32 %v2519, %v2741
        %v2788 = vadd.f32 %v2520, %v2746
        %v2789 = vadd.f32 %v2521, %v2751
        %v2790 = vadd.f32 %v2522, %v2756
        %v2791 = vld [vmem:[#allocation2 + $0x2] sm:$0xff]
        %v2792 = vld [vmem:[#allocation2 + $0xa] sm:$0xff]
        %v2793 = vld [vmem:[#allocation2 + $0x1a] sm:$0xff]
        %v2794 = vld [vmem:[#allocation2 + $0x22] sm:$0xff]
        %v2795 = vld [vmem:[#allocation2 + $0x32] sm:$0xff]
        %v2796 = vld [vmem:[#allocation2 + $0x3a] sm:$0xff]
        %v2797 = vld [vmem:[#allocation2 + $0x4a] sm:$0xff]
        %v2798 = vld [vmem:[#allocation2 + $0x52] sm:$0xff]
        %v2799 = vld [vmem:[#allocation2 + $0x62] sm:$0xff]
        %v2800 = vld [vmem:[#allocation2 + $0x6a] sm:$0xff]
        %v2801 = vld [vmem:[#allocation2 + $0x7a] sm:$0xff]
        %v2802 = vld [vmem:[#allocation2 + $0x82] sm:$0xff]
        %v2803 = vld [vmem:[#allocation2 + $0x92] sm:$0xff]
        %v2804 = vld [vmem:[#allocation2 + $0x9a] sm:$0xff]
        %v2805 = vld [vmem:[#allocation2 + $0xaa] sm:$0xff]
        %v2806 = vld [vmem:[#allocation2 + $0xb2] sm:$0xff]
        %v2807 = vld [vmem:[#allocation2 + $0xc2] sm:$0xff]
        %v2808 = vld [vmem:[#allocation2 + $0xca] sm:$0xff]
        %v2809 = vld [vmem:[#allocation2 + $0xda] sm:$0xff]
        %v2810 = vld [vmem:[#allocation2 + $0xe2] sm:$0xff]
        %v2811 = vld [vmem:[#allocation2 + $0xf2] sm:$0xff]
        %v2812 = vld [vmem:[#allocation2 + $0xfa] sm:$0xff]
        %v2813 = vld [vmem:[#allocation2 + $0x10a] sm:$0xff]
        %v2814 = vld [vmem:[#allocation2 + $0x112] sm:$0xff]
        %v2815 = vld [vmem:[#allocation2 + $0x122] sm:$0xff]
        %v2816 = vld [vmem:[#allocation2 + $0x12a] sm:$0xff]
        %v2817 = vld [vmem:[#allocation2 + $0x13a] sm:$0xff]
        %v2818 = vld [vmem:[#allocation2 + $0x142] sm:$0xff]
        %v2819 = vld [vmem:[#allocation2 + $0x152] sm:$0xff]
        %v2820 = vld [vmem:[#allocation2 + $0x15a] sm:$0xff]
        %v2821 = vld [vmem:[#allocation2 + $0x16a] sm:$0xff]
        %v2822 = vld [vmem:[#allocation2 + $0x172] sm:$0xff]
        %v2823 = vld [vmem:[#allocation2 + $0x182] sm:$0xff]
        %v2824 = vld [vmem:[#allocation2 + $0x18a] sm:$0xff]
        %v2825 = vld [vmem:[#allocation2 + $0x19a] sm:$0xff]
        %v2826 = vld [vmem:[#allocation2 + $0x1a2] sm:$0xff]
        %s2827 = scalar_lea.vmem [#allocation5], 64
        %v2828 = vld [vmem:[%s2827] sm:$0xff]
        %v2829 = vld [vmem:[%s2827 + $0x8] sm:$0xff]
        %v2830 = vld [vmem:[%s2827 + $0x10] sm:$0xff]
        %v2831 = vld [vmem:[%s2827 + $0x18] sm:$0xff]
        %v2833 = vsel %vm292, %v2791, 0
        %v2836 = vsel %vm292, %v2792, 0
        %v2839 = vsel %vm292, %v2793, 0
        %v2842 = vsel %vm292, %v2794, 0
        %v2845 = vsel %vm292, %v2795, 0
        %v2848 = vsel %vm292, %v2796, 0
        %v2851 = vsel %vm292, %v2797, 0
        %v2854 = vsel %vm292, %v2798, 0
        %v2857 = vsel %vm292, %v2799, 0
        %v2860 = vsel %vm292, %v2800, 0
        %v2863 = vsel %vm292, %v2801, 0
        %v2866 = vsel %vm292, %v2802, 0
        %v2869 = vsel %vm292, %v2803, 0
        %v2872 = vsel %vm292, %v2804, 0
        %v2875 = vsel %vm292, %v2805, 0
        %v2878 = vsel %vm292, %v2806, 0
        %v2881 = vsel %vm292, %v2807, 0
        %v2884 = vsel %vm292, %v2808, 0
        %v2887 = vsel %vm292, %v2809, 0
        %v2890 = vsel %vm292, %v2810, 0
        %v2893 = vsel %vm292, %v2811, 0
        %v2896 = vsel %vm292, %v2812, 0
        %v2899 = vsel %vm292, %v2813, 0
        %v2902 = vsel %vm292, %v2814, 0
        %v2905 = vsel %vm292, %v2815, 0
        %v2908 = vsel %vm292, %v2816, 0
        %v2911 = vsel %vm292, %v2817, 0
        %v2914 = vsel %vm292, %v2818, 0
        %v2917 = vsel %vm292, %v2819, 0
        %v2920 = vsel %vm292, %v2820, 0
        %v2923 = vsel %vm292, %v2821, 0
        %v2926 = vsel %vm292, %v2822, 0
        %2928 = vmatprep.subr.mxu0 0.0
        %2929 = vmatpush1.msra.mxu0 %v2828
        %2930 = vmatprep.subr.mxu0 0.0
        %2931 = vmatpush1.msra.mxu0 %v2829
        %2932 = vmatprep.subr.mxu0 0.0
        %2933 = vmatpush1.msra.mxu0 %v2830
        %2934 = vmatprep.subr.mxu0 0.0
        %2935 = vmatpush1.msra.mxu0 %v2831
        %2936 = vmatprep.subr.mxu0 0.0
        %2937 = vmatpush1.msra.mxu0 0.0
        %2938 = vmatprep.subr.mxu0 0.0
        %2939 = vmatpush1.msra.mxu0 0.0
        %2940 = vmatprep.subr.mxu0 0.0
        %2941 = vmatpush1.msra.mxu0 0.0
        %2942 = vmatprep.subr.mxu0 0.0
        %2943 = vmatpush1.msra.mxu0 0.0
        %2944 = vmatprep.subr.mxu0 0.0
        %2945 = vmatpush1.msra.mxu0 0.0
        %2946 = vmatprep.subr.mxu0 0.0
        %2947 = vmatpush1.msra.mxu0 0.0
        %2948 = vmatprep.subr.mxu0 0.0
        %2949 = vmatpush1.msra.mxu0 0.0
        %2950 = vmatprep.subr.mxu0 0.0
        %2951 = vmatpush1.msra.mxu0 0.0
        %2952 = vmatprep.subr.mxu0 0.0
        %2953 = vmatpush1.msra.mxu0 0.0
        %2954 = vmatprep.subr.mxu0 0.0
        %2955 = vmatpush1.msra.mxu0 0.0
        %2956 = vmatprep.subr.mxu0 0.0
        %2957 = vmatpush1.msra.mxu0 0.0
        %2958 = vmatprep.subr.mxu0 0.0
        %2959 = vmatpush1.msra.mxu0 0.0
        %2960 = vmatprep.subr.mxu0 0.0
        %2961 = vmatpush1.msra.mxu0 0.0
        %2962 = vmatprep.subr.mxu0 0.0
        %2963 = vmatpush1.msra.mxu0 0.0
        %2964 = vmatprep.subr.mxu0 0.0
        %2965 = vmatpush1.msra.mxu0 0.0
        %2966 = vmatprep.subr.mxu0 0.0
        %2967 = vmatpush1.msra.mxu0 0.0
        %2968 = vmatprep.subr.mxu0 0.0
        %2969 = vmatpush1.msra.mxu0 0.0
        %2970 = vmatprep.subr.mxu0 0.0
        %2971 = vmatpush1.msra.mxu0 0.0
        %2972 = vmatprep.subr.mxu0 0.0
        %2973 = vmatpush1.msra.mxu0 0.0
        %2974 = vmatprep.subr.mxu0 0.0
        %2975 = vmatpush1.msra.mxu0 0.0
        %2976 = vmatprep.subr.mxu0 0.0
        %2977 = vmatpush1.msra.mxu0 0.0
        %2978 = vmatprep.subr.mxu0 0.0
        %2979 = vmatpush1.msra.mxu0 0.0
        %2980 = vmatprep.subr.mxu0 0.0
        %2981 = vmatpush1.msra.mxu0 0.0
        %2982 = vmatprep.subr.mxu0 0.0
        %2983 = vmatpush1.msra.mxu0 0.0
        %2984 = vmatprep.subr.mxu0 0.0
        %2985 = vmatpush1.msra.mxu0 0.0
        %2986 = vmatprep.subr.mxu0 0.0
        %2987 = vmatpush1.msra.mxu0 0.0
        %2988 = vmatprep.subr.mxu0 0.0
        %2989 = vmatpush1.msra.mxu0 0.0
        %2990 = vmatprep.subr.mxu0 0.0
        %2991 = vmatpush1.msra.mxu0 0.0
        %2992 = vmatprep.mubr.f32.mxu0 0.0
        %2993 = vmatmul.mubr.f32.gmra.mrb[0].mxu0 %v2833
        %v2994 = vpop.f32.mrb[0].mxu0
        %v2995 = vadd.f32 0.0, %v2994
        %v2996 = vpop.f32.mrb[0].mxu0
        %2997 = vmatprep.mubr.f32.mxu0 0.0
        %2998 = vmatmul.mubr.f32.gmra.mrb[0].mxu0 %v2836
        %v2999 = vpop.f32.mrb[0].mxu0
        %v3000 = vadd.f32 0.0, %v2999
        %v3001 = vpop.f32.mrb[0].mxu0
        %3002 = vmatprep.mubr.f32.mxu0 0.0
        %3003 = vmatmul.mubr.f32.gmra.mrb[0].mxu0 %v2839
        %v3004 = vpop.f32.mrb[0].mxu0
        %v3005 = vadd.f32 0.0, %v3004
        %v3006 = vpop.f32.mrb[0].mxu0
        %3007 = vmatprep.mubr.f32.mxu0 0.0
        %3008 = vmatmul.mubr.f32.gmra.mrb[0].mxu0 %v2842
        %v3009 = vpop.f32.mrb[0].mxu0
        %v3010 = vadd.f32 0.0, %v3009
        %v3011 = vpop.f32.mrb[0].mxu0
        %3012 = vmatprep.mubr.f32.mxu0 0.0
        %3013 = vmatmul.mubr.f32.gmra.mrb[0].mxu0 %v2845
        %v3014 = vpop.f32.mrb[0].mxu0
        %v3015 = vadd.f32 0.0, %v3014
        %v3016 = vpop.f32.mrb[0].mxu0
        %3017 = vmatprep.mubr.f32.mxu0 0.0
        %3018 = vmatmul.mubr.f32.gmra.mrb[0].mxu0 %v2848
        %v3019 = vpop.f32.mrb[0].mxu0
        %v3020 = vadd.f32 0.0, %v3019
        %v3021 = vpop.f32.mrb[0].mxu0
        %3022 = vmatprep.mubr.f32.mxu0 0.0
        %3023 = vmatmul.mubr.f32.gmra.mrb[0].mxu0 %v2851
        %v3024 = vpop.f32.mrb[0].mxu0
        %v3025 = vadd.f32 0.0, %v3024
        %v3026 = vpop.f32.mrb[0].mxu0
        %3027 = vmatprep.mubr.f32.mxu0 0.0
        %3028 = vmatmul.mubr.f32.gmra.mrb[0].mxu0 %v2854
        %v3029 = vpop.f32.mrb[0].mxu0
        %v3030 = vadd.f32 0.0, %v3029
        %v3031 = vpop.f32.mrb[0].mxu0
        %3032 = vmatprep.mubr.f32.mxu0 0.0
        %3033 = vmatmul.mubr.f32.gmra.mrb[0].mxu0 %v2857
        %v3034 = vpop.f32.mrb[0].mxu0
        %v3035 = vadd.f32 0.0, %v3034
        %v3036 = vpop.f32.mrb[0].mxu0
        %3037 = vmatprep.mubr.f32.mxu0 0.0
        %3038 = vmatmul.mubr.f32.gmra.mrb[0].mxu0 %v2860
        %v3039 = vpop.f32.mrb[0].mxu0
        %v3040 = vadd.f32 0.0, %v3039
        %v3041 = vpop.f32.mrb[0].mxu0
        %3042 = vmatprep.mubr.f32.mxu0 0.0
        %3043 = vmatmul.mubr.f32.gmra.mrb[0].mxu0 %v2863
        %v3044 = vpop.f32.mrb[0].mxu0
        %v3045 = vadd.f32 0.0, %v3044
        %v3046 = vpop.f32.mrb[0].mxu0
        %3047 = vmatprep.mubr.f32.mxu0 0.0
        %3048 = vmatmul.mubr.f32.gmra.mrb[0].mxu0 %v2866
        %v3049 = vpop.f32.mrb[0].mxu0
        %v3050 = vadd.f32 0.0, %v3049
        %v3051 = vpop.f32.mrb[0].mxu0
        %3052 = vmatprep.mubr.f32.mxu0 0.0
        %3053 = vmatmul.mubr.f32.gmra.mrb[0].mxu0 %v2869
        %v3054 = vpop.f32.mrb[0].mxu0
        %v3055 = vadd.f32 0.0, %v3054
        %v3056 = vpop.f32.mrb[0].mxu0
        %3057 = vmatprep.mubr.f32.mxu0 0.0
        %3058 = vmatmul.mubr.f32.gmra.mrb[0].mxu0 %v2872
        %v3059 = vpop.f32.mrb[0].mxu0
        %v3060 = vadd.f32 0.0, %v3059
        %v3061 = vpop.f32.mrb[0].mxu0
        %3062 = vmatprep.mubr.f32.mxu0 0.0
        %3063 = vmatmul.mubr.f32.gmra.mrb[0].mxu0 %v2875
        %v3064 = vpop.f32.mrb[0].mxu0
        %v3065 = vadd.f32 0.0, %v3064
        %v3066 = vpop.f32.mrb[0].mxu0
        %3067 = vmatprep.mubr.f32.mxu0 0.0
        %3068 = vmatmul.mubr.f32.gmra.mrb[0].mxu0 %v2878
        %v3069 = vpop.f32.mrb[0].mxu0
        %v3070 = vadd.f32 0.0, %v3069
        %v3071 = vpop.f32.mrb[0].mxu0
        %3072 = vmatprep.mubr.f32.mxu0 0.0
        %3073 = vmatmul.mubr.f32.gmra.mrb[0].mxu0 %v2881
        %v3074 = vpop.f32.mrb[0].mxu0
        %v3075 = vadd.f32 0.0, %v3074
        %v3076 = vpop.f32.mrb[0].mxu0
        %3077 = vmatprep.mubr.f32.mxu0 0.0
        %3078 = vmatmul.mubr.f32.gmra.mrb[0].mxu0 %v2884
        %v3079 = vpop.f32.mrb[0].mxu0
        %v3080 = vadd.f32 0.0, %v3079
        %v3081 = vpop.f32.mrb[0].mxu0
        %3082 = vmatprep.mubr.f32.mxu0 0.0
        %3083 = vmatmul.mubr.f32.gmra.mrb[0].mxu0 %v2887
        %v3084 = vpop.f32.mrb[0].mxu0
        %v3085 = vadd.f32 0.0, %v3084
        %v3086 = vpop.f32.mrb[0].mxu0
        %3087 = vmatprep.mubr.f32.mxu0 0.0
        %3088 = vmatmul.mubr.f32.gmra.mrb[0].mxu0 %v2890
        %v3089 = vpop.f32.mrb[0].mxu0
        %v3090 = vadd.f32 0.0, %v3089
        %v3091 = vpop.f32.mrb[0].mxu0
        %3092 = vmatprep.mubr.f32.mxu0 0.0
        %3093 = vmatmul.mubr.f32.gmra.mrb[0].mxu0 %v2893
        %v3094 = vpop.f32.mrb[0].mxu0
        %v3095 = vadd.f32 0.0, %v3094
        %v3096 = vpop.f32.mrb[0].mxu0
        %3097 = vmatprep.mubr.f32.mxu0 0.0
        %3098 = vmatmul.mubr.f32.gmra.mrb[0].mxu0 %v2896
        %v3099 = vpop.f32.mrb[0].mxu0
        %v3100 = vadd.f32 0.0, %v3099
        %v3101 = vpop.f32.mrb[0].mxu0
        %3102 = vmatprep.mubr.f32.mxu0 0.0
        %3103 = vmatmul.mubr.f32.gmra.mrb[0].mxu0 %v2899
        %v3104 = vpop.f32.mrb[0].mxu0
        %v3105 = vadd.f32 0.0, %v3104
        %v3106 = vpop.f32.mrb[0].mxu0
        %3107 = vmatprep.mubr.f32.mxu0 0.0
        %3108 = vmatmul.mubr.f32.gmra.mrb[0].mxu0 %v2902
        %v3109 = vpop.f32.mrb[0].mxu0
        %v3110 = vadd.f32 0.0, %v3109
        %v3111 = vpop.f32.mrb[0].mxu0
        %3112 = vmatprep.mubr.f32.mxu0 0.0
        %3113 = vmatmul.mubr.f32.gmra.mrb[0].mxu0 %v2905
        %v3114 = vpop.f32.mrb[0].mxu0
        %v3115 = vadd.f32 0.0, %v3114
        %v3116 = vpop.f32.mrb[0].mxu0
        %3117 = vmatprep.mubr.f32.mxu0 0.0
        %3118 = vmatmul.mubr.f32.gmra.mrb[0].mxu0 %v2908
        %v3119 = vpop.f32.mrb[0].mxu0
        %v3120 = vadd.f32 0.0, %v3119
        %v3121 = vpop.f32.mrb[0].mxu0
        %3122 = vmatprep.mubr.f32.mxu0 0.0
        %3123 = vmatmul.mubr.f32.gmra.mrb[0].mxu0 %v2911
        %v3124 = vpop.f32.mrb[0].mxu0
        %v3125 = vadd.f32 0.0, %v3124
        %v3126 = vpop.f32.mrb[0].mxu0
        %3127 = vmatprep.mubr.f32.mxu0 0.0
        %3128 = vmatmul.mubr.f32.gmra.mrb[0].mxu0 %v2914
        %v3129 = vpop.f32.mrb[0].mxu0
        %v3130 = vadd.f32 0.0, %v3129
        %v3131 = vpop.f32.mrb[0].mxu0
        %3132 = vmatprep.mubr.f32.mxu0 0.0
        %3133 = vmatmul.mubr.f32.gmra.mrb[0].mxu0 %v2917
        %v3134 = vpop.f32.mrb[0].mxu0
        %v3135 = vadd.f32 0.0, %v3134
        %v3136 = vpop.f32.mrb[0].mxu0
        %3137 = vmatprep.mubr.f32.mxu0 0.0
        %3138 = vmatmul.mubr.f32.gmra.mrb[0].mxu0 %v2920
        %v3139 = vpop.f32.mrb[0].mxu0
        %v3140 = vadd.f32 0.0, %v3139
        %v3141 = vpop.f32.mrb[0].mxu0
        %3142 = vmatprep.mubr.f32.mxu0 0.0
        %3143 = vmatmul.mubr.f32.gmra.mrb[0].mxu0 %v2923
        %v3144 = vpop.f32.mrb[0].mxu0
        %v3145 = vadd.f32 0.0, %v3144
        %v3146 = vpop.f32.mrb[0].mxu0
        %3147 = vmatprep.mubr.f32.mxu0 0.0
        %3148 = vmatmul.mubr.f32.gmra.mrb[0].mxu0 %v2926
        %v3149 = vpop.f32.mrb[0].mxu0
        %v3150 = vadd.f32 0.0, %v3149
        %v3151 = vpop.f32.mrb[0].mxu0
        %3152 = vdwg.mxu0
        %v3153 = vadd.f32 %v2759, %v2995
        %v3154 = vadd.f32 %v2760, %v3000
        %v3155 = vadd.f32 %v2761, %v3005
        %v3156 = vadd.f32 %v2762, %v3010
        %v3157 = vadd.f32 %v2763, %v3015
        %v3158 = vadd.f32 %v2764, %v3020
        %v3159 = vadd.f32 %v2765, %v3025
        %v3160 = vadd.f32 %v2766, %v3030
        %v3161 = vadd.f32 %v2767, %v3035
        %v3162 = vadd.f32 %v2768, %v3040
        %v3163 = vadd.f32 %v2769, %v3045
        %v3164 = vadd.f32 %v2770, %v3050
        %v3165 = vadd.f32 %v2771, %v3055
        %v3166 = vadd.f32 %v2772, %v3060
        %v3167 = vadd.f32 %v2773, %v3065
        %v3168 = vadd.f32 %v2774, %v3070
        %v3169 = vadd.f32 %v2775, %v3075
        %v3170 = vadd.f32 %v2776, %v3080
        %v3171 = vadd.f32 %v2777, %v3085
        %v3172 = vadd.f32 %v2778, %v3090
        %v3173 = vadd.f32 %v2779, %v3095
        %v3174 = vadd.f32 %v2780, %v3100
        %v3175 = vadd.f32 %v2781, %v3105
        %v3176 = vadd.f32 %v2782, %v3110
        %v3177 = vadd.f32 %v2783, %v3115
        %v3178 = vadd.f32 %v2784, %v3120
        %v3179 = vadd.f32 %v2785, %v3125
        %v3180 = vadd.f32 %v2786, %v3130
        %v3181 = vadd.f32 %v2787, %v3135
        %v3182 = vadd.f32 %v2788, %v3140
        %v3183 = vadd.f32 %v2789, %v3145
        %v3184 = vadd.f32 %v2790, %v3150
        %s3185 = scalar_lea.vmem [#allocation5], 160
        %v3186 = vld [vmem:[%s3185] sm:$0xff]
        %v3187 = vld [vmem:[%s3185 + $0x8] sm:$0xff]
        %v3188 = vld [vmem:[%s3185 + $0x10] sm:$0xff]
        %v3189 = vld [vmem:[%s3185 + $0x18] sm:$0xff]
        %v3191 = vsel %vm292, %v2823, 0
        %v3194 = vsel %vm292, %v2824, 0
        %3196 = vmatprep.subr.mxu0 0.0
        %3197 = vmatpush1.msra.mxu0 %v3186
        %3198 = vmatprep.subr.mxu0 0.0
        %3199 = vmatpush1.msra.mxu0 %v3187
        %3200 = vmatprep.subr.mxu0 0.0
        %3201 = vmatpush1.msra.mxu0 %v3188
        %3202 = vmatprep.subr.mxu0 0.0
        %3203 = vmatpush1.msra.mxu0 %v3189
        %3204 = vmatprep.subr.mxu0 0.0
        %3205 = vmatpush1.msra.mxu0 0.0
        %3206 = vmatprep.subr.mxu0 0.0
        %3207 = vmatpush1.msra.mxu0 0.0
        %3208 = vmatprep.subr.mxu0 0.0
        %3209 = vmatpush1.msra.mxu0 0.0
        %3210 = vmatprep.subr.mxu0 0.0
        %3211 = vmatpush1.msra.mxu0 0.0
        %3212 = vmatprep.subr.mxu0 0.0
        %3213 = vmatpush1.msra.mxu0 0.0
        %3214 = vmatprep.subr.mxu0 0.0
        %3215 = vmatpush1.msra.mxu0 0.0
        %3216 = vmatprep.subr.mxu0 0.0
        %3217 = vmatpush1.msra.mxu0 0.0
        %3218 = vmatprep.subr.mxu0 0.0
        %3219 = vmatpush1.msra.mxu0 0.0
        %3220 = vmatprep.subr.mxu0 0.0
        %3221 = vmatpush1.msra.mxu0 0.0
        %3222 = vmatprep.subr.mxu0 0.0
        %3223 = vmatpush1.msra.mxu0 0.0
        %3224 = vmatprep.subr.mxu0 0.0
        %3225 = vmatpush1.msra.mxu0 0.0
        %3226 = vmatprep.subr.mxu0 0.0
        %3227 = vmatpush1.msra.mxu0 0.0
        %3228 = vmatprep.subr.mxu0 0.0
        %3229 = vmatpush1.msra.mxu0 0.0
        %3230 = vmatprep.subr.mxu0 0.0
        %3231 = vmatpush1.msra.mxu0 0.0
        %3232 = vmatprep.subr.mxu0 0.0
        %3233 = vmatpush1.msra.mxu0 0.0
        %3234 = vmatprep.subr.mxu0 0.0
        %3235 = vmatpush1.msra.mxu0 0.0
        %3236 = vmatprep.subr.mxu0 0.0
        %3237 = vmatpush1.msra.mxu0 0.0
        %3238 = vmatprep.subr.mxu0 0.0
        %3239 = vmatpush1.msra.mxu0 0.0
        %3240 = vmatprep.subr.mxu0 0.0
        %3241 = vmatpush1.msra.mxu0 0.0
        %3242 = vmatprep.subr.mxu0 0.0
        %3243 = vmatpush1.msra.mxu0 0.0
        %3244 = vmatprep.subr.mxu0 0.0
        %3245 = vmatpush1.msra.mxu0 0.0
        %3246 = vmatprep.subr.mxu0 0.0
        %3247 = vmatpush1.msra.mxu0 0.0
        %3248 = vmatprep.subr.mxu0 0.0
        %3249 = vmatpush1.msra.mxu0 0.0
        %3250 = vmatprep.subr.mxu0 0.0
        %3251 = vmatpush1.msra.mxu0 0.0
        %3252 = vmatprep.subr.mxu0 0.0
        %3253 = vmatpush1.msra.mxu0 0.0
        %3254 = vmatprep.subr.mxu0 0.0
        %3255 = vmatpush1.msra.mxu0 0.0
        %3256 = vmatprep.subr.mxu0 0.0
        %3257 = vmatpush1.msra.mxu0 0.0
        %3258 = vmatprep.subr.mxu0 0.0
        %3259 = vmatpush1.msra.mxu0 0.0
        %3260 = vmatprep.mubr.f32.mxu0 0.0
        %3261 = vmatmul.mubr.f32.gmra.mrb[0].mxu0 %v2839
        %v3262 = vpop.f32.mrb[0].mxu0
        %v3263 = vadd.f32 0.0, %v3262
        %v3264 = vpop.f32.mrb[0].mxu0
        %3265 = vmatprep.mubr.f32.mxu0 0.0
        %3266 = vmatmul.mubr.f32.gmra.mrb[0].mxu0 %v2842
        %v3267 = vpop.f32.mrb[0].mxu0
        %v3268 = vadd.f32 0.0, %v3267
        %v3269 = vpop.f32.mrb[0].mxu0
        %3270 = vmatprep.mubr.f32.mxu0 0.0
        %3271 = vmatmul.mubr.f32.gmra.mrb[0].mxu0 %v2845
        %v3272 = vpop.f32.mrb[0].mxu0
        %v3273 = vadd.f32 0.0, %v3272
        %v3274 = vpop.f32.mrb[0].mxu0
        %3275 = vmatprep.mubr.f32.mxu0 0.0
        %3276 = vmatmul.mubr.f32.gmra.mrb[0].mxu0 %v2848
        %v3277 = vpop.f32.mrb[0].mxu0
        %v3278 = vadd.f32 0.0, %v3277
        %v3279 = vpop.f32.mrb[0].mxu0
        %3280 = vmatprep.mubr.f32.mxu0 0.0
        %3281 = vmatmul.mubr.f32.gmra.mrb[0].mxu0 %v2851
        %v3282 = vpop.f32.mrb[0].mxu0
        %v3283 = vadd.f32 0.0, %v3282
        %v3284 = vpop.f32.mrb[0].mxu0
        %3285 = vmatprep.mubr.f32.mxu0 0.0
        %3286 = vmatmul.mubr.f32.gmra.mrb[0].mxu0 %v2854
        %v3287 = vpop.f32.mrb[0].mxu0
        %v3288 = vadd.f32 0.0, %v3287
        %v3289 = vpop.f32.mrb[0].mxu0
        %3290 = vmatprep.mubr.f32.mxu0 0.0
        %3291 = vmatmul.mubr.f32.gmra.mrb[0].mxu0 %v2857
        %v3292 = vpop.f32.mrb[0].mxu0
        %v3293 = vadd.f32 0.0, %v3292
        %v3294 = vpop.f32.mrb[0].mxu0
        %3295 = vmatprep.mubr.f32.mxu0 0.0
        %3296 = vmatmul.mubr.f32.gmra.mrb[0].mxu0 %v2860
        %v3297 = vpop.f32.mrb[0].mxu0
        %v3298 = vadd.f32 0.0, %v3297
        %v3299 = vpop.f32.mrb[0].mxu0
        %3300 = vmatprep.mubr.f32.mxu0 0.0
        %3301 = vmatmul.mubr.f32.gmra.mrb[0].mxu0 %v2863
        %v3302 = vpop.f32.mrb[0].mxu0
        %v3303 = vadd.f32 0.0, %v3302
        %v3304 = vpop.f32.mrb[0].mxu0
        %3305 = vmatprep.mubr.f32.mxu0 0.0
        %3306 = vmatmul.mubr.f32.gmra.mrb[0].mxu0 %v2866
        %v3307 = vpop.f32.mrb[0].mxu0
        %v3308 = vadd.f32 0.0, %v3307
        %v3309 = vpop.f32.mrb[0].mxu0
        %3310 = vmatprep.mubr.f32.mxu0 0.0
        %3311 = vmatmul.mubr.f32.gmra.mrb[0].mxu0 %v2869
        %v3312 = vpop.f32.mrb[0].mxu0
        %v3313 = vadd.f32 0.0, %v3312
        %v3314 = vpop.f32.mrb[0].mxu0
        %3315 = vmatprep.mubr.f32.mxu0 0.0
        %3316 = vmatmul.mubr.f32.gmra.mrb[0].mxu0 %v2872
        %v3317 = vpop.f32.mrb[0].mxu0
        %v3318 = vadd.f32 0.0, %v3317
        %v3319 = vpop.f32.mrb[0].mxu0
        %3320 = vmatprep.mubr.f32.mxu0 0.0
        %3321 = vmatmul.mubr.f32.gmra.mrb[0].mxu0 %v2875
        %v3322 = vpop.f32.mrb[0].mxu0
        %v3323 = vadd.f32 0.0, %v3322
        %v3324 = vpop.f32.mrb[0].mxu0
        %3325 = vmatprep.mubr.f32.mxu0 0.0
        %3326 = vmatmul.mubr.f32.gmra.mrb[0].mxu0 %v2878
        %v3327 = vpop.f32.mrb[0].mxu0
        %v3328 = vadd.f32 0.0, %v3327
        %v3329 = vpop.f32.mrb[0].mxu0
        %3330 = vmatprep.mubr.f32.mxu0 0.0
        %3331 = vmatmul.mubr.f32.gmra.mrb[0].mxu0 %v2881
        %v3332 = vpop.f32.mrb[0].mxu0
        %v3333 = vadd.f32 0.0, %v3332
        %v3334 = vpop.f32.mrb[0].mxu0
        %3335 = vmatprep.mubr.f32.mxu0 0.0
        %3336 = vmatmul.mubr.f32.gmra.mrb[0].mxu0 %v2884
        %v3337 = vpop.f32.mrb[0].mxu0
        %v3338 = vadd.f32 0.0, %v3337
        %v3339 = vpop.f32.mrb[0].mxu0
        %3340 = vmatprep.mubr.f32.mxu0 0.0
        %3341 = vmatmul.mubr.f32.gmra.mrb[0].mxu0 %v2887
        %v3342 = vpop.f32.mrb[0].mxu0
        %v3343 = vadd.f32 0.0, %v3342
        %v3344 = vpop.f32.mrb[0].mxu0
        %3345 = vmatprep.mubr.f32.mxu0 0.0
        %3346 = vmatmul.mubr.f32.gmra.mrb[0].mxu0 %v2890
        %v3347 = vpop.f32.mrb[0].mxu0
        %v3348 = vadd.f32 0.0, %v3347
        %v3349 = vpop.f32.mrb[0].mxu0
        %3350 = vmatprep.mubr.f32.mxu0 0.0
        %3351 = vmatmul.mubr.f32.gmra.mrb[0].mxu0 %v2893
        %v3352 = vpop.f32.mrb[0].mxu0
        %v3353 = vadd.f32 0.0, %v3352
        %v3354 = vpop.f32.mrb[0].mxu0
        %3355 = vmatprep.mubr.f32.mxu0 0.0
        %3356 = vmatmul.mubr.f32.gmra.mrb[0].mxu0 %v2896
        %v3357 = vpop.f32.mrb[0].mxu0
        %v3358 = vadd.f32 0.0, %v3357
        %v3359 = vpop.f32.mrb[0].mxu0
        %3360 = vmatprep.mubr.f32.mxu0 0.0
        %3361 = vmatmul.mubr.f32.gmra.mrb[0].mxu0 %v2899
        %v3362 = vpop.f32.mrb[0].mxu0
        %v3363 = vadd.f32 0.0, %v3362
        %v3364 = vpop.f32.mrb[0].mxu0
        %3365 = vmatprep.mubr.f32.mxu0 0.0
        %3366 = vmatmul.mubr.f32.gmra.mrb[0].mxu0 %v2902
        %v3367 = vpop.f32.mrb[0].mxu0
        %v3368 = vadd.f32 0.0, %v3367
        %v3369 = vpop.f32.mrb[0].mxu0
        %3370 = vmatprep.mubr.f32.mxu0 0.0
        %3371 = vmatmul.mubr.f32.gmra.mrb[0].mxu0 %v2905
        %v3372 = vpop.f32.mrb[0].mxu0
        %v3373 = vadd.f32 0.0, %v3372
        %v3374 = vpop.f32.mrb[0].mxu0
        %3375 = vmatprep.mubr.f32.mxu0 0.0
        %3376 = vmatmul.mubr.f32.gmra.mrb[0].mxu0 %v2908
        %v3377 = vpop.f32.mrb[0].mxu0
        %v3378 = vadd.f32 0.0, %v3377
        %v3379 = vpop.f32.mrb[0].mxu0
        %3380 = vmatprep.mubr.f32.mxu0 0.0
        %3381 = vmatmul.mubr.f32.gmra.mrb[0].mxu0 %v2911
        %v3382 = vpop.f32.mrb[0].mxu0
        %v3383 = vadd.f32 0.0, %v3382
        %v3384 = vpop.f32.mrb[0].mxu0
        %3385 = vmatprep.mubr.f32.mxu0 0.0
        %3386 = vmatmul.mubr.f32.gmra.mrb[0].mxu0 %v2914
        %v3387 = vpop.f32.mrb[0].mxu0
        %v3388 = vadd.f32 0.0, %v3387
        %v3389 = vpop.f32.mrb[0].mxu0
        %3390 = vmatprep.mubr.f32.mxu0 0.0
        %3391 = vmatmul.mubr.f32.gmra.mrb[0].mxu0 %v2917
        %v3392 = vpop.f32.mrb[0].mxu0
        %v3393 = vadd.f32 0.0, %v3392
        %v3394 = vpop.f32.mrb[0].mxu0
        %3395 = vmatprep.mubr.f32.mxu0 0.0
        %3396 = vmatmul.mubr.f32.gmra.mrb[0].mxu0 %v2920
        %v3397 = vpop.f32.mrb[0].mxu0
        %v3398 = vadd.f32 0.0, %v3397
        %v3399 = vpop.f32.mrb[0].mxu0
        %3400 = vmatprep.mubr.f32.mxu0 0.0
        %3401 = vmatmul.mubr.f32.gmra.mrb[0].mxu0 %v2923
        %v3402 = vpop.f32.mrb[0].mxu0
        %v3403 = vadd.f32 0.0, %v3402
        %v3404 = vpop.f32.mrb[0].mxu0
        %3405 = vmatprep.mubr.f32.mxu0 0.0
        %3406 = vmatmul.mubr.f32.gmra.mrb[0].mxu0 %v2926
        %v3407 = vpop.f32.mrb[0].mxu0
        %v3408 = vadd.f32 0.0, %v3407
        %v3409 = vpop.f32.mrb[0].mxu0
        %3410 = vmatprep.mubr.f32.mxu0 0.0
        %3411 = vmatmul.mubr.f32.gmra.mrb[0].mxu0 %v3191
        %v3412 = vpop.f32.mrb[0].mxu0
        %v3413 = vadd.f32 0.0, %v3412
        %v3414 = vpop.f32.mrb[0].mxu0
        %3415 = vmatprep.mubr.f32.mxu0 0.0
        %3416 = vmatmul.mubr.f32.gmra.mrb[0].mxu0 %v3194
        %v3417 = vpop.f32.mrb[0].mxu0
        %v3418 = vadd.f32 0.0, %v3417
        %v3419 = vpop.f32.mrb[0].mxu0
        %3420 = vdwg.mxu0
        %v3421 = vadd.f32 %v3153, %v3263
        %v3422 = vadd.f32 %v3154, %v3268
        %v3423 = vadd.f32 %v3155, %v3273
        %v3424 = vadd.f32 %v3156, %v3278
        %v3425 = vadd.f32 %v3157, %v3283
        %v3426 = vadd.f32 %v3158, %v3288
        %v3427 = vadd.f32 %v3159, %v3293
        %v3428 = vadd.f32 %v3160, %v3298
        %v3429 = vadd.f32 %v3161, %v3303
        %v3430 = vadd.f32 %v3162, %v3308
        %v3431 = vadd.f32 %v3163, %v3313
        %v3432 = vadd.f32 %v3164, %v3318
        %v3433 = vadd.f32 %v3165, %v3323
        %v3434 = vadd.f32 %v3166, %v3328
        %v3435 = vadd.f32 %v3167, %v3333
        %v3436 = vadd.f32 %v3168, %v3338
        %v3437 = vadd.f32 %v3169, %v3343
        %v3438 = vadd.f32 %v3170, %v3348
        %v3439 = vadd.f32 %v3171, %v3353
        %v3440 = vadd.f32 %v3172, %v3358
        %v3441 = vadd.f32 %v3173, %v3363
        %v3442 = vadd.f32 %v3174, %v3368
        %v3443 = vadd.f32 %v3175, %v3373
        %v3444 = vadd.f32 %v3176, %v3378
        %v3445 = vadd.f32 %v3177, %v3383
        %v3446 = vadd.f32 %v3178, %v3388
        %v3447 = vadd.f32 %v3179, %v3393
        %v3448 = vadd.f32 %v3180, %v3398
        %v3449 = vadd.f32 %v3181, %v3403
        %v3450 = vadd.f32 %v3182, %v3408
        %v3451 = vadd.f32 %v3183, %v3413
        %v3452 = vadd.f32 %v3184, %v3418
        %s3453 = scalar_lea.vmem [#allocation5], 256
        %v3454 = vld [vmem:[%s3453] sm:$0xff]
        %v3455 = vld [vmem:[%s3453 + $0x8] sm:$0xff]
        %v3456 = vld [vmem:[%s3453 + $0x10] sm:$0xff]
        %v3457 = vld [vmem:[%s3453 + $0x18] sm:$0xff]
        %v3459 = vsel %vm292, %v2825, 0
        %v3462 = vsel %vm292, %v2826, 0
        %3464 = vmatprep.subr.mxu0 0.0
        %3465 = vmatpush1.msra.mxu0 %v3454
        %3466 = vmatprep.subr.mxu0 0.0
        %3467 = vmatpush1.msra.mxu0 %v3455
        %3468 = vmatprep.subr.mxu0 0.0
        %3469 = vmatpush1.msra.mxu0 %v3456
        %3470 = vmatprep.subr.mxu0 0.0
        %3471 = vmatpush1.msra.mxu0 %v3457
        %3472 = vmatprep.subr.mxu0 0.0
        %3473 = vmatpush1.msra.mxu0 0.0
        %3474 = vmatprep.subr.mxu0 0.0
        %3475 = vmatpush1.msra.mxu0 0.0
        %3476 = vmatprep.subr.mxu0 0.0
        %3477 = vmatpush1.msra.mxu0 0.0
        %3478 = vmatprep.subr.mxu0 0.0
        %3479 = vmatpush1.msra.mxu0 0.0
        %3480 = vmatprep.subr.mxu0 0.0
        %3481 = vmatpush1.msra.mxu0 0.0
        %3482 = vmatprep.subr.mxu0 0.0
        %3483 = vmatpush1.msra.mxu0 0.0
        %3484 = vmatprep.subr.mxu0 0.0
        %3485 = vmatpush1.msra.mxu0 0.0
        %3486 = vmatprep.subr.mxu0 0.0
        %3487 = vmatpush1.msra.mxu0 0.0
        %3488 = vmatprep.subr.mxu0 0.0
        %3489 = vmatpush1.msra.mxu0 0.0
        %3490 = vmatprep.subr.mxu0 0.0
        %3491 = vmatpush1.msra.mxu0 0.0
        %3492 = vmatprep.subr.mxu0 0.0
        %3493 = vmatpush1.msra.mxu0 0.0
        %3494 = vmatprep.subr.mxu0 0.0
        %3495 = vmatpush1.msra.mxu0 0.0
        %3496 = vmatprep.subr.mxu0 0.0
        %3497 = vmatpush1.msra.mxu0 0.0
        %3498 = vmatprep.subr.mxu0 0.0
        %3499 = vmatpush1.msra.mxu0 0.0
        %3500 = vmatprep.subr.mxu0 0.0
        %3501 = vmatpush1.msra.mxu0 0.0
        %3502 = vmatprep.subr.mxu0 0.0
        %3503 = vmatpush1.msra.mxu0 0.0
        %3504 = vmatprep.subr.mxu0 0.0
        %3505 = vmatpush1.msra.mxu0 0.0
        %3506 = vmatprep.subr.mxu0 0.0
        %3507 = vmatpush1.msra.mxu0 0.0
        %3508 = vmatprep.subr.mxu0 0.0
        %3509 = vmatpush1.msra.mxu0 0.0
        %3510 = vmatprep.subr.mxu0 0.0
        %3511 = vmatpush1.msra.mxu0 0.0
        %3512 = vmatprep.subr.mxu0 0.0
        %3513 = vmatpush1.msra.mxu0 0.0
        %3514 = vmatprep.subr.mxu0 0.0
        %3515 = vmatpush1.msra.mxu0 0.0
        %3516 = vmatprep.subr.mxu0 0.0
        %3517 = vmatpush1.msra.mxu0 0.0
        %3518 = vmatprep.subr.mxu0 0.0
        %3519 = vmatpush1.msra.mxu0 0.0
        %3520 = vmatprep.subr.mxu0 0.0
        %3521 = vmatpush1.msra.mxu0 0.0
        %3522 = vmatprep.subr.mxu0 0.0
        %3523 = vmatpush1.msra.mxu0 0.0
        %3524 = vmatprep.subr.mxu0 0.0
        %3525 = vmatpush1.msra.mxu0 0.0
        %3526 = vmatprep.subr.mxu0 0.0
        %3527 = vmatpush1.msra.mxu0 0.0
        %3528 = vmatprep.mubr.f32.mxu0 0.0
        %3529 = vmatmul.mubr.f32.gmra.mrb[0].mxu0 %v2845
        %v3530 = vpop.f32.mrb[0].mxu0
        %v3531 = vadd.f32 0.0, %v3530
        %v3532 = vpop.f32.mrb[0].mxu0
        %3533 = vmatprep.mubr.f32.mxu0 0.0
        %3534 = vmatmul.mubr.f32.gmra.mrb[0].mxu0 %v2848
        %v3535 = vpop.f32.mrb[0].mxu0
        %v3536 = vadd.f32 0.0, %v3535
        %v3537 = vpop.f32.mrb[0].mxu0
        %3538 = vmatprep.mubr.f32.mxu0 0.0
        %3539 = vmatmul.mubr.f32.gmra.mrb[0].mxu0 %v2851
        %v3540 = vpop.f32.mrb[0].mxu0
        %v3541 = vadd.f32 0.0, %v3540
        %v3542 = vpop.f32.mrb[0].mxu0
        %3543 = vmatprep.mubr.f32.mxu0 0.0
        %3544 = vmatmul.mubr.f32.gmra.mrb[0].mxu0 %v2854
        %v3545 = vpop.f32.mrb[0].mxu0
        %v3546 = vadd.f32 0.0, %v3545
        %v3547 = vpop.f32.mrb[0].mxu0
        %3548 = vmatprep.mubr.f32.mxu0 0.0
        %3549 = vmatmul.mubr.f32.gmra.mrb[0].mxu0 %v2857
        %v3550 = vpop.f32.mrb[0].mxu0
        %v3551 = vadd.f32 0.0, %v3550
        %v3552 = vpop.f32.mrb[0].mxu0
        %3553 = vmatprep.mubr.f32.mxu0 0.0
        %3554 = vmatmul.mubr.f32.gmra.mrb[0].mxu0 %v2860
        %v3555 = vpop.f32.mrb[0].mxu0
        %v3556 = vadd.f32 0.0, %v3555
        %v3557 = vpop.f32.mrb[0].mxu0
        %3558 = vmatprep.mubr.f32.mxu0 0.0
        %3559 = vmatmul.mubr.f32.gmra.mrb[0].mxu0 %v2863
        %v3560 = vpop.f32.mrb[0].mxu0
        %v3561 = vadd.f32 0.0, %v3560
        %v3562 = vpop.f32.mrb[0].mxu0
        %3563 = vmatprep.mubr.f32.mxu0 0.0
        %3564 = vmatmul.mubr.f32.gmra.mrb[0].mxu0 %v2866
        %v3565 = vpop.f32.mrb[0].mxu0
        %v3566 = vadd.f32 0.0, %v3565
        %v3567 = vpop.f32.mrb[0].mxu0
        %3568 = vmatprep.mubr.f32.mxu0 0.0
        %3569 = vmatmul.mubr.f32.gmra.mrb[0].mxu0 %v2869
        %v3570 = vpop.f32.mrb[0].mxu0
        %v3571 = vadd.f32 0.0, %v3570
        %v3572 = vpop.f32.mrb[0].mxu0
        %3573 = vmatprep.mubr.f32.mxu0 0.0
        %3574 = vmatmul.mubr.f32.gmra.mrb[0].mxu0 %v2872
        %v3575 = vpop.f32.mrb[0].mxu0
        %v3576 = vadd.f32 0.0, %v3575
        %v3577 = vpop.f32.mrb[0].mxu0
        %3578 = vmatprep.mubr.f32.mxu0 0.0
        %3579 = vmatmul.mubr.f32.gmra.mrb[0].mxu0 %v2875
        %v3580 = vpop.f32.mrb[0].mxu0
        %v3581 = vadd.f32 0.0, %v3580
        %v3582 = vpop.f32.mrb[0].mxu0
        %3583 = vmatprep.mubr.f32.mxu0 0.0
        %3584 = vmatmul.mubr.f32.gmra.mrb[0].mxu0 %v2878
        %v3585 = vpop.f32.mrb[0].mxu0
        %v3586 = vadd.f32 0.0, %v3585
        %v3587 = vpop.f32.mrb[0].mxu0
        %3588 = vmatprep.mubr.f32.mxu0 0.0
        %3589 = vmatmul.mubr.f32.gmra.mrb[0].mxu0 %v2881
        %v3590 = vpop.f32.mrb[0].mxu0
        %v3591 = vadd.f32 0.0, %v3590
        %v3592 = vpop.f32.mrb[0].mxu0
        %3593 = vmatprep.mubr.f32.mxu0 0.0
        %3594 = vmatmul.mubr.f32.gmra.mrb[0].mxu0 %v2884
        %v3595 = vpop.f32.mrb[0].mxu0
        %v3596 = vadd.f32 0.0, %v3595
        %v3597 = vpop.f32.mrb[0].mxu0
        %3598 = vmatprep.mubr.f32.mxu0 0.0
        %3599 = vmatmul.mubr.f32.gmra.mrb[0].mxu0 %v2887
        %v3600 = vpop.f32.mrb[0].mxu0
        %v3601 = vadd.f32 0.0, %v3600
        %v3602 = vpop.f32.mrb[0].mxu0
        %3603 = vmatprep.mubr.f32.mxu0 0.0
        %3604 = vmatmul.mubr.f32.gmra.mrb[0].mxu0 %v2890
        %v3605 = vpop.f32.mrb[0].mxu0
        %v3606 = vadd.f32 0.0, %v3605
        %v3607 = vpop.f32.mrb[0].mxu0
        %3608 = vmatprep.mubr.f32.mxu0 0.0
        %3609 = vmatmul.mubr.f32.gmra.mrb[0].mxu0 %v2893
        %v3610 = vpop.f32.mrb[0].mxu0
        %v3611 = vadd.f32 0.0, %v3610
        %v3612 = vpop.f32.mrb[0].mxu0
        %3613 = vmatprep.mubr.f32.mxu0 0.0
        %3614 = vmatmul.mubr.f32.gmra.mrb[0].mxu0 %v2896
        %v3615 = vpop.f32.mrb[0].mxu0
        %v3616 = vadd.f32 0.0, %v3615
        %v3617 = vpop.f32.mrb[0].mxu0
        %3618 = vmatprep.mubr.f32.mxu0 0.0
        %3619 = vmatmul.mubr.f32.gmra.mrb[0].mxu0 %v2899
        %v3620 = vpop.f32.mrb[0].mxu0
        %v3621 = vadd.f32 0.0, %v3620
        %v3622 = vpop.f32.mrb[0].mxu0
        %3623 = vmatprep.mubr.f32.mxu0 0.0
        %3624 = vmatmul.mubr.f32.gmra.mrb[0].mxu0 %v2902
        %v3625 = vpop.f32.mrb[0].mxu0
        %v3626 = vadd.f32 0.0, %v3625
        %v3627 = vpop.f32.mrb[0].mxu0
        %3628 = vmatprep.mubr.f32.mxu0 0.0
        %3629 = vmatmul.mubr.f32.gmra.mrb[0].mxu0 %v2905
        %v3630 = vpop.f32.mrb[0].mxu0
        %v3631 = vadd.f32 0.0, %v3630
        %v3632 = vpop.f32.mrb[0].mxu0
        %3633 = vmatprep.mubr.f32.mxu0 0.0
        %3634 = vmatmul.mubr.f32.gmra.mrb[0].mxu0 %v2908
        %v3635 = vpop.f32.mrb[0].mxu0
        %v3636 = vadd.f32 0.0, %v3635
        %v3637 = vpop.f32.mrb[0].mxu0
        %3638 = vmatprep.mubr.f32.mxu0 0.0
        %3639 = vmatmul.mubr.f32.gmra.mrb[0].mxu0 %v2911
        %v3640 = vpop.f32.mrb[0].mxu0
        %v3641 = vadd.f32 0.0, %v3640
        %v3642 = vpop.f32.mrb[0].mxu0
        %3643 = vmatprep.mubr.f32.mxu0 0.0
        %3644 = vmatmul.mubr.f32.gmra.mrb[0].mxu0 %v2914
        %v3645 = vpop.f32.mrb[0].mxu0
        %v3646 = vadd.f32 0.0, %v3645
        %v3647 = vpop.f32.mrb[0].mxu0
        %3648 = vmatprep.mubr.f32.mxu0 0.0
        %3649 = vmatmul.mubr.f32.gmra.mrb[0].mxu0 %v2917
        %v3650 = vpop.f32.mrb[0].mxu0
        %v3651 = vadd.f32 0.0, %v3650
        %v3652 = vpop.f32.mrb[0].mxu0
        %3653 = vmatprep.mubr.f32.mxu0 0.0
        %3654 = vmatmul.mubr.f32.gmra.mrb[0].mxu0 %v2920
        %v3655 = vpop.f32.mrb[0].mxu0
        %v3656 = vadd.f32 0.0, %v3655
        %v3657 = vpop.f32.mrb[0].mxu0
        %3658 = vmatprep.mubr.f32.mxu0 0.0
        %3659 = vmatmul.mubr.f32.gmra.mrb[0].mxu0 %v2923
        %v3660 = vpop.f32.mrb[0].mxu0
        %v3661 = vadd.f32 0.0, %v3660
        %v3662 = vpop.f32.mrb[0].mxu0
        %3663 = vmatprep.mubr.f32.mxu0 0.0
        %3664 = vmatmul.mubr.f32.gmra.mrb[0].mxu0 %v2926
        %v3665 = vpop.f32.mrb[0].mxu0
        %v3666 = vadd.f32 0.0, %v3665
        %v3667 = vpop.f32.mrb[0].mxu0
        %3668 = vmatprep.mubr.f32.mxu0 0.0
        %3669 = vmatmul.mubr.f32.gmra.mrb[0].mxu0 %v3191
        %v3670 = vpop.f32.mrb[0].mxu0
        %v3671 = vadd.f32 0.0, %v3670
        %v3672 = vpop.f32.mrb[0].mxu0
        %3673 = vmatprep.mubr.f32.mxu0 0.0
        %3674 = vmatmul.mubr.f32.gmra.mrb[0].mxu0 %v3194
        %v3675 = vpop.f32.mrb[0].mxu0
        %v3676 = vadd.f32 0.0, %v3675
        %v3677 = vpop.f32.mrb[0].mxu0
        %3678 = vmatprep.mubr.f32.mxu0 0.0
        %3679 = vmatmul.mubr.f32.gmra.mrb[0].mxu0 %v3459
        %v3680 = vpop.f32.mrb[0].mxu0
        %v3681 = vadd.f32 0.0, %v3680
        %v3682 = vpop.f32.mrb[0].mxu0
        %3683 = vmatprep.mubr.f32.mxu0 0.0
        %3684 = vmatmul.mubr.f32.gmra.mrb[0].mxu0 %v3462
        %v3685 = vpop.f32.mrb[0].mxu0
        %v3686 = vadd.f32 0.0, %v3685
        %v3687 = vpop.f32.mrb[0].mxu0
        %3688 = vdwg.mxu0
        %v3689 = vadd.f32 %v3421, %v3531
        %v3690 = vadd.f32 %v3422, %v3536
        %v3691 = vadd.f32 %v3423, %v3541
        %v3692 = vadd.f32 %v3424, %v3546
        %v3693 = vadd.f32 %v3425, %v3551
        %v3694 = vadd.f32 %v3426, %v3556
        %v3695 = vadd.f32 %v3427, %v3561
        %v3696 = vadd.f32 %v3428, %v3566
        %v3697 = vadd.f32 %v3429, %v3571
        %v3698 = vadd.f32 %v3430, %v3576
        %v3699 = vadd.f32 %v3431, %v3581
        %v3700 = vadd.f32 %v3432, %v3586
        %v3701 = vadd.f32 %v3433, %v3591
        %v3702 = vadd.f32 %v3434, %v3596
        %v3703 = vadd.f32 %v3435, %v3601
        %v3704 = vadd.f32 %v3436, %v3606
        %v3705 = vadd.f32 %v3437, %v3611
        %v3706 = vadd.f32 %v3438, %v3616
        %v3707 = vadd.f32 %v3439, %v3621
        %v3708 = vadd.f32 %v3440, %v3626
        %v3709 = vadd.f32 %v3441, %v3631
        %v3710 = vadd.f32 %v3442, %v3636
        %v3711 = vadd.f32 %v3443, %v3641
        %v3712 = vadd.f32 %v3444, %v3646
        %v3713 = vadd.f32 %v3445, %v3651
        %v3714 = vadd.f32 %v3446, %v3656
        %v3715 = vadd.f32 %v3447, %v3661
        %v3716 = vadd.f32 %v3448, %v3666
        %v3717 = vadd.f32 %v3449, %v3671
        %v3718 = vadd.f32 %v3450, %v3676
        %v3719 = vadd.f32 %v3451, %v3681
        %v3720 = vadd.f32 %v3452, %v3686
        %v3721 = vld [vmem:[%s4] sm:$0x1]
        %v3723 = vlaneseq
        %v3724 = vshrl.u32 %v3723, 7
        %v3725 = vsub.s32 0, %v3724
        %v3726 = vrot.slane %v3721, %v3725
        %v3728 = vadd.f32 %v3689, %v3726
        %v3729 = vadd.f32 %v3690, %v3726
        %v3730 = vadd.f32 %v3691, %v3726
        %v3731 = vadd.f32 %v3692, %v3726
        %v3732 = vadd.f32 %v3693, %v3726
        %v3733 = vadd.f32 %v3694, %v3726
        %v3734 = vadd.f32 %v3695, %v3726
        %v3735 = vadd.f32 %v3696, %v3726
        %v3736 = vadd.f32 %v3697, %v3726
        %v3737 = vadd.f32 %v3698, %v3726
        %v3738 = vadd.f32 %v3699, %v3726
        %v3739 = vadd.f32 %v3700, %v3726
        %v3740 = vadd.f32 %v3701, %v3726
        %v3741 = vadd.f32 %v3702, %v3726
        %v3742 = vadd.f32 %v3703, %v3726
        %v3743 = vadd.f32 %v3704, %v3726
        %v3744 = vadd.f32 %v3705, %v3726
        %v3745 = vadd.f32 %v3706, %v3726
        %v3746 = vadd.f32 %v3707, %v3726
        %v3747 = vadd.f32 %v3708, %v3726
        %v3748 = vadd.f32 %v3709, %v3726
        %v3749 = vadd.f32 %v3710, %v3726
        %v3750 = vadd.f32 %v3711, %v3726
        %v3751 = vadd.f32 %v3712, %v3726
        %v3752 = vadd.f32 %v3713, %v3726
        %v3753 = vadd.f32 %v3714, %v3726
        %v3754 = vadd.f32 %v3715, %v3726
        %v3755 = vadd.f32 %v3716, %v3726
        %v3756 = vadd.f32 %v3717, %v3726
        %v3757 = vadd.f32 %v3718, %v3726
        %v3758 = vadd.f32 %v3719, %v3726
        %v3759 = vadd.f32 %v3720, %v3726
        %vm3760 = vcmask 523264
        %3761 = vst.msk [vmem:[%s259] sm:$0xff] %vm3760, %v3728
        %3762 = vst.msk [vmem:[%s259 + $0x8] sm:$0xff] %vm3760, %v3729
        %3763 = vst.msk [vmem:[%s259 + $0x10] sm:$0xff] %vm3760, %v3730
        %3764 = vst.msk [vmem:[%s259 + $0x18] sm:$0xff] %vm3760, %v3731
        %3765 = vst.msk [vmem:[%s259 + $0x20] sm:$0xff] %vm3760, %v3732
        %3766 = vst.msk [vmem:[%s259 + $0x28] sm:$0xff] %vm3760, %v3733
        %3767 = vst.msk [vmem:[%s259 + $0x30] sm:$0xff] %vm3760, %v3734
        %3768 = vst.msk [vmem:[%s259 + $0x38] sm:$0xff] %vm3760, %v3735
        %3769 = vst.msk [vmem:[%s259 + $0x40] sm:$0xff] %vm3760, %v3736
        %3770 = vst.msk [vmem:[%s259 + $0x48] sm:$0xff] %vm3760, %v3737
        %3771 = vst.msk [vmem:[%s259 + $0x50] sm:$0xff] %vm3760, %v3738
        %3772 = vst.msk [vmem:[%s259 + $0x58] sm:$0xff] %vm3760, %v3739
        %3773 = vst.msk [vmem:[%s259 + $0x60] sm:$0xff] %vm3760, %v3740
        %3774 = vst.msk [vmem:[%s259 + $0x68] sm:$0xff] %vm3760, %v3741
        %3775 = vst.msk [vmem:[%s259 + $0x70] sm:$0xff] %vm3760, %v3742
        %3776 = vst.msk [vmem:[%s259 + $0x78] sm:$0xff] %vm3760, %v3743
        %3777 = vst.msk [vmem:[%s259 + $0x80] sm:$0xff] %vm3760, %v3744
        %3778 = vst.msk [vmem:[%s259 + $0x88] sm:$0xff] %vm3760, %v3745
        %3779 = vst.msk [vmem:[%s259 + $0x90] sm:$0xff] %vm3760, %v3746
        %3780 = vst.msk [vmem:[%s259 + $0x98] sm:$0xff] %vm3760, %v3747
        %3781 = vst.msk [vmem:[%s259 + $0xa0] sm:$0xff] %vm3760, %v3748
        %3782 = vst.msk [vmem:[%s259 + $0xa8] sm:$0xff] %vm3760, %v3749
        %3783 = vst.msk [vmem:[%s259 + $0xb0] sm:$0xff] %vm3760, %v3750
        %3784 = vst.msk [vmem:[%s259 + $0xb8] sm:$0xff] %vm3760, %v3751
        %3785 = vst.msk [vmem:[%s259 + $0xc0] sm:$0xff] %vm3760, %v3752
        %3786 = vst.msk [vmem:[%s259 + $0xc8] sm:$0xff] %vm3760, %v3753
        %3787 = vst.msk [vmem:[%s259 + $0xd0] sm:$0xff] %vm3760, %v3754
        %3788 = vst.msk [vmem:[%s259 + $0xd8] sm:$0xff] %vm3760, %v3755
        %3789 = vst.msk [vmem:[%s259 + $0xe0] sm:$0xff] %vm3760, %v3756
        %3790 = vst.msk [vmem:[%s259 + $0xe8] sm:$0xff] %vm3760, %v3757
        %3791 = vst.msk [vmem:[%s259 + $0xf0] sm:$0xff] %vm3760, %v3758
        %3792 = vst.msk [vmem:[%s259 + $0xf8] sm:$0xff] %vm3760, %v3759
        %p3793 = scmp.lt.s32.totalorder %s20, 1
        %s3794 = scalar_select %p3793, %s20, 1
        %s3795 = smul.addr %s3794, 32
        %s3796 = smul.addr %s3795, 8
        %s3797 = scalar_lea.vmem %s5, %s3796
        // Predicated region
        $region49: #{residual_block_forward.2} parent=39 // pred_check
          %p3798 = pneg %p148
        $region50: #{residual_block_forward.2} parent=39 // pred_check_branch
          %3800 = sbr.rel (%p3798) target = $region52
        $region51: #{residual_block_forward.2} parent=39 // pred_region
          _
        $region52: #{residual_block_forward.2} parent=39 // pred_fallthru
          _
      $region40: #{residual_block_forward.2} parent=5 // pred_fallthru
        _
      %p3801 = scmp.le.s32.totalorder 2, %s15
      // Predicated region
      $region53: #{residual_block_forward.2} parent=5 // pred_check
        %p3802 = pneg %p3801
      $region54: #{residual_block_forward.2} parent=5 // pred_check_branch
        %3804 = sbr.rel (%p3802) target = $region56
      $region55: #{residual_block_forward.2} parent=5 // pred_region
        %s3805 = ssub.s32 %s15, 2
        // Predicated region
        $region57: #{residual_block_forward.2} parent=55 // pred_check
          %p3806 = pneg %p154
        $region58: #{residual_block_forward.2} parent=55 // pred_check_branch
          %3808 = sbr.rel (%p3806) target = $region60
        $region59: #{residual_block_forward.2} parent=55 // pred_region
          %p3809 = scmp.lt.s32.totalorder %s21, 1
          %s3810 = scalar_select %p3809, %s21, 1
          %s3811 = smul.addr %s3810, 32
          %s3812 = smul.addr %s3811, 8
          %s3813 = scalar_lea.vmem %s5, %s3812
        $region60: #{residual_block_forward.2} parent=55 // pred_fallthru
          _
      $region56: #{residual_block_forward.2} parent=5 // pred_fallthru
        _
    $region6: #{residual_block_forward.2} parent=1 // loop_footer
      %s19 = sadd.s32 1, %s15
    $region7: #{residual_block_forward.2} parent=1 // loop_footer_branch
      %14 = sbr.rel target = $region3
    $region8: #{residual_block_forward.2} parent=1 // loop_exit
      _
    %3814 = vsyncpa [#allocation4], 1
    %s3815 = scalar_lea.sflag [#allocation4], 1
    %3816 = vsyncpa %s3815, 1
    %3817 = vsyncpa [#allocation6], 1

// kernel: residual_block_forward.3
$region0: #{residual_block_forward.3}
  #allocation0 [shape = 'u32[]', space=smem, size = 0x4, offset = 0x4, fixed_abs, tag = 'smem constant byte address 0x4 - core index']
  #allocation1 [shape = 'u32[144,128]{1,0:T(1,128)}', space=vmem, size = 0x12000, scoped, tag = 'internal scratch']
  #allocation2 [shape = 'f32[18,18,64]{2,1,0:T(8,128)}', space=vmem, size = 0x36000, scoped, tag = 'scratch operand']
  %s0 = inlined_call_operand.vmem [shape: f32[2,16,16,64], index: 0, kind: input, shape index: {}]
  %s1 = inlined_call_operand.vmem [shape: f32[64,64], index: 1, kind: input, shape index: {}]
  %s2 = inlined_call_operand.vmem [shape: f32[1,64], index: 2, kind: input, shape index: {}]
  %s3 = inlined_call_operand.vmem [shape: f32[3,3,64,64], index: 3, kind: input, shape index: {}]
  %s4 = inlined_call_operand.vmem [shape: f32[1,64], index: 4, kind: input, shape index: {}]
  %s5 = inlined_call_operand.vmem [shape: f32[2,16,16,32], index: 5, kind: input, shape index: {}]
  %s6 = inlined_call_operand.vmem [shape: f32[32,64], index: 6, kind: input, shape index: {}]
  %s7 = inlined_call_operand.vmem [shape: f32[1,64], index: 7, kind: input, shape index: {}]
  %s8 = inlined_call_operand.hbm [shape: f32[2,16,16,64], index: 8, kind: output, shape index: {}]
  %s9 = sld [smem:[#allocation0]]
  $region65: #{residual_block_forward.3} parent=0
    _
  %s11 = ssub.s32 1, %s9
  %s12 = scalar_select 0, %s11, %s9
  $region1: #{residual_block_forward.3} parent=0
    #allocation3 [shape = 'u8[262144]{0}', space=vmem, size = 0x40000, scoped, tag = 'output window, operand 0']
    #allocation4 [shape = 's32[2]{0}', space=sflag, size = 0x8, scoped, tag = 'scoped memory for residual_block_forward.3']
    %13 = vsyncpa [#allocation4], 0
    %s14 = scalar_lea.sflag [#allocation4], 1
    %15 = vsyncpa %s14, 0
    loop: start=0, step=1, limit=4
    $region2: #{residual_block_forward.3} parent=1 // loop_pre_header
      _
    $region3: #{residual_block_forward.3} parent=1 // loop_header
      %s17 = sphi 0, %s21
      %p18 = scmp.ge.s32.totalorder %s17, 4
      %s27 = sphi 0, %s29
      %s30 = sphi 0, %s27
      %s31 = sphi 0, %s30
      %s47 = sphi 0, %s31
      %s51 = sphi 0, %s51
      %s53 = sphi 0, %s51
      %s54 = sphi 0, %s53
      %s68 = sphi 0, %s54
      %s72 = sphi 0, %s72
      %s74 = sphi 0, %s72
      %s75 = sphi 0, %s74
      %s89 = sphi 0, %s75
      %s93 = sphi 0, %s93
      %s95 = sphi 0, %s93
      %s96 = sphi 0, %s95
      %s110 = sphi 0, %s96
      %s114 = sphi 0, %s114
      %s116 = sphi 0, %s114
      %s117 = sphi 0, %s116
      %s131 = sphi 0, %s117
      %s137 = sphi 0, %s139
      %s140 = sphi 0, %s137
      %s141 = sphi 0, %s140
      %s157 = sphi 0, %s141
      %s161 = sphi 0, %s161
      %s163 = sphi 0, %s161
      %s164 = sphi 0, %s163
      %s178 = sphi 0, %s164
      %s182 = sphi 0, %s182
      %s184 = sphi 0, %s182
      %s185 = sphi 0, %s184
      %s199 = sphi 0, %s185
      %s205 = sphi 0, %s207
      %s208 = sphi 0, %s205
      %s209 = sphi 0, %s208
      %s225 = sphi 0, %s209
    $region4: #{residual_block_forward.3} parent=1 // loop_header_branch
      %20 = sbr.rel (%p18) target = $region8
    $region5: #{residual_block_forward.3} parent=1 // loop_body
      %s22 = ssub.s32 %s17, 1
      %s23 = ssub.s32 %s17, 2
      %s24 = sadd.s32 %s17, 1
      %s25 = ssub.s32 %s17, %s24
      %p26 = scmp.eq.s32.totalorder %s25, 0
      %s28 = sadd.s32 %s27, 1
      %s29 = scalar_select %p26, %s27, %s28
      %p32 = pneg %p26
      %p33 = scmp.eq.s32.totalorder %s17, 1
      %p34 = por %p32, %p33
      %p35 = scmp.ne.s32.totalorder %s27, %s30
      %p36 = scmp.eq.s32.totalorder %s17, 0
      %p37 = por %p35, %p36
      %p38 = scmp.ne.s32.totalorder %s27, %s30
      %p39 = scmp.eq.s32.totalorder %s22, 1
      %p40 = por %p38, %p39
      %p41 = scmp.ne.s32.totalorder %s30, %s31
      %p42 = scmp.eq.s32.totalorder %s22, 0
      %p43 = por %p41, %p42
      %p44 = scmp.ne.s32.totalorder %s30, %s31
      %p45 = scmp.eq.s32.totalorder %s23, 1
      %p46 = por %p44, %p45
      %p48 = scmp.ne.s32.totalorder %s31, %s47
      %p49 = scmp.eq.s32.totalorder %s23, 0
      %p50 = por %p48, %p49
      %s52 = sadd.s32 %s51, 1
      %p55 = scmp.eq.s32.totalorder %s17, 1
      %p56 = scmp.ne.s32.totalorder %s51, %s53
      %p57 = scmp.eq.s32.totalorder %s17, 0
      %p58 = por %p56, %p57
      %p59 = scmp.ne.s32.totalorder %s51, %s53
      %p60 = scmp.eq.s32.totalorder %s22, 1
      %p61 = por %p59, %p60
      %p62 = scmp.ne.s32.totalorder %s53, %s54
      %p63 = scmp.eq.s32.totalorder %s22, 0
      %p64 = por %p62, %p63
      %p65 = scmp.ne.s32.totalorder %s53, %s54
      %p66 = scmp.eq.s32.totalorder %s23, 1
      %p67 = por %p65, %p66
      %p69 = scmp.ne.s32.totalorder %s54, %s68
      %p70 = scmp.eq.s32.totalorder %s23, 0
      %p71 = por %p69, %p70
      %s73 = sadd.s32 %s72, 1
      %p76 = scmp.eq.s32.totalorder %s17, 1
      %p77 = scmp.ne.s32.totalorder %s72, %s74
      %p78 = scmp.eq.s32.totalorder %s17, 0
      %p79 = por %p77, %p78
      %p80 = scmp.ne.s32.totalorder %s72, %s74
      %p81 = scmp.eq.s32.totalorder %s22, 1
      %p82 = por %p80, %p81
      %p83 = scmp.ne.s32.totalorder %s74, %s75
      %p84 = scmp.eq.s32.totalorder %s22, 0
      %p85 = por %p83, %p84
      %p86 = scmp.ne.s32.totalorder %s74, %s75
      %p87 = scmp.eq.s32.totalorder %s23, 1
      %p88 = por %p86, %p87
      %p90 = scmp.ne.s32.totalorder %s75, %s89
      %p91 = scmp.eq.s32.totalorder %s23, 0
      %p92 = por %p90, %p91
      %s94 = sadd.s32 %s93, 1
      %p97 = scmp.eq.s32.totalorder %s17, 1
      %p98 = scmp.ne.s32.totalorder %s93, %s95
      %p99 = scmp.eq.s32.totalorder %s17, 0
      %p100 = por %p98, %p99
      %p101 = scmp.ne.s32.totalorder %s93, %s95
      %p102 = scmp.eq.s32.totalorder %s22, 1
      %p103 = por %p101, %p102
      %p104 = scmp.ne.s32.totalorder %s95, %s96
      %p105 = scmp.eq.s32.totalorder %s22, 0
      %p106 = por %p104, %p105
      %p107 = scmp.ne.s32.totalorder %s95, %s96
      %p108 = scmp.eq.s32.totalorder %s23, 1
      %p109 = por %p107, %p108
      %p111 = scmp.ne.s32.totalorder %s96, %s110
      %p112 = scmp.eq.s32.totalorder %s23, 0
      %p113 = por %p111, %p112
      %s115 = sadd.s32 %s114, 1
      %p118 = scmp.eq.s32.totalorder %s17, 1
      %p119 = scmp.ne.s32.totalorder %s114, %s116
      %p120 = scmp.eq.s32.totalorder %s17, 0
      %p121 = por %p119, %p120
      %p122 = scmp.ne.s32.totalorder %s114, %s116
      %p123 = scmp.eq.s32.totalorder %s22, 1
      %p124 = por %p122, %p123
      %p125 = scmp.ne.s32.totalorder %s116, %s117
      %p126 = scmp.eq.s32.totalorder %s22, 0
      %p127 = por %p125, %p126
      %p128 = scmp.ne.s32.totalorder %s116, %s117
      %p129 = scmp.eq.s32.totalorder %s23, 1
      %p130 = por %p128, %p129
      %p132 = scmp.ne.s32.totalorder %s117, %s131
      %p133 = scmp.eq.s32.totalorder %s23, 0
      %p134 = por %p132, %p133
      %s135 = ssub.s32 %s17, %s24
      %p136 = scmp.eq.s32.totalorder %s135, 0
      %s138 = sadd.s32 %s137, 1
      %s139 = scalar_select %p136, %s137, %s138
      %p142 = pneg %p136
      %p143 = scmp.eq.s32.totalorder %s17, 1
      %p144 = por %p142, %p143
      %p145 = scmp.ne.s32.totalorder %s137, %s140
      %p146 = scmp.eq.s32.totalorder %s17, 0
      %p147 = por %p145, %p146
      %p148 = scmp.ne.s32.totalorder %s137, %s140
      %p149 = scmp.eq.s32.totalorder %s22, 1
      %p150 = por %p148, %p149
      %p151 = scmp.ne.s32.totalorder %s140, %s141
      %p152 = scmp.eq.s32.totalorder %s22, 0
      %p153 = por %p151, %p152
      %p154 = scmp.ne.s32.totalorder %s140, %s141
      %p155 = scmp.eq.s32.totalorder %s23, 1
      %p156 = por %p154, %p155
      %p158 = scmp.ne.s32.totalorder %s141, %s157
      %p159 = scmp.eq.s32.totalorder %s23, 0
      %p160 = por %p158, %p159
      %s162 = sadd.s32 %s161, 1
      %p165 = scmp.eq.s32.totalorder %s17, 1
      %p166 = scmp.ne.s32.totalorder %s161, %s163
      %p167 = scmp.eq.s32.totalorder %s17, 0
      %p168 = por %p166, %p167
      %p169 = scmp.ne.s32.totalorder %s161, %s163
      %p170 = scmp.eq.s32.totalorder %s22, 1
      %p171 = por %p169, %p170
      %p172 = scmp.ne.s32.totalorder %s163, %s164
      %p173 = scmp.eq.s32.totalorder %s22, 0
      %p174 = por %p172, %p173
      %p175 = scmp.ne.s32.totalorder %s163, %s164
      %p176 = scmp.eq.s32.totalorder %s23, 1
      %p177 = por %p175, %p176
      %p179 = scmp.ne.s32.totalorder %s164, %s178
      %p180 = scmp.eq.s32.totalorder %s23, 0
      %p181 = por %p179, %p180
      %s183 = sadd.s32 %s182, 1
      %p186 = scmp.eq.s32.totalorder %s17, 1
      %p187 = scmp.ne.s32.totalorder %s182, %s184
      %p188 = scmp.eq.s32.totalorder %s17, 0
      %p189 = por %p187, %p188
      %p190 = scmp.ne.s32.totalorder %s182, %s184
      %p191 = scmp.eq.s32.totalorder %s22, 1
      %p192 = por %p190, %p191
      %p193 = scmp.ne.s32.totalorder %s184, %s185
      %p194 = scmp.eq.s32.totalorder %s22, 0
      %p195 = por %p193, %p194
      %p196 = scmp.ne.s32.totalorder %s184, %s185
      %p197 = scmp.eq.s32.totalorder %s23, 1
      %p198 = por %p196, %p197
      %p200 = scmp.ne.s32.totalorder %s185, %s199
      %p201 = scmp.eq.s32.totalorder %s23, 0
      %p202 = por %p200, %p201
      %s203 = ssub.s32 %s17, %s24
      %p204 = scmp.eq.s32.totalorder %s203, 0
      %s206 = sadd.s32 %s205, 1
      %s207 = scalar_select %p204, %s205, %s206
      %p210 = pneg %p204
      %p211 = scmp.eq.s32.totalorder %s17, 1
      %p212 = por %p210, %p211
      %p213 = scmp.ne.s32.totalorder %s205, %s208
      %p214 = scmp.eq.s32.totalorder %s17, 0
      %p215 = por %p213, %p214
      %p216 = scmp.ne.s32.totalorder %s205, %s208
      %p217 = scmp.eq.s32.totalorder %s22, 1
      %p218 = por %p216, %p217
      %p219 = scmp.ne.s32.totalorder %s208, %s209
      %p220 = scmp.eq.s32.totalorder %s22, 0
      %p221 = por %p219, %p220
      %p222 = scmp.ne.s32.totalorder %s208, %s209
      %p223 = scmp.eq.s32.totalorder %s23, 1
      %p224 = por %p222, %p223
      %p226 = scmp.ne.s32.totalorder %s209, %s225
      %p227 = scmp.eq.s32.totalorder %s23, 0
      %p228 = por %p226, %p227
      %p229 = scmp.le.s32.totalorder 1, %s17
      %p230 = scmp.lt.s32.totalorder %s17, 3
      %p231 = pnand %p229, %p230
      %p232 = pneg %p231
      // Predicated region
      $region9: #{residual_block_forward.3} parent=5 // pred_check
        _
      $region10: #{residual_block_forward.3} parent=5 // pred_check_branch
        %234 = sbr.rel (%p231) target = $region12
      $region11: #{residual_block_forward.3} parent=5 // pred_region
        %s235 = ssub.s32 %s17, 1
        // Predicated region
        $region13: #{residual_block_forward.3} parent=11 // pred_check
          %p236 = pneg %p64
        $region14: #{residual_block_forward.3} parent=11 // pred_check_branch
          %238 = sbr.rel (%p236) target = $region16
        $region15: #{residual_block_forward.3} parent=11 // pred_region
          _
        $region16: #{residual_block_forward.3} parent=11 // pred_fallthru
          _
        // Predicated region
        $region17: #{residual_block_forward.3} parent=11 // pred_check
          %p239 = pneg %p85
        $region18: #{residual_block_forward.3} parent=11 // pred_check_branch
          %241 = sbr.rel (%p239) target = $region20
        $region19: #{residual_block_forward.3} parent=11 // pred_region
          _
        $region20: #{residual_block_forward.3} parent=11 // pred_fallthru
          _
        // Predicated region
        $region21: #{residual_block_forward.3} parent=11 // pred_check
          %p242 = pneg %p106
        $region22: #{residual_block_forward.3} parent=11 // pred_check_branch
          %244 = sbr.rel (%p242) target = $region24
        $region23: #{residual_block_forward.3} parent=11 // pred_region
          _
        $region24: #{residual_block_forward.3} parent=11 // pred_fallthru
          _
        // Predicated region
        $region25: #{residual_block_forward.3} parent=11 // pred_check
          %p245 = pneg %p127
        $region26: #{residual_block_forward.3} parent=11 // pred_check_branch
          %247 = sbr.rel (%p245) target = $region28
        $region27: #{residual_block_forward.3} parent=11 // pred_region
          _
        $region28: #{residual_block_forward.3} parent=11 // pred_fallthru
          _
        // Predicated region
        $region29: #{residual_block_forward.3} parent=11 // pred_check
          %p248 = pneg %p174
        $region30: #{residual_block_forward.3} parent=11 // pred_check_branch
          %250 = sbr.rel (%p248) target = $region32
        $region31: #{residual_block_forward.3} parent=11 // pred_region
          _
        $region32: #{residual_block_forward.3} parent=11 // pred_fallthru
          _
        // Predicated region
        $region33: #{residual_block_forward.3} parent=11 // pred_check
          %p251 = pneg %p195
        $region34: #{residual_block_forward.3} parent=11 // pred_check_branch
          %253 = sbr.rel (%p251) target = $region36
        $region35: #{residual_block_forward.3} parent=11 // pred_region
          _
        $region36: #{residual_block_forward.3} parent=11 // pred_fallthru
          _
      $region12: #{residual_block_forward.3} parent=5 // pred_fallthru
        _
      %p254 = scmp.lt.s32.totalorder %s17, 2
      // Predicated region
      $region37: #{residual_block_forward.3} parent=5 // pred_check
        %p255 = pneg %p254
      $region38: #{residual_block_forward.3} parent=5 // pred_check_branch
        %257 = sbr.rel (%p255) target = $region40
      $region39: #{residual_block_forward.3} parent=5 // pred_region
        // Predicated region
        $region41: #{residual_block_forward.3} parent=39 // pred_check
          %p258 = pneg %p37
        $region42: #{residual_block_forward.3} parent=39 // pred_check_branch
          %260 = sbr.rel (%p258) target = $region44
        $region43: #{residual_block_forward.3} parent=39 // pred_region
          %p261 = scmp.lt.s32.totalorder %s17, 1
          %s262 = scalar_select %p261, %s17, 1
          %s263 = smul.addr %s262, 32
          %s264 = smul.addr %s263, 8
          %s265 = scalar_lea.vmem %s0, %s264
        $region44: #{residual_block_forward.3} parent=39 // pred_fallthru
          _
        // Predicated region
        $region45: #{residual_block_forward.3} parent=39 // pred_check
          %p266 = pneg %p147
        $region46: #{residual_block_forward.3} parent=39 // pred_check_branch
          %268 = sbr.rel (%p266) target = $region48
        $region47: #{residual_block_forward.3} parent=39 // pred_region
          %p269 = scmp.lt.s32.totalorder %s17, 1
          %s270 = scalar_select %p269, %s17, 1
          %s271 = smul.addr %s270, 32
          %s272 = smul.addr %s271, 8
          %s273 = scalar_lea.vmem %s5, %s272
        $region48: #{residual_block_forward.3} parent=39 // pred_fallthru
          _
      $region40: #{residual_block_forward.3} parent=5 // pred_fallthru
        _
      %p274 = scmp.le.s32.totalorder 1, %s17
      %p275 = scmp.lt.s32.totalorder %s17, 3
      %p276 = pnand %p274, %p275
      %p277 = pneg %p276
      // Predicated region
      $region49: #{residual_block_forward.3} parent=5 // pred_check
        _
      $region50: #{residual_block_forward.3} parent=5 // pred_check_branch
        %279 = sbr.rel (%p276) target = $region52
      $region51: #{residual_block_forward.3} parent=5 // pred_region
        %s280 = ssub.s32 %s17, 1
        %p281 = scmp.lt.s32.totalorder %s22, 1
        %s282 = scalar_select %p281, %s22, 1
        %s283 = smul.addr %s282, 32
        %s284 = smul.addr %s283, 8
        %s285 = scalar_lea.vmem %s0, %s284
        %p286 = pneg %p43
        %p287 = pneg %p40
        %p288 = pneg %p64
        %p289 = pneg %p61
        %p290 = pneg %p85
        %p291 = pneg %p82
        %p292 = pneg %p106
        %p293 = pneg %p103
        %p294 = pneg %p127
        %p295 = pneg %p124
        %p296 = scmp.lt.s32.totalorder %s22, 1
        %s297 = scalar_select %p296, %s22, 1
        %s298 = smul.addr %s297, 32
        %s299 = smul.addr %s298, 8
        %s300 = scalar_lea.vmem %s5, %s299
        %p301 = pneg %p153
        %p302 = pneg %p150
        %p303 = pneg %p174
        %p304 = pneg %p171
        %p305 = pneg %p195
        %p306 = pneg %p192
        %p307 = pneg %p221
        %p308 = pneg %p218
        %s309 = sand.u32 %s208, 1
        %s310 = scalar_lea.sflag [#allocation4], %s309
        %s311 = sand.u32 %s208, 1
        %s312 = smul.addr %s311, 256
        %s313 = scalar_lea.vmem [#allocation3], %s312
        %p314 = scmp.lt.s32.totalorder %s22, 1
        %s315 = scalar_select %p314, %s22, 1
        %s316 = smul.addr %s315, 32
        %s317 = smul.addr %s316, 8
        %s318 = scalar_lea.vmem %s0, %s317
        %p319 = scmp.lt.s32.totalorder %s22, 1
        %s320 = scalar_select %p319, %s22, 1
        %s321 = smul.addr %s320, 32
        %s322 = smul.addr %s321, 8
        %s323 = scalar_lea.vmem %s5, %s322
        %v324 = vld [vmem:[%s318] sm:$0xff]
        %v325 = vld [vmem:[%s318 + $0x8] sm:$0xff]
        %v326 = vld [vmem:[%s318 + $0x10] sm:$0xff]
        %v327 = vld [vmem:[%s318 + $0x18] sm:$0xff]
        %v328 = vld [vmem:[%s318 + $0x20] sm:$0xff]
        %v329 = vld [vmem:[%s318 + $0x28] sm:$0xff]
        %v330 = vld [vmem:[%s318 + $0x30] sm:$0xff]
        %v331 = vld [vmem:[%s318 + $0x38] sm:$0xff]
        %v332 = vld [vmem:[%s318 + $0x40] sm:$0xff]
        %v333 = vld [vmem:[%s318 + $0x48] sm:$0xff]
        %v334 = vld [vmem:[%s318 + $0x50] sm:$0xff]
        %v335 = vld [vmem:[%s318 + $0x58] sm:$0xff]
        %v336 = vld [vmem:[%s318 + $0x60] sm:$0xff]
        %v337 = vld [vmem:[%s318 + $0x68] sm:$0xff]
        %v338 = vld [vmem:[%s318 + $0x70] sm:$0xff]
        %v339 = vld [vmem:[%s318 + $0x78] sm:$0xff]
        %v340 = vld [vmem:[%s318 + $0x80] sm:$0xff]
        %v341 = vld [vmem:[%s318 + $0x88] sm:$0xff]
        %v342 = vld [vmem:[%s318 + $0x90] sm:$0xff]
        %v343 = vld [vmem:[%s318 + $0x98] sm:$0xff]
        %v344 = vld [vmem:[%s318 + $0xa0] sm:$0xff]
        %v345 = vld [vmem:[%s318 + $0xa8] sm:$0xff]
        %v346 = vld [vmem:[%s318 + $0xb0] sm:$0xff]
        %v347 = vld [vmem:[%s318 + $0xb8] sm:$0xff]
        %v348 = vld [vmem:[%s318 + $0xc0] sm:$0xff]
        %v349 = vld [vmem:[%s318 + $0xc8] sm:$0xff]
        %v350 = vld [vmem:[%s318 + $0xd0] sm:$0xff]
        %v351 = vld [vmem:[%s318 + $0xd8] sm:$0xff]
        %v352 = vld [vmem:[%s318 + $0xe0] sm:$0xff]
        %v353 = vld [vmem:[%s318 + $0xe8] sm:$0xff]
        %v354 = vld [vmem:[%s318 + $0xf0] sm:$0xff]
        %v355 = vld [vmem:[%s318 + $0xf8] sm:$0xff]
        %vm356 = vcmask 523264
        %v357 = vsel %vm356, %v324, 0.0
        %v358 = vsel %vm356, %v326, 0.0
        %v359 = vadd.f32 %v357, %v358
        %v360 = vsel %vm356, %v328, 0.0
        %v361 = vadd.f32 %v359, %v360
        %v362 = vsel %vm356, %v330, 0.0
        %v363 = vadd.f32 %v361, %v362
        %v364 = vsel %vm356, %v332, 0.0
        %v365 = vadd.f32 %v363, %v364
        %v366 = vsel %vm356, %v334, 0.0
        %v367 = vadd.f32 %v365, %v366
        %v368 = vsel %vm356, %v336, 0.0
        %v369 = vadd.f32 %v367, %v368
        %v370 = vsel %vm356, %v338, 0.0
        %v371 = vadd.f32 %v369, %v370
        %v372 = vsel %vm356, %v340, 0.0
        %v373 = vadd.f32 %v371, %v372
        %v374 = vsel %vm356, %v342, 0.0
        %v375 = vadd.f32 %v373, %v374
        %v376 = vsel %vm356, %v344, 0.0
        %v377 = vadd.f32 %v375, %v376
        %v378 = vsel %vm356, %v346, 0.0
        %v379 = vadd.f32 %v377, %v378
        %v380 = vsel %vm356, %v348, 0.0
        %v381 = vadd.f32 %v379, %v380
        %v382 = vsel %vm356, %v350, 0.0
        %v383 = vadd.f32 %v381, %v382
        %v384 = vsel %vm356, %v352, 0.0
        %v385 = vadd.f32 %v383, %v384
        %v386 = vsel %vm356, %v354, 0.0
        %v387 = vadd.f32 %v385, %v386
        %v388 = vsel %vm356, %v325, 0.0
        %v389 = vsel %vm356, %v327, 0.0
        %v390 = vadd.f32 %v388, %v389
        %v391 = vsel %vm356, %v329, 0.0
        %v392 = vadd.f32 %v390, %v391
        %v393 = vsel %vm356, %v331, 0.0
        %v394 = vadd.f32 %v392, %v393
        %v395 = vsel %vm356, %v333, 0.0
        %v396 = vadd.f32 %v394, %v395
        %v397 = vsel %vm356, %v335, 0.0
        %v398 = vadd.f32 %v396, %v397
        %v399 = vsel %vm356, %v337, 0.0
        %v400 = vadd.f32 %v398, %v399
        %v401 = vsel %vm356, %v339, 0.0
        %v402 = vadd.f32 %v400, %v401
        %v403 = vsel %vm356, %v341, 0.0
        %v404 = vadd.f32 %v402, %v403
        %v405 = vsel %vm356, %v343, 0.0
        %v406 = vadd.f32 %v404, %v405
        %v407 = vsel %vm356, %v345, 0.0
        %v408 = vadd.f32 %v406, %v407
        %v409 = vsel %vm356, %v347, 0.0
        %v410 = vadd.f32 %v408, %v409
        %v411 = vsel %vm356, %v349, 0.0
        %v412 = vadd.f32 %v410, %v411
        %v413 = vsel %vm356, %v351, 0.0
        %v414 = vadd.f32 %v412, %v413
        %v415 = vsel %vm356, %v353, 0.0
        %v416 = vadd.f32 %v414, %v415
        %v417 = vsel %vm356, %v355, 0.0
        %v418 = vadd.f32 %v416, %v417
        %v419 = vsel %vm356, %v387, 0.0
        %v420 = vsel %vm356, %v418, 0.0
        %v421 = vadd.f32 %v419, %v420
        %v422 = vrot.slane %v421, 4
        %v423 = vadd.f32 %v421, %v422
        %v424 = vrot.slane %v423, 2
        %v425 = vadd.f32 %v423, %v424
        %v426 = vrot.slane %v425, 1
        %v427 = vadd.f32 %v425, %v426
        %v428 = vmul.f32 %v324, %v324
        %v429 = vmul.f32 %v325, %v325
        %v430 = vmul.f32 %v326, %v326
        %v431 = vmul.f32 %v327, %v327
        %v432 = vmul.f32 %v328, %v328
        %v433 = vmul.f32 %v329, %v329
        %v434 = vmul.f32 %v330, %v330
        %v435 = vmul.f32 %v331, %v331
        %v436 = vmul.f32 %v332, %v332
        %v437 = vmul.f32 %v333, %v333
        %v438 = vmul.f32 %v334, %v334
        %v439 = vmul.f32 %v335, %v335
        %v440 = vmul.f32 %v336, %v336
        %v441 = vmul.f32 %v337, %v337
        %v442 = vmul.f32 %v338, %v338
        %v443 = vmul.f32 %v339, %v339
        %v444 = vmul.f32 %v340, %v340
        %v445 = vmul.f32 %v341, %v341
        %v446 = vmul.f32 %v342, %v342
        %v447 = vmul.f32 %v343, %v343
        %v448 = vmul.f32 %v344, %v344
        %v449 = vmul.f32 %v345, %v345
        %v450 = vmul.f32 %v346, %v346
        %v451 = vmul.f32 %v347, %v347
        %v452 = vmul.f32 %v348, %v348
        %v453 = vmul.f32 %v349, %v349
        %v454 = vmul.f32 %v350, %v350
        %v455 = vmul.f32 %v351, %v351
        %v456 = vmul.f32 %v352, %v352
        %v457 = vmul.f32 %v353, %v353
        %v458 = vmul.f32 %v354, %v354
        %v459 = vmul.f32 %v355, %v355
        %v460 = vsel %vm356, %v428, 0.0
        %v461 = vsel %vm356, %v430, 0.0
        %v462 = vadd.f32 %v460, %v461
        %v463 = vsel %vm356, %v432, 0.0
        %v464 = vadd.f32 %v462, %v463
        %v465 = vsel %vm356, %v434, 0.0
        %v466 = vadd.f32 %v464, %v465
        %v467 = vsel %vm356, %v436, 0.0
        %v468 = vadd.f32 %v466, %v467
        %v469 = vsel %vm356, %v438, 0.0
        %v470 = vadd.f32 %v468, %v469
        %v471 = vsel %vm356, %v440, 0.0
        %v472 = vadd.f32 %v470, %v471
        %v473 = vsel %vm356, %v442, 0.0
        %v474 = vadd.f32 %v472, %v473
        %v475 = vsel %vm356, %v444, 0.0
        %v476 = vadd.f32 %v474, %v475
        %v477 = vsel %vm356, %v446, 0.0
        %v478 = vadd.f32 %v476, %v477
        %v479 = vsel %vm356, %v448, 0.0
        %v480 = vadd.f32 %v478, %v479
        %v481 = vsel %vm356, %v450, 0.0
        %v482 = vadd.f32 %v480, %v481
        %v483 = vsel %vm356, %v452, 0.0
        %v484 = vadd.f32 %v482, %v483
        %v485 = vsel %vm356, %v454, 0.0
        %v486 = vadd.f32 %v484, %v485
        %v487 = vsel %vm356, %v456, 0.0
        %v488 = vadd.f32 %v486, %v487
        %v489 = vsel %vm356, %v458, 0.0
        %v490 = vadd.f32 %v488, %v489
        %v491 = vsel %vm356, %v429, 0.0
        %v492 = vsel %vm356, %v431, 0.0
        %v493 = vadd.f32 %v491, %v492
        %v494 = vsel %vm356, %v433, 0.0
        %v495 = vadd.f32 %v493, %v494
        %v496 = vsel %vm356, %v435, 0.0
        %v497 = vadd.f32 %v495, %v496
        %v498 = vsel %vm356, %v437, 0.0
        %v499 = vadd.f32 %v497, %v498
        %v500 = vsel %vm356, %v439, 0.0
        %v501 = vadd.f32 %v499, %v500
        %v502 = vsel %vm356, %v441, 0.0
        %v503 = vadd.f32 %v501, %v502
        %v504 = vsel %vm356, %v443, 0.0
        %v505 = vadd.f32 %v503, %v504
        %v506 = vsel %vm356, %v445, 0.0
        %v507 = vadd.f32 %v505, %v506
        %v508 = vsel %vm356, %v447, 0.0
        %v509 = vadd.f32 %v507, %v508
        %v510 = vsel %vm356, %v449, 0.0
        %v511 = vadd.f32 %v509, %v510
        %v512 = vsel %vm356, %v451, 0.0
        %v513 = vadd.f32 %v511, %v512
        %v514 = vsel %vm356, %v453, 0.0
        %v515 = vadd.f32 %v513, %v514
        %v516 = vsel %vm356, %v455, 0.0
        %v517 = vadd.f32 %v515, %v516
        %v518 = vsel %vm356, %v457, 0.0
        %v519 = vadd.f32 %v517, %v518
        %v520 = vsel %vm356, %v459, 0.0
        %v521 = vadd.f32 %v519, %v520
        %v522 = vsel %vm356, %v490, 0.0
        %v523 = vsel %vm356, %v521, 0.0
        %v524 = vadd.f32 %v522, %v523
        %v525 = vrot.slane %v524, 4
        %v526 = vadd.f32 %v524, %v525
        %v527 = vrot.slane %v526, 2
        %v528 = vadd.f32 %v526, %v527
        %v529 = vrot.slane %v528, 1
        %v530 = vadd.f32 %v528, %v529
        %v531 = vld [vmem:[%s1] sm:$0xff]
        %v532 = vld [vmem:[%s1 + $0x8] sm:$0xff]
        %v533 = vld [vmem:[%s1 + $0x10] sm:$0xff]
        %v534 = vld [vmem:[%s1 + $0x18] sm:$0xff]
        %v535 = vld [vmem:[%s1 + $0x20] sm:$0xff]
        %v536 = vld [vmem:[%s1 + $0x28] sm:$0xff]
        %v537 = vld [vmem:[%s1 + $0x30] sm:$0xff]
        %v538 = vld [vmem:[%s1 + $0x38] sm:$0xff]
        %v540 = vsel %vm356, %v427, 0
        %542 = vmatprep.subr.mxu0 0.0
        %543 = vmatpush1.msra.mxu0 %v531
        %544 = vmatprep.subr.mxu0 0.0
        %545 = vmatpush1.msra.mxu0 %v532
        %546 = vmatprep.subr.mxu0 0.0
        %547 = vmatpush1.msra.mxu0 %v533
        %548 = vmatprep.subr.mxu0 0.0
        %549 = vmatpush1.msra.mxu0 %v534
        %550 = vmatprep.subr.mxu0 0.0
        %551 = vmatpush1.msra.mxu0 %v535
        %552 = vmatprep.subr.mxu0 0.0
        %553 = vmatpush1.msra.mxu0 %v536
        %554 = vmatprep.subr.mxu0 0.0
        %555 = vmatpush1.msra.mxu0 %v537
        %556 = vmatprep.subr.mxu0 0.0
        %557 = vmatpush1.msra.mxu0 %v538
        %558 = vmatprep.subr.mxu0 0.0
        %559 = vmatpush1.msra.mxu0 0.0
        %560 = vmatprep.subr.mxu0 0.0
        %561 = vmatpush1.msra.mxu0 0.0
        %562 = vmatprep.subr.mxu0 0.0
        %563 = vmatpush1.msra.mxu0 0.0
        %564 = vmatprep.subr.mxu0 0.0
        %565 = vmatpush1.msra.mxu0 0.0
        %566 = vmatprep.subr.mxu0 0.0
        %567 = vmatpush1.msra.mxu0 0.0
        %568 = vmatprep.subr.mxu0 0.0
        %569 = vmatpush1.msra.mxu0 0.0
        %570 = vmatprep.subr.mxu0 0.0
        %571 = vmatpush1.msra.mxu0 0.0
        %572 = vmatprep.subr.mxu0 0.0
        %573 = vmatpush1.msra.mxu0 0.0
        %574 = vmatprep.subr.mxu0 0.0
        %575 = vmatpush1.msra.mxu0 0.0
        %576 = vmatprep.subr.mxu0 0.0
        %577 = vmatpush1.msra.mxu0 0.0
        %578 = vmatprep.subr.mxu0 0.0
        %579 = vmatpush1.msra.mxu0 0.0
        %580 = vmatprep.subr.mxu0 0.0
        %581 = vmatpush1.msra.mxu0 0.0
        %582 = vmatprep.subr.mxu0 0.0
        %583 = vmatpush1.msra.mxu0 0.0
        %584 = vmatprep.subr.mxu0 0.0
        %585 = vmatpush1.msra.mxu0 0.0
        %586 = vmatprep.subr.mxu0 0.0
        %587 = vmatpush1.msra.mxu0 0.0
        %588 = vmatprep.subr.mxu0 0.0
        %589 = vmatpush1.msra.mxu0 0.0
        %590 = vmatprep.subr.mxu0 0.0
        %591 = vmatpush1.msra.mxu0 0.0
        %592 = vmatprep.subr.mxu0 0.0
        %593 = vmatpush1.msra.mxu0 0.0
        %594 = vmatprep.subr.mxu0 0.0
        %595 = vmatpush1.msra.mxu0 0.0
        %596 = vmatprep.subr.mxu0 0.0
        %597 = vmatpush1.msra.mxu0 0.0
        %598 = vmatprep.subr.mxu0 0.0
        %599 = vmatpush1.msra.mxu0 0.0
        %600 = vmatprep.subr.mxu0 0.0
        %601 = vmatpush1.msra.mxu0 0.0
        %602 = vmatprep.subr.mxu0 0.0
        %603 = vmatpush1.msra.mxu0 0.0
        %604 = vmatprep.subr.mxu0 0.0
        %605 = vmatpush1.msra.mxu0 0.0
        %606 = vmatprep.mubr.f32.mxu0 0.0
        %607 = vmatmul.mubr.f32.gmra.mrb[0].mxu0 %v540
        %v608 = vpop.f32.mrb[0].mxu0
        %v609 = vadd.f32 0.0, %v608
        %v610 = vpop.f32.mrb[0].mxu0
        %611 = vdwg.mxu0
        %v613 = vsel %vm356, %v530, 0
        %615 = vmatprep.subr.mxu0 0.0
        %616 = vmatpush1.msra.mxu0 %v531
        %617 = vmatprep.subr.mxu0 0.0
        %618 = vmatpush1.msra.mxu0 %v532
        %619 = vmatprep.subr.mxu0 0.0
        %620 = vmatpush1.msra.mxu0 %v533
        %621 = vmatprep.subr.mxu0 0.0
        %622 = vmatpush1.msra.mxu0 %v534
        %623 = vmatprep.subr.mxu0 0.0
        %624 = vmatpush1.msra.mxu0 %v535
        %625 = vmatprep.subr.mxu0 0.0
        %626 = vmatpush1.msra.mxu0 %v536
        %627 = vmatprep.subr.mxu0 0.0
        %628 = vmatpush1.msra.mxu0 %v537
        %629 = vmatprep.subr.mxu0 0.0
        %630 = vmatpush1.msra.mxu0 %v538
        %631 = vmatprep.subr.mxu0 0.0
        %632 = vmatpush1.msra.mxu0 0.0
        %633 = vmatprep.subr.mxu0 0.0
        %634 = vmatpush1.msra.mxu0 0.0
        %635 = vmatprep.subr.mxu0 0.0
        %636 = vmatpush1.msra.mxu0 0.0
        %637 = vmatprep.subr.mxu0 0.0
        %638 = vmatpush1.msra.mxu0 0.0
        %639 = vmatprep.subr.mxu0 0.0
        %640 = vmatpush1.msra.mxu0 0.0
        %641 = vmatprep.subr.mxu0 0.0
        %642 = vmatpush1.msra.mxu0 0.0
        %643 = vmatprep.subr.mxu0 0.0
        %644 = vmatpush1.msra.mxu0 0.0
        %645 = vmatprep.subr.mxu0 0.0
        %646 = vmatpush1.msra.mxu0 0.0
        %647 = vmatprep.subr.mxu0 0.0
        %648 = vmatpush1.msra.mxu0 0.0
        %649 = vmatprep.subr.mxu0 0.0
        %650 = vmatpush1.msra.mxu0 0.0
        %651 = vmatprep.subr.mxu0 0.0
        %652 = vmatpush1.msra.mxu0 0.0
        %653 = vmatprep.subr.mxu0 0.0
        %654 = vmatpush1.msra.mxu0 0.0
        %655 = vmatprep.subr.mxu0 0.0
        %656 = vmatpush1.msra.mxu0 0.0
        %657 = vmatprep.subr.mxu0 0.0
        %658 = vmatpush1.msra.mxu0 0.0
        %659 = vmatprep.subr.mxu0 0.0
        %660 = vmatpush1.msra.mxu0 0.0
        %661 = vmatprep.subr.mxu0 0.0
        %662 = vmatpush1.msra.mxu0 0.0
        %663 = vmatprep.subr.mxu0 0.0
        %664 = vmatpush1.msra.mxu0 0.0
        %665 = vmatprep.subr.mxu0 0.0
        %666 = vmatpush1.msra.mxu0 0.0
        %667 = vmatprep.subr.mxu0 0.0
        %668 = vmatpush1.msra.mxu0 0.0
        %669 = vmatprep.subr.mxu0 0.0
        %670 = vmatpush1.msra.mxu0 0.0
        %671 = vmatprep.subr.mxu0 0.0
        %672 = vmatpush1.msra.mxu0 0.0
        %673 = vmatprep.subr.mxu0 0.0
        %674 = vmatpush1.msra.mxu0 0.0
        %675 = vmatprep.subr.mxu0 0.0
        %676 = vmatpush1.msra.mxu0 0.0
        %677 = vmatprep.subr.mxu0 0.0
        %678 = vmatpush1.msra.mxu0 0.0
        %679 = vmatprep.mubr.f32.mxu0 0.0
        %680 = vmatmul.mubr.f32.gmra.mrb[0].mxu0 %v613
        %v681 = vpop.f32.mrb[0].mxu0
        %v682 = vadd.f32 0.0, %v681
        %v683 = vpop.f32.mrb[0].mxu0
        %684 = vdwg.mxu0
        %v685 = vmul.f32 %v609, %v609
        %v686 = vsub.f32 %v682, %v685
        %v687 = vmax.f32 %v686, 0.0
        %v688 = vadd.f32 %v687, 1e-05
        %v689 = vrsqrt.pop %v688
        %v690 = vld [vmem:[%s2] sm:$0x1]
        %v691 = vmul.f32 %v689, %v690
        %v692 = vsub.f32 0.0, %v609
        %v693 = vmul.f32 %v692, %v691
        %v694 = vlaneseq
        %v695 = vshrl.u32 %v694, 7
        %v696 = vsub.s32 0, %v695
        %v697 = vrot.slane %v691, %v696
        %v698 = vmul.f32 %v324, %v697
        %v699 = vmul.f32 %v325, %v697
        %v700 = vmul.f32 %v326, %v697
        %v701 = vmul.f32 %v327, %v697
        %v702 = vmul.f32 %v328, %v697
        %v703 = vmul.f32 %v329, %v697
        %v704 = vmul.f32 %v330, %v697
        %v705 = vmul.f32 %v331, %v697
        %v706 = vmul.f32 %v332, %v697
        %v707 = vmul.f32 %v333, %v697
        %v708 = vmul.f32 %v334, %v697
        %v709 = vmul.f32 %v335, %v697
        %v710 = vmul.f32 %v336, %v697
        %v711 = vmul.f32 %v337, %v697
        %v712 = vmul.f32 %v338, %v697
        %v713 = vmul.f32 %v339, %v697
        %v714 = vmul.f32 %v340, %v697
        %v715 = vmul.f32 %v341, %v697
        %v716 = vmul.f32 %v342, %v697
        %v717 = vmul.f32 %v343, %v697
        %v718 = vmul.f32 %v344, %v697
        %v719 = vmul.f32 %v345, %v697
        %v720 = vmul.f32 %v346, %v697
        %v721 = vmul.f32 %v347, %v697
        %v722 = vmul.f32 %v348, %v697
        %v723 = vmul.f32 %v349, %v697
        %v724 = vmul.f32 %v350, %v697
        %v725 = vmul.f32 %v351, %v697
        %v726 = vmul.f32 %v352, %v697
        %v727 = vmul.f32 %v353, %v697
        %v728 = vmul.f32 %v354, %v697
        %v729 = vmul.f32 %v355, %v697
        %v730 = vlaneseq
        %v731 = vshrl.u32 %v730, 7
        %v732 = vsub.s32 0, %v731
        %v733 = vrot.slane %v693, %v732
        %v734 = vadd.f32 %v698, %v733
        %v735 = vadd.f32 %v699, %v733
        %v736 = vadd.f32 %v700, %v733
        %v737 = vadd.f32 %v701, %v733
        %v738 = vadd.f32 %v702, %v733
        %v739 = vadd.f32 %v703, %v733
        %v740 = vadd.f32 %v704, %v733
        %v741 = vadd.f32 %v705, %v733
        %v742 = vadd.f32 %v706, %v733
        %v743 = vadd.f32 %v707, %v733
        %v744 = vadd.f32 %v708, %v733
        %v745 = vadd.f32 %v709, %v733
        %v746 = vadd.f32 %v710, %v733
        %v747 = vadd.f32 %v711, %v733
        %v748 = vadd.f32 %v712, %v733
        %v749 = vadd.f32 %v713, %v733
        %v750 = vadd.f32 %v714, %v733
        %v751 = vadd.f32 %v715, %v733
        %v752 = vadd.f32 %v716, %v733
        %v753 = vadd.f32 %v717, %v733
        %v754 = vadd.f32 %v718, %v733
        %v755 = vadd.f32 %v719, %v733
        %v756 = vadd.f32 %v720, %v733
        %v757 = vadd.f32 %v721, %v733
        %v758 = vadd.f32 %v722, %v733
        %v759 = vadd.f32 %v723, %v733
        %v760 = vadd.f32 %v724, %v733
        %v761 = vadd.f32 %v725, %v733
        %v762 = vadd.f32 %v726, %v733
        %v763 = vadd.f32 %v727, %v733
        %v764 = vadd.f32 %v728, %v733
        %v765 = vadd.f32 %v729, %v733
        %v766 = vxor.u32 %v734, 2147483648
        %v767 = vxor.u32 %v735, 2147483648
        %v768 = vxor.u32 %v736, 2147483648
        %v769 = vxor.u32 %v737, 2147483648
        %v770 = vxor.u32 %v738, 2147483648
        %v771 = vxor.u32 %v739, 2147483648
        %v772 = vxor.u32 %v740, 2147483648
        %v773 = vxor.u32 %v741, 2147483648
        %v774 = vxor.u32 %v742, 2147483648
        %v775 = vxor.u32 %v743, 2147483648
        %v776 = vxor.u32 %v744, 2147483648
        %v777 = vxor.u32 %v745, 2147483648
        %v778 = vxor.u32 %v746, 2147483648
        %v779 = vxor.u32 %v747, 2147483648
        %v780 = vxor.u32 %v748, 2147483648
        %v781 = vxor.u32 %v749, 2147483648
        %v782 = vxor.u32 %v750, 2147483648
        %v783 = vxor.u32 %v751, 2147483648
        %v784 = vxor.u32 %v752, 2147483648
        %v785 = vxor.u32 %v753, 2147483648
        %v786 = vxor.u32 %v754, 2147483648
        %v787 = vxor.u32 %v755, 2147483648
        %v788 = vxor.u32 %v756, 2147483648
        %v789 = vxor.u32 %v757, 2147483648
        %v790 = vxor.u32 %v758, 2147483648
        %v791 = vxor.u32 %v759, 2147483648
        %v792 = vxor.u32 %v760, 2147483648
        %v793 = vxor.u32 %v761, 2147483648
        %v794 = vxor.u32 %v762, 2147483648
        %v795 = vxor.u32 %v763, 2147483648
        %v796 = vxor.u32 %v764, 2147483648
        %v797 = vxor.u32 %v765, 2147483648
        %v798 = vmul.f32 %v766, 1.442695
        %v799 = vpow.pop %v798
        %v800 = vmul.f32 %v767, 1.442695
        %v801 = vpow.pop %v800
        %v802 = vmul.f32 %v768, 1.442695
        %v803 = vpow.pop %v802
        %v804 = vmul.f32 %v769, 1.442695
        %v805 = vpow.pop %v804
        %v806 = vmul.f32 %v770, 1.442695
        %v807 = vpow.pop %v806
        %v808 = vmul.f32 %v771, 1.442695
        %v809 = vpow.pop %v808
        %v810 = vmul.f32 %v772, 1.442695
        %v811 = vpow.pop %v810
        %v812 = vmul.f32 %v773, 1.442695
        %v813 = vpow.pop %v812
        %v814 = vmul.f32 %v774, 1.442695
        %v815 = vpow.pop %v814
        %v816 = vmul.f32 %v775, 1.442695
        %v817 = vpow.pop %v816
        %v818 = vmul.f32 %v776, 1.442695
        %v819 = vpow.pop %v818
        %v820 = vmul.f32 %v777, 1.442695
        %v821 = vpow.pop %v820
        %v822 = vmul.f32 %v778, 1.442695
        %v823 = vpow.pop %v822
        %v824 = vmul.f32 %v779, 1.442695
        %v825 = vpow.pop %v824
        %v826 = vmul.f32 %v780, 1.442695
        %v827 = vpow.pop %v826
        %v828 = vmul.f32 %v781, 1.442695
        %v829 = vpow.pop %v828
        %v830 = vmul.f32 %v782, 1.442695
        %v831 = vpow.pop %v830
        %v832 = vmul.f32 %v783, 1.442695
        %v833 = vpow.pop %v832
        %v834 = vmul.f32 %v784, 1.442695
        %v835 = vpow.pop %v834
        %v836 = vmul.f32 %v785, 1.442695
        %v837 = vpow.pop %v836
        %v838 = vmul.f32 %v786, 1.442695
        %v839 = vpow.pop %v838
        %v840 = vmul.f32 %v787, 1.442695
        %v841 = vpow.pop %v840
        %v842 = vmul.f32 %v788, 1.442695
        %v843 = vpow.pop %v842
        %v844 = vmul.f32 %v789, 1.442695
        %v845 = vpow.pop %v844
        %v846 = vmul.f32 %v790, 1.442695
        %v847 = vpow.pop %v846
        %v848 = vmul.f32 %v791, 1.442695
        %v849 = vpow.pop %v848
        %v850 = vmul.f32 %v792, 1.442695
        %v851 = vpow.pop %v850
        %v852 = vmul.f32 %v793, 1.442695
        %v853 = vpow.pop %v852
        %v854 = vmul.f32 %v794, 1.442695
        %v855 = vpow.pop %v854
        %v856 = vmul.f32 %v795, 1.442695
        %v857 = vpow.pop %v856
        %v858 = vmul.f32 %v796, 1.442695
        %v859 = vpow.pop %v858
        %v860 = vmul.f32 %v797, 1.442695
        %v861 = vpow.pop %v860
        %v862 = vadd.f32 %v799, 1.0
        %v863 = vadd.f32 %v801, 1.0
        %v864 = vadd.f32 %v803, 1.0
        %v865 = vadd.f32 %v805, 1.0
        %v866 = vadd.f32 %v807, 1.0
        %v867 = vadd.f32 %v809, 1.0
        %v868 = vadd.f32 %v811, 1.0
        %v869 = vadd.f32 %v813, 1.0
        %v870 = vadd.f32 %v815, 1.0
        %v871 = vadd.f32 %v817, 1.0
        %v872 = vadd.f32 %v819, 1.0
        %v873 = vadd.f32 %v821, 1.0
        %v874 = vadd.f32 %v823, 1.0
        %v875 = vadd.f32 %v825, 1.0
        %v876 = vadd.f32 %v827, 1.0
        %v877 = vadd.f32 %v829, 1.0
        %v878 = vadd.f32 %v831, 1.0
        %v879 = vadd.f32 %v833, 1.0
        %v880 = vadd.f32 %v835, 1.0
        %v881 = vadd.f32 %v837, 1.0
        %v882 = vadd.f32 %v839, 1.0
        %v883 = vadd.f32 %v841, 1.0
        %v884 = vadd.f32 %v843, 1.0
        %v885 = vadd.f32 %v845, 1.0
        %v886 = vadd.f32 %v847, 1.0
        %v887 = vadd.f32 %v849, 1.0
        %v888 = vadd.f32 %v851, 1.0
        %v889 = vadd.f32 %v853, 1.0
        %v890 = vadd.f32 %v855, 1.0
        %v891 = vadd.f32 %v857, 1.0
        %v892 = vadd.f32 %v859, 1.0
        %v893 = vadd.f32 %v861, 1.0
        %v894 = vrcp.pop %v862
        %v895 = vmul.f32 1.0, %v894
        %v896 = vrcp.pop %v863
        %v897 = vmul.f32 1.0, %v896
        %v898 = vrcp.pop %v864
        %v899 = vmul.f32 1.0, %v898
        %v900 = vrcp.pop %v865
        %v901 = vmul.f32 1.0, %v900
        %v902 = vrcp.pop %v866
        %v903 = vmul.f32 1.0, %v902
        %v904 = vrcp.pop %v867
        %v905 = vmul.f32 1.0, %v904
        %v906 = vrcp.pop %v868
        %v907 = vmul.f32 1.0, %v906
        %v908 = vrcp.pop %v869
        %v909 = vmul.f32 1.0, %v908
        %v910 = vrcp.pop %v870
        %v911 = vmul.f32 1.0, %v910
        %v912 = vrcp.pop %v871
        %v913 = vmul.f32 1.0, %v912
        %v914 = vrcp.pop %v872
        %v915 = vmul.f32 1.0, %v914
        %v916 = vrcp.pop %v873
        %v917 = vmul.f32 1.0, %v916
        %v918 = vrcp.pop %v874
        %v919 = vmul.f32 1.0, %v918
        %v920 = vrcp.pop %v875
        %v921 = vmul.f32 1.0, %v920
        %v922 = vrcp.pop %v876
        %v923 = vmul.f32 1.0, %v922
        %v924 = vrcp.pop %v877
        %v925 = vmul.f32 1.0, %v924
        %v926 = vrcp.pop %v878
        %v927 = vmul.f32 1.0, %v926
        %v928 = vrcp.pop %v879
        %v929 = vmul.f32 1.0, %v928
        %v930 = vrcp.pop %v880
        %v931 = vmul.f32 1.0, %v930
        %v932 = vrcp.pop %v881
        %v933 = vmul.f32 1.0, %v932
        %v934 = vrcp.pop %v882
        %v935 = vmul.f32 1.0, %v934
        %v936 = vrcp.pop %v883
        %v937 = vmul.f32 1.0, %v936
        %v938 = vrcp.pop %v884
        %v939 = vmul.f32 1.0, %v938
        %v940 = vrcp.pop %v885
        %v941 = vmul.f32 1.0, %v940
        %v942 = vrcp.pop %v886
        %v943 = vmul.f32 1.0, %v942
        %v944 = vrcp.pop %v887
        %v945 = vmul.f32 1.0, %v944
        %v946 = vrcp.pop %v888
        %v947 = vmul.f32 1.0, %v946
        %v948 = vrcp.pop %v889
        %v949 = vmul.f32 1.0, %v948
        %v950 = vrcp.pop %v890
        %v951 = vmul.f32 1.0, %v950
        %v952 = vrcp.pop %v891
        %v953 = vmul.f32 1.0, %v952
        %v954 = vrcp.pop %v892
        %v955 = vmul.f32 1.0, %v954
        %v956 = vrcp.pop %v893
        %v957 = vmul.f32 1.0, %v956
        %v958 = vmul.f32 %v734, %v895
        %v959 = vmul.f32 %v735, %v897
        %v960 = vmul.f32 %v736, %v899
        %v961 = vmul.f32 %v737, %v901
        %v962 = vmul.f32 %v738, %v903
        %v963 = vmul.f32 %v739, %v905
        %v964 = vmul.f32 %v740, %v907
        %v965 = vmul.f32 %v741, %v909
        %v966 = vmul.f32 %v742, %v911
        %v967 = vmul.f32 %v743, %v913
        %v968 = vmul.f32 %v744, %v915
        %v969 = vmul.f32 %v745, %v917
        %v970 = vmul.f32 %v746, %v919
        %v971 = vmul.f32 %v747, %v921
        %v972 = vmul.f32 %v748, %v923
        %v973 = vmul.f32 %v749, %v925
        %v974 = vmul.f32 %v750, %v927
        %v975 = vmul.f32 %v751, %v929
        %v976 = vmul.f32 %v752, %v931
        %v977 = vmul.f32 %v753, %v933
        %v978 = vmul.f32 %v754, %v935
        %v979 = vmul.f32 %v755, %v937
        %v980 = vmul.f32 %v756, %v939
        %v981 = vmul.f32 %v757, %v941
        %v982 = vmul.f32 %v758, %v943
        %v983 = vmul.f32 %v759, %v945
        %v984 = vmul.f32 %v760, %v947
        %v985 = vmul.f32 %v761, %v949
        %v986 = vmul.f32 %v762, %v951
        %v987 = vmul.f32 %v763, %v953
        %v988 = vmul.f32 %v764, %v955
        %v989 = vmul.f32 %v765, %v957
        %990 = vst.msk [vmem:[#allocation2] sm:$0xff] %vm356, 0.0
        %991 = vst.msk [vmem:[#allocation2 + $0x8] sm:$0xff] %vm356, 0.0
        %vm992 = vcmask 517120
        %993 = vst.msk [vmem:[#allocation2 + $0x10] sm:$0x3] %vm992, 0.0
        %s994 = scalar_lea.vmem [#allocation2], 408
        %995 = vst.msk [vmem:[%s994] sm:$0xff] %vm356, 0.0
        %996 = vst.msk [vmem:[%s994 + $0x8] sm:$0xff] %vm356, 0.0
        %997 = vst.msk [vmem:[%s994 + $0x10] sm:$0x3] %vm992, 0.0
        %s998 = scalar_lea.vmem [#allocation2], 24
        %vm999 = vcmask 516096
        %1000 = vst.msk [vmem:[%s998] sm:$0x1] %vm999, 0.0
        %1001 = vst.msk [vmem:[%s998 + $0x18] sm:$0x1] %vm999, 0.0
        %1002 = vst.msk [vmem:[%s998 + $0x30] sm:$0x1] %vm999, 0.0
        %1003 = vst.msk [vmem:[%s998 + $0x48] sm:$0x1] %vm999, 0.0
        %1004 = vst.msk [vmem:[%s998 + $0x60] sm:$0x1] %vm999, 0.0
        %1005 = vst.msk [vmem:[%s998 + $0x78] sm:$0x1] %vm999, 0.0
        %1006 = vst.msk [vmem:[%s998 + $0x90] sm:$0x1] %vm999, 0.0
        %1007 = vst.msk [vmem:[%s998 + $0xa8] sm:$0x1] %vm999, 0.0
        %1008 = vst.msk [vmem:[%s998 + $0xc0] sm:$0x1] %vm999, 0.0
        %1009 = vst.msk [vmem:[%s998 + $0xd8] sm:$0x1] %vm999, 0.0
        %1010 = vst.msk [vmem:[%s998 + $0xf0] sm:$0x1] %vm999, 0.0
        %1011 = vst.msk [vmem:[%s998 + $0x108] sm:$0x1] %vm999, 0.0
        %1012 = vst.msk [vmem:[%s998 + $0x120] sm:$0x1] %vm999, 0.0
        %1013 = vst.msk [vmem:[%s998 + $0x138] sm:$0x1] %vm999, 0.0
        %1014 = vst.msk [vmem:[%s998 + $0x150] sm:$0x1] %vm999, 0.0
        %1015 = vst.msk [vmem:[%s998 + $0x168] sm:$0x1] %vm999, 0.0
        %1016 = vst.msk [vmem:[%s998 + $0x11] sm:$0x1] %vm999, 0.0
        %1017 = vst.msk [vmem:[%s998 + $0x29] sm:$0x1] %vm999, 0.0
        %1018 = vst.msk [vmem:[%s998 + $0x41] sm:$0x1] %vm999, 0.0
        %1019 = vst.msk [vmem:[%s998 + $0x59] sm:$0x1] %vm999, 0.0
        %1020 = vst.msk [vmem:[%s998 + $0x71] sm:$0x1] %vm999, 0.0
        %1021 = vst.msk [vmem:[%s998 + $0x89] sm:$0x1] %vm999, 0.0
        %1022 = vst.msk [vmem:[%s998 + $0xa1] sm:$0x1] %vm999, 0.0
        %1023 = vst.msk [vmem:[%s998 + $0xb9] sm:$0x1] %vm999, 0.0
        %1024 = vst.msk [vmem:[%s998 + $0xd1] sm:$0x1] %vm999, 0.0
        %1025 = vst.msk [vmem:[%s998 + $0xe9] sm:$0x1] %vm999, 0.0
        %1026 = vst.msk [vmem:[%s998 + $0x101] sm:$0x1] %vm999, 0.0
        %1027 = vst.msk [vmem:[%s998 + $0x119] sm:$0x1] %vm999, 0.0
        %1028 = vst.msk [vmem:[%s998 + $0x131] sm:$0x1] %vm999, 0.0
        %1029 = vst.msk [vmem:[%s998 + $0x149] sm:$0x1] %vm999, 0.0
        %1030 = vst.msk [vmem:[%s998 + $0x161] sm:$0x1] %vm999, 0.0
        %1031 = vst.msk [vmem:[%s998 + $0x179] sm:$0x1] %vm999, 0.0
        %1032 = vst.msk [vmem:[%s998 + $0x1] sm:$0xff] %vm356, %v958
        %1033 = vst.msk [vmem:[%s998 + $0x9] sm:$0xff] %vm356, %v959
        %1034 = vst.msk [vmem:[%s998 + $0x19] sm:$0xff] %vm356, %v960
        %1035 = vst.msk [vmem:[%s998 + $0x21] sm:$0xff] %vm356, %v961
        %1036 = vst.msk [vmem:[%s998 + $0x31] sm:$0xff] %vm356, %v962
        %1037 = vst.msk [vmem:[%s998 + $0x39] sm:$0xff] %vm356, %v963
        %1038 = vst.msk [vmem:[%s998 + $0x49] sm:$0xff] %vm356, %v964
        %1039 = vst.msk [vmem:[%s998 + $0x51] sm:$0xff] %vm356, %v965
        %1040 = vst.msk [vmem:[%s998 + $0x61] sm:$0xff] %vm356, %v966
        %1041 = vst.msk [vmem:[%s998 + $0x69] sm:$0xff] %vm356, %v967
        %1042 = vst.msk [vmem:[%s998 + $0x79] sm:$0xff] %vm356, %v968
        %1043 = vst.msk [vmem:[%s998 + $0x81] sm:$0xff] %vm356, %v969
        %1044 = vst.msk [vmem:[%s998 + $0x91] sm:$0xff] %vm356, %v970
        %1045 = vst.msk [vmem:[%s998 + $0x99] sm:$0xff] %vm356, %v971
        %1046 = vst.msk [vmem:[%s998 + $0xa9] sm:$0xff] %vm356, %v972
        %1047 = vst.msk [vmem:[%s998 + $0xb1] sm:$0xff] %vm356, %v973
        %1048 = vst.msk [vmem:[%s998 + $0xc1] sm:$0xff] %vm356, %v974
        %1049 = vst.msk [vmem:[%s998 + $0xc9] sm:$0xff] %vm356, %v975
        %1050 = vst.msk [vmem:[%s998 + $0xd9] sm:$0xff] %vm356, %v976
        %1051 = vst.msk [vmem:[%s998 + $0xe1] sm:$0xff] %vm356, %v977
        %1052 = vst.msk [vmem:[%s998 + $0xf1] sm:$0xff] %vm356, %v978
        %1053 = vst.msk [vmem:[%s998 + $0xf9] sm:$0xff] %vm356, %v979
        %1054 = vst.msk [vmem:[%s998 + $0x109] sm:$0xff] %vm356, %v980
        %1055 = vst.msk [vmem:[%s998 + $0x111] sm:$0xff] %vm356, %v981
        %1056 = vst.msk [vmem:[%s998 + $0x121] sm:$0xff] %vm356, %v982
        %1057 = vst.msk [vmem:[%s998 + $0x129] sm:$0xff] %vm356, %v983
        %1058 = vst.msk [vmem:[%s998 + $0x139] sm:$0xff] %vm356, %v984
        %1059 = vst.msk [vmem:[%s998 + $0x141] sm:$0xff] %vm356, %v985
        %1060 = vst.msk [vmem:[%s998 + $0x151] sm:$0xff] %vm356, %v986
        %1061 = vst.msk [vmem:[%s998 + $0x159] sm:$0xff] %vm356, %v987
        %1062 = vst.msk [vmem:[%s998 + $0x169] sm:$0xff] %vm356, %v988
        %1063 = vst.msk [vmem:[%s998 + $0x171] sm:$0xff] %vm356, %v989
        %v1064 = vld [vmem:[#allocation2] sm:$0xff]
        %v1065 = vld [vmem:[#allocation2 + $0x8] sm:$0xff]
        %v1066 = vld [vmem:[#allocation2 + $0x18] sm:$0xff]
        %v1067 = vld [vmem:[#allocation2 + $0x20] sm:$0xff]
        %v1068 = vld [vmem:[#allocation2 + $0x30] sm:$0xff]
        %v1069 = vld [vmem:[#allocation2 + $0x38] sm:$0xff]
        %v1070 = vld [vmem:[#allocation2 + $0x48] sm:$0xff]
        %v1071 = vld [vmem:[#allocation2 + $0x50] sm:$0xff]
        %v1072 = vld [vmem:[#allocation2 + $0x60] sm:$0xff]
        %v1073 = vld [vmem:[#allocation2 + $0x68] sm:$0xff]
        %v1074 = vld [vmem:[#allocation2 + $0x78] sm:$0xff]
        %v1075 = vld [vmem:[#allocation2 + $0x80] sm:$0xff]
        %v1076 = vld [vmem:[#allocation2 + $0x90] sm:$0xff]
        %v1077 = vld [vmem:[#allocation2 + $0x98] sm:$0xff]
        %v1078 = vld [vmem:[#allocation2 + $0xa8] sm:$0xff]
        %v1079 = vld [vmem:[#allocation2 + $0xb0] sm:$0xff]
        %v1080 = vld [vmem:[#allocation2 + $0xc0] sm:$0xff]
        %v1081 = vld [vmem:[#allocation2 + $0xc8] sm:$0xff]
        %v1082 = vld [vmem:[#allocation2 + $0xd8] sm:$0xff]
        %v1083 = vld [vmem:[#allocation2 + $0xe0] sm:$0xff]
        %v1084 = vld [vmem:[#allocation2 + $0xf0] sm:$0xff]
        %v1085 = vld [vmem:[#allocation2 + $0xf8] sm:$0xff]
        %v1086 = vld [vmem:[#allocation2 + $0x108] sm:$0xff]
        %v1087 = vld [vmem:[#allocation2 + $0x110] sm:$0xff]
        %v1088 = vld [vmem:[#allocation2 + $0x120] sm:$0xff]
        %v1089 = vld [vmem:[#allocation2 + $0x128] sm:$0xff]
        %v1090 = vld [vmem:[#allocation2 + $0x138] sm:$0xff]
        %v1091 = vld [vmem:[#allocation2 + $0x140] sm:$0xff]
        %v1092 = vld [vmem:[#allocation2 + $0x150] sm:$0xff]
        %v1093 = vld [vmem:[#allocation2 + $0x158] sm:$0xff]
        %v1094 = vld [vmem:[#allocation2 + $0x168] sm:$0xff]
        %v1095 = vld [vmem:[#allocation2 + $0x170] sm:$0xff]
        %v1096 = vld [vmem:[#allocation2 + $0x180] sm:$0xff]
        %v1097 = vld [vmem:[#allocation2 + $0x188] sm:$0xff]
        %v1098 = vld [vmem:[#allocation2 + $0x198] sm:$0xff]
        %v1099 = vld [vmem:[#allocation2 + $0x1a0] sm:$0xff]
        %v1100 = vld [vmem:[%s3] sm:$0xff]
        %v1101 = vld [vmem:[%s3 + $0x8] sm:$0xff]
        %v1102 = vld [vmem:[%s3 + $0x10] sm:$0xff]
        %v1103 = vld [vmem:[%s3 + $0x18] sm:$0xff]
        %v1104 = vld [vmem:[%s3 + $0x20] sm:$0xff]
        %v1105 = vld [vmem:[%s3 + $0x28] sm:$0xff]
        %v1106 = vld [vmem:[%s3 + $0x30] sm:$0xff]
        %v1107 = vld [vmem:[%s3 + $0x38] sm:$0xff]
        %s1108 = scalar_lea.vmem %s3, 192
        %v1109 = vld [vmem:[%s1108] sm:$0xff]
        %v1110 = vld [vmem:[%s1108 + $0x8] sm:$0xff]
        %v1111 = vld [vmem:[%s1108 + $0x10] sm:$0xff]
        %v1112 = vld [vmem:[%s1108 + $0x18] sm:$0xff]
        %v1113 = vld [vmem:[%s1108 + $0x20] sm:$0xff]
        %v1114 = vld [vmem:[%s1108 + $0x28] sm:$0xff]
        %v1115 = vld [vmem:[%s1108 + $0x30] sm:$0xff]
        %v1116 = vld [vmem:[%s1108 + $0x38] sm:$0xff]
        %v1118 = vsel %vm356, %v1066, 0
        %v1121 = vsel %vm356, %v1067, 0
        %v1124 = vsel %vm356, %v1068, 0
        %v1127 = vsel %vm356, %v1069, 0
        %v1130 = vsel %vm356, %v1070, 0
        %v1133 = vsel %vm356, %v1071, 0
        %v1136 = vsel %vm356, %v1072, 0
        %v1139 = vsel %vm356, %v1073, 0
        %v1142 = vsel %vm356, %v1074, 0
        %v1145 = vsel %vm356, %v1075, 0
        %v1148 = vsel %vm356, %v1076, 0
        %v1151 = vsel %vm356, %v1077, 0
        %v1154 = vsel %vm356, %v1078, 0
        %v1157 = vsel %vm356, %v1079, 0
        %v1160 = vsel %vm356, %v1080, 0
        %v1163 = vsel %vm356, %v1081, 0
        %v1166 = vsel %vm356, %v1082, 0
        %v1169 = vsel %vm356, %v1083, 0
        %v1172 = vsel %vm356, %v1084, 0
        %v1175 = vsel %vm356, %v1085, 0
        %v1178 = vsel %vm356, %v1086, 0
        %v1181 = vsel %vm356, %v1087, 0
        %v1184 = vsel %vm356, %v1088, 0
        %v1187 = vsel %vm356, %v1089, 0
        %v1190 = vsel %vm356, %v1090, 0
        %v1193 = vsel %vm356, %v1091, 0
        %v1196 = vsel %vm356, %v1092, 0
        %v1199 = vsel %vm356, %v1093, 0
        %v1202 = vsel %vm356, %v1094, 0
        %v1205 = vsel %vm356, %v1095, 0
        %v1208 = vsel %vm356, %v1096, 0
        %v1211 = vsel %vm356, %v1097, 0
        %1213 = vmatprep.subr.mxu0 0.0
        %1214 = vmatpush1.msra.mxu0 %v1109
        %1215 = vmatprep.subr.mxu0 0.0
        %1216 = vmatpush1.msra.mxu0 %v1110
        %1217 = vmatprep.subr.mxu0 0.0
        %1218 = vmatpush1.msra.mxu0 %v1111
        %1219 = vmatprep.subr.mxu0 0.0
        %1220 = vmatpush1.msra.mxu0 %v1112
        %1221 = vmatprep.subr.mxu0 0.0
        %1222 = vmatpush1.msra.mxu0 %v1113
        %1223 = vmatprep.subr.mxu0 0.0
        %1224 = vmatpush1.msra.mxu0 %v1114
        %1225 = vmatprep.subr.mxu0 0.0
        %1226 = vmatpush1.msra.mxu0 %v1115
        %1227 = vmatprep.subr.mxu0 0.0
        %1228 = vmatpush1.msra.mxu0 %v1116
        %1229 = vmatprep.subr.mxu0 0.0
        %1230 = vmatpush1.msra.mxu0 0.0
        %1231 = vmatprep.subr.mxu0 0.0
        %1232 = vmatpush1.msra.mxu0 0.0
        %1233 = vmatprep.subr.mxu0 0.0
        %1234 = vmatpush1.msra.mxu0 0.0
        %1235 = vmatprep.subr.mxu0 0.0
        %1236 = vmatpush1.msra.mxu0 0.0
        %1237 = vmatprep.subr.mxu0 0.0
        %1238 = vmatpush1.msra.mxu0 0.0
        %1239 = vmatprep.subr.mxu0 0.0
        %1240 = vmatpush1.msra.mxu0 0.0
        %1241 = vmatprep.subr.mxu0 0.0
        %1242 = vmatpush1.msra.mxu0 0.0
        %1243 = vmatprep.subr.mxu0 0.0
        %1244 = vmatpush1.msra.mxu0 0.0
        %1245 = vmatprep.subr.mxu0 0.0
        %1246 = vmatpush1.msra.mxu0 0.0
        %1247 = vmatprep.subr.mxu0 0.0
        %1248 = vmatpush1.msra.mxu0 0.0
        %1249 = vmatprep.subr.mxu0 0.0
        %1250 = vmatpush1.msra.mxu0 0.0
        %1251 = vmatprep.subr.mxu0 0.0
        %1252 = vmatpush1.msra.mxu0 0.0
        %1253 = vmatprep.subr.mxu0 0.0
        %1254 = vmatpush1.msra.mxu0 0.0
        %1255 = vmatprep.subr.mxu0 0.0
        %1256 = vmatpush1.msra.mxu0 0.0
        %1257 = vmatprep.subr.mxu0 0.0
        %1258 = vmatpush1.msra.mxu0 0.0
        %1259 = vmatprep.subr.mxu0 0.0
        %1260 = vmatpush1.msra.mxu0 0.0
        %1261 = vmatprep.subr.mxu0 0.0
        %1262 = vmatpush1.msra.mxu0 0.0
        %1263 = vmatprep.subr.mxu0 0.0
        %1264 = vmatpush1.msra.mxu0 0.0
        %1265 = vmatprep.subr.mxu0 0.0
        %1266 = vmatpush1.msra.mxu0 0.0
        %1267 = vmatprep.subr.mxu0 0.0
        %1268 = vmatpush1.msra.mxu0 0.0
        %1269 = vmatprep.subr.mxu0 0.0
        %1270 = vmatpush1.msra.mxu0 0.0
        %1271 = vmatprep.subr.mxu0 0.0
        %1272 = vmatpush1.msra.mxu0 0.0
        %1273 = vmatprep.subr.mxu0 0.0
        %1274 = vmatpush1.msra.mxu0 0.0
        %1275 = vmatprep.subr.mxu0 0.0
        %1276 = vmatpush1.msra.mxu0 0.0
        %1277 = vmatprep.mubr.f32.mxu0 0.0
        %1278 = vmatmul.mubr.f32.gmra.mrb[0].mxu0 %v1118
        %v1279 = vpop.f32.mrb[0].mxu0
        %v1280 = vadd.f32 0.0, %v1279
        %v1281 = vpop.f32.mrb[0].mxu0
        %1282 = vmatprep.mubr.f32.mxu0 0.0
        %1283 = vmatmul.mubr.f32.gmra.mrb[0].mxu0 %v1121
        %v1284 = vpop.f32.mrb[0].mxu0
        %v1285 = vadd.f32 0.0, %v1284
        %v1286 = vpop.f32.mrb[0].mxu0
        %1287 = vmatprep.mubr.f32.mxu0 0.0
        %1288 = vmatmul.mubr.f32.gmra.mrb[0].mxu0 %v1124
        %v1289 = vpop.f32.mrb[0].mxu0
        %v1290 = vadd.f32 0.0, %v1289
        %v1291 = vpop.f32.mrb[0].mxu0
        %1292 = vmatprep.mubr.f32.mxu0 0.0
        %1293 = vmatmul.mubr.f32.gmra.mrb[0].mxu0 %v1127
        %v1294 = vpop.f32.mrb[0].mxu0
        %v1295 = vadd.f32 0.0, %v1294
        %v1296 = vpop.f32.mrb[0].mxu0
        %1297 = vmatprep.mubr.f32.mxu0 0.0
        %1298 = vmatmul.mubr.f32.gmra.mrb[0].mxu0 %v1130
        %v1299 = vpop.f32.mrb[0].mxu0
        %v1300 = vadd.f32 0.0, %v1299
        %v1301 = vpop.f32.mrb[0].mxu0
        %1302 = vmatprep.mubr.f32.mxu0 0.0
        %1303 = vmatmul.mubr.f32.gmra.mrb[0].mxu0 %v1133
        %v1304 = vpop.f32.mrb[0].mxu0
        %v1305 = vadd.f32 0.0, %v1304
        %v1306 = vpop.f32.mrb[0].mxu0
        %1307 = vmatprep.mubr.f32.mxu0 0.0
        %1308 = vmatmul.mubr.f32.gmra.mrb[0].mxu0 %v1136
        %v1309 = vpop.f32.mrb[0].mxu0
        %v1310 = vadd.f32 0.0, %v1309
        %v1311 = vpop.f32.mrb[0].mxu0
        %1312 = vmatprep.mubr.f32.mxu0 0.0
        %1313 = vmatmul.mubr.f32.gmra.mrb[0].mxu0 %v1139
        %v1314 = vpop.f32.mrb[0].mxu0
        %v1315 = vadd.f32 0.0, %v1314
        %v1316 = vpop.f32.mrb[0].mxu0
        %1317 = vmatprep.mubr.f32.mxu0 0.0
        %1318 = vmatmul.mubr.f32.gmra.mrb[0].mxu0 %v1142
        %v1319 = vpop.f32.mrb[0].mxu0
        %v1320 = vadd.f32 0.0, %v1319
        %v1321 = vpop.f32.mrb[0].mxu0
        %1322 = vmatprep.mubr.f32.mxu0 0.0
        %1323 = vmatmul.mubr.f32.gmra.mrb[0].mxu0 %v1145
        %v1324 = vpop.f32.mrb[0].mxu0
        %v1325 = vadd.f32 0.0, %v1324
        %v1326 = vpop.f32.mrb[0].mxu0
        %1327 = vmatprep.mubr.f32.mxu0 0.0
        %1328 = vmatmul.mubr.f32.gmra.mrb[0].mxu0 %v1148
        %v1329 = vpop.f32.mrb[0].mxu0
        %v1330 = vadd.f32 0.0, %v1329
        %v1331 = vpop.f32.mrb[0].mxu0
        %1332 = vmatprep.mubr.f32.mxu0 0.0
        %1333 = vmatmul.mubr.f32.gmra.mrb[0].mxu0 %v1151
        %v1334 = vpop.f32.mrb[0].mxu0
        %v1335 = vadd.f32 0.0, %v1334
        %v1336 = vpop.f32.mrb[0].mxu0
        %1337 = vmatprep.mubr.f32.mxu0 0.0
        %1338 = vmatmul.mubr.f32.gmra.mrb[0].mxu0 %v1154
        %v1339 = vpop.f32.mrb[0].mxu0
        %v1340 = vadd.f32 0.0, %v1339
        %v1341 = vpop.f32.mrb[0].mxu0
        %1342 = vmatprep.mubr.f32.mxu0 0.0
        %1343 = vmatmul.mubr.f32.gmra.mrb[0].mxu0 %v1157
        %v1344 = vpop.f32.mrb[0].mxu0
        %v1345 = vadd.f32 0.0, %v1344
        %v1346 = vpop.f32.mrb[0].mxu0
        %1347 = vmatprep.mubr.f32.mxu0 0.0
        %1348 = vmatmul.mubr.f32.gmra.mrb[0].mxu0 %v1160
        %v1349 = vpop.f32.mrb[0].mxu0
        %v1350 = vadd.f32 0.0, %v1349
        %v1351 = vpop.f32.mrb[0].mxu0
        %1352 = vmatprep.mubr.f32.mxu0 0.0
        %1353 = vmatmul.mubr.f32.gmra.mrb[0].mxu0 %v1163
        %v1354 = vpop.f32.mrb[0].mxu0
        %v1355 = vadd.f32 0.0, %v1354
        %v1356 = vpop.f32.mrb[0].mxu0
        %1357 = vmatprep.mubr.f32.mxu0 0.0
        %1358 = vmatmul.mubr.f32.gmra.mrb[0].mxu0 %v1166
        %v1359 = vpop.f32.mrb[0].mxu0
        %v1360 = vadd.f32 0.0, %v1359
        %v1361 = vpop.f32.mrb[0].mxu0
        %1362 = vmatprep.mubr.f32.mxu0 0.0
        %1363 = vmatmul.mubr.f32.gmra.mrb[0].mxu0 %v1169
        %v1364 = vpop.f32.mrb[0].mxu0
        %v1365 = vadd.f32 0.0, %v1364
        %v1366 = vpop.f32.mrb[0].mxu0
        %1367 = vmatprep.mubr.f32.mxu0 0.0
        %1368 = vmatmul.mubr.f32.gmra.mrb[0].mxu0 %v1172
        %v1369 = vpop.f32.mrb[0].mxu0
        %v1370 = vadd.f32 0.0, %v1369
        %v1371 = vpop.f32.mrb[0].mxu0
        %1372 = vmatprep.mubr.f32.mxu0 0.0
        %1373 = vmatmul.mubr.f32.gmra.mrb[0].mxu0 %v1175
        %v1374 = vpop.f32.mrb[0].mxu0
        %v1375 = vadd.f32 0.0, %v1374
        %v1376 = vpop.f32.mrb[0].mxu0
        %1377 = vmatprep.mubr.f32.mxu0 0.0
        %1378 = vmatmul.mubr.f32.gmra.mrb[0].mxu0 %v1178
        %v1379 = vpop.f32.mrb[0].mxu0
        %v1380 = vadd.f32 0.0, %v1379
        %v1381 = vpop.f32.mrb[0].mxu0
        %1382 = vmatprep.mubr.f32.mxu0 0.0
        %1383 = vmatmul.mubr.f32.gmra.mrb[0].mxu0 %v1181
        %v1384 = vpop.f32.mrb[0].mxu0
        %v1385 = vadd.f32 0.0, %v1384
        %v1386 = vpop.f32.mrb[0].mxu0
        %1387 = vmatprep.mubr.f32.mxu0 0.0
        %1388 = vmatmul.mubr.f32.gmra.mrb[0].mxu0 %v1184
        %v1389 = vpop.f32.mrb[0].mxu0
        %v1390 = vadd.f32 0.0, %v1389
        %v1391 = vpop.f32.mrb[0].mxu0
        %1392 = vmatprep.mubr.f32.mxu0 0.0
        %1393 = vmatmul.mubr.f32.gmra.mrb[0].mxu0 %v1187
        %v1394 = vpop.f32.mrb[0].mxu0
        %v1395 = vadd.f32 0.0, %v1394
        %v1396 = vpop.f32.mrb[0].mxu0
        %1397 = vmatprep.mubr.f32.mxu0 0.0
        %1398 = vmatmul.mubr.f32.gmra.mrb[0].mxu0 %v1190
        %v1399 = vpop.f32.mrb[0].mxu0
        %v1400 = vadd.f32 0.0, %v1399
        %v1401 = vpop.f32.mrb[0].mxu0
        %1402 = vmatprep.mubr.f32.mxu0 0.0
        %1403 = vmatmul.mubr.f32.gmra.mrb[0].mxu0 %v1193
        %v1404 = vpop.f32.mrb[0].mxu0
        %v1405 = vadd.f32 0.0, %v1404
        %v1406 = vpop.f32.mrb[0].mxu0
        %1407 = vmatprep.mubr.f32.mxu0 0.0
        %1408 = vmatmul.mubr.f32.gmra.mrb[0].mxu0 %v1196
        %v1409 = vpop.f32.mrb[0].mxu0
        %v1410 = vadd.f32 0.0, %v1409
        %v1411 = vpop.f32.mrb[0].mxu0
        %1412 = vmatprep.mubr.f32.mxu0 0.0
        %1413 = vmatmul.mubr.f32.gmra.mrb[0].mxu0 %v1199
        %v1414 = vpop.f32.mrb[0].mxu0
        %v1415 = vadd.f32 0.0, %v1414
        %v1416 = vpop.f32.mrb[0].mxu0
        %1417 = vmatprep.mubr.f32.mxu0 0.0
        %1418 = vmatmul.mubr.f32.gmra.mrb[0].mxu0 %v1202
        %v1419 = vpop.f32.mrb[0].mxu0
        %v1420 = vadd.f32 0.0, %v1419
        %v1421 = vpop.f32.mrb[0].mxu0
        %1422 = vmatprep.mubr.f32.mxu0 0.0
        %1423 = vmatmul.mubr.f32.gmra.mrb[0].mxu0 %v1205
        %v1424 = vpop.f32.mrb[0].mxu0
        %v1425 = vadd.f32 0.0, %v1424
        %v1426 = vpop.f32.mrb[0].mxu0
        %1427 = vmatprep.mubr.f32.mxu0 0.0
        %1428 = vmatmul.mubr.f32.gmra.mrb[0].mxu0 %v1208
        %v1429 = vpop.f32.mrb[0].mxu0
        %v1430 = vadd.f32 0.0, %v1429
        %v1431 = vpop.f32.mrb[0].mxu0
        %1432 = vmatprep.mubr.f32.mxu0 0.0
        %1433 = vmatmul.mubr.f32.gmra.mrb[0].mxu0 %v1211
        %v1434 = vpop.f32.mrb[0].mxu0
        %v1435 = vadd.f32 0.0, %v1434
        %v1436 = vpop.f32.mrb[0].mxu0
        %1437 = vdwg.mxu0
        %v1439 = vsel %vm356, %v1064, 0
        %v1442 = vsel %vm356, %v1065, 0
        %1444 = vmatprep.subr.mxu0 0.0
        %1445 = vmatpush1.msra.mxu0 %v1100
        %1446 = vmatprep.subr.mxu0 0.0
        %1447 = vmatpush1.msra.mxu0 %v1101
        %1448 = vmatprep.subr.mxu0 0.0
        %1449 = vmatpush1.msra.mxu0 %v1102
        %1450 = vmatprep.subr.mxu0 0.0
        %1451 = vmatpush1.msra.mxu0 %v1103
        %1452 = vmatprep.subr.mxu0 0.0
        %1453 = vmatpush1.msra.mxu0 %v1104
        %1454 = vmatprep.subr.mxu0 0.0
        %1455 = vmatpush1.msra.mxu0 %v1105
        %1456 = vmatprep.subr.mxu0 0.0
        %1457 = vmatpush1.msra.mxu0 %v1106
        %1458 = vmatprep.subr.mxu0 0.0
        %1459 = vmatpush1.msra.mxu0 %v1107
        %1460 = vmatprep.subr.mxu0 0.0
        %1461 = vmatpush1.msra.mxu0 0.0
        %1462 = vmatprep.subr.mxu0 0.0
        %1463 = vmatpush1.msra.mxu0 0.0
        %1464 = vmatprep.subr.mxu0 0.0
        %1465 = vmatpush1.msra.mxu0 0.0
        %1466 = vmatprep.subr.mxu0 0.0
        %1467 = vmatpush1.msra.mxu0 0.0
        %1468 = vmatprep.subr.mxu0 0.0
        %1469 = vmatpush1.msra.mxu0 0.0
        %1470 = vmatprep.subr.mxu0 0.0
        %1471 = vmatpush1.msra.mxu0 0.0
        %1472 = vmatprep.subr.mxu0 0.0
        %1473 = vmatpush1.msra.mxu0 0.0
        %1474 = vmatprep.subr.mxu0 0.0
        %1475 = vmatpush1.msra.mxu0 0.0
        %1476 = vmatprep.subr.mxu0 0.0
        %1477 = vmatpush1.msra.mxu0 0.0
        %1478 = vmatprep.subr.mxu0 0.0
        %1479 = vmatpush1.msra.mxu0 0.0
        %1480 = vmatprep.subr.mxu0 0.0
        %1481 = vmatpush1.msra.mxu0 0.0
        %1482 = vmatprep.subr.mxu0 0.0
        %1483 = vmatpush1.msra.mxu0 0.0
        %1484 = vmatprep.subr.mxu0 0.0
        %1485 = vmatpush1.msra.mxu0 0.0
        %1486 = vmatprep.subr.mxu0 0.0
        %1487 = vmatpush1.msra.mxu0 0.0
        %1488 = vmatprep.subr.mxu0 0.0
        %1489 = vmatpush1.msra.mxu0 0.0
        %1490 = vmatprep.subr.mxu0 0.0
        %1491 = vmatpush1.msra.mxu0 0.0
        %1492 = vmatprep.subr.mxu0 0.0
        %1493 = vmatpush1.msra.mxu0 0.0
        %1494 = vmatprep.subr.mxu0 0.0
        %1495 = vmatpush1.msra.mxu0 0.0
        %1496 = vmatprep.subr.mxu0 0.0
        %1497 = vmatpush1.msra.mxu0 0.0
        %1498 = vmatprep.subr.mxu0 0.0
        %1499 = vmatpush1.msra.mxu0 0.0
        %1500 = vmatprep.subr.mxu0 0.0
        %1501 = vmatpush1.msra.mxu0 0.0
        %1502 = vmatprep.subr.mxu0 0.0
        %1503 = vmatpush1.msra.mxu0 0.0
        %1504 = vmatprep.subr.mxu0 0.0
        %1505 = vmatpush1.msra.mxu0 0.0
        %1506 = vmatprep.subr.mxu0 0.0
        %1507 = vmatpush1.msra.mxu0 0.0
        %1508 = vmatprep.mubr.f32.mxu0 0.0
        %1509 = vmatmul.mubr.f32.gmra.mrb[0].mxu0 %v1439
        %v1510 = vpop.f32.mrb[0].mxu0
        %v1511 = vadd.f32 %v1280, %v1510
        %v1512 = vpop.f32.mrb[0].mxu0
        %1513 = vmatprep.mubr.f32.mxu0 0.0
        %1514 = vmatmul.mubr.f32.gmra.mrb[0].mxu0 %v1442
        %v1515 = vpop.f32.mrb[0].mxu0
        %v1516 = vadd.f32 %v1285, %v1515
        %v1517 = vpop.f32.mrb[0].mxu0
        %1518 = vmatprep.mubr.f32.mxu0 0.0
        %1519 = vmatmul.mubr.f32.gmra.mrb[0].mxu0 %v1118
        %v1520 = vpop.f32.mrb[0].mxu0
        %v1521 = vadd.f32 %v1290, %v1520
        %v1522 = vpop.f32.mrb[0].mxu0
        %1523 = vmatprep.mubr.f32.mxu0 0.0
        %1524 = vmatmul.mubr.f32.gmra.mrb[0].mxu0 %v1121
        %v1525 = vpop.f32.mrb[0].mxu0
        %v1526 = vadd.f32 %v1295, %v1525
        %v1527 = vpop.f32.mrb[0].mxu0
        %1528 = vmatprep.mubr.f32.mxu0 0.0
        %1529 = vmatmul.mubr.f32.gmra.mrb[0].mxu0 %v1124
        %v1530 = vpop.f32.mrb[0].mxu0
        %v1531 = vadd.f32 %v1300, %v1530
        %v1532 = vpop.f32.mrb[0].mxu0
        %1533 = vmatprep.mubr.f32.mxu0 0.0
        %1534 = vmatmul.mubr.f32.gmra.mrb[0].mxu0 %v1127
        %v1535 = vpop.f32.mrb[0].mxu0
        %v1536 = vadd.f32 %v1305, %v1535
        %v1537 = vpop.f32.mrb[0].mxu0
        %1538 = vmatprep.mubr.f32.mxu0 0.0
        %1539 = vmatmul.mubr.f32.gmra.mrb[0].mxu0 %v1130
        %v1540 = vpop.f32.mrb[0].mxu0
        %v1541 = vadd.f32 %v1310, %v1540
        %v1542 = vpop.f32.mrb[0].mxu0
        %1543 = vmatprep.mubr.f32.mxu0 0.0
        %1544 = vmatmul.mubr.f32.gmra.mrb[0].mxu0 %v1133
        %v1545 = vpop.f32.mrb[0].mxu0
        %v1546 = vadd.f32 %v1315, %v1545
        %v1547 = vpop.f32.mrb[0].mxu0
        %1548 = vmatprep.mubr.f32.mxu0 0.0
        %1549 = vmatmul.mubr.f32.gmra.mrb[0].mxu0 %v1136
        %v1550 = vpop.f32.mrb[0].mxu0
        %v1551 = vadd.f32 %v1320, %v1550
        %v1552 = vpop.f32.mrb[0].mxu0
        %1553 = vmatprep.mubr.f32.mxu0 0.0
        %1554 = vmatmul.mubr.f32.gmra.mrb[0].mxu0 %v1139
        %v1555 = vpop.f32.mrb[0].mxu0
        %v1556 = vadd.f32 %v1325, %v1555
        %v1557 = vpop.f32.mrb[0].mxu0
        %1558 = vmatprep.mubr.f32.mxu0 0.0
        %1559 = vmatmul.mubr.f32.gmra.mrb[0].mxu0 %v1142
        %v1560 = vpop.f32.mrb[0].mxu0
        %v1561 = vadd.f32 %v1330, %v1560
        %v1562 = vpop.f32.mrb[0].mxu0
        %1563 = vmatprep.mubr.f32.mxu0 0.0
        %1564 = vmatmul.mubr.f32.gmra.mrb[0].mxu0 %v1145
        %v1565 = vpop.f32.mrb[0].mxu0
        %v1566 = vadd.f32 %v1335, %v1565
        %v1567 = vpop.f32.mrb[0].mxu0
        %1568 = vmatprep.mubr.f32.mxu0 0.0
        %1569 = vmatmul.mubr.f32.gmra.mrb[0].mxu0 %v1148
        %v1570 = vpop.f32.mrb[0].mxu0
        %v1571 = vadd.f32 %v1340, %v1570
        %v1572 = vpop.f32.mrb[0].mxu0
        %1573 = vmatprep.mubr.f32.mxu0 0.0
        %1574 = vmatmul.mubr.f32.gmra.mrb[0].mxu0 %v1151
        %v1575 = vpop.f32.mrb[0].mxu0
        %v1576 = vadd.f32 %v1345, %v1575
        %v1577 = vpop.f32.mrb[0].mxu0
        %1578 = vmatprep.mubr.f32.mxu0 0.0
        %1579 = vmatmul.mubr.f32.gmra.mrb[0].mxu0 %v1154
        %v1580 = vpop.f32.mrb[0].mxu0
        %v1581 = vadd.f32 %v1350, %v1580
        %v1582 = vpop.f32.mrb[0].mxu0
        %1583 = vmatprep.mubr.f32.mxu0 0.0
        %1584 = vmatmul.mubr.f32.gmra.mrb[0].mxu0 %v1157
        %v1585 = vpop.f32.mrb[0].mxu0
        %v1586 = vadd.f32 %v1355, %v1585
        %v1587 = vpop.f32.mrb[0].mxu0
        %1588 = vmatprep.mubr.f32.mxu0 0.0
        %1589 = vmatmul.mubr.f32.gmra.mrb[0].mxu0 %v1160
        %v1590 = vpop.f32.mrb[0].mxu0
        %v1591 = vadd.f32 %v1360, %v1590
        %v1592 = vpop.f32.mrb[0].mxu0
        %1593 = vmatprep.mubr.f32.mxu0 0.0
        %1594 = vmatmul.mubr.f32.gmra.mrb[0].mxu0 %v1163
        %v1595 = vpop.f32.mrb[0].mxu0
        %v1596 = vadd.f32 %v1365, %v1595
        %v1597 = vpop.f32.mrb[0].mxu0
        %1598 = vmatprep.mubr.f32.mxu0 0.0
        %1599 = vmatmul.mubr.f32.gmra.mrb[0].mxu0 %v1166
        %v1600 = vpop.f32.mrb[0].mxu0
        %v1601 = vadd.f32 %v1370, %v1600
        %v1602 = vpop.f32.mrb[0].mxu0
        %1603 = vmatprep.mubr.f32.mxu0 0.0
        %1604 = vmatmul.mubr.f32.gmra.mrb[0].mxu0 %v1169
        %v1605 = vpop.f32.mrb[0].mxu0
        %v1606 = vadd.f32 %v1375, %v1605
        %v1607 = vpop.f32.mrb[0].mxu0
        %1608 = vmatprep.mubr.f32.mxu0 0.0
        %1609 = vmatmul.mubr.f32.gmra.mrb[0].mxu0 %v1172
        %v1610 = vpop.f32.mrb[0].mxu0
        %v1611 = vadd.f32 %v1380, %v1610
        %v1612 = vpop.f32.mrb[0].mxu0
        %1613 = vmatprep.mubr.f32.mxu0 0.0
        %1614 = vmatmul.mubr.f32.gmra.mrb[0].mxu0 %v1175
        %v1615 = vpop.f32.mrb[0].mxu0
        %v1616 = vadd.f32 %v1385, %v1615
        %v1617 = vpop.f32.mrb[0].mxu0
        %1618 = vmatprep.mubr.f32.mxu0 0.0
        %1619 = vmatmul.mubr.f32.gmra.mrb[0].mxu0 %v1178
        %v1620 = vpop.f32.mrb[0].mxu0
        %v1621 = vadd.f32 %v1390, %v1620
        %v1622 = vpop.f32.mrb[0].mxu0
        %1623 = vmatprep.mubr.f32.mxu0 0.0
        %1624 = vmatmul.mubr.f32.gmra.mrb[0].mxu0 %v1181
        %v1625 = vpop.f32.mrb[0].mxu0
        %v1626 = vadd.f32 %v1395, %v1625
        %v1627 = vpop.f32.mrb[0].mxu0
        %1628 = vmatprep.mubr.f32.mxu0 0.0
        %1629 = vmatmul.mubr.f32.gmra.mrb[0].mxu0 %v1184
        %v1630 = vpop.f32.mrb[0].mxu0
        %v1631 = vadd.f32 %v1400, %v1630
        %v1632 = vpop.f32.mrb[0].mxu0
        %1633 = vmatprep.mubr.f32.mxu0 0.0
        %1634 = vmatmul.mubr.f32.gmra.mrb[0].mxu0 %v1187
        %v1635 = vpop.f32.mrb[0].mxu0
        %v1636 = vadd.f32 %v1405, %v1635
        %v1637 = vpop.f32.mrb[0].mxu0
        %1638 = vmatprep.mubr.f32.mxu0 0.0
        %1639 = vmatmul.mubr.f32.gmra.mrb[0].mxu0 %v1190
        %v1640 = vpop.f32.mrb[0].mxu0
        %v1641 = vadd.f32 %v1410, %v1640
        %v1642 = vpop.f32.mrb[0].mxu0
        %1643 = vmatprep.mubr.f32.mxu0 0.0
        %1644 = vmatmul.mubr.f32.gmra.mrb[0].mxu0 %v1193
        %v1645 = vpop.f32.mrb[0].mxu0
        %v1646 = vadd.f32 %v1415, %v1645
        %v1647 = vpop.f32.mrb[0].mxu0
        %1648 = vmatprep.mubr.f32.mxu0 0.0
        %1649 = vmatmul.mubr.f32.gmra.mrb[0].mxu0 %v1196
        %v1650 = vpop.f32.mrb[0].mxu0
        %v1651 = vadd.f32 %v1420, %v1650
        %v1652 = vpop.f32.mrb[0].mxu0
        %1653 = vmatprep.mubr.f32.mxu0 0.0
        %1654 = vmatmul.mubr.f32.gmra.mrb[0].mxu0 %v1199
        %v1655 = vpop.f32.mrb[0].mxu0
        %v1656 = vadd.f32 %v1425, %v1655
        %v1657 = vpop.f32.mrb[0].mxu0
        %1658 = vmatprep.mubr.f32.mxu0 0.0
        %1659 = vmatmul.mubr.f32.gmra.mrb[0].mxu0 %v1202
        %v1660 = vpop.f32.mrb[0].mxu0
        %v1661 = vadd.f32 %v1430, %v1660
        %v1662 = vpop.f32.mrb[0].mxu0
        %1663 = vmatprep.mubr.f32.mxu0 0.0
        %1664 = vmatmul.mubr.f32.gmra.mrb[0].mxu0 %v1205
        %v1665 = vpop.f32.mrb[0].mxu0
        %v1666 = vadd.f32 %v1435, %v1665
        %v1667 = vpop.f32.mrb[0].mxu0
        %1668 = vdwg.mxu0
        %s1669 = scalar_lea.vmem %s3, 384
        %v1670 = vld [vmem:[%s1669] sm:$0xff]
        %v1671 = vld [vmem:[%s1669 + $0x8] sm:$0xff]
        %v1672 = vld [vmem:[%s1669 + $0x10] sm:$0xff]
        %v1673 = vld [vmem:[%s1669 + $0x18] sm:$0xff]
        %v1674 = vld [vmem:[%s1669 + $0x20] sm:$0xff]
        %v1675 = vld [vmem:[%s1669 + $0x28] sm:$0xff]
        %v1676 = vld [vmem:[%s1669 + $0x30] sm:$0xff]
        %v1677 = vld [vmem:[%s1669 + $0x38] sm:$0xff]
        %v1679 = vsel %vm356, %v1098, 0
        %v1682 = vsel %vm356, %v1099, 0
        %1684 = vmatprep.subr.mxu0 0.0
        %1685 = vmatpush1.msra.mxu0 %v1670
        %1686 = vmatprep.subr.mxu0 0.0
        %1687 = vmatpush1.msra.mxu0 %v1671
        %1688 = vmatprep.subr.mxu0 0.0
        %1689 = vmatpush1.msra.mxu0 %v1672
        %1690 = vmatprep.subr.mxu0 0.0
        %1691 = vmatpush1.msra.mxu0 %v1673
        %1692 = vmatprep.subr.mxu0 0.0
        %1693 = vmatpush1.msra.mxu0 %v1674
        %1694 = vmatprep.subr.mxu0 0.0
        %1695 = vmatpush1.msra.mxu0 %v1675
        %1696 = vmatprep.subr.mxu0 0.0
        %1697 = vmatpush1.msra.mxu0 %v1676
        %1698 = vmatprep.subr.mxu0 0.0
        %1699 = vmatpush1.msra.mxu0 %v1677
        %1700 = vmatprep.subr.mxu0 0.0
        %1701 = vmatpush1.msra.mxu0 0.0
        %1702 = vmatprep.subr.mxu0 0.0
        %1703 = vmatpush1.msra.mxu0 0.0
        %1704 = vmatprep.subr.mxu0 0.0
        %1705 = vmatpush1.msra.mxu0 0.0
        %1706 = vmatprep.subr.mxu0 0.0
        %1707 = vmatpush1.msra.mxu0 0.0
        %1708 = vmatprep.subr.mxu0 0.0
        %1709 = vmatpush1.msra.mxu0 0.0
        %1710 = vmatprep.subr.mxu0 0.0
        %1711 = vmatpush1.msra.mxu0 0.0
        %1712 = vmatprep.subr.mxu0 0.0
        %1713 = vmatpush1.msra.mxu0 0.0
        %1714 = vmatprep.subr.mxu0 0.0
        %1715 = vmatpush1.msra.mxu0 0.0
        %1716 = vmatprep.subr.mxu0 0.0
        %1717 = vmatpush1.msra.mxu0 0.0
        %1718 = vmatprep.subr.mxu0 0.0
        %1719 = vmatpush1.msra.mxu0 0.0
        %1720 = vmatprep.subr.mxu0 0.0
        %1721 = vmatpush1.msra.mxu0 0.0
        %1722 = vmatprep.subr.mxu0 0.0
        %1723 = vmatpush1.msra.mxu0 0.0
        %1724 = vmatprep.subr.mxu0 0.0
        %1725 = vmatpush1.msra.mxu0 0.0
        %1726 = vmatprep.subr.mxu0 0.0
        %1727 = vmatpush1.msra.mxu0 0.0
        %1728 = vmatprep.subr.mxu0 0.0
        %1729 = vmatpush1.msra.mxu0 0.0
        %1730 = vmatprep.subr.mxu0 0.0
        %1731 = vmatpush1.msra.mxu0 0.0
        %1732 = vmatprep.subr.mxu0 0.0
        %1733 = vmatpush1.msra.mxu0 0.0
        %1734 = vmatprep.subr.mxu0 0.0
        %1735 = vmatpush1.msra.mxu0 0.0
        %1736 = vmatprep.subr.mxu0 0.0
        %1737 = vmatpush1.msra.mxu0 0.0
        %1738 = vmatprep.subr.mxu0 0.0
        %1739 = vmatpush1.msra.mxu0 0.0
        %1740 = vmatprep.subr.mxu0 0.0
        %1741 = vmatpush1.msra.mxu0 0.0
        %1742 = vmatprep.subr.mxu0 0.0
        %1743 = vmatpush1.msra.mxu0 0.0
        %1744 = vmatprep.subr.mxu0 0.0
        %1745 = vmatpush1.msra.mxu0 0.0
        %1746 = vmatprep.subr.mxu0 0.0
        %1747 = vmatpush1.msra.mxu0 0.0
        %1748 = vmatprep.mubr.f32.mxu0 0.0
        %1749 = vmatmul.mubr.f32.gmra.mrb[0].mxu0 %v1124
        %v1750 = vpop.f32.mrb[0].mxu0
        %v1751 = vadd.f32 0.0, %v1750
        %v1752 = vpop.f32.mrb[0].mxu0
        %1753 = vmatprep.mubr.f32.mxu0 0.0
        %1754 = vmatmul.mubr.f32.gmra.mrb[0].mxu0 %v1127
        %v1755 = vpop.f32.mrb[0].mxu0
        %v1756 = vadd.f32 0.0, %v1755
        %v1757 = vpop.f32.mrb[0].mxu0
        %1758 = vmatprep.mubr.f32.mxu0 0.0
        %1759 = vmatmul.mubr.f32.gmra.mrb[0].mxu0 %v1130
        %v1760 = vpop.f32.mrb[0].mxu0
        %v1761 = vadd.f32 0.0, %v1760
        %v1762 = vpop.f32.mrb[0].mxu0
        %1763 = vmatprep.mubr.f32.mxu0 0.0
        %1764 = vmatmul.mubr.f32.gmra.mrb[0].mxu0 %v1133
        %v1765 = vpop.f32.mrb[0].mxu0
        %v1766 = vadd.f32 0.0, %v1765
        %v1767 = vpop.f32.mrb[0].mxu0
        %1768 = vmatprep.mubr.f32.mxu0 0.0
        %1769 = vmatmul.mubr.f32.gmra.mrb[0].mxu0 %v1136
        %v1770 = vpop.f32.mrb[0].mxu0
        %v1771 = vadd.f32 0.0, %v1770
        %v1772 = vpop.f32.mrb[0].mxu0
        %1773 = vmatprep.mubr.f32.mxu0 0.0
        %1774 = vmatmul.mubr.f32.gmra.mrb[0].mxu0 %v1139
        %v1775 = vpop.f32.mrb[0].mxu0
        %v1776 = vadd.f32 0.0, %v1775
        %v1777 = vpop.f32.mrb[0].mxu0
        %1778 = vmatprep.mubr.f32.mxu0 0.0
        %1779 = vmatmul.mubr.f32.gmra.mrb[0].mxu0 %v1142
        %v1780 = vpop.f32.mrb[0].mxu0
        %v1781 = vadd.f32 0.0, %v1780
        %v1782 = vpop.f32.mrb[0].mxu0
        %1783 = vmatprep.mubr.f32.mxu0 0.0
        %1784 = vmatmul.mubr.f32.gmra.mrb[0].mxu0 %v1145
        %v1785 = vpop.f32.mrb[0].mxu0
        %v1786 = vadd.f32 0.0, %v1785
        %v1787 = vpop.f32.mrb[0].mxu0
        %1788 = vmatprep.mubr.f32.mxu0 0.0
        %1789 = vmatmul.mubr.f32.gmra.mrb[0].mxu0 %v1148
        %v1790 = vpop.f32.mrb[0].mxu0
        %v1791 = vadd.f32 0.0, %v1790
        %v1792 = vpop.f32.mrb[0].mxu0
        %1793 = vmatprep.mubr.f32.mxu0 0.0
        %1794 = vmatmul.mubr.f32.gmra.mrb[0].mxu0 %v1151
        %v1795 = vpop.f32.mrb[0].mxu0
        %v1796 = vadd.f32 0.0, %v1795
        %v1797 = vpop.f32.mrb[0].mxu0
        %1798 = vmatprep.mubr.f32.mxu0 0.0
        %1799 = vmatmul.mubr.f32.gmra.mrb[0].mxu0 %v1154
        %v1800 = vpop.f32.mrb[0].mxu0
        %v1801 = vadd.f32 0.0, %v1800
        %v1802 = vpop.f32.mrb[0].mxu0
        %1803 = vmatprep.mubr.f32.mxu0 0.0
        %1804 = vmatmul.mubr.f32.gmra.mrb[0].mxu0 %v1157
        %v1805 = vpop.f32.mrb[0].mxu0
        %v1806 = vadd.f32 0.0, %v1805
        %v1807 = vpop.f32.mrb[0].mxu0
        %1808 = vmatprep.mubr.f32.mxu0 0.0
        %1809 = vmatmul.mubr.f32.gmra.mrb[0].mxu0 %v1160
        %v1810 = vpop.f32.mrb[0].mxu0
        %v1811 = vadd.f32 0.0, %v1810
        %v1812 = vpop.f32.mrb[0].mxu0
        %1813 = vmatprep.mubr.f32.mxu0 0.0
        %1814 = vmatmul.mubr.f32.gmra.mrb[0].mxu0 %v1163
        %v1815 = vpop.f32.mrb[0].mxu0
        %v1816 = vadd.f32 0.0, %v1815
        %v1817 = vpop.f32.mrb[0].mxu0
        %1818 = vmatprep.mubr.f32.mxu0 0.0
        %1819 = vmatmul.mubr.f32.gmra.mrb[0].mxu0 %v1166
        %v1820 = vpop.f32.mrb[0].mxu0
        %v1821 = vadd.f32 0.0, %v1820
        %v1822 = vpop.f32.mrb[0].mxu0
        %1823 = vmatprep.mubr.f32.mxu0 0.0
        %1824 = vmatmul.mubr.f32.gmra.mrb[0].mxu0 %v1169
        %v1825 = vpop.f32.mrb[0].mxu0
        %v1826 = vadd.f32 0.0, %v1825
        %v1827 = vpop.f32.mrb[0].mxu0
        %1828 = vmatprep.mubr.f32.mxu0 0.0
        %1829 = vmatmul.mubr.f32.gmra.mrb[0].mxu0 %v1172
        %v1830 = vpop.f32.mrb[0].mxu0
        %v1831 = vadd.f32 0.0, %v1830
        %v1832 = vpop.f32.mrb[0].mxu0
        %1833 = vmatprep.mubr.f32.mxu0 0.0
        %1834 = vmatmul.mubr.f32.gmra.mrb[0].mxu0 %v1175
        %v1835 = vpop.f32.mrb[0].mxu0
        %v1836 = vadd.f32 0.0, %v1835
        %v1837 = vpop.f32.mrb[0].mxu0
        %1838 = vmatprep.mubr.f32.mxu0 0.0
        %1839 = vmatmul.mubr.f32.gmra.mrb[0].mxu0 %v1178
        %v1840 = vpop.f32.mrb[0].mxu0
        %v1841 = vadd.f32 0.0, %v1840
        %v1842 = vpop.f32.mrb[0].mxu0
        %1843 = vmatprep.mubr.f32.mxu0 0.0
        %1844 = vmatmul.mubr.f32.gmra.mrb[0].mxu0 %v1181
        %v1845 = vpop.f32.mrb[0].mxu0
        %v1846 = vadd.f32 0.0, %v1845
        %v1847 = vpop.f32.mrb[0].mxu0
        %1848 = vmatprep.mubr.f32.mxu0 0.0
        %1849 = vmatmul.mubr.f32.gmra.mrb[0].mxu0 %v1184
        %v1850 = vpop.f32.mrb[0].mxu0
        %v1851 = vadd.f32 0.0, %v1850
        %v1852 = vpop.f32.mrb[0].mxu0
        %1853 = vmatprep.mubr.f32.mxu0 0.0
        %1854 = vmatmul.mubr.f32.gmra.mrb[0].mxu0 %v1187
        %v1855 = vpop.f32.mrb[0].mxu0
        %v1856 = vadd.f32 0.0, %v1855
        %v1857 = vpop.f32.mrb[0].mxu0
        %1858 = vmatprep.mubr.f32.mxu0 0.0
        %1859 = vmatmul.mubr.f32.gmra.mrb[0].mxu0 %v1190
        %v1860 = vpop.f32.mrb[0].mxu0
        %v1861 = vadd.f32 0.0, %v1860
        %v1862 = vpop.f32.mrb[0].mxu0
        %1863 = vmatprep.mubr.f32.mxu0 0.0
        %1864 = vmatmul.mubr.f32.gmra.mrb[0].mxu0 %v1193
        %v1865 = vpop.f32.mrb[0].mxu0
        %v1866 = vadd.f32 0.0, %v1865
        %v1867 = vpop.f32.mrb[0].mxu0
        %1868 = vmatprep.mubr.f32.mxu0 0.0
        %1869 = vmatmul.mubr.f32.gmra.mrb[0].mxu0 %v1196
        %v1870 = vpop.f32.mrb[0].mxu0
        %v1871 = vadd.f32 0.0, %v1870
        %v1872 = vpop.f32.mrb[0].mxu0
        %1873 = vmatprep.mubr.f32.mxu0 0.0
        %1874 = vmatmul.mubr.f32.gmra.mrb[0].mxu0 %v1199
        %v1875 = vpop.f32.mrb[0].mxu0
        %v1876 = vadd.f32 0.0, %v1875
        %v1877 = vpop.f32.mrb[0].mxu0
        %1878 = vmatprep.mubr.f32.mxu0 0.0
        %1879 = vmatmul.mubr.f32.gmra.mrb[0].mxu0 %v1202
        %v1880 = vpop.f32.mrb[0].mxu0
        %v1881 = vadd.f32 0.0, %v1880
        %v1882 = vpop.f32.mrb[0].mxu0
        %1883 = vmatprep.mubr.f32.mxu0 0.0
        %1884 = vmatmul.mubr.f32.gmra.mrb[0].mxu0 %v1205
        %v1885 = vpop.f32.mrb[0].mxu0
        %v1886 = vadd.f32 0.0, %v1885
        %v1887 = vpop.f32.mrb[0].mxu0
        %1888 = vmatprep.mubr.f32.mxu0 0.0
        %1889 = vmatmul.mubr.f32.gmra.mrb[0].mxu0 %v1208
        %v1890 = vpop.f32.mrb[0].mxu0
        %v1891 = vadd.f32 0.0, %v1890
        %v1892 = vpop.f32.mrb[0].mxu0
        %1893 = vmatprep.mubr.f32.mxu0 0.0
        %1894 = vmatmul.mubr.f32.gmra.mrb[0].mxu0 %v1211
        %v1895 = vpop.f32.mrb[0].mxu0
        %v1896 = vadd.f32 0.0, %v1895
        %v1897 = vpop.f32.mrb[0].mxu0
        %1898 = vmatprep.mubr.f32.mxu0 0.0
        %1899 = vmatmul.mubr.f32.gmra.mrb[0].mxu0 %v1679
        %v1900 = vpop.f32.mrb[0].mxu0
        %v1901 = vadd.f32 0.0, %v1900
        %v1902 = vpop.f32.mrb[0].mxu0
        %1903 = vmatprep.mubr.f32.mxu0 0.0
        %1904 = vmatmul.mubr.f32.gmra.mrb[0].mxu0 %v1682
        %v1905 = vpop.f32.mrb[0].mxu0
        %v1906 = vadd.f32 0.0, %v1905
        %v1907 = vpop.f32.mrb[0].mxu0
        %1908 = vdwg.mxu0
        %v1909 = vadd.f32 %v1511, %v1751
        %v1910 = vadd.f32 %v1516, %v1756
        %v1911 = vadd.f32 %v1521, %v1761
        %v1912 = vadd.f32 %v1526, %v1766
        %v1913 = vadd.f32 %v1531, %v1771
        %v1914 = vadd.f32 %v1536, %v1776
        %v1915 = vadd.f32 %v1541, %v1781
        %v1916 = vadd.f32 %v1546, %v1786
        %v1917 = vadd.f32 %v1551, %v1791
        %v1918 = vadd.f32 %v1556, %v1796
        %v1919 = vadd.f32 %v1561, %v1801
        %v1920 = vadd.f32 %v1566, %v1806
        %v1921 = vadd.f32 %v1571, %v1811
        %v1922 = vadd.f32 %v1576, %v1816
        %v1923 = vadd.f32 %v1581, %v1821
        %v1924 = vadd.f32 %v1586, %v1826
        %v1925 = vadd.f32 %v1591, %v1831
        %v1926 = vadd.f32 %v1596, %v1836
        %v1927 = vadd.f32 %v1601, %v1841
        %v1928 = vadd.f32 %v1606, %v1846
        %v1929 = vadd.f32 %v1611, %v1851
        %v1930 = vadd.f32 %v1616, %v1856
        %v1931 = vadd.f32 %v1621, %v1861
        %v1932 = vadd.f32 %v1626, %v1866
        %v1933 = vadd.f32 %v1631, %v1871
        %v1934 = vadd.f32 %v1636, %v1876
        %v1935 = vadd.f32 %v1641, %v1881
        %v1936 = vadd.f32 %v1646, %v1886
        %v1937 = vadd.f32 %v1651, %v1891
        %v1938 = vadd.f32 %v1656, %v1896
        %v1939 = vadd.f32 %v1661, %v1901
        %v1940 = vadd.f32 %v1666, %v1906
        %v1941 = vld [vmem:[#allocation2 + $0x1] sm:$0xff]
        %v1942 = vld [vmem:[#allocation2 + $0x9] sm:$0xff]
        %v1943 = vld [vmem:[#allocation2 + $0x19] sm:$0xff]
        %v1944 = vld [vmem:[#allocation2 + $0x21] sm:$0xff]
        %v1945 = vld [vmem:[#allocation2 + $0x31] sm:$0xff]
        %v1946 = vld [vmem:[#allocation2 + $0x39] sm:$0xff]
        %v1947 = vld [vmem:[#allocation2 + $0x49] sm:$0xff]
        %v1948 = vld [vmem:[#allocation2 + $0x51] sm:$0xff]
        %v1949 = vld [vmem:[#allocation2 + $0x61] sm:$0xff]
        %v1950 = vld [vmem:[#allocation2 + $0x69] sm:$0xff]
        %v1951 = vld [vmem:[#allocation2 + $0x79] sm:$0xff]
        %v1952 = vld [vmem:[#allocation2 + $0x81] sm:$0xff]
        %v1953 = vld [vmem:[#allocation2 + $0x91] sm:$0xff]
        %v1954 = vld [vmem:[#allocation2 + $0x99] sm:$0xff]
        %v1955 = vld [vmem:[#allocation2 + $0xa9] sm:$0xff]
        %v1956 = vld [vmem:[#allocation2 + $0xb1] sm:$0xff]
        %v1957 = vld [vmem:[#allocation2 + $0xc1] sm:$0xff]
        %v1958 = vld [vmem:[#allocation2 + $0xc9] sm:$0xff]
        %v1959 = vld [vmem:[#allocation2 + $0xd9] sm:$0xff]
        %v1960 = vld [vmem:[#allocation2 + $0xe1] sm:$0xff]
        %v1961 = vld [vmem:[#allocation2 + $0xf1] sm:$0xff]
        %v1962 = vld [vmem:[#allocation2 + $0xf9] sm:$0xff]
        %v1963 = vld [vmem:[#allocation2 + $0x109] sm:$0xff]
        %v1964 = vld [vmem:[#allocation2 + $0x111] sm:$0xff]
        %v1965 = vld [vmem:[#allocation2 + $0x121] sm:$0xff]
        %v1966 = vld [vmem:[#allocation2 + $0x129] sm:$0xff]
        %v1967 = vld [vmem:[#allocation2 + $0x139] sm:$0xff]
        %v1968 = vld [vmem:[#allocation2 + $0x141] sm:$0xff]
        %v1969 = vld [vmem:[#allocation2 + $0x151] sm:$0xff]
        %v1970 = vld [vmem:[#allocation2 + $0x159] sm:$0xff]
        %v1971 = vld [vmem:[#allocation2 + $0x169] sm:$0xff]
        %v1972 = vld [vmem:[#allocation2 + $0x171] sm:$0xff]
        %v1973 = vld [vmem:[#allocation2 + $0x181] sm:$0xff]
        %v1974 = vld [vmem:[#allocation2 + $0x189] sm:$0xff]
        %v1975 = vld [vmem:[#allocation2 + $0x199] sm:$0xff]
        %v1976 = vld [vmem:[#allocation2 + $0x1a1] sm:$0xff]
        %s1977 = scalar_lea.vmem %s3, 64
        %v1978 = vld [vmem:[%s1977] sm:$0xff]
        %v1979 = vld [vmem:[%s1977 + $0x8] sm:$0xff]
        %v1980 = vld [vmem:[%s1977 + $0x10] sm:$0xff]
        %v1981 = vld [vmem:[%s1977 + $0x18] sm:$0xff]
        %v1982 = vld [vmem:[%s1977 + $0x20] sm:$0xff]
        %v1983 = vld [vmem:[%s1977 + $0x28] sm:$0xff]
        %v1984 = vld [vmem:[%s1977 + $0x30] sm:$0xff]
        %v1985 = vld [vmem:[%s1977 + $0x38] sm:$0xff]
        %v1987 = vsel %vm356, %v1941, 0
        %v1990 = vsel %vm356, %v1942, 0
        %v1993 = vsel %vm356, %v1943, 0
        %v1996 = vsel %vm356, %v1944, 0
        %v1999 = vsel %vm356, %v1945, 0
        %v2002 = vsel %vm356, %v1946, 0
        %v2005 = vsel %vm356, %v1947, 0
        %v2008 = vsel %vm356, %v1948, 0
        %v2011 = vsel %vm356, %v1949, 0
        %v2014 = vsel %vm356, %v1950, 0
        %v2017 = vsel %vm356, %v1951, 0
        %v2020 = vsel %vm356, %v1952, 0
        %v2023 = vsel %vm356, %v1953, 0
        %v2026 = vsel %vm356, %v1954, 0
        %v2029 = vsel %vm356, %v1955, 0
        %v2032 = vsel %vm356, %v1956, 0
        %v2035 = vsel %vm356, %v1957, 0
        %v2038 = vsel %vm356, %v1958, 0
        %v2041 = vsel %vm356, %v1959, 0
        %v2044 = vsel %vm356, %v1960, 0
        %v2047 = vsel %vm356, %v1961, 0
        %v2050 = vsel %vm356, %v1962, 0
        %v2053 = vsel %vm356, %v1963, 0
        %v2056 = vsel %vm356, %v1964, 0
        %v2059 = vsel %vm356, %v1965, 0
        %v2062 = vsel %vm356, %v1966, 0
        %v2065 = vsel %vm356, %v1967, 0
        %v2068 = vsel %vm356, %v1968, 0
        %v2071 = vsel %vm356, %v1969, 0
        %v2074 = vsel %vm356, %v1970, 0
        %v2077 = vsel %vm356, %v1971, 0
        %v2080 = vsel %vm356, %v1972, 0
        %2082 = vmatprep.subr.mxu0 0.0
        %2083 = vmatpush1.msra.mxu0 %v1978
        %2084 = vmatprep.subr.mxu0 0.0
        %2085 = vmatpush1.msra.mxu0 %v1979
        %2086 = vmatprep.subr.mxu0 0.0
        %2087 = vmatpush1.msra.mxu0 %v1980
        %2088 = vmatprep.subr.mxu0 0.0
        %2089 = vmatpush1.msra.mxu0 %v1981
        %2090 = vmatprep.subr.mxu0 0.0
        %2091 = vmatpush1.msra.mxu0 %v1982
        %2092 = vmatprep.subr.mxu0 0.0
        %2093 = vmatpush1.msra.mxu0 %v1983
        %2094 = vmatprep.subr.mxu0 0.0
        %2095 = vmatpush1.msra.mxu0 %v1984
        %2096 = vmatprep.subr.mxu0 0.0
        %2097 = vmatpush1.msra.mxu0 %v1985
        %2098 = vmatprep.subr.mxu0 0.0
        %2099 = vmatpush1.msra.mxu0 0.0
        %2100 = vmatprep.subr.mxu0 0.0
        %2101 = vmatpush1.msra.mxu0 0.0
        %2102 = vmatprep.subr.mxu0 0.0
        %2103 = vmatpush1.msra.mxu0 0.0
        %2104 = vmatprep.subr.mxu0 0.0
        %2105 = vmatpush1.msra.mxu0 0.0
        %2106 = vmatprep.subr.mxu0 0.0
        %2107 = vmatpush1.msra.mxu0 0.0
        %2108 = vmatprep.subr.mxu0 0.0
        %2109 = vmatpush1.msra.mxu0 0.0
        %2110 = vmatprep.subr.mxu0 0.0
        %2111 = vmatpush1.msra.mxu0 0.0
        %2112 = vmatprep.subr.mxu0 0.0
        %2113 = vmatpush1.msra.mxu0 0.0
        %2114 = vmatprep.subr.mxu0 0.0
        %2115 = vmatpush1.msra.mxu0 0.0
        %2116 = vmatprep.subr.mxu0 0.0
        %2117 = vmatpush1.msra.mxu0 0.0
        %2118 = vmatprep.subr.mxu0 0.0
        %2119 = vmatpush1.msra.mxu0 0.0
        %2120 = vmatprep.subr.mxu0 0.0
        %2121 = vmatpush1.msra.mxu0 0.0
        %2122 = vmatprep.subr.mxu0 0.0
        %2123 = vmatpush1.msra.mxu0 0.0
        %2124 = vmatprep.subr.mxu0 0.0
        %2125 = vmatpush1.msra.mxu0 0.0
        %2126 = vmatprep.subr.mxu0 0.0
        %2127 = vmatpush1.msra.mxu0 0.0
        %2128 = vmatprep.subr.mxu0 0.0
        %2129 = vmatpush1.msra.mxu0 0.0
        %2130 = vmatprep.subr.mxu0 0.0
        %2131 = vmatpush1.msra.mxu0 0.0
        %2132 = vmatprep.subr.mxu0 0.0
        %2133 = vmatpush1.msra.mxu0 0.0
        %2134 = vmatprep.subr.mxu0 0.0
        %2135 = vmatpush1.msra.mxu0 0.0
        %2136 = vmatprep.subr.mxu0 0.0
        %2137 = vmatpush1.msra.mxu0 0.0
        %2138 = vmatprep.subr.mxu0 0.0
        %2139 = vmatpush1.msra.mxu0 0.0
        %2140 = vmatprep.subr.mxu0 0.0
        %2141 = vmatpush1.msra.mxu0 0.0
        %2142 = vmatprep.subr.mxu0 0.0
        %2143 = vmatpush1.msra.mxu0 0.0
        %2144 = vmatprep.subr.mxu0 0.0
        %2145 = vmatpush1.msra.mxu0 0.0
        %2146 = vmatprep.mubr.f32.mxu0 0.0
        %2147 = vmatmul.mubr.f32.gmra.mrb[0].mxu0 %v1987
        %v2148 = vpop.f32.mrb[0].mxu0
        %v2149 = vadd.f32 0.0, %v2148
        %v2150 = vpop.f32.mrb[0].mxu0
        %2151 = vmatprep.mubr.f32.mxu0 0.0
        %2152 = vmatmul.mubr.f32.gmra.mrb[0].mxu0 %v1990
        %v2153 = vpop.f32.mrb[0].mxu0
        %v2154 = vadd.f32 0.0, %v2153
        %v2155 = vpop.f32.mrb[0].mxu0
        %2156 = vmatprep.mubr.f32.mxu0 0.0
        %2157 = vmatmul.mubr.f32.gmra.mrb[0].mxu0 %v1993
        %v2158 = vpop.f32.mrb[0].mxu0
        %v2159 = vadd.f32 0.0, %v2158
        %v2160 = vpop.f32.mrb[0].mxu0
        %2161 = vmatprep.mubr.f32.mxu0 0.0
        %2162 = vmatmul.mubr.f32.gmra.mrb[0].mxu0 %v1996
        %v2163 = vpop.f32.mrb[0].mxu0
        %v2164 = vadd.f32 0.0, %v2163
        %v2165 = vpop.f32.mrb[0].mxu0
        %2166 = vmatprep.mubr.f32.mxu0 0.0
        %2167 = vmatmul.mubr.f32.gmra.mrb[0].mxu0 %v1999
        %v2168 = vpop.f32.mrb[0].mxu0
        %v2169 = vadd.f32 0.0, %v2168
        %v2170 = vpop.f32.mrb[0].mxu0
        %2171 = vmatprep.mubr.f32.mxu0 0.0
        %2172 = vmatmul.mubr.f32.gmra.mrb[0].mxu0 %v2002
        %v2173 = vpop.f32.mrb[0].mxu0
        %v2174 = vadd.f32 0.0, %v2173
        %v2175 = vpop.f32.mrb[0].mxu0
        %2176 = vmatprep.mubr.f32.mxu0 0.0
        %2177 = vmatmul.mubr.f32.gmra.mrb[0].mxu0 %v2005
        %v2178 = vpop.f32.mrb[0].mxu0
        %v2179 = vadd.f32 0.0, %v2178
        %v2180 = vpop.f32.mrb[0].mxu0
        %2181 = vmatprep.mubr.f32.mxu0 0.0
        %2182 = vmatmul.mubr.f32.gmra.mrb[0].mxu0 %v2008
        %v2183 = vpop.f32.mrb[0].mxu0
        %v2184 = vadd.f32 0.0, %v2183
        %v2185 = vpop.f32.mrb[0].mxu0
        %2186 = vmatprep.mubr.f32.mxu0 0.0
        %2187 = vmatmul.mubr.f32.gmra.mrb[0].mxu0 %v2011
        %v2188 = vpop.f32.mrb[0].mxu0
        %v2189 = vadd.f32 0.0, %v2188
        %v2190 = vpop.f32.mrb[0].mxu0
        %2191 = vmatprep.mubr.f32.mxu0 0.0
        %2192 = vmatmul.mubr.f32.gmra.mrb[0].mxu0 %v2014
        %v2193 = vpop.f32.mrb[0].mxu0
        %v2194 = vadd.f32 0.0, %v2193
        %v2195 = vpop.f32.mrb[0].mxu0
        %2196 = vmatprep.mubr.f32.mxu0 0.0
        %2197 = vmatmul.mubr.f32.gmra.mrb[0].mxu0 %v2017
        %v2198 = vpop.f32.mrb[0].mxu0
        %v2199 = vadd.f32 0.0, %v2198
        %v2200 = vpop.f32.mrb[0].mxu0
        %2201 = vmatprep.mubr.f32.mxu0 0.0
        %2202 = vmatmul.mubr.f32.gmra.mrb[0].mxu0 %v2020
        %v2203 = vpop.f32.mrb[0].mxu0
        %v2204 = vadd.f32 0.0, %v2203
        %v2205 = vpop.f32.mrb[0].mxu0
        %2206 = vmatprep.mubr.f32.mxu0 0.0
        %2207 = vmatmul.mubr.f32.gmra.mrb[0].mxu0 %v2023
        %v2208 = vpop.f32.mrb[0].mxu0
        %v2209 = vadd.f32 0.0, %v2208
        %v2210 = vpop.f32.mrb[0].mxu0
        %2211 = vmatprep.mubr.f32.mxu0 0.0
        %2212 = vmatmul.mubr.f32.gmra.mrb[0].mxu0 %v2026
        %v2213 = vpop.f32.mrb[0].mxu0
        %v2214 = vadd.f32 0.0, %v2213
        %v2215 = vpop.f32.mrb[0].mxu0
        %2216 = vmatprep.mubr.f32.mxu0 0.0
        %2217 = vmatmul.mubr.f32.gmra.mrb[0].mxu0 %v2029
        %v2218 = vpop.f32.mrb[0].mxu0
        %v2219 = vadd.f32 0.0, %v2218
        %v2220 = vpop.f32.mrb[0].mxu0
        %2221 = vmatprep.mubr.f32.mxu0 0.0
        %2222 = vmatmul.mubr.f32.gmra.mrb[0].mxu0 %v2032
        %v2223 = vpop.f32.mrb[0].mxu0
        %v2224 = vadd.f32 0.0, %v2223
        %v2225 = vpop.f32.mrb[0].mxu0
        %2226 = vmatprep.mubr.f32.mxu0 0.0
        %2227 = vmatmul.mubr.f32.gmra.mrb[0].mxu0 %v2035
        %v2228 = vpop.f32.mrb[0].mxu0
        %v2229 = vadd.f32 0.0, %v2228
        %v2230 = vpop.f32.mrb[0].mxu0
        %2231 = vmatprep.mubr.f32.mxu0 0.0
        %2232 = vmatmul.mubr.f32.gmra.mrb[0].mxu0 %v2038
        %v2233 = vpop.f32.mrb[0].mxu0
        %v2234 = vadd.f32 0.0, %v2233
        %v2235 = vpop.f32.mrb[0].mxu0
        %2236 = vmatprep.mubr.f32.mxu0 0.0
        %2237 = vmatmul.mubr.f32.gmra.mrb[0].mxu0 %v2041
        %v2238 = vpop.f32.mrb[0].mxu0
        %v2239 = vadd.f32 0.0, %v2238
        %v2240 = vpop.f32.mrb[0].mxu0
        %2241 = vmatprep.mubr.f32.mxu0 0.0
        %2242 = vmatmul.mubr.f32.gmra.mrb[0].mxu0 %v2044
        %v2243 = vpop.f32.mrb[0].mxu0
        %v2244 = vadd.f32 0.0, %v2243
        %v2245 = vpop.f32.mrb[0].mxu0
        %2246 = vmatprep.mubr.f32.mxu0 0.0
        %2247 = vmatmul.mubr.f32.gmra.mrb[0].mxu0 %v2047
        %v2248 = vpop.f32.mrb[0].mxu0
        %v2249 = vadd.f32 0.0, %v2248
        %v2250 = vpop.f32.mrb[0].mxu0
        %2251 = vmatprep.mubr.f32.mxu0 0.0
        %2252 = vmatmul.mubr.f32.gmra.mrb[0].mxu0 %v2050
        %v2253 = vpop.f32.mrb[0].mxu0
        %v2254 = vadd.f32 0.0, %v2253
        %v2255 = vpop.f32.mrb[0].mxu0
        %2256 = vmatprep.mubr.f32.mxu0 0.0
        %2257 = vmatmul.mubr.f32.gmra.mrb[0].mxu0 %v2053
        %v2258 = vpop.f32.mrb[0].mxu0
        %v2259 = vadd.f32 0.0, %v2258
        %v2260 = vpop.f32.mrb[0].mxu0
        %2261 = vmatprep.mubr.f32.mxu0 0.0
        %2262 = vmatmul.mubr.f32.gmra.mrb[0].mxu0 %v2056
        %v2263 = vpop.f32.mrb[0].mxu0
        %v2264 = vadd.f32 0.0, %v2263
        %v2265 = vpop.f32.mrb[0].mxu0
        %2266 = vmatprep.mubr.f32.mxu0 0.0
        %2267 = vmatmul.mubr.f32.gmra.mrb[0].mxu0 %v2059
        %v2268 = vpop.f32.mrb[0].mxu0
        %v2269 = vadd.f32 0.0, %v2268
        %v2270 = vpop.f32.mrb[0].mxu0
        %2271 = vmatprep.mubr.f32.mxu0 0.0
        %2272 = vmatmul.mubr.f32.gmra.mrb[0].mxu0 %v2062
        %v2273 = vpop.f32.mrb[0].mxu0
        %v2274 = vadd.f32 0.0, %v2273
        %v2275 = vpop.f32.mrb[0].mxu0
        %2276 = vmatprep.mubr.f32.mxu0 0.0
        %2277 = vmatmul.mubr.f32.gmra.mrb[0].mxu0 %v2065
        %v2278 = vpop.f32.mrb[0].mxu0
        %v2279 = vadd.f32 0.0, %v2278
        %v2280 = vpop.f32.mrb[0].mxu0
        %2281 = vmatprep.mubr.f32.mxu0 0.0
        %2282 = vmatmul.mubr.f32.gmra.mrb[0].mxu0 %v2068
        %v2283 = vpop.f32.mrb[0].mxu0
        %v2284 = vadd.f32 0.0, %v2283
        %v2285 = vpop.f32.mrb[0].mxu0
        %2286 = vmatprep.mubr.f32.mxu0 0.0
        %2287 = vmatmul.mubr.f32.gmra.mrb[0].mxu0 %v2071
        %v2288 = vpop.f32.mrb[0].mxu0
        %v2289 = vadd.f32 0.0, %v2288
        %v2290 = vpop.f32.mrb[0].mxu0
        %2291 = vmatprep.mubr.f32.mxu0 0.0
        %2292 = vmatmul.mubr.f32.gmra.mrb[0].mxu0 %v2074
        %v2293 = vpop.f32.mrb[0].mxu0
        %v2294 = vadd.f32 0.0, %v2293
        %v2295 = vpop.f32.mrb[0].mxu0
        %2296 = vmatprep.mubr.f32.mxu0 0.0
        %2297 = vmatmul.mubr.f32.gmra.mrb[0].mxu0 %v2077
        %v2298 = vpop.f32.mrb[0].mxu0
        %v2299 = vadd.f32 0.0, %v2298
        %v2300 = vpop.f32.mrb[0].mxu0
        %2301 = vmatprep.mubr.f32.mxu0 0.0
        %2302 = vmatmul.mubr.f32.gmra.mrb[0].mxu0 %v2080
        %v2303 = vpop.f32.mrb[0].mxu0
        %v2304 = vadd.f32 0.0, %v2303
        %v2305 = vpop.f32.mrb[0].mxu0
        %2306 = vdwg.mxu0
        %v2307 = vadd.f32 %v1909, %v2149
        %v2308 = vadd.f32 %v1910, %v2154
        %v2309 = vadd.f32 %v1911, %v2159
        %v2310 = vadd.f32 %v1912, %v2164
        %v2311 = vadd.f32 %v1913, %v2169
        %v2312 = vadd.f32 %v1914, %v2174
        %v2313 = vadd.f32 %v1915, %v2179
        %v2314 = vadd.f32 %v1916, %v2184
        %v2315 = vadd.f32 %v1917, %v2189
        %v2316 = vadd.f32 %v1918, %v2194
        %v2317 = vadd.f32 %v1919, %v2199
        %v2318 = vadd.f32 %v1920, %v2204
        %v2319 = vadd.f32 %v1921, %v2209
        %v2320 = vadd.f32 %v1922, %v2214
        %v2321 = vadd.f32 %v1923, %v2219
        %v2322 = vadd.f32 %v1924, %v2224
        %v2323 = vadd.f32 %v1925, %v2229
        %v2324 = vadd.f32 %v1926, %v2234
        %v2325 = vadd.f32 %v1927, %v2239
        %v2326 = vadd.f32 %v1928, %v2244
        %v2327 = vadd.f32 %v1929, %v2249
        %v2328 = vadd.f32 %v1930, %v2254
        %v2329 = vadd.f32 %v1931, %v2259
        %v2330 = vadd.f32 %v1932, %v2264
        %v2331 = vadd.f32 %v1933, %v2269
        %v2332 = vadd.f32 %v1934, %v2274
        %v2333 = vadd.f32 %v1935, %v2279
        %v2334 = vadd.f32 %v1936, %v2284
        %v2335 = vadd.f32 %v1937, %v2289
        %v2336 = vadd.f32 %v1938, %v2294
        %v2337 = vadd.f32 %v1939, %v2299
        %v2338 = vadd.f32 %v1940, %v2304
        %s2339 = scalar_lea.vmem %s3, 256
        %v2340 = vld [vmem:[%s2339] sm:$0xff]
        %v2341 = vld [vmem:[%s2339 + $0x8] sm:$0xff]
        %v2342 = vld [vmem:[%s2339 + $0x10] sm:$0xff]
        %v2343 = vld [vmem:[%s2339 + $0x18] sm:$0xff]
        %v2344 = vld [vmem:[%s2339 + $0x20] sm:$0xff]
        %v2345 = vld [vmem:[%s2339 + $0x28] sm:$0xff]
        %v2346 = vld [vmem:[%s2339 + $0x30] sm:$0xff]
        %v2347 = vld [vmem:[%s2339 + $0x38] sm:$0xff]
        %v2349 = vsel %vm356, %v1973, 0
        %v2352 = vsel %vm356, %v1974, 0
        %2354 = vmatprep.subr.mxu0 0.0
        %2355 = vmatpush1.msra.mxu0 %v2340
        %2356 = vmatprep.subr.mxu0 0.0
        %2357 = vmatpush1.msra.mxu0 %v2341
        %2358 = vmatprep.subr.mxu0 0.0
        %2359 = vmatpush1.msra.mxu0 %v2342
        %2360 = vmatprep.subr.mxu0 0.0
        %2361 = vmatpush1.msra.mxu0 %v2343
        %2362 = vmatprep.subr.mxu0 0.0
        %2363 = vmatpush1.msra.mxu0 %v2344
        %2364 = vmatprep.subr.mxu0 0.0
        %2365 = vmatpush1.msra.mxu0 %v2345
        %2366 = vmatprep.subr.mxu0 0.0
        %2367 = vmatpush1.msra.mxu0 %v2346
        %2368 = vmatprep.subr.mxu0 0.0
        %2369 = vmatpush1.msra.mxu0 %v2347
        %2370 = vmatprep.subr.mxu0 0.0
        %2371 = vmatpush1.msra.mxu0 0.0
        %2372 = vmatprep.subr.mxu0 0.0
        %2373 = vmatpush1.msra.mxu0 0.0
        %2374 = vmatprep.subr.mxu0 0.0
        %2375 = vmatpush1.msra.mxu0 0.0
        %2376 = vmatprep.subr.mxu0 0.0
        %2377 = vmatpush1.msra.mxu0 0.0
        %2378 = vmatprep.subr.mxu0 0.0
        %2379 = vmatpush1.msra.mxu0 0.0
        %2380 = vmatprep.subr.mxu0 0.0
        %2381 = vmatpush1.msra.mxu0 0.0
        %2382 = vmatprep.subr.mxu0 0.0
        %2383 = vmatpush1.msra.mxu0 0.0
        %2384 = vmatprep.subr.mxu0 0.0
        %2385 = vmatpush1.msra.mxu0 0.0
        %2386 = vmatprep.subr.mxu0 0.0
        %2387 = vmatpush1.msra.mxu0 0.0
        %2388 = vmatprep.subr.mxu0 0.0
        %2389 = vmatpush1.msra.mxu0 0.0
        %2390 = vmatprep.subr.mxu0 0.0
        %2391 = vmatpush1.msra.mxu0 0.0
        %2392 = vmatprep.subr.mxu0 0.0
        %2393 = vmatpush1.msra.mxu0 0.0
        %2394 = vmatprep.subr.mxu0 0.0
        %2395 = vmatpush1.msra.mxu0 0.0
        %2396 = vmatprep.subr.mxu0 0.0
        %2397 = vmatpush1.msra.mxu0 0.0
        %2398 = vmatprep.subr.mxu0 0.0
        %2399 = vmatpush1.msra.mxu0 0.0
        %2400 = vmatprep.subr.mxu0 0.0
        %2401 = vmatpush1.msra.mxu0 0.0
        %2402 = vmatprep.subr.mxu0 0.0
        %2403 = vmatpush1.msra.mxu0 0.0
        %2404 = vmatprep.subr.mxu0 0.0
        %2405 = vmatpush1.msra.mxu0 0.0
        %2406 = vmatprep.subr.mxu0 0.0
        %2407 = vmatpush1.msra.mxu0 0.0
        %2408 = vmatprep.subr.mxu0 0.0
        %2409 = vmatpush1.msra.mxu0 0.0
        %2410 = vmatprep.subr.mxu0 0.0
        %2411 = vmatpush1.msra.mxu0 0.0
        %2412 = vmatprep.subr.mxu0 0.0
        %2413 = vmatpush1.msra.mxu0 0.0
        %2414 = vmatprep.subr.mxu0 0.0
        %2415 = vmatpush1.msra.mxu0 0.0
        %2416 = vmatprep.subr.mxu0 0.0
        %2417 = vmatpush1.msra.mxu0 0.0
        %2418 = vmatprep.mubr.f32.mxu0 0.0
        %2419 = vmatmul.mubr.f32.gmra.mrb[0].mxu0 %v1993
        %v2420 = vpop.f32.mrb[0].mxu0
        %v2421 = vadd.f32 0.0, %v2420
        %v2422 = vpop.f32.mrb[0].mxu0
        %2423 = vmatprep.mubr.f32.mxu0 0.0
        %2424 = vmatmul.mubr.f32.gmra.mrb[0].mxu0 %v1996
        %v2425 = vpop.f32.mrb[0].mxu0
        %v2426 = vadd.f32 0.0, %v2425
        %v2427 = vpop.f32.mrb[0].mxu0
        %2428 = vmatprep.mubr.f32.mxu0 0.0
        %2429 = vmatmul.mubr.f32.gmra.mrb[0].mxu0 %v1999
        %v2430 = vpop.f32.mrb[0].mxu0
        %v2431 = vadd.f32 0.0, %v2430
        %v2432 = vpop.f32.mrb[0].mxu0
        %2433 = vmatprep.mubr.f32.mxu0 0.0
        %2434 = vmatmul.mubr.f32.gmra.mrb[0].mxu0 %v2002
        %v2435 = vpop.f32.mrb[0].mxu0
        %v2436 = vadd.f32 0.0, %v2435
        %v2437 = vpop.f32.mrb[0].mxu0
        %2438 = vmatprep.mubr.f32.mxu0 0.0
        %2439 = vmatmul.mubr.f32.gmra.mrb[0].mxu0 %v2005
        %v2440 = vpop.f32.mrb[0].mxu0
        %v2441 = vadd.f32 0.0, %v2440
        %v2442 = vpop.f32.mrb[0].mxu0
        %2443 = vmatprep.mubr.f32.mxu0 0.0
        %2444 = vmatmul.mubr.f32.gmra.mrb[0].mxu0 %v2008
        %v2445 = vpop.f32.mrb[0].mxu0
        %v2446 = vadd.f32 0.0, %v2445
        %v2447 = vpop.f32.mrb[0].mxu0
        %2448 = vmatprep.mubr.f32.mxu0 0.0
        %2449 = vmatmul.mubr.f32.gmra.mrb[0].mxu0 %v2011
        %v2450 = vpop.f32.mrb[0].mxu0
        %v2451 = vadd.f32 0.0, %v2450
        %v2452 = vpop.f32.mrb[0].mxu0
        %2453 = vmatprep.mubr.f32.mxu0 0.0
        %2454 = vmatmul.mubr.f32.gmra.mrb[0].mxu0 %v2014
        %v2455 = vpop.f32.mrb[0].mxu0
        %v2456 = vadd.f32 0.0, %v2455
        %v2457 = vpop.f32.mrb[0].mxu0
        %2458 = vmatprep.mubr.f32.mxu0 0.0
        %2459 = vmatmul.mubr.f32.gmra.mrb[0].mxu0 %v2017
        %v2460 = vpop.f32.mrb[0].mxu0
        %v2461 = vadd.f32 0.0, %v2460
        %v2462 = vpop.f32.mrb[0].mxu0
        %2463 = vmatprep.mubr.f32.mxu0 0.0
        %2464 = vmatmul.mubr.f32.gmra.mrb[0].mxu0 %v2020
        %v2465 = vpop.f32.mrb[0].mxu0
        %v2466 = vadd.f32 0.0, %v2465
        %v2467 = vpop.f32.mrb[0].mxu0
        %2468 = vmatprep.mubr.f32.mxu0 0.0
        %2469 = vmatmul.mubr.f32.gmra.mrb[0].mxu0 %v2023
        %v2470 = vpop.f32.mrb[0].mxu0
        %v2471 = vadd.f32 0.0, %v2470
        %v2472 = vpop.f32.mrb[0].mxu0
        %2473 = vmatprep.mubr.f32.mxu0 0.0
        %2474 = vmatmul.mubr.f32.gmra.mrb[0].mxu0 %v2026
        %v2475 = vpop.f32.mrb[0].mxu0
        %v2476 = vadd.f32 0.0, %v2475
        %v2477 = vpop.f32.mrb[0].mxu0
        %2478 = vmatprep.mubr.f32.mxu0 0.0
        %2479 = vmatmul.mubr.f32.gmra.mrb[0].mxu0 %v2029
        %v2480 = vpop.f32.mrb[0].mxu0
        %v2481 = vadd.f32 0.0, %v2480
        %v2482 = vpop.f32.mrb[0].mxu0
        %2483 = vmatprep.mubr.f32.mxu0 0.0
        %2484 = vmatmul.mubr.f32.gmra.mrb[0].mxu0 %v2032
        %v2485 = vpop.f32.mrb[0].mxu0
        %v2486 = vadd.f32 0.0, %v2485
        %v2487 = vpop.f32.mrb[0].mxu0
        %2488 = vmatprep.mubr.f32.mxu0 0.0
        %2489 = vmatmul.mubr.f32.gmra.mrb[0].mxu0 %v2035
        %v2490 = vpop.f32.mrb[0].mxu0
        %v2491 = vadd.f32 0.0, %v2490
        %v2492 = vpop.f32.mrb[0].mxu0
        %2493 = vmatprep.mubr.f32.mxu0 0.0
        %2494 = vmatmul.mubr.f32.gmra.mrb[0].mxu0 %v2038
        %v2495 = vpop.f32.mrb[0].mxu0
        %v2496 = vadd.f32 0.0, %v2495
        %v2497 = vpop.f32.mrb[0].mxu0
        %2498 = vmatprep.mubr.f32.mxu0 0.0
        %2499 = vmatmul.mubr.f32.gmra.mrb[0].mxu0 %v2041
        %v2500 = vpop.f32.mrb[0].mxu0
        %v2501 = vadd.f32 0.0, %v2500
        %v2502 = vpop.f32.mrb[0].mxu0
        %2503 = vmatprep.mubr.f32.mxu0 0.0
        %2504 = vmatmul.mubr.f32.gmra.mrb[0].mxu0 %v2044
        %v2505 = vpop.f32.mrb[0].mxu0
        %v2506 = vadd.f32 0.0, %v2505
        %v2507 = vpop.f32.mrb[0].mxu0
        %2508 = vmatprep.mubr.f32.mxu0 0.0
        %2509 = vmatmul.mubr.f32.gmra.mrb[0].mxu0 %v2047
        %v2510 = vpop.f32.mrb[0].mxu0
        %v2511 = vadd.f32 0.0, %v2510
        %v2512 = vpop.f32.mrb[0].mxu0
        %2513 = vmatprep.mubr.f32.mxu0 0.0
        %2514 = vmatmul.mubr.f32.gmra.mrb[0].mxu0 %v2050
        %v2515 = vpop.f32.mrb[0].mxu0
        %v2516 = vadd.f32 0.0, %v2515
        %v2517 = vpop.f32.mrb[0].mxu0
        %2518 = vmatprep.mubr.f32.mxu0 0.0
        %2519 = vmatmul.mubr.f32.gmra.mrb[0].mxu0 %v2053
        %v2520 = vpop.f32.mrb[0].mxu0
        %v2521 = vadd.f32 0.0, %v2520
        %v2522 = vpop.f32.mrb[0].mxu0
        %2523 = vmatprep.mubr.f32.mxu0 0.0
        %2524 = vmatmul.mubr.f32.gmra.mrb[0].mxu0 %v2056
        %v2525 = vpop.f32.mrb[0].mxu0
        %v2526 = vadd.f32 0.0, %v2525
        %v2527 = vpop.f32.mrb[0].mxu0
        %2528 = vmatprep.mubr.f32.mxu0 0.0
        %2529 = vmatmul.mubr.f32.gmra.mrb[0].mxu0 %v2059
        %v2530 = vpop.f32.mrb[0].mxu0
        %v2531 = vadd.f32 0.0, %v2530
        %v2532 = vpop.f32.mrb[0].mxu0
        %2533 = vmatprep.mubr.f32.mxu0 0.0
        %2534 = vmatmul.mubr.f32.gmra.mrb[0].mxu0 %v2062
        %v2535 = vpop.f32.mrb[0].mxu0
        %v2536 = vadd.f32 0.0, %v2535
        %v2537 = vpop.f32.mrb[0].mxu0
        %2538 = vmatprep.mubr.f32.mxu0 0.0
        %2539 = vmatmul.mubr.f32.gmra.mrb[0].mxu0 %v2065
        %v2540 = vpop.f32.mrb[0].mxu0
        %v2541 = vadd.f32 0.0, %v2540
        %v2542 = vpop.f32.mrb[0].mxu0
        %2543 = vmatprep.mubr.f32.mxu0 0.0
        %2544 = vmatmul.mubr.f32.gmra.mrb[0].mxu0 %v2068
        %v2545 = vpop.f32.mrb[0].mxu0
        %v2546 = vadd.f32 0.0, %v2545
        %v2547 = vpop.f32.mrb[0].mxu0
        %2548 = vmatprep.mubr.f32.mxu0 0.0
        %2549 = vmatmul.mubr.f32.gmra.mrb[0].mxu0 %v2071
        %v2550 = vpop.f32.mrb[0].mxu0
        %v2551 = vadd.f32 0.0, %v2550
        %v2552 = vpop.f32.mrb[0].mxu0
        %2553 = vmatprep.mubr.f32.mxu0 0.0
        %2554 = vmatmul.mubr.f32.gmra.mrb[0].mxu0 %v2074
        %v2555 = vpop.f32.mrb[0].mxu0
        %v2556 = vadd.f32 0.0, %v2555
        %v2557 = vpop.f32.mrb[0].mxu0
        %2558 = vmatprep.mubr.f32.mxu0 0.0
        %2559 = vmatmul.mubr.f32.gmra.mrb[0].mxu0 %v2077
        %v2560 = vpop.f32.mrb[0].mxu0
        %v2561 = vadd.f32 0.0, %v2560
        %v2562 = vpop.f32.mrb[0].mxu0
        %2563 = vmatprep.mubr.f32.mxu0 0.0
        %2564 = vmatmul.mubr.f32.gmra.mrb[0].mxu0 %v2080
        %v2565 = vpop.f32.mrb[0].mxu0
        %v2566 = vadd.f32 0.0, %v2565
        %v2567 = vpop.f32.mrb[0].mxu0
        %2568 = vmatprep.mubr.f32.mxu0 0.0
        %2569 = vmatmul.mubr.f32.gmra.mrb[0].mxu0 %v2349
        %v2570 = vpop.f32.mrb[0].mxu0
        %v2571 = vadd.f32 0.0, %v2570
        %v2572 = vpop.f32.mrb[0].mxu0
        %2573 = vmatprep.mubr.f32.mxu0 0.0
        %2574 = vmatmul.mubr.f32.gmra.mrb[0].mxu0 %v2352
        %v2575 = vpop.f32.mrb[0].mxu0
        %v2576 = vadd.f32 0.0, %v2575
        %v2577 = vpop.f32.mrb[0].mxu0
        %2578 = vdwg.mxu0
        %v2579 = vadd.f32 %v2307, %v2421
        %v2580 = vadd.f32 %v2308, %v2426
        %v2581 = vadd.f32 %v2309, %v2431
        %v2582 = vadd.f32 %v2310, %v2436
        %v2583 = vadd.f32 %v2311, %v2441
        %v2584 = vadd.f32 %v2312, %v2446
        %v2585 = vadd.f32 %v2313, %v2451
        %v2586 = vadd.f32 %v2314, %v2456
        %v2587 = vadd.f32 %v2315, %v2461
        %v2588 = vadd.f32 %v2316, %v2466
        %v2589 = vadd.f32 %v2317, %v2471
        %v2590 = vadd.f32 %v2318, %v2476
        %v2591 = vadd.f32 %v2319, %v2481
        %v2592 = vadd.f32 %v2320, %v2486
        %v2593 = vadd.f32 %v2321, %v2491
        %v2594 = vadd.f32 %v2322, %v2496
        %v2595 = vadd.f32 %v2323, %v2501
        %v2596 = vadd.f32 %v2324, %v2506
        %v2597 = vadd.f32 %v2325, %v2511
        %v2598 = vadd.f32 %v2326, %v2516
        %v2599 = vadd.f32 %v2327, %v2521
        %v2600 = vadd.f32 %v2328, %v2526
        %v2601 = vadd.f32 %v2329, %v2531
        %v2602 = vadd.f32 %v2330, %v2536
        %v2603 = vadd.f32 %v2331, %v2541
        %v2604 = vadd.f32 %v2332, %v2546
        %v2605 = vadd.f32 %v2333, %v2551
        %v2606 = vadd.f32 %v2334, %v2556
        %v2607 = vadd.f32 %v2335, %v2561
        %v2608 = vadd.f32 %v2336, %v2566
        %v2609 = vadd.f32 %v2337, %v2571
        %v2610 = vadd.f32 %v2338, %v2576
        %s2611 = scalar_lea.vmem %s3, 448
        %v2612 = vld [vmem:[%s2611] sm:$0xff]
        %v2613 = vld [vmem:[%s2611 + $0x8] sm:$0xff]
        %v2614 = vld [vmem:[%s2611 + $0x10] sm:$0xff]
        %v2615 = vld [vmem:[%s2611 + $0x18] sm:$0xff]
        %v2616 = vld [vmem:[%s2611 + $0x20] sm:$0xff]
        %v2617 = vld [vmem:[%s2611 + $0x28] sm:$0xff]
        %v2618 = vld [vmem:[%s2611 + $0x30] sm:$0xff]
        %v2619 = vld [vmem:[%s2611 + $0x38] sm:$0xff]
        %v2621 = vsel %vm356, %v1975, 0
        %v2624 = vsel %vm356, %v1976, 0
        %2626 = vmatprep.subr.mxu0 0.0
        %2627 = vmatpush1.msra.mxu0 %v2612
        %2628 = vmatprep.subr.mxu0 0.0
        %2629 = vmatpush1.msra.mxu0 %v2613
        %2630 = vmatprep.subr.mxu0 0.0
        %2631 = vmatpush1.msra.mxu0 %v2614
        %2632 = vmatprep.subr.mxu0 0.0
        %2633 = vmatpush1.msra.mxu0 %v2615
        %2634 = vmatprep.subr.mxu0 0.0
        %2635 = vmatpush1.msra.mxu0 %v2616
        %2636 = vmatprep.subr.mxu0 0.0
        %2637 = vmatpush1.msra.mxu0 %v2617
        %2638 = vmatprep.subr.mxu0 0.0
        %2639 = vmatpush1.msra.mxu0 %v2618
        %2640 = vmatprep.subr.mxu0 0.0
        %2641 = vmatpush1.msra.mxu0 %v2619
        %2642 = vmatprep.subr.mxu0 0.0
        %2643 = vmatpush1.msra.mxu0 0.0
        %2644 = vmatprep.subr.mxu0 0.0
        %2645 = vmatpush1.msra.mxu0 0.0
        %2646 = vmatprep.subr.mxu0 0.0
        %2647 = vmatpush1.msra.mxu0 0.0
        %2648 = vmatprep.subr.mxu0 0.0
        %2649 = vmatpush1.msra.mxu0 0.0
        %2650 = vmatprep.subr.mxu0 0.0
        %2651 = vmatpush1.msra.mxu0 0.0
        %2652 = vmatprep.subr.mxu0 0.0
        %2653 = vmatpush1.msra.mxu0 0.0
        %2654 = vmatprep.subr.mxu0 0.0
        %2655 = vmatpush1.msra.mxu0 0.0
        %2656 = vmatprep.subr.mxu0 0.0
        %2657 = vmatpush1.msra.mxu0 0.0
        %2658 = vmatprep.subr.mxu0 0.0
        %2659 = vmatpush1.msra.mxu0 0.0
        %2660 = vmatprep.subr.mxu0 0.0
        %2661 = vmatpush1.msra.mxu0 0.0
        %2662 = vmatprep.subr.mxu0 0.0
        %2663 = vmatpush1.msra.mxu0 0.0
        %2664 = vmatprep.subr.mxu0 0.0
        %2665 = vmatpush1.msra.mxu0 0.0
        %2666 = vmatprep.subr.mxu0 0.0
        %2667 = vmatpush1.msra.mxu0 0.0
        %2668 = vmatprep.subr.mxu0 0.0
        %2669 = vmatpush1.msra.mxu0 0.0
        %2670 = vmatprep.subr.mxu0 0.0
        %2671 = vmatpush1.msra.mxu0 0.0
        %2672 = vmatprep.subr.mxu0 0.0
        %2673 = vmatpush1.msra.mxu0 0.0
        %2674 = vmatprep.subr.mxu0 0.0
        %2675 = vmatpush1.msra.mxu0 0.0
        %2676 = vmatprep.subr.mxu0 0.0
        %2677 = vmatpush1.msra.mxu0 0.0
        %2678 = vmatprep.subr.mxu0 0.0
        %2679 = vmatpush1.msra.mxu0 0.0
        %2680 = vmatprep.subr.mxu0 0.0
        %2681 = vmatpush1.msra.mxu0 0.0
        %2682 = vmatprep.subr.mxu0 0.0
        %2683 = vmatpush1.msra.mxu0 0.0
        %2684 = vmatprep.subr.mxu0 0.0
        %2685 = vmatpush1.msra.mxu0 0.0
        %2686 = vmatprep.subr.mxu0 0.0
        %2687 = vmatpush1.msra.mxu0 0.0
        %2688 = vmatprep.subr.mxu0 0.0
        %2689 = vmatpush1.msra.mxu0 0.0
        %2690 = vmatprep.mubr.f32.mxu0 0.0
        %2691 = vmatmul.mubr.f32.gmra.mrb[0].mxu0 %v1999
        %v2692 = vpop.f32.mrb[0].mxu0
        %v2693 = vadd.f32 0.0, %v2692
        %v2694 = vpop.f32.mrb[0].mxu0
        %2695 = vmatprep.mubr.f32.mxu0 0.0
        %2696 = vmatmul.mubr.f32.gmra.mrb[0].mxu0 %v2002
        %v2697 = vpop.f32.mrb[0].mxu0
        %v2698 = vadd.f32 0.0, %v2697
        %v2699 = vpop.f32.mrb[0].mxu0
        %2700 = vmatprep.mubr.f32.mxu0 0.0
        %2701 = vmatmul.mubr.f32.gmra.mrb[0].mxu0 %v2005
        %v2702 = vpop.f32.mrb[0].mxu0
        %v2703 = vadd.f32 0.0, %v2702
        %v2704 = vpop.f32.mrb[0].mxu0
        %2705 = vmatprep.mubr.f32.mxu0 0.0
        %2706 = vmatmul.mubr.f32.gmra.mrb[0].mxu0 %v2008
        %v2707 = vpop.f32.mrb[0].mxu0
        %v2708 = vadd.f32 0.0, %v2707
        %v2709 = vpop.f32.mrb[0].mxu0
        %2710 = vmatprep.mubr.f32.mxu0 0.0
        %2711 = vmatmul.mubr.f32.gmra.mrb[0].mxu0 %v2011
        %v2712 = vpop.f32.mrb[0].mxu0
        %v2713 = vadd.f32 0.0, %v2712
        %v2714 = vpop.f32.mrb[0].mxu0
        %2715 = vmatprep.mubr.f32.mxu0 0.0
        %2716 = vmatmul.mubr.f32.gmra.mrb[0].mxu0 %v2014
        %v2717 = vpop.f32.mrb[0].mxu0
        %v2718 = vadd.f32 0.0, %v2717
        %v2719 = vpop.f32.mrb[0].mxu0
        %2720 = vmatprep.mubr.f32.mxu0 0.0
        %2721 = vmatmul.mubr.f32.gmra.mrb[0].mxu0 %v2017
        %v2722 = vpop.f32.mrb[0].mxu0
        %v2723 = vadd.f32 0.0, %v2722
        %v2724 = vpop.f32.mrb[0].mxu0
        %2725 = vmatprep.mubr.f32.mxu0 0.0
        %2726 = vmatmul.mubr.f32.gmra.mrb[0].mxu0 %v2020
        %v2727 = vpop.f32.mrb[0].mxu0
        %v2728 = vadd.f32 0.0, %v2727
        %v2729 = vpop.f32.mrb[0].mxu0
        %2730 = vmatprep.mubr.f32.mxu0 0.0
        %2731 = vmatmul.mubr.f32.gmra.mrb[0].mxu0 %v2023
        %v2732 = vpop.f32.mrb[0].mxu0
        %v2733 = vadd.f32 0.0, %v2732
        %v2734 = vpop.f32.mrb[0].mxu0
        %2735 = vmatprep.mubr.f32.mxu0 0.0
        %2736 = vmatmul.mubr.f32.gmra.mrb[0].mxu0 %v2026
        %v2737 = vpop.f32.mrb[0].mxu0
        %v2738 = vadd.f32 0.0, %v2737
        %v2739 = vpop.f32.mrb[0].mxu0
        %2740 = vmatprep.mubr.f32.mxu0 0.0
        %2741 = vmatmul.mubr.f32.gmra.mrb[0].mxu0 %v2029
        %v2742 = vpop.f32.mrb[0].mxu0
        %v2743 = vadd.f32 0.0, %v2742
        %v2744 = vpop.f32.mrb[0].mxu0
        %2745 = vmatprep.mubr.f32.mxu0 0.0
        %2746 = vmatmul.mubr.f32.gmra.mrb[0].mxu0 %v2032
        %v2747 = vpop.f32.mrb[0].mxu0
        %v2748 = vadd.f32 0.0, %v2747
        %v2749 = vpop.f32.mrb[0].mxu0
        %2750 = vmatprep.mubr.f32.mxu0 0.0
        %2751 = vmatmul.mubr.f32.gmra.mrb[0].mxu0 %v2035
        %v2752 = vpop.f32.mrb[0].mxu0
        %v2753 = vadd.f32 0.0, %v2752
        %v2754 = vpop.f32.mrb[0].mxu0
        %2755 = vmatprep.mubr.f32.mxu0 0.0
        %2756 = vmatmul.mubr.f32.gmra.mrb[0].mxu0 %v2038
        %v2757 = vpop.f32.mrb[0].mxu0
        %v2758 = vadd.f32 0.0, %v2757
        %v2759 = vpop.f32.mrb[0].mxu0
        %2760 = vmatprep.mubr.f32.mxu0 0.0
        %2761 = vmatmul.mubr.f32.gmra.mrb[0].mxu0 %v2041
        %v2762 = vpop.f32.mrb[0].mxu0
        %v2763 = vadd.f32 0.0, %v2762
        %v2764 = vpop.f32.mrb[0].mxu0
        %2765 = vmatprep.mubr.f32.mxu0 0.0
        %2766 = vmatmul.mubr.f32.gmra.mrb[0].mxu0 %v2044
        %v2767 = vpop.f32.mrb[0].mxu0
        %v2768 = vadd.f32 0.0, %v2767
        %v2769 = vpop.f32.mrb[0].mxu0
        %2770 = vmatprep.mubr.f32.mxu0 0.0
        %2771 = vmatmul.mubr.f32.gmra.mrb[0].mxu0 %v2047
        %v2772 = vpop.f32.mrb[0].mxu0
        %v2773 = vadd.f32 0.0, %v2772
        %v2774 = vpop.f32.mrb[0].mxu0
        %2775 = vmatprep.mubr.f32.mxu0 0.0
        %2776 = vmatmul.mubr.f32.gmra.mrb[0].mxu0 %v2050
        %v2777 = vpop.f32.mrb[0].mxu0
        %v2778 = vadd.f32 0.0, %v2777
        %v2779 = vpop.f32.mrb[0].mxu0
        %2780 = vmatprep.mubr.f32.mxu0 0.0
        %2781 = vmatmul.mubr.f32.gmra.mrb[0].mxu0 %v2053
        %v2782 = vpop.f32.mrb[0].mxu0
        %v2783 = vadd.f32 0.0, %v2782
        %v2784 = vpop.f32.mrb[0].mxu0
        %2785 = vmatprep.mubr.f32.mxu0 0.0
        %2786 = vmatmul.mubr.f32.gmra.mrb[0].mxu0 %v2056
        %v2787 = vpop.f32.mrb[0].mxu0
        %v2788 = vadd.f32 0.0, %v2787
        %v2789 = vpop.f32.mrb[0].mxu0
        %2790 = vmatprep.mubr.f32.mxu0 0.0
        %2791 = vmatmul.mubr.f32.gmra.mrb[0].mxu0 %v2059
        %v2792 = vpop.f32.mrb[0].mxu0
        %v2793 = vadd.f32 0.0, %v2792
        %v2794 = vpop.f32.mrb[0].mxu0
        %2795 = vmatprep.mubr.f32.mxu0 0.0
        %2796 = vmatmul.mubr.f32.gmra.mrb[0].mxu0 %v2062
        %v2797 = vpop.f32.mrb[0].mxu0
        %v2798 = vadd.f32 0.0, %v2797
        %v2799 = vpop.f32.mrb[0].mxu0
        %2800 = vmatprep.mubr.f32.mxu0 0.0
        %2801 = vmatmul.mubr.f32.gmra.mrb[0].mxu0 %v2065
        %v2802 = vpop.f32.mrb[0].mxu0
        %v2803 = vadd.f32 0.0, %v2802
        %v2804 = vpop.f32.mrb[0].mxu0
        %2805 = vmatprep.mubr.f32.mxu0 0.0
        %2806 = vmatmul.mubr.f32.gmra.mrb[0].mxu0 %v2068
        %v2807 = vpop.f32.mrb[0].mxu0
        %v2808 = vadd.f32 0.0, %v2807
        %v2809 = vpop.f32.mrb[0].mxu0
        %2810 = vmatprep.mubr.f32.mxu0 0.0
        %2811 = vmatmul.mubr.f32.gmra.mrb[0].mxu0 %v2071
        %v2812 = vpop.f32.mrb[0].mxu0
        %v2813 = vadd.f32 0.0, %v2812
        %v2814 = vpop.f32.mrb[0].mxu0
        %2815 = vmatprep.mubr.f32.mxu0 0.0
        %2816 = vmatmul.mubr.f32.gmra.mrb[0].mxu0 %v2074
        %v2817 = vpop.f32.mrb[0].mxu0
        %v2818 = vadd.f32 0.0, %v2817
        %v2819 = vpop.f32.mrb[0].mxu0
        %2820 = vmatprep.mubr.f32.mxu0 0.0
        %2821 = vmatmul.mubr.f32.gmra.mrb[0].mxu0 %v2077
        %v2822 = vpop.f32.mrb[0].mxu0
        %v2823 = vadd.f32 0.0, %v2822
        %v2824 = vpop.f32.mrb[0].mxu0
        %2825 = vmatprep.mubr.f32.mxu0 0.0
        %2826 = vmatmul.mubr.f32.gmra.mrb[0].mxu0 %v2080
        %v2827 = vpop.f32.mrb[0].mxu0
        %v2828 = vadd.f32 0.0, %v2827
        %v2829 = vpop.f32.mrb[0].mxu0
        %2830 = vmatprep.mubr.f32.mxu0 0.0
        %2831 = vmatmul.mubr.f32.gmra.mrb[0].mxu0 %v2349
        %v2832 = vpop.f32.mrb[0].mxu0
        %v2833 = vadd.f32 0.0, %v2832
        %v2834 = vpop.f32.mrb[0].mxu0
        %2835 = vmatprep.mubr.f32.mxu0 0.0
        %2836 = vmatmul.mubr.f32.gmra.mrb[0].mxu0 %v2352
        %v2837 = vpop.f32.mrb[0].mxu0
        %v2838 = vadd.f32 0.0, %v2837
        %v2839 = vpop.f32.mrb[0].mxu0
        %2840 = vmatprep.mubr.f32.mxu0 0.0
        %2841 = vmatmul.mubr.f32.gmra.mrb[0].mxu0 %v2621
        %v2842 = vpop.f32.mrb[0].mxu0
        %v2843 = vadd.f32 0.0, %v2842
        %v2844 = vpop.f32.mrb[0].mxu0
        %2845 = vmatprep.mubr.f32.mxu0 0.0
        %2846 = vmatmul.mubr.f32.gmra.mrb[0].mxu0 %v2624
        %v2847 = vpop.f32.mrb[0].mxu0
        %v2848 = vadd.f32 0.0, %v2847
        %v2849 = vpop.f32.mrb[0].mxu0
        %2850 = vdwg.mxu0
        %v2851 = vadd.f32 %v2579, %v2693
        %v2852 = vadd.f32 %v2580, %v2698
        %v2853 = vadd.f32 %v2581, %v2703
        %v2854 = vadd.f32 %v2582, %v2708
        %v2855 = vadd.f32 %v2583, %v2713
        %v2856 = vadd.f32 %v2584, %v2718
        %v2857 = vadd.f32 %v2585, %v2723
        %v2858 = vadd.f32 %v2586, %v2728
        %v2859 = vadd.f32 %v2587, %v2733
        %v2860 = vadd.f32 %v2588, %v2738
        %v2861 = vadd.f32 %v2589, %v2743
        %v2862 = vadd.f32 %v2590, %v2748
        %v2863 = vadd.f32 %v2591, %v2753
        %v2864 = vadd.f32 %v2592, %v2758
        %v2865 = vadd.f32 %v2593, %v2763
        %v2866 = vadd.f32 %v2594, %v2768
        %v2867 = vadd.f32 %v2595, %v2773
        %v2868 = vadd.f32 %v2596, %v2778
        %v2869 = vadd.f32 %v2597, %v2783
        %v2870 = vadd.f32 %v2598, %v2788
        %v2871 = vadd.f32 %v2599, %v2793
        %v2872 = vadd.f32 %v2600, %v2798
        %v2873 = vadd.f32 %v2601, %v2803
        %v2874 = vadd.f32 %v2602, %v2808
        %v2875 = vadd.f32 %v2603, %v2813
        %v2876 = vadd.f32 %v2604, %v2818
        %v2877 = vadd.f32 %v2605, %v2823
        %v2878 = vadd.f32 %v2606, %v2828
        %v2879 = vadd.f32 %v2607, %v2833
        %v2880 = vadd.f32 %v2608, %v2838
        %v2881 = vadd.f32 %v2609, %v2843
        %v2882 = vadd.f32 %v2610, %v2848
        %v2883 = vld [vmem:[#allocation2 + $0x2] sm:$0xff]
        %v2884 = vld [vmem:[#allocation2 + $0xa] sm:$0xff]
        %v2885 = vld [vmem:[#allocation2 + $0x1a] sm:$0xff]
        %v2886 = vld [vmem:[#allocation2 + $0x22] sm:$0xff]
        %v2887 = vld [vmem:[#allocation2 + $0x32] sm:$0xff]
        %v2888 = vld [vmem:[#allocation2 + $0x3a] sm:$0xff]
        %v2889 = vld [vmem:[#allocation2 + $0x4a] sm:$0xff]
        %v2890 = vld [vmem:[#allocation2 + $0x52] sm:$0xff]
        %v2891 = vld [vmem:[#allocation2 + $0x62] sm:$0xff]
        %v2892 = vld [vmem:[#allocation2 + $0x6a] sm:$0xff]
        %v2893 = vld [vmem:[#allocation2 + $0x7a] sm:$0xff]
        %v2894 = vld [vmem:[#allocation2 + $0x82] sm:$0xff]
        %v2895 = vld [vmem:[#allocation2 + $0x92] sm:$0xff]
        %v2896 = vld [vmem:[#allocation2 + $0x9a] sm:$0xff]
        %v2897 = vld [vmem:[#allocation2 + $0xaa] sm:$0xff]
        %v2898 = vld [vmem:[#allocation2 + $0xb2] sm:$0xff]
        %v2899 = vld [vmem:[#allocation2 + $0xc2] sm:$0xff]
        %v2900 = vld [vmem:[#allocation2 + $0xca] sm:$0xff]
        %v2901 = vld [vmem:[#allocation2 + $0xda] sm:$0xff]
        %v2902 = vld [vmem:[#allocation2 + $0xe2] sm:$0xff]
        %v2903 = vld [vmem:[#allocation2 + $0xf2] sm:$0xff]
        %v2904 = vld [vmem:[#allocation2 + $0xfa] sm:$0xff]
        %v2905 = vld [vmem:[#allocation2 + $0x10a] sm:$0xff]
        %v2906 = vld [vmem:[#allocation2 + $0x112] sm:$0xff]
        %v2907 = vld [vmem:[#allocation2 + $0x122] sm:$0xff]
        %v2908 = vld [vmem:[#allocation2 + $0x12a] sm:$0xff]
        %v2909 = vld [vmem:[#allocation2 + $0x13a] sm:$0xff]
        %v2910 = vld [vmem:[#allocation2 + $0x142] sm:$0xff]
        %v2911 = vld [vmem:[#allocation2 + $0x152] sm:$0xff]
        %v2912 = vld [vmem:[#allocation2 + $0x15a] sm:$0xff]
        %v2913 = vld [vmem:[#allocation2 + $0x16a] sm:$0xff]
        %v2914 = vld [vmem:[#allocation2 + $0x172] sm:$0xff]
        %v2915 = vld [vmem:[#allocation2 + $0x182] sm:$0xff]
        %v2916 = vld [vmem:[#allocation2 + $0x18a] sm:$0xff]
        %v2917 = vld [vmem:[#allocation2 + $0x19a] sm:$0xff]
        %v2918 = vld [vmem:[#allocation2 + $0x1a2] sm:$0xff]
        %s2919 = scalar_lea.vmem %s3, 128
        %v2920 = vld [vmem:[%s2919] sm:$0xff]
        %v2921 = vld [vmem:[%s2919 + $0x8] sm:$0xff]
        %v2922 = vld [vmem:[%s2919 + $0x10] sm:$0xff]
        %v2923 = vld [vmem:[%s2919 + $0x18] sm:$0xff]
        %v2924 = vld [vmem:[%s2919 + $0x20] sm:$0xff]
        %v2925 = vld [vmem:[%s2919 + $0x28] sm:$0xff]
        %v2926 = vld [vmem:[%s2919 + $0x30] sm:$0xff]
        %v2927 = vld [vmem:[%s2919 + $0x38] sm:$0xff]
        %v2929 = vsel %vm356, %v2883, 0
        %v2932 = vsel %vm356, %v2884, 0
        %v2935 = vsel %vm356, %v2885, 0
        %v2938 = vsel %vm356, %v2886, 0
        %v2941 = vsel %vm356, %v2887, 0
        %v2944 = vsel %vm356, %v2888, 0
        %v2947 = vsel %vm356, %v2889, 0
        %v2950 = vsel %vm356, %v2890, 0
        %v2953 = vsel %vm356, %v2891, 0
        %v2956 = vsel %vm356, %v2892, 0
        %v2959 = vsel %vm356, %v2893, 0
        %v2962 = vsel %vm356, %v2894, 0
        %v2965 = vsel %vm356, %v2895, 0
        %v2968 = vsel %vm356, %v2896, 0
        %v2971 = vsel %vm356, %v2897, 0
        %v2974 = vsel %vm356, %v2898, 0
        %v2977 = vsel %vm356, %v2899, 0
        %v2980 = vsel %vm356, %v2900, 0
        %v2983 = vsel %vm356, %v2901, 0
        %v2986 = vsel %vm356, %v2902, 0
        %v2989 = vsel %vm356, %v2903, 0
        %v2992 = vsel %vm356, %v2904, 0
        %v2995 = vsel %vm356, %v2905, 0
        %v2998 = vsel %vm356, %v2906, 0
        %v3001 = vsel %vm356, %v2907, 0
        %v3004 = vsel %vm356, %v2908, 0
        %v3007 = vsel %vm356, %v2909, 0
        %v3010 = vsel %vm356, %v2910, 0
        %v3013 = vsel %vm356, %v2911, 0
        %v3016 = vsel %vm356, %v2912, 0
        %v3019 = vsel %vm356, %v2913, 0
        %v3022 = vsel %vm356, %v2914, 0
        %3024 = vmatprep.subr.mxu0 0.0
        %3025 = vmatpush1.msra.mxu0 %v2920
        %3026 = vmatprep.subr.mxu0 0.0
        %3027 = vmatpush1.msra.mxu0 %v2921
        %3028 = vmatprep.subr.mxu0 0.0
        %3029 = vmatpush1.msra.mxu0 %v2922
        %3030 = vmatprep.subr.mxu0 0.0
        %3031 = vmatpush1.msra.mxu0 %v2923
        %3032 = vmatprep.subr.mxu0 0.0
        %3033 = vmatpush1.msra.mxu0 %v2924
        %3034 = vmatprep.subr.mxu0 0.0
        %3035 = vmatpush1.msra.mxu0 %v2925
        %3036 = vmatprep.subr.mxu0 0.0
        %3037 = vmatpush1.msra.mxu0 %v2926
        %3038 = vmatprep.subr.mxu0 0.0
        %3039 = vmatpush1.msra.mxu0 %v2927
        %3040 = vmatprep.subr.mxu0 0.0
        %3041 = vmatpush1.msra.mxu0 0.0
        %3042 = vmatprep.subr.mxu0 0.0
        %3043 = vmatpush1.msra.mxu0 0.0
        %3044 = vmatprep.subr.mxu0 0.0
        %3045 = vmatpush1.msra.mxu0 0.0
        %3046 = vmatprep.subr.mxu0 0.0
        %3047 = vmatpush1.msra.mxu0 0.0
        %3048 = vmatprep.subr.mxu0 0.0
        %3049 = vmatpush1.msra.mxu0 0.0
        %3050 = vmatprep.subr.mxu0 0.0
        %3051 = vmatpush1.msra.mxu0 0.0
        %3052 = vmatprep.subr.mxu0 0.0
        %3053 = vmatpush1.msra.mxu0 0.0
        %3054 = vmatprep.subr.mxu0 0.0
        %3055 = vmatpush1.msra.mxu0 0.0
        %3056 = vmatprep.subr.mxu0 0.0
        %3057 = vmatpush1.msra.mxu0 0.0
        %3058 = vmatprep.subr.mxu0 0.0
        %3059 = vmatpush1.msra.mxu0 0.0
        %3060 = vmatprep.subr.mxu0 0.0
        %3061 = vmatpush1.msra.mxu0 0.0
        %3062 = vmatprep.subr.mxu0 0.0
        %3063 = vmatpush1.msra.mxu0 0.0
        %3064 = vmatprep.subr.mxu0 0.0
        %3065 = vmatpush1.msra.mxu0 0.0
        %3066 = vmatprep.subr.mxu0 0.0
        %3067 = vmatpush1.msra.mxu0 0.0
        %3068 = vmatprep.subr.mxu0 0.0
        %3069 = vmatpush1.msra.mxu0 0.0
        %3070 = vmatprep.subr.mxu0 0.0
        %3071 = vmatpush1.msra.mxu0 0.0
        %3072 = vmatprep.subr.mxu0 0.0
        %3073 = vmatpush1.msra.mxu0 0.0
        %3074 = vmatprep.subr.mxu0 0.0
        %3075 = vmatpush1.msra.mxu0 0.0
        %3076 = vmatprep.subr.mxu0 0.0
        %3077 = vmatpush1.msra.mxu0 0.0
        %3078 = vmatprep.subr.mxu0 0.0
        %3079 = vmatpush1.msra.mxu0 0.0
        %3080 = vmatprep.subr.mxu0 0.0
        %3081 = vmatpush1.msra.mxu0 0.0
        %3082 = vmatprep.subr.mxu0 0.0
        %3083 = vmatpush1.msra.mxu0 0.0
        %3084 = vmatprep.subr.mxu0 0.0
        %3085 = vmatpush1.msra.mxu0 0.0
        %3086 = vmatprep.subr.mxu0 0.0
        %3087 = vmatpush1.msra.mxu0 0.0
        %3088 = vmatprep.mubr.f32.mxu0 0.0
        %3089 = vmatmul.mubr.f32.gmra.mrb[0].mxu0 %v2929
        %v3090 = vpop.f32.mrb[0].mxu0
        %v3091 = vadd.f32 0.0, %v3090
        %v3092 = vpop.f32.mrb[0].mxu0
        %3093 = vmatprep.mubr.f32.mxu0 0.0
        %3094 = vmatmul.mubr.f32.gmra.mrb[0].mxu0 %v2932
        %v3095 = vpop.f32.mrb[0].mxu0
        %v3096 = vadd.f32 0.0, %v3095
        %v3097 = vpop.f32.mrb[0].mxu0
        %3098 = vmatprep.mubr.f32.mxu0 0.0
        %3099 = vmatmul.mubr.f32.gmra.mrb[0].mxu0 %v2935
        %v3100 = vpop.f32.mrb[0].mxu0
        %v3101 = vadd.f32 0.0, %v3100
        %v3102 = vpop.f32.mrb[0].mxu0
        %3103 = vmatprep.mubr.f32.mxu0 0.0
        %3104 = vmatmul.mubr.f32.gmra.mrb[0].mxu0 %v2938
        %v3105 = vpop.f32.mrb[0].mxu0
        %v3106 = vadd.f32 0.0, %v3105
        %v3107 = vpop.f32.mrb[0].mxu0
        %3108 = vmatprep.mubr.f32.mxu0 0.0
        %3109 = vmatmul.mubr.f32.gmra.mrb[0].mxu0 %v2941
        %v3110 = vpop.f32.mrb[0].mxu0
        %v3111 = vadd.f32 0.0, %v3110
        %v3112 = vpop.f32.mrb[0].mxu0
        %3113 = vmatprep.mubr.f32.mxu0 0.0
        %3114 = vmatmul.mubr.f32.gmra.mrb[0].mxu0 %v2944
        %v3115 = vpop.f32.mrb[0].mxu0
        %v3116 = vadd.f32 0.0, %v3115
        %v3117 = vpop.f32.mrb[0].mxu0
        %3118 = vmatprep.mubr.f32.mxu0 0.0
        %3119 = vmatmul.mubr.f32.gmra.mrb[0].mxu0 %v2947
        %v3120 = vpop.f32.mrb[0].mxu0
        %v3121 = vadd.f32 0.0, %v3120
        %v3122 = vpop.f32.mrb[0].mxu0
        %3123 = vmatprep.mubr.f32.mxu0 0.0
        %3124 = vmatmul.mubr.f32.gmra.mrb[0].mxu0 %v2950
        %v3125 = vpop.f32.mrb[0].mxu0
        %v3126 = vadd.f32 0.0, %v3125
        %v3127 = vpop.f32.mrb[0].mxu0
        %3128 = vmatprep.mubr.f32.mxu0 0.0
        %3129 = vmatmul.mubr.f32.gmra.mrb[0].mxu0 %v2953
        %v3130 = vpop.f32.mrb[0].mxu0
        %v3131 = vadd.f32 0.0, %v3130
        %v3132 = vpop.f32.mrb[0].mxu0
        %3133 = vmatprep.mubr.f32.mxu0 0.0
        %3134 = vmatmul.mubr.f32.gmra.mrb[0].mxu0 %v2956
        %v3135 = vpop.f32.mrb[0].mxu0
        %v3136 = vadd.f32 0.0, %v3135
        %v3137 = vpop.f32.mrb[0].mxu0
        %3138 = vmatprep.mubr.f32.mxu0 0.0
        %3139 = vmatmul.mubr.f32.gmra.mrb[0].mxu0 %v2959
        %v3140 = vpop.f32.mrb[0].mxu0
        %v3141 = vadd.f32 0.0, %v3140
        %v3142 = vpop.f32.mrb[0].mxu0
        %3143 = vmatprep.mubr.f32.mxu0 0.0
        %3144 = vmatmul.mubr.f32.gmra.mrb[0].mxu0 %v2962
        %v3145 = vpop.f32.mrb[0].mxu0
        %v3146 = vadd.f32 0.0, %v3145
        %v3147 = vpop.f32.mrb[0].mxu0
        %3148 = vmatprep.mubr.f32.mxu0 0.0
        %3149 = vmatmul.mubr.f32.gmra.mrb[0].mxu0 %v2965
        %v3150 = vpop.f32.mrb[0].mxu0
        %v3151 = vadd.f32 0.0, %v3150
        %v3152 = vpop.f32.mrb[0].mxu0
        %3153 = vmatprep.mubr.f32.mxu0 0.0
        %3154 = vmatmul.mubr.f32.gmra.mrb[0].mxu0 %v2968
        %v3155 = vpop.f32.mrb[0].mxu0
        %v3156 = vadd.f32 0.0, %v3155
        %v3157 = vpop.f32.mrb[0].mxu0
        %3158 = vmatprep.mubr.f32.mxu0 0.0
        %3159 = vmatmul.mubr.f32.gmra.mrb[0].mxu0 %v2971
        %v3160 = vpop.f32.mrb[0].mxu0
        %v3161 = vadd.f32 0.0, %v3160
        %v3162 = vpop.f32.mrb[0].mxu0
        %3163 = vmatprep.mubr.f32.mxu0 0.0
        %3164 = vmatmul.mubr.f32.gmra.mrb[0].mxu0 %v2974
        %v3165 = vpop.f32.mrb[0].mxu0
        %v3166 = vadd.f32 0.0, %v3165
        %v3167 = vpop.f32.mrb[0].mxu0
        %3168 = vmatprep.mubr.f32.mxu0 0.0
        %3169 = vmatmul.mubr.f32.gmra.mrb[0].mxu0 %v2977
        %v3170 = vpop.f32.mrb[0].mxu0
        %v3171 = vadd.f32 0.0, %v3170
        %v3172 = vpop.f32.mrb[0].mxu0
        %3173 = vmatprep.mubr.f32.mxu0 0.0
        %3174 = vmatmul.mubr.f32.gmra.mrb[0].mxu0 %v2980
        %v3175 = vpop.f32.mrb[0].mxu0
        %v3176 = vadd.f32 0.0, %v3175
        %v3177 = vpop.f32.mrb[0].mxu0
        %3178 = vmatprep.mubr.f32.mxu0 0.0
        %3179 = vmatmul.mubr.f32.gmra.mrb[0].mxu0 %v2983
        %v3180 = vpop.f32.mrb[0].mxu0
        %v3181 = vadd.f32 0.0, %v3180
        %v3182 = vpop.f32.mrb[0].mxu0
        %3183 = vmatprep.mubr.f32.mxu0 0.0
        %3184 = vmatmul.mubr.f32.gmra.mrb[0].mxu0 %v2986
        %v3185 = vpop.f32.mrb[0].mxu0
        %v3186 = vadd.f32 0.0, %v3185
        %v3187 = vpop.f32.mrb[0].mxu0
        %3188 = vmatprep.mubr.f32.mxu0 0.0
        %3189 = vmatmul.mubr.f32.gmra.mrb[0].mxu0 %v2989
        %v3190 = vpop.f32.mrb[0].mxu0
        %v3191 = vadd.f32 0.0, %v3190
        %v3192 = vpop.f32.mrb[0].mxu0
        %3193 = vmatprep.mubr.f32.mxu0 0.0
        %3194 = vmatmul.mubr.f32.gmra.mrb[0].mxu0 %v2992
        %v3195 = vpop.f32.mrb[0].mxu0
        %v3196 = vadd.f32 0.0, %v3195
        %v3197 = vpop.f32.mrb[0].mxu0
        %3198 = vmatprep.mubr.f32.mxu0 0.0
        %3199 = vmatmul.mubr.f32.gmra.mrb[0].mxu0 %v2995
        %v3200 = vpop.f32.mrb[0].mxu0
        %v3201 = vadd.f32 0.0, %v3200
        %v3202 = vpop.f32.mrb[0].mxu0
        %3203 = vmatprep.mubr.f32.mxu0 0.0
        %3204 = vmatmul.mubr.f32.gmra.mrb[0].mxu0 %v2998
        %v3205 = vpop.f32.mrb[0].mxu0
        %v3206 = vadd.f32 0.0, %v3205
        %v3207 = vpop.f32.mrb[0].mxu0
        %3208 = vmatprep.mubr.f32.mxu0 0.0
        %3209 = vmatmul.mubr.f32.gmra.mrb[0].mxu0 %v3001
        %v3210 = vpop.f32.mrb[0].mxu0
        %v3211 = vadd.f32 0.0, %v3210
        %v3212 = vpop.f32.mrb[0].mxu0
        %3213 = vmatprep.mubr.f32.mxu0 0.0
        %3214 = vmatmul.mubr.f32.gmra.mrb[0].mxu0 %v3004
        %v3215 = vpop.f32.mrb[0].mxu0
        %v3216 = vadd.f32 0.0, %v3215
        %v3217 = vpop.f32.mrb[0].mxu0
        %3218 = vmatprep.mubr.f32.mxu0 0.0
        %3219 = vmatmul.mubr.f32.gmra.mrb[0].mxu0 %v3007
        %v3220 = vpop.f32.mrb[0].mxu0
        %v3221 = vadd.f32 0.0, %v3220
        %v3222 = vpop.f32.mrb[0].mxu0
        %3223 = vmatprep.mubr.f32.mxu0 0.0
        %3224 = vmatmul.mubr.f32.gmra.mrb[0].mxu0 %v3010
        %v3225 = vpop.f32.mrb[0].mxu0
        %v3226 = vadd.f32 0.0, %v3225
        %v3227 = vpop.f32.mrb[0].mxu0
        %3228 = vmatprep.mubr.f32.mxu0 0.0
        %3229 = vmatmul.mubr.f32.gmra.mrb[0].mxu0 %v3013
        %v3230 = vpop.f32.mrb[0].mxu0
        %v3231 = vadd.f32 0.0, %v3230
        %v3232 = vpop.f32.mrb[0].mxu0
        %3233 = vmatprep.mubr.f32.mxu0 0.0
        %3234 = vmatmul.mubr.f32.gmra.mrb[0].mxu0 %v3016
        %v3235 = vpop.f32.mrb[0].mxu0
        %v3236 = vadd.f32 0.0, %v3235
        %v3237 = vpop.f32.mrb[0].mxu0
        %3238 = vmatprep.mubr.f32.mxu0 0.0
        %3239 = vmatmul.mubr.f32.gmra.mrb[0].mxu0 %v3019
        %v3240 = vpop.f32.mrb[0].mxu0
        %v3241 = vadd.f32 0.0, %v3240
        %v3242 = vpop.f32.mrb[0].mxu0
        %3243 = vmatprep.mubr.f32.mxu0 0.0
        %3244 = vmatmul.mubr.f32.gmra.mrb[0].mxu0 %v3022
        %v3245 = vpop.f32.mrb[0].mxu0
        %v3246 = vadd.f32 0.0, %v3245
        %v3247 = vpop.f32.mrb[0].mxu0
        %3248 = vdwg.mxu0
        %v3249 = vadd.f32 %v2851, %v3091
        %v3250 = vadd.f32 %v2852, %v3096
        %v3251 = vadd.f32 %v2853, %v3101
        %v3252 = vadd.f32 %v2854, %v3106
        %v3253 = vadd.f32 %v2855, %v3111
        %v3254 = vadd.f32 %v2856, %v3116
        %v3255 = vadd.f32 %v2857, %v3121
        %v3256 = vadd.f32 %v2858, %v3126
        %v3257 = vadd.f32 %v2859, %v3131
        %v3258 = vadd.f32 %v2860, %v3136
        %v3259 = vadd.f32 %v2861, %v3141
        %v3260 = vadd.f32 %v2862, %v3146
        %v3261 = vadd.f32 %v2863, %v3151
        %v3262 = vadd.f32 %v2864, %v3156
        %v3263 = vadd.f32 %v2865, %v3161
        %v3264 = vadd.f32 %v2866, %v3166
        %v3265 = vadd.f32 %v2867, %v3171
        %v3266 = vadd.f32 %v2868, %v3176
        %v3267 = vadd.f32 %v2869, %v3181
        %v3268 = vadd.f32 %v2870, %v3186
        %v3269 = vadd.f32 %v2871, %v3191
        %v3270 = vadd.f32 %v2872, %v3196
        %v3271 = vadd.f32 %v2873, %v3201
        %v3272 = vadd.f32 %v2874, %v3206
        %v3273 = vadd.f32 %v2875, %v3211
        %v3274 = vadd.f32 %v2876, %v3216
        %v3275 = vadd.f32 %v2877, %v3221
        %v3276 = vadd.f32 %v2878, %v3226
        %v3277 = vadd.f32 %v2879, %v3231
        %v3278 = vadd.f32 %v2880, %v3236
        %v3279 = vadd.f32 %v2881, %v3241
        %v3280 = vadd.f32 %v2882, %v3246
        %s3281 = scalar_lea.vmem %s3, 320
        %v3282 = vld [vmem:[%s3281] sm:$0xff]
        %v3283 = vld [vmem:[%s3281 + $0x8] sm:$0xff]
        %v3284 = vld [vmem:[%s3281 + $0x10] sm:$0xff]
        %v3285 = vld [vmem:[%s3281 + $0x18] sm:$0xff]
        %v3286 = vld [vmem:[%s3281 + $0x20] sm:$0xff]
        %v3287 = vld [vmem:[%s3281 + $0x28] sm:$0xff]
        %v3288 = vld [vmem:[%s3281 + $0x30] sm:$0xff]
        %v3289 = vld [vmem:[%s3281 + $0x38] sm:$0xff]
        %v3291 = vsel %vm356, %v2915, 0
        %v3294 = vsel %vm356, %v2916, 0
        %3296 = vmatprep.subr.mxu0 0.0
        %3297 = vmatpush1.msra.mxu0 %v3282
        %3298 = vmatprep.subr.mxu0 0.0
        %3299 = vmatpush1.msra.mxu0 %v3283
        %3300 = vmatprep.subr.mxu0 0.0
        %3301 = vmatpush1.msra.mxu0 %v3284
        %3302 = vmatprep.subr.mxu0 0.0
        %3303 = vmatpush1.msra.mxu0 %v3285
        %3304 = vmatprep.subr.mxu0 0.0
        %3305 = vmatpush1.msra.mxu0 %v3286
        %3306 = vmatprep.subr.mxu0 0.0
        %3307 = vmatpush1.msra.mxu0 %v3287
        %3308 = vmatprep.subr.mxu0 0.0
        %3309 = vmatpush1.msra.mxu0 %v3288
        %3310 = vmatprep.subr.mxu0 0.0
        %3311 = vmatpush1.msra.mxu0 %v3289
        %3312 = vmatprep.subr.mxu0 0.0
        %3313 = vmatpush1.msra.mxu0 0.0
        %3314 = vmatprep.subr.mxu0 0.0
        %3315 = vmatpush1.msra.mxu0 0.0
        %3316 = vmatprep.subr.mxu0 0.0
        %3317 = vmatpush1.msra.mxu0 0.0
        %3318 = vmatprep.subr.mxu0 0.0
        %3319 = vmatpush1.msra.mxu0 0.0
        %3320 = vmatprep.subr.mxu0 0.0
        %3321 = vmatpush1.msra.mxu0 0.0
        %3322 = vmatprep.subr.mxu0 0.0
        %3323 = vmatpush1.msra.mxu0 0.0
        %3324 = vmatprep.subr.mxu0 0.0
        %3325 = vmatpush1.msra.mxu0 0.0
        %3326 = vmatprep.subr.mxu0 0.0
        %3327 = vmatpush1.msra.mxu0 0.0
        %3328 = vmatprep.subr.mxu0 0.0
        %3329 = vmatpush1.msra.mxu0 0.0
        %3330 = vmatprep.subr.mxu0 0.0
        %3331 = vmatpush1.msra.mxu0 0.0
        %3332 = vmatprep.subr.mxu0 0.0
        %3333 = vmatpush1.msra.mxu0 0.0
        %3334 = vmatprep.subr.mxu0 0.0
        %3335 = vmatpush1.msra.mxu0 0.0
        %3336 = vmatprep.subr.mxu0 0.0
        %3337 = vmatpush1.msra.mxu0 0.0
        %3338 = vmatprep.subr.mxu0 0.0
        %3339 = vmatpush1.msra.mxu0 0.0
        %3340 = vmatprep.subr.mxu0 0.0
        %3341 = vmatpush1.msra.mxu0 0.0
        %3342 = vmatprep.subr.mxu0 0.0
        %3343 = vmatpush1.msra.mxu0 0.0
        %3344 = vmatprep.subr.mxu0 0.0
        %3345 = vmatpush1.msra.mxu0 0.0
        %3346 = vmatprep.subr.mxu0 0.0
        %3347 = vmatpush1.msra.mxu0 0.0
        %3348 = vmatprep.subr.mxu0 0.0
        %3349 = vmatpush1.msra.mxu0 0.0
        %3350 = vmatprep.subr.mxu0 0.0
        %3351 = vmatpush1.msra.mxu0 0.0
        %3352 = vmatprep.subr.mxu0 0.0
        %3353 = vmatpush1.msra.mxu0 0.0
        %3354 = vmatprep.subr.mxu0 0.0
        %3355 = vmatpush1.msra.mxu0 0.0
        %3356 = vmatprep.subr.mxu0 0.0
        %3357 = vmatpush1.msra.mxu0 0.0
        %3358 = vmatprep.subr.mxu0 0.0
        %3359 = vmatpush1.msra.mxu0 0.0
        %3360 = vmatprep.mubr.f32.mxu0 0.0
        %3361 = vmatmul.mubr.f32.gmra.mrb[0].mxu0 %v2935
        %v3362 = vpop.f32.mrb[0].mxu0
        %v3363 = vadd.f32 0.0, %v3362
        %v3364 = vpop.f32.mrb[0].mxu0
        %3365 = vmatprep.mubr.f32.mxu0 0.0
        %3366 = vmatmul.mubr.f32.gmra.mrb[0].mxu0 %v2938
        %v3367 = vpop.f32.mrb[0].mxu0
        %v3368 = vadd.f32 0.0, %v3367
        %v3369 = vpop.f32.mrb[0].mxu0
        %3370 = vmatprep.mubr.f32.mxu0 0.0
        %3371 = vmatmul.mubr.f32.gmra.mrb[0].mxu0 %v2941
        %v3372 = vpop.f32.mrb[0].mxu0
        %v3373 = vadd.f32 0.0, %v3372
        %v3374 = vpop.f32.mrb[0].mxu0
        %3375 = vmatprep.mubr.f32.mxu0 0.0
        %3376 = vmatmul.mubr.f32.gmra.mrb[0].mxu0 %v2944
        %v3377 = vpop.f32.mrb[0].mxu0
        %v3378 = vadd.f32 0.0, %v3377
        %v3379 = vpop.f32.mrb[0].mxu0
        %3380 = vmatprep.mubr.f32.mxu0 0.0
        %3381 = vmatmul.mubr.f32.gmra.mrb[0].mxu0 %v2947
        %v3382 = vpop.f32.mrb[0].mxu0
        %v3383 = vadd.f32 0.0, %v3382
        %v3384 = vpop.f32.mrb[0].mxu0
        %3385 = vmatprep.mubr.f32.mxu0 0.0
        %3386 = vmatmul.mubr.f32.gmra.mrb[0].mxu0 %v2950
        %v3387 = vpop.f32.mrb[0].mxu0
        %v3388 = vadd.f32 0.0, %v3387
        %v3389 = vpop.f32.mrb[0].mxu0
        %3390 = vmatprep.mubr.f32.mxu0 0.0
        %3391 = vmatmul.mubr.f32.gmra.mrb[0].mxu0 %v2953
        %v3392 = vpop.f32.mrb[0].mxu0
        %v3393 = vadd.f32 0.0, %v3392
        %v3394 = vpop.f32.mrb[0].mxu0
        %3395 = vmatprep.mubr.f32.mxu0 0.0
        %3396 = vmatmul.mubr.f32.gmra.mrb[0].mxu0 %v2956
        %v3397 = vpop.f32.mrb[0].mxu0
        %v3398 = vadd.f32 0.0, %v3397
        %v3399 = vpop.f32.mrb[0].mxu0
        %3400 = vmatprep.mubr.f32.mxu0 0.0
        %3401 = vmatmul.mubr.f32.gmra.mrb[0].mxu0 %v2959
        %v3402 = vpop.f32.mrb[0].mxu0
        %v3403 = vadd.f32 0.0, %v3402
        %v3404 = vpop.f32.mrb[0].mxu0
        %3405 = vmatprep.mubr.f32.mxu0 0.0
        %3406 = vmatmul.mubr.f32.gmra.mrb[0].mxu0 %v2962
        %v3407 = vpop.f32.mrb[0].mxu0
        %v3408 = vadd.f32 0.0, %v3407
        %v3409 = vpop.f32.mrb[0].mxu0
        %3410 = vmatprep.mubr.f32.mxu0 0.0
        %3411 = vmatmul.mubr.f32.gmra.mrb[0].mxu0 %v2965
        %v3412 = vpop.f32.mrb[0].mxu0
        %v3413 = vadd.f32 0.0, %v3412
        %v3414 = vpop.f32.mrb[0].mxu0
        %3415 = vmatprep.mubr.f32.mxu0 0.0
        %3416 = vmatmul.mubr.f32.gmra.mrb[0].mxu0 %v2968
        %v3417 = vpop.f32.mrb[0].mxu0
        %v3418 = vadd.f32 0.0, %v3417
        %v3419 = vpop.f32.mrb[0].mxu0
        %3420 = vmatprep.mubr.f32.mxu0 0.0
        %3421 = vmatmul.mubr.f32.gmra.mrb[0].mxu0 %v2971
        %v3422 = vpop.f32.mrb[0].mxu0
        %v3423 = vadd.f32 0.0, %v3422
        %v3424 = vpop.f32.mrb[0].mxu0
        %3425 = vmatprep.mubr.f32.mxu0 0.0
        %3426 = vmatmul.mubr.f32.gmra.mrb[0].mxu0 %v2974
        %v3427 = vpop.f32.mrb[0].mxu0
        %v3428 = vadd.f32 0.0, %v3427
        %v3429 = vpop.f32.mrb[0].mxu0
        %3430 = vmatprep.mubr.f32.mxu0 0.0
        %3431 = vmatmul.mubr.f32.gmra.mrb[0].mxu0 %v2977
        %v3432 = vpop.f32.mrb[0].mxu0
        %v3433 = vadd.f32 0.0, %v3432
        %v3434 = vpop.f32.mrb[0].mxu0
        %3435 = vmatprep.mubr.f32.mxu0 0.0
        %3436 = vmatmul.mubr.f32.gmra.mrb[0].mxu0 %v2980
        %v3437 = vpop.f32.mrb[0].mxu0
        %v3438 = vadd.f32 0.0, %v3437
        %v3439 = vpop.f32.mrb[0].mxu0
        %3440 = vmatprep.mubr.f32.mxu0 0.0
        %3441 = vmatmul.mubr.f32.gmra.mrb[0].mxu0 %v2983
        %v3442 = vpop.f32.mrb[0].mxu0
        %v3443 = vadd.f32 0.0, %v3442
        %v3444 = vpop.f32.mrb[0].mxu0
        %3445 = vmatprep.mubr.f32.mxu0 0.0
        %3446 = vmatmul.mubr.f32.gmra.mrb[0].mxu0 %v2986
        %v3447 = vpop.f32.mrb[0].mxu0
        %v3448 = vadd.f32 0.0, %v3447
        %v3449 = vpop.f32.mrb[0].mxu0
        %3450 = vmatprep.mubr.f32.mxu0 0.0
        %3451 = vmatmul.mubr.f32.gmra.mrb[0].mxu0 %v2989
        %v3452 = vpop.f32.mrb[0].mxu0
        %v3453 = vadd.f32 0.0, %v3452
        %v3454 = vpop.f32.mrb[0].mxu0
        %3455 = vmatprep.mubr.f32.mxu0 0.0
        %3456 = vmatmul.mubr.f32.gmra.mrb[0].mxu0 %v2992
        %v3457 = vpop.f32.mrb[0].mxu0
        %v3458 = vadd.f32 0.0, %v3457
        %v3459 = vpop.f32.mrb[0].mxu0
        %3460 = vmatprep.mubr.f32.mxu0 0.0
        %3461 = vmatmul.mubr.f32.gmra.mrb[0].mxu0 %v2995
        %v3462 = vpop.f32.mrb[0].mxu0
        %v3463 = vadd.f32 0.0, %v3462
        %v3464 = vpop.f32.mrb[0].mxu0
        %3465 = vmatprep.mubr.f32.mxu0 0.0
        %3466 = vmatmul.mubr.f32.gmra.mrb[0].mxu0 %v2998
        %v3467 = vpop.f32.mrb[0].mxu0
        %v3468 = vadd.f32 0.0, %v3467
        %v3469 = vpop.f32.mrb[0].mxu0
        %3470 = vmatprep.mubr.f32.mxu0 0.0
        %3471 = vmatmul.mubr.f32.gmra.mrb[0].mxu0 %v3001
        %v3472 = vpop.f32.mrb[0].mxu0
        %v3473 = vadd.f32 0.0, %v3472
        %v3474 = vpop.f32.mrb[0].mxu0
        %3475 = vmatprep.mubr.f32.mxu0 0.0
        %3476 = vmatmul.mubr.f32.gmra.mrb[0].mxu0 %v3004
        %v3477 = vpop.f32.mrb[0].mxu0
        %v3478 = vadd.f32 0.0, %v3477
        %v3479 = vpop.f32.mrb[0].mxu0
        %3480 = vmatprep.mubr.f32.mxu0 0.0
        %3481 = vmatmul.mubr.f32.gmra.mrb[0].mxu0 %v3007
        %v3482 = vpop.f32.mrb[0].mxu0
        %v3483 = vadd.f32 0.0, %v3482
        %v3484 = vpop.f32.mrb[0].mxu0
        %3485 = vmatprep.mubr.f32.mxu0 0.0
        %3486 = vmatmul.mubr.f32.gmra.mrb[0].mxu0 %v3010
        %v3487 = vpop.f32.mrb[0].mxu0
        %v3488 = vadd.f32 0.0, %v3487
        %v3489 = vpop.f32.mrb[0].mxu0
        %3490 = vmatprep.mubr.f32.mxu0 0.0
        %3491 = vmatmul.mubr.f32.gmra.mrb[0].mxu0 %v3013
        %v3492 = vpop.f32.mrb[0].mxu0
        %v3493 = vadd.f32 0.0, %v3492
        %v3494 = vpop.f32.mrb[0].mxu0
        %3495 = vmatprep.mubr.f32.mxu0 0.0
        %3496 = vmatmul.mubr.f32.gmra.mrb[0].mxu0 %v3016
        %v3497 = vpop.f32.mrb[0].mxu0
        %v3498 = vadd.f32 0.0, %v3497
        %v3499 = vpop.f32.mrb[0].mxu0
        %3500 = vmatprep.mubr.f32.mxu0 0.0
        %3501 = vmatmul.mubr.f32.gmra.mrb[0].mxu0 %v3019
        %v3502 = vpop.f32.mrb[0].mxu0
        %v3503 = vadd.f32 0.0, %v3502
        %v3504 = vpop.f32.mrb[0].mxu0
        %3505 = vmatprep.mubr.f32.mxu0 0.0
        %3506 = vmatmul.mubr.f32.gmra.mrb[0].mxu0 %v3022
        %v3507 = vpop.f32.mrb[0].mxu0
        %v3508 = vadd.f32 0.0, %v3507
        %v3509 = vpop.f32.mrb[0].mxu0
        %3510 = vmatprep.mubr.f32.mxu0 0.0
        %3511 = vmatmul.mubr.f32.gmra.mrb[0].mxu0 %v3291
        %v3512 = vpop.f32.mrb[0].mxu0
        %v3513 = vadd.f32 0.0, %v3512
        %v3514 = vpop.f32.mrb[0].mxu0
        %3515 = vmatprep.mubr.f32.mxu0 0.0
        %3516 = vmatmul.mubr.f32.gmra.mrb[0].mxu0 %v3294
        %v3517 = vpop.f32.mrb[0].mxu0
        %v3518 = vadd.f32 0.0, %v3517
        %v3519 = vpop.f32.mrb[0].mxu0
        %3520 = vdwg.mxu0
        %v3521 = vadd.f32 %v3249, %v3363
        %v3522 = vadd.f32 %v3250, %v3368
        %v3523 = vadd.f32 %v3251, %v3373
        %v3524 = vadd.f32 %v3252, %v3378
        %v3525 = vadd.f32 %v3253, %v3383
        %v3526 = vadd.f32 %v3254, %v3388
        %v3527 = vadd.f32 %v3255, %v3393
        %v3528 = vadd.f32 %v3256, %v3398
        %v3529 = vadd.f32 %v3257, %v3403
        %v3530 = vadd.f32 %v3258, %v3408
        %v3531 = vadd.f32 %v3259, %v3413
        %v3532 = vadd.f32 %v3260, %v3418
        %v3533 = vadd.f32 %v3261, %v3423
        %v3534 = vadd.f32 %v3262, %v3428
        %v3535 = vadd.f32 %v3263, %v3433
        %v3536 = vadd.f32 %v3264, %v3438
        %v3537 = vadd.f32 %v3265, %v3443
        %v3538 = vadd.f32 %v3266, %v3448
        %v3539 = vadd.f32 %v3267, %v3453
        %v3540 = vadd.f32 %v3268, %v3458
        %v3541 = vadd.f32 %v3269, %v3463
        %v3542 = vadd.f32 %v3270, %v3468
        %v3543 = vadd.f32 %v3271, %v3473
        %v3544 = vadd.f32 %v3272, %v3478
        %v3545 = vadd.f32 %v3273, %v3483
        %v3546 = vadd.f32 %v3274, %v3488
        %v3547 = vadd.f32 %v3275, %v3493
        %v3548 = vadd.f32 %v3276, %v3498
        %v3549 = vadd.f32 %v3277, %v3503
        %v3550 = vadd.f32 %v3278, %v3508
        %v3551 = vadd.f32 %v3279, %v3513
        %v3552 = vadd.f32 %v3280, %v3518
        %s3553 = scalar_lea.vmem %s3, 512
        %v3554 = vld [vmem:[%s3553] sm:$0xff]
        %v3555 = vld [vmem:[%s3553 + $0x8] sm:$0xff]
        %v3556 = vld [vmem:[%s3553 + $0x10] sm:$0xff]
        %v3557 = vld [vmem:[%s3553 + $0x18] sm:$0xff]
        %v3558 = vld [vmem:[%s3553 + $0x20] sm:$0xff]
        %v3559 = vld [vmem:[%s3553 + $0x28] sm:$0xff]
        %v3560 = vld [vmem:[%s3553 + $0x30] sm:$0xff]
        %v3561 = vld [vmem:[%s3553 + $0x38] sm:$0xff]
        %v3563 = vsel %vm356, %v2917, 0
        %v3566 = vsel %vm356, %v2918, 0
        %3568 = vmatprep.subr.mxu0 0.0
        %3569 = vmatpush1.msra.mxu0 %v3554
        %3570 = vmatprep.subr.mxu0 0.0
        %3571 = vmatpush1.msra.mxu0 %v3555
        %3572 = vmatprep.subr.mxu0 0.0
        %3573 = vmatpush1.msra.mxu0 %v3556
        %3574 = vmatprep.subr.mxu0 0.0
        %3575 = vmatpush1.msra.mxu0 %v3557
        %3576 = vmatprep.subr.mxu0 0.0
        %3577 = vmatpush1.msra.mxu0 %v3558
        %3578 = vmatprep.subr.mxu0 0.0
        %3579 = vmatpush1.msra.mxu0 %v3559
        %3580 = vmatprep.subr.mxu0 0.0
        %3581 = vmatpush1.msra.mxu0 %v3560
        %3582 = vmatprep.subr.mxu0 0.0
        %3583 = vmatpush1.msra.mxu0 %v3561
        %3584 = vmatprep.subr.mxu0 0.0
        %3585 = vmatpush1.msra.mxu0 0.0
        %3586 = vmatprep.subr.mxu0 0.0
        %3587 = vmatpush1.msra.mxu0 0.0
        %3588 = vmatprep.subr.mxu0 0.0
        %3589 = vmatpush1.msra.mxu0 0.0
        %3590 = vmatprep.subr.mxu0 0.0
        %3591 = vmatpush1.msra.mxu0 0.0
        %3592 = vmatprep.subr.mxu0 0.0
        %3593 = vmatpush1.msra.mxu0 0.0
        %3594 = vmatprep.subr.mxu0 0.0
        %3595 = vmatpush1.msra.mxu0 0.0
        %3596 = vmatprep.subr.mxu0 0.0
        %3597 = vmatpush1.msra.mxu0 0.0
        %3598 = vmatprep.subr.mxu0 0.0
        %3599 = vmatpush1.msra.mxu0 0.0
        %3600 = vmatprep.subr.mxu0 0.0
        %3601 = vmatpush1.msra.mxu0 0.0
        %3602 = vmatprep.subr.mxu0 0.0
        %3603 = vmatpush1.msra.mxu0 0.0
        %3604 = vmatprep.subr.mxu0 0.0
        %3605 = vmatpush1.msra.mxu0 0.0
        %3606 = vmatprep.subr.mxu0 0.0
        %3607 = vmatpush1.msra.mxu0 0.0
        %3608 = vmatprep.subr.mxu0 0.0
        %3609 = vmatpush1.msra.mxu0 0.0
        %3610 = vmatprep.subr.mxu0 0.0
        %3611 = vmatpush1.msra.mxu0 0.0
        %3612 = vmatprep.subr.mxu0 0.0
        %3613 = vmatpush1.msra.mxu0 0.0
        %3614 = vmatprep.subr.mxu0 0.0
        %3615 = vmatpush1.msra.mxu0 0.0
        %3616 = vmatprep.subr.mxu0 0.0
        %3617 = vmatpush1.msra.mxu0 0.0
        %3618 = vmatprep.subr.mxu0 0.0
        %3619 = vmatpush1.msra.mxu0 0.0
        %3620 = vmatprep.subr.mxu0 0.0
        %3621 = vmatpush1.msra.mxu0 0.0
        %3622 = vmatprep.subr.mxu0 0.0
        %3623 = vmatpush1.msra.mxu0 0.0
        %3624 = vmatprep.subr.mxu0 0.0
        %3625 = vmatpush1.msra.mxu0 0.0
        %3626 = vmatprep.subr.mxu0 0.0
        %3627 = vmatpush1.msra.mxu0 0.0
        %3628 = vmatprep.subr.mxu0 0.0
        %3629 = vmatpush1.msra.mxu0 0.0
        %3630 = vmatprep.subr.mxu0 0.0
        %3631 = vmatpush1.msra.mxu0 0.0
        %3632 = vmatprep.mubr.f32.mxu0 0.0
        %3633 = vmatmul.mubr.f32.gmra.mrb[0].mxu0 %v2941
        %v3634 = vpop.f32.mrb[0].mxu0
        %v3635 = vadd.f32 0.0, %v3634
        %v3636 = vpop.f32.mrb[0].mxu0
        %3637 = vmatprep.mubr.f32.mxu0 0.0
        %3638 = vmatmul.mubr.f32.gmra.mrb[0].mxu0 %v2944
        %v3639 = vpop.f32.mrb[0].mxu0
        %v3640 = vadd.f32 0.0, %v3639
        %v3641 = vpop.f32.mrb[0].mxu0
        %3642 = vmatprep.mubr.f32.mxu0 0.0
        %3643 = vmatmul.mubr.f32.gmra.mrb[0].mxu0 %v2947
        %v3644 = vpop.f32.mrb[0].mxu0
        %v3645 = vadd.f32 0.0, %v3644
        %v3646 = vpop.f32.mrb[0].mxu0
        %3647 = vmatprep.mubr.f32.mxu0 0.0
        %3648 = vmatmul.mubr.f32.gmra.mrb[0].mxu0 %v2950
        %v3649 = vpop.f32.mrb[0].mxu0
        %v3650 = vadd.f32 0.0, %v3649
        %v3651 = vpop.f32.mrb[0].mxu0
        %3652 = vmatprep.mubr.f32.mxu0 0.0
        %3653 = vmatmul.mubr.f32.gmra.mrb[0].mxu0 %v2953
        %v3654 = vpop.f32.mrb[0].mxu0
        %v3655 = vadd.f32 0.0, %v3654
        %v3656 = vpop.f32.mrb[0].mxu0
        %3657 = vmatprep.mubr.f32.mxu0 0.0
        %3658 = vmatmul.mubr.f32.gmra.mrb[0].mxu0 %v2956
        %v3659 = vpop.f32.mrb[0].mxu0
        %v3660 = vadd.f32 0.0, %v3659
        %v3661 = vpop.f32.mrb[0].mxu0
        %3662 = vmatprep.mubr.f32.mxu0 0.0
        %3663 = vmatmul.mubr.f32.gmra.mrb[0].mxu0 %v2959
        %v3664 = vpop.f32.mrb[0].mxu0
        %v3665 = vadd.f32 0.0, %v3664
        %v3666 = vpop.f32.mrb[0].mxu0
        %3667 = vmatprep.mubr.f32.mxu0 0.0
        %3668 = vmatmul.mubr.f32.gmra.mrb[0].mxu0 %v2962
        %v3669 = vpop.f32.mrb[0].mxu0
        %v3670 = vadd.f32 0.0, %v3669
        %v3671 = vpop.f32.mrb[0].mxu0
        %3672 = vmatprep.mubr.f32.mxu0 0.0
        %3673 = vmatmul.mubr.f32.gmra.mrb[0].mxu0 %v2965
        %v3674 = vpop.f32.mrb[0].mxu0
        %v3675 = vadd.f32 0.0, %v3674
        %v3676 = vpop.f32.mrb[0].mxu0
        %3677 = vmatprep.mubr.f32.mxu0 0.0
        %3678 = vmatmul.mubr.f32.gmra.mrb[0].mxu0 %v2968
        %v3679 = vpop.f32.mrb[0].mxu0
        %v3680 = vadd.f32 0.0, %v3679
        %v3681 = vpop.f32.mrb[0].mxu0
        %3682 = vmatprep.mubr.f32.mxu0 0.0
        %3683 = vmatmul.mubr.f32.gmra.mrb[0].mxu0 %v2971
        %v3684 = vpop.f32.mrb[0].mxu0
        %v3685 = vadd.f32 0.0, %v3684
        %v3686 = vpop.f32.mrb[0].mxu0
        %3687 = vmatprep.mubr.f32.mxu0 0.0
        %3688 = vmatmul.mubr.f32.gmra.mrb[0].mxu0 %v2974
        %v3689 = vpop.f32.mrb[0].mxu0
        %v3690 = vadd.f32 0.0, %v3689
        %v3691 = vpop.f32.mrb[0].mxu0
        %3692 = vmatprep.mubr.f32.mxu0 0.0
        %3693 = vmatmul.mubr.f32.gmra.mrb[0].mxu0 %v2977
        %v3694 = vpop.f32.mrb[0].mxu0
        %v3695 = vadd.f32 0.0, %v3694
        %v3696 = vpop.f32.mrb[0].mxu0
        %3697 = vmatprep.mubr.f32.mxu0 0.0
        %3698 = vmatmul.mubr.f32.gmra.mrb[0].mxu0 %v2980
        %v3699 = vpop.f32.mrb[0].mxu0
        %v3700 = vadd.f32 0.0, %v3699
        %v3701 = vpop.f32.mrb[0].mxu0
        %3702 = vmatprep.mubr.f32.mxu0 0.0
        %3703 = vmatmul.mubr.f32.gmra.mrb[0].mxu0 %v2983
        %v3704 = vpop.f32.mrb[0].mxu0
        %v3705 = vadd.f32 0.0, %v3704
        %v3706 = vpop.f32.mrb[0].mxu0
        %3707 = vmatprep.mubr.f32.mxu0 0.0
        %3708 = vmatmul.mubr.f32.gmra.mrb[0].mxu0 %v2986
        %v3709 = vpop.f32.mrb[0].mxu0
        %v3710 = vadd.f32 0.0, %v3709
        %v3711 = vpop.f32.mrb[0].mxu0
        %3712 = vmatprep.mubr.f32.mxu0 0.0
        %3713 = vmatmul.mubr.f32.gmra.mrb[0].mxu0 %v2989
        %v3714 = vpop.f32.mrb[0].mxu0
        %v3715 = vadd.f32 0.0, %v3714
        %v3716 = vpop.f32.mrb[0].mxu0
        %3717 = vmatprep.mubr.f32.mxu0 0.0
        %3718 = vmatmul.mubr.f32.gmra.mrb[0].mxu0 %v2992
        %v3719 = vpop.f32.mrb[0].mxu0
        %v3720 = vadd.f32 0.0, %v3719
        %v3721 = vpop.f32.mrb[0].mxu0
        %3722 = vmatprep.mubr.f32.mxu0 0.0
        %3723 = vmatmul.mubr.f32.gmra.mrb[0].mxu0 %v2995
        %v3724 = vpop.f32.mrb[0].mxu0
        %v3725 = vadd.f32 0.0, %v3724
        %v3726 = vpop.f32.mrb[0].mxu0
        %3727 = vmatprep.mubr.f32.mxu0 0.0
        %3728 = vmatmul.mubr.f32.gmra.mrb[0].mxu0 %v2998
        %v3729 = vpop.f32.mrb[0].mxu0
        %v3730 = vadd.f32 0.0, %v3729
        %v3731 = vpop.f32.mrb[0].mxu0
        %3732 = vmatprep.mubr.f32.mxu0 0.0
        %3733 = vmatmul.mubr.f32.gmra.mrb[0].mxu0 %v3001
        %v3734 = vpop.f32.mrb[0].mxu0
        %v3735 = vadd.f32 0.0, %v3734
        %v3736 = vpop.f32.mrb[0].mxu0
        %3737 = vmatprep.mubr.f32.mxu0 0.0
        %3738 = vmatmul.mubr.f32.gmra.mrb[0].mxu0 %v3004
        %v3739 = vpop.f32.mrb[0].mxu0
        %v3740 = vadd.f32 0.0, %v3739
        %v3741 = vpop.f32.mrb[0].mxu0
        %3742 = vmatprep.mubr.f32.mxu0 0.0
        %3743 = vmatmul.mubr.f32.gmra.mrb[0].mxu0 %v3007
        %v3744 = vpop.f32.mrb[0].mxu0
        %v3745 = vadd.f32 0.0, %v3744
        %v3746 = vpop.f32.mrb[0].mxu0
        %3747 = vmatprep.mubr.f32.mxu0 0.0
        %3748 = vmatmul.mubr.f32.gmra.mrb[0].mxu0 %v3010
        %v3749 = vpop.f32.mrb[0].mxu0
        %v3750 = vadd.f32 0.0, %v3749
        %v3751 = vpop.f32.mrb[0].mxu0
        %3752 = vmatprep.mubr.f32.mxu0 0.0
        %3753 = vmatmul.mubr.f32.gmra.mrb[0].mxu0 %v3013
        %v3754 = vpop.f32.mrb[0].mxu0
        %v3755 = vadd.f32 0.0, %v3754
        %v3756 = vpop.f32.mrb[0].mxu0
        %3757 = vmatprep.mubr.f32.mxu0 0.0
        %3758 = vmatmul.mubr.f32.gmra.mrb[0].mxu0 %v3016
        %v3759 = vpop.f32.mrb[0].mxu0
        %v3760 = vadd.f32 0.0, %v3759
        %v3761 = vpop.f32.mrb[0].mxu0
        %3762 = vmatprep.mubr.f32.mxu0 0.0
        %3763 = vmatmul.mubr.f32.gmra.mrb[0].mxu0 %v3019
        %v3764 = vpop.f32.mrb[0].mxu0
        %v3765 = vadd.f32 0.0, %v3764
        %v3766 = vpop.f32.mrb[0].mxu0
        %3767 = vmatprep.mubr.f32.mxu0 0.0
        %3768 = vmatmul.mubr.f32.gmra.mrb[0].mxu0 %v3022
        %v3769 = vpop.f32.mrb[0].mxu0
        %v3770 = vadd.f32 0.0, %v3769
        %v3771 = vpop.f32.mrb[0].mxu0
        %3772 = vmatprep.mubr.f32.mxu0 0.0
        %3773 = vmatmul.mubr.f32.gmra.mrb[0].mxu0 %v3291
        %v3774 = vpop.f32.mrb[0].mxu0
        %v3775 = vadd.f32 0.0, %v3774
        %v3776 = vpop.f32.mrb[0].mxu0
        %3777 = vmatprep.mubr.f32.mxu0 0.0
        %3778 = vmatmul.mubr.f32.gmra.mrb[0].mxu0 %v3294
        %v3779 = vpop.f32.mrb[0].mxu0
        %v3780 = vadd.f32 0.0, %v3779
        %v3781 = vpop.f32.mrb[0].mxu0
        %3782 = vmatprep.mubr.f32.mxu0 0.0
        %3783 = vmatmul.mubr.f32.gmra.mrb[0].mxu0 %v3563
        %v3784 = vpop.f32.mrb[0].mxu0
        %v3785 = vadd.f32 0.0, %v3784
        %v3786 = vpop.f32.mrb[0].mxu0
        %3787 = vmatprep.mubr.f32.mxu0 0.0
        %3788 = vmatmul.mubr.f32.gmra.mrb[0].mxu0 %v3566
        %v3789 = vpop.f32.mrb[0].mxu0
        %v3790 = vadd.f32 0.0, %v3789
        %v3791 = vpop.f32.mrb[0].mxu0
        %3792 = vdwg.mxu0
        %v3793 = vadd.f32 %v3521, %v3635
        %v3794 = vadd.f32 %v3522, %v3640
        %v3795 = vadd.f32 %v3523, %v3645
        %v3796 = vadd.f32 %v3524, %v3650
        %v3797 = vadd.f32 %v3525, %v3655
        %v3798 = vadd.f32 %v3526, %v3660
        %v3799 = vadd.f32 %v3527, %v3665
        %v3800 = vadd.f32 %v3528, %v3670
        %v3801 = vadd.f32 %v3529, %v3675
        %v3802 = vadd.f32 %v3530, %v3680
        %v3803 = vadd.f32 %v3531, %v3685
        %v3804 = vadd.f32 %v3532, %v3690
        %v3805 = vadd.f32 %v3533, %v3695
        %v3806 = vadd.f32 %v3534, %v3700
        %v3807 = vadd.f32 %v3535, %v3705
        %v3808 = vadd.f32 %v3536, %v3710
        %v3809 = vadd.f32 %v3537, %v3715
        %v3810 = vadd.f32 %v3538, %v3720
        %v3811 = vadd.f32 %v3539, %v3725
        %v3812 = vadd.f32 %v3540, %v3730
        %v3813 = vadd.f32 %v3541, %v3735
        %v3814 = vadd.f32 %v3542, %v3740
        %v3815 = vadd.f32 %v3543, %v3745
        %v3816 = vadd.f32 %v3544, %v3750
        %v3817 = vadd.f32 %v3545, %v3755
        %v3818 = vadd.f32 %v3546, %v3760
        %v3819 = vadd.f32 %v3547, %v3765
        %v3820 = vadd.f32 %v3548, %v3770
        %v3821 = vadd.f32 %v3549, %v3775
        %v3822 = vadd.f32 %v3550, %v3780
        %v3823 = vadd.f32 %v3551, %v3785
        %v3824 = vadd.f32 %v3552, %v3790
        %v3825 = vld [vmem:[%s4] sm:$0x1]
        %v3827 = vlaneseq
        %v3828 = vshrl.u32 %v3827, 7
        %v3829 = vsub.s32 0, %v3828
        %v3830 = vrot.slane %v3825, %v3829
        %v3832 = vadd.f32 %v3793, %v3830
        %v3833 = vadd.f32 %v3794, %v3830
        %v3834 = vadd.f32 %v3795, %v3830
        %v3835 = vadd.f32 %v3796, %v3830
        %v3836 = vadd.f32 %v3797, %v3830
        %v3837 = vadd.f32 %v3798, %v3830
        %v3838 = vadd.f32 %v3799, %v3830
        %v3839 = vadd.f32 %v3800, %v3830
        %v3840 = vadd.f32 %v3801, %v3830
        %v3841 = vadd.f32 %v3802, %v3830
        %v3842 = vadd.f32 %v3803, %v3830
        %v3843 = vadd.f32 %v3804, %v3830
        %v3844 = vadd.f32 %v3805, %v3830
        %v3845 = vadd.f32 %v3806, %v3830
        %v3846 = vadd.f32 %v3807, %v3830
        %v3847 = vadd.f32 %v3808, %v3830
        %v3848 = vadd.f32 %v3809, %v3830
        %v3849 = vadd.f32 %v3810, %v3830
        %v3850 = vadd.f32 %v3811, %v3830
        %v3851 = vadd.f32 %v3812, %v3830
        %v3852 = vadd.f32 %v3813, %v3830
        %v3853 = vadd.f32 %v3814, %v3830
        %v3854 = vadd.f32 %v3815, %v3830
        %v3855 = vadd.f32 %v3816, %v3830
        %v3856 = vadd.f32 %v3817, %v3830
        %v3857 = vadd.f32 %v3818, %v3830
        %v3858 = vadd.f32 %v3819, %v3830
        %v3859 = vadd.f32 %v3820, %v3830
        %v3860 = vadd.f32 %v3821, %v3830
        %v3861 = vadd.f32 %v3822, %v3830
        %v3862 = vadd.f32 %v3823, %v3830
        %v3863 = vadd.f32 %v3824, %v3830
        %v3864 = vld [vmem:[%s323] sm:$0xff]
        %v3865 = vld [vmem:[%s323 + $0x8] sm:$0xff]
        %v3866 = vld [vmem:[%s323 + $0x10] sm:$0xff]
        %v3867 = vld [vmem:[%s323 + $0x18] sm:$0xff]
        %v3868 = vld [vmem:[%s323 + $0x20] sm:$0xff]
        %v3869 = vld [vmem:[%s323 + $0x28] sm:$0xff]
        %v3870 = vld [vmem:[%s323 + $0x30] sm:$0xff]
        %v3871 = vld [vmem:[%s323 + $0x38] sm:$0xff]
        %v3872 = vld [vmem:[%s323 + $0x40] sm:$0xff]
        %v3873 = vld [vmem:[%s323 + $0x48] sm:$0xff]
        %v3874 = vld [vmem:[%s323 + $0x50] sm:$0xff]
        %v3875 = vld [vmem:[%s323 + $0x58] sm:$0xff]
        %v3876 = vld [vmem:[%s323 + $0x60] sm:$0xff]
        %v3877 = vld [vmem:[%s323 + $0x68] sm:$0xff]
        %v3878 = vld [vmem:[%s323 + $0x70] sm:$0xff]
        %v3879 = vld [vmem:[%s323 + $0x78] sm:$0xff]
        %v3880 = vld [vmem:[%s323 + $0x80] sm:$0xff]
        %v3881 = vld [vmem:[%s323 + $0x88] sm:$0xff]
        %v3882 = vld [vmem:[%s323 + $0x90] sm:$0xff]
        %v3883 = vld [vmem:[%s323 + $0x98] sm:$0xff]
        %v3884 = vld [vmem:[%s323 + $0xa0] sm:$0xff]
        %v3885 = vld [vmem:[%s323 + $0xa8] sm:$0xff]
        %v3886 = vld [vmem:[%s323 + $0xb0] sm:$0xff]
        %v3887 = vld [vmem:[%s323 + $0xb8] sm:$0xff]
        %v3888 = vld [vmem:[%s323 + $0xc0] sm:$0xff]
        %v3889 = vld [vmem:[%s323 + $0xc8] sm:$0xff]
        %v3890 = vld [vmem:[%s323 + $0xd0] sm:$0xff]
        %v3891 = vld [vmem:[%s323 + $0xd8] sm:$0xff]
        %v3892 = vld [vmem:[%s323 + $0xe0] sm:$0xff]
        %v3893 = vld [vmem:[%s323 + $0xe8] sm:$0xff]
        %v3894 = vld [vmem:[%s323 + $0xf0] sm:$0xff]
        %v3895 = vld [vmem:[%s323 + $0xf8] sm:$0xff]
        %v3896 = vld [vmem:[%s6] sm:$0xff]
        %v3897 = vld [vmem:[%s6 + $0x8] sm:$0xff]
        %v3898 = vld [vmem:[%s6 + $0x10] sm:$0xff]
        %v3899 = vld [vmem:[%s6 + $0x18] sm:$0xff]
        %vm3900 = vcmask 261120
        %v3902 = vsel %vm3900, %v3864, 0
        %v3905 = vsel %vm3900, %v3865, 0
        %v3908 = vsel %vm3900, %v3866, 0
        %v3911 = vsel %vm3900, %v3867, 0
        %v3914 = vsel %vm3900, %v3868, 0
        %v3917 = vsel %vm3900, %v3869, 0
        %v3920 = vsel %vm3900, %v3870, 0
        %v3923 = vsel %vm3900, %v3871, 0
        %v3926 = vsel %vm3900, %v3872, 0
        %v3929 = vsel %vm3900, %v3873, 0
        %v3932 = vsel %vm3900, %v3874, 0
        %v3935 = vsel %vm3900, %v3875, 0
        %v3938 = vsel %vm3900, %v3876, 0
        %v3941 = vsel %vm3900, %v3877, 0
        %v3944 = vsel %vm3900, %v3878, 0
        %v3947 = vsel %vm3900, %v3879, 0
        %v3950 = vsel %vm3900, %v3880, 0
        %v3953 = vsel %vm3900, %v3881, 0
        %v3956 = vsel %vm3900, %v3882, 0
        %v3959 = vsel %vm3900, %v3883, 0
        %v3962 = vsel %vm3900, %v3884, 0
        %v3965 = vsel %vm3900, %v3885, 0
        %v3968 = vsel %vm3900, %v3886, 0
        %v3971 = vsel %vm3900, %v3887, 0
        %v3974 = vsel %vm3900, %v3888, 0
        %v3977 = vsel %vm3900, %v3889, 0
        %v3980 = vsel %vm3900, %v3890, 0
        %v3983 = vsel %vm3900, %v3891, 0
        %v3986 = vsel %vm3900, %v3892, 0
        %v3989 = vsel %vm3900, %v3893, 0
        %v3992 = vsel %vm3900, %v3894, 0
        %v3995 = vsel %vm3900, %v3895, 0
        %3997 = vmatprep.subr.mxu0 0.0
        %3998 = vmatpush1.msra.mxu0 %v3896
        %3999 = vmatprep.subr.mxu0 0.0
        %4000 = vmatpush1.msra.mxu0 %v3897
        %4001 = vmatprep.subr.mxu0 0.0
        %4002 = vmatpush1.msra.mxu0 %v3898
        %4003 = vmatprep.subr.mxu0 0.0
        %4004 = vmatpush1.msra.mxu0 %v3899
        %4005 = vmatprep.subr.mxu0 0.0
        %4006 = vmatpush1.msra.mxu0 0.0
        %4007 = vmatprep.subr.mxu0 0.0
        %4008 = vmatpush1.msra.mxu0 0.0
        %4009 = vmatprep.subr.mxu0 0.0
        %4010 = vmatpush1.msra.mxu0 0.0
        %4011 = vmatprep.subr.mxu0 0.0
        %4012 = vmatpush1.msra.mxu0 0.0
        %4013 = vmatprep.subr.mxu0 0.0
        %4014 = vmatpush1.msra.mxu0 0.0
        %4015 = vmatprep.subr.mxu0 0.0
        %4016 = vmatpush1.msra.mxu0 0.0
        %4017 = vmatprep.subr.mxu0 0.0
        %4018 = vmatpush1.msra.mxu0 0.0
        %4019 = vmatprep.subr.mxu0 0.0
        %4020 = vmatpush1.msra.mxu0 0.0
        %4021 = vmatprep.subr.mxu0 0.0
        %4022 = vmatpush1.msra.mxu0 0.0
        %4023 = vmatprep.subr.mxu0 0.0
        %4024 = vmatpush1.msra.mxu0 0.0
        %4025 = vmatprep.subr.mxu0 0.0
        %4026 = vmatpush1.msra.mxu0 0.0
        %4027 = vmatprep.subr.mxu0 0.0
        %4028 = vmatpush1.msra.mxu0 0.0
        %4029 = vmatprep.subr.mxu0 0.0
        %4030 = vmatpush1.msra.mxu0 0.0
        %4031 = vmatprep.subr.mxu0 0.0
        %4032 = vmatpush1.msra.mxu0 0.0
        %4033 = vmatprep.subr.mxu0 0.0
        %4034 = vmatpush1.msra.mxu0 0.0
        %4035 = vmatprep.subr.mxu0 0.0
        %4036 = vmatpush1.msra.mxu0 0.0
        %4037 = vmatprep.subr.mxu0 0.0
        %4038 = vmatpush1.msra.mxu0 0.0
        %4039 = vmatprep.subr.mxu0 0.0
        %4040 = vmatpush1.msra.mxu0 0.0
        %4041 = vmatprep.subr.mxu0 0.0
        %4042 = vmatpush1.msra.mxu0 0.0
        %4043 = vmatprep.subr.mxu0 0.0
        %4044 = vmatpush1.msra.mxu0 0.0
        %4045 = vmatprep.subr.mxu0 0.0
        %4046 = vmatpush1.msra.mxu0 0.0
        %4047 = vmatprep.subr.mxu0 0.0
        %4048 = vmatpush1.msra.mxu0 0.0
        %4049 = vmatprep.subr.mxu0 0.0
        %4050 = vmatpush1.msra.mxu0 0.0
        %4051 = vmatprep.subr.mxu0 0.0
        %4052 = vmatpush1.msra.mxu0 0.0
        %4053 = vmatprep.subr.mxu0 0.0
        %4054 = vmatpush1.msra.mxu0 0.0
        %4055 = vmatprep.subr.mxu0 0.0
        %4056 = vmatpush1.msra.mxu0 0.0
        %4057 = vmatprep.subr.mxu0 0.0
        %4058 = vmatpush1.msra.mxu0 0.0
        %4059 = vmatprep.subr.mxu0 0.0
        %4060 = vmatpush1.msra.mxu0 0.0
        %4061 = vmatprep.mubr.f32.mxu0 0.0
        %4062 = vmatmul.mubr.f32.gmra.mrb[0].mxu0 %v3902
        %v4063 = vpop.f32.mrb[0].mxu0
        %v4064 = vadd.f32 0.0, %v4063
        %v4065 = vpop.f32.mrb[0].mxu0
        %4066 = vmatprep.mubr.f32.mxu0 0.0
        %4067 = vmatmul.mubr.f32.gmra.mrb[0].mxu0 %v3905
        %v4068 = vpop.f32.mrb[0].mxu0
        %v4069 = vadd.f32 0.0, %v4068
        %v4070 = vpop.f32.mrb[0].mxu0
        %4071 = vmatprep.mubr.f32.mxu0 0.0
        %4072 = vmatmul.mubr.f32.gmra.mrb[0].mxu0 %v3908
        %v4073 = vpop.f32.mrb[0].mxu0
        %v4074 = vadd.f32 0.0, %v4073
        %v4075 = vpop.f32.mrb[0].mxu0
        %4076 = vmatprep.mubr.f32.mxu0 0.0
        %4077 = vmatmul.mubr.f32.gmra.mrb[0].mxu0 %v3911
        %v4078 = vpop.f32.mrb[0].mxu0
        %v4079 = vadd.f32 0.0, %v4078
        %v4080 = vpop.f32.mrb[0].mxu0
        %4081 = vmatprep.mubr.f32.mxu0 0.0
        %4082 = vmatmul.mubr.f32.gmra.mrb[0].mxu0 %v3914
        %v4083 = vpop.f32.mrb[0].mxu0
        %v4084 = vadd.f32 0.0, %v4083
        %v4085 = vpop.f32.mrb[0].mxu0
        %4086 = vmatprep.mubr.f32.mxu0 0.0
        %4087 = vmatmul.mubr.f32.gmra.mrb[0].mxu0 %v3917
        %v4088 = vpop.f32.mrb[0].mxu0
        %v4089 = vadd.f32 0.0, %v4088
        %v4090 = vpop.f32.mrb[0].mxu0
        %4091 = vmatprep.mubr.f32.mxu0 0.0
        %4092 = vmatmul.mubr.f32.gmra.mrb[0].mxu0 %v3920
        %v4093 = vpop.f32.mrb[0].mxu0
        %v4094 = vadd.f32 0.0, %v4093
        %v4095 = vpop.f32.mrb[0].mxu0
        %4096 = vmatprep.mubr.f32.mxu0 0.0
        %4097 = vmatmul.mubr.f32.gmra.mrb[0].mxu0 %v3923
        %v4098 = vpop.f32.mrb[0].mxu0
        %v4099 = vadd.f32 0.0, %v4098
        %v4100 = vpop.f32.mrb[0].mxu0
        %4101 = vmatprep.mubr.f32.mxu0 0.0
        %4102 = vmatmul.mubr.f32.gmra.mrb[0].mxu0 %v3926
        %v4103 = vpop.f32.mrb[0].mxu0
        %v4104 = vadd.f32 0.0, %v4103
        %v4105 = vpop.f32.mrb[0].mxu0
        %4106 = vmatprep.mubr.f32.mxu0 0.0
        %4107 = vmatmul.mubr.f32.gmra.mrb[0].mxu0 %v3929
        %v4108 = vpop.f32.mrb[0].mxu0
        %v4109 = vadd.f32 0.0, %v4108
        %v4110 = vpop.f32.mrb[0].mxu0
        %4111 = vmatprep.mubr.f32.mxu0 0.0
        %4112 = vmatmul.mubr.f32.gmra.mrb[0].mxu0 %v3932
        %v4113 = vpop.f32.mrb[0].mxu0
        %v4114 = vadd.f32 0.0, %v4113
        %v4115 = vpop.f32.mrb[0].mxu0
        %4116 = vmatprep.mubr.f32.mxu0 0.0
        %4117 = vmatmul.mubr.f32.gmra.mrb[0].mxu0 %v3935
        %v4118 = vpop.f32.mrb[0].mxu0
        %v4119 = vadd.f32 0.0, %v4118
        %v4120 = vpop.f32.mrb[0].mxu0
        %4121 = vmatprep.mubr.f32.mxu0 0.0
        %4122 = vmatmul.mubr.f32.gmra.mrb[0].mxu0 %v3938
        %v4123 = vpop.f32.mrb[0].mxu0
        %v4124 = vadd.f32 0.0, %v4123
        %v4125 = vpop.f32.mrb[0].mxu0
        %4126 = vmatprep.mubr.f32.mxu0 0.0
        %4127 = vmatmul.mubr.f32.gmra.mrb[0].mxu0 %v3941
        %v4128 = vpop.f32.mrb[0].mxu0
        %v4129 = vadd.f32 0.0, %v4128
        %v4130 = vpop.f32.mrb[0].mxu0
        %4131 = vmatprep.mubr.f32.mxu0 0.0
        %4132 = vmatmul.mubr.f32.gmra.mrb[0].mxu0 %v3944
        %v4133 = vpop.f32.mrb[0].mxu0
        %v4134 = vadd.f32 0.0, %v4133
        %v4135 = vpop.f32.mrb[0].mxu0
        %4136 = vmatprep.mubr.f32.mxu0 0.0
        %4137 = vmatmul.mubr.f32.gmra.mrb[0].mxu0 %v3947
        %v4138 = vpop.f32.mrb[0].mxu0
        %v4139 = vadd.f32 0.0, %v4138
        %v4140 = vpop.f32.mrb[0].mxu0
        %4141 = vmatprep.mubr.f32.mxu0 0.0
        %4142 = vmatmul.mubr.f32.gmra.mrb[0].mxu0 %v3950
        %v4143 = vpop.f32.mrb[0].mxu0
        %v4144 = vadd.f32 0.0, %v4143
        %v4145 = vpop.f32.mrb[0].mxu0
        %4146 = vmatprep.mubr.f32.mxu0 0.0
        %4147 = vmatmul.mubr.f32.gmra.mrb[0].mxu0 %v3953
        %v4148 = vpop.f32.mrb[0].mxu0
        %v4149 = vadd.f32 0.0, %v4148
        %v4150 = vpop.f32.mrb[0].mxu0
        %4151 = vmatprep.mubr.f32.mxu0 0.0
        %4152 = vmatmul.mubr.f32.gmra.mrb[0].mxu0 %v3956
        %v4153 = vpop.f32.mrb[0].mxu0
        %v4154 = vadd.f32 0.0, %v4153
        %v4155 = vpop.f32.mrb[0].mxu0
        %4156 = vmatprep.mubr.f32.mxu0 0.0
        %4157 = vmatmul.mubr.f32.gmra.mrb[0].mxu0 %v3959
        %v4158 = vpop.f32.mrb[0].mxu0
        %v4159 = vadd.f32 0.0, %v4158
        %v4160 = vpop.f32.mrb[0].mxu0
        %4161 = vmatprep.mubr.f32.mxu0 0.0
        %4162 = vmatmul.mubr.f32.gmra.mrb[0].mxu0 %v3962
        %v4163 = vpop.f32.mrb[0].mxu0
        %v4164 = vadd.f32 0.0, %v4163
        %v4165 = vpop.f32.mrb[0].mxu0
        %4166 = vmatprep.mubr.f32.mxu0 0.0
        %4167 = vmatmul.mubr.f32.gmra.mrb[0].mxu0 %v3965
        %v4168 = vpop.f32.mrb[0].mxu0
        %v4169 = vadd.f32 0.0, %v4168
        %v4170 = vpop.f32.mrb[0].mxu0
        %4171 = vmatprep.mubr.f32.mxu0 0.0
        %4172 = vmatmul.mubr.f32.gmra.mrb[0].mxu0 %v3968
        %v4173 = vpop.f32.mrb[0].mxu0
        %v4174 = vadd.f32 0.0, %v4173
        %v4175 = vpop.f32.mrb[0].mxu0
        %4176 = vmatprep.mubr.f32.mxu0 0.0
        %4177 = vmatmul.mubr.f32.gmra.mrb[0].mxu0 %v3971
        %v4178 = vpop.f32.mrb[0].mxu0
        %v4179 = vadd.f32 0.0, %v4178
        %v4180 = vpop.f32.mrb[0].mxu0
        %4181 = vmatprep.mubr.f32.mxu0 0.0
        %4182 = vmatmul.mubr.f32.gmra.mrb[0].mxu0 %v3974
        %v4183 = vpop.f32.mrb[0].mxu0
        %v4184 = vadd.f32 0.0, %v4183
        %v4185 = vpop.f32.mrb[0].mxu0
        %4186 = vmatprep.mubr.f32.mxu0 0.0
        %4187 = vmatmul.mubr.f32.gmra.mrb[0].mxu0 %v3977
        %v4188 = vpop.f32.mrb[0].mxu0
        %v4189 = vadd.f32 0.0, %v4188
        %v4190 = vpop.f32.mrb[0].mxu0
        %4191 = vmatprep.mubr.f32.mxu0 0.0
        %4192 = vmatmul.mubr.f32.gmra.mrb[0].mxu0 %v3980
        %v4193 = vpop.f32.mrb[0].mxu0
        %v4194 = vadd.f32 0.0, %v4193
        %v4195 = vpop.f32.mrb[0].mxu0
        %4196 = vmatprep.mubr.f32.mxu0 0.0
        %4197 = vmatmul.mubr.f32.gmra.mrb[0].mxu0 %v3983
        %v4198 = vpop.f32.mrb[0].mxu0
        %v4199 = vadd.f32 0.0, %v4198
        %v4200 = vpop.f32.mrb[0].mxu0
        %4201 = vmatprep.mubr.f32.mxu0 0.0
        %4202 = vmatmul.mubr.f32.gmra.mrb[0].mxu0 %v3986
        %v4203 = vpop.f32.mrb[0].mxu0
        %v4204 = vadd.f32 0.0, %v4203
        %v4205 = vpop.f32.mrb[0].mxu0
        %4206 = vmatprep.mubr.f32.mxu0 0.0
        %4207 = vmatmul.mubr.f32.gmra.mrb[0].mxu0 %v3989
        %v4208 = vpop.f32.mrb[0].mxu0
        %v4209 = vadd.f32 0.0, %v4208
        %v4210 = vpop.f32.mrb[0].mxu0
        %4211 = vmatprep.mubr.f32.mxu0 0.0
        %4212 = vmatmul.mubr.f32.gmra.mrb[0].mxu0 %v3992
        %v4213 = vpop.f32.mrb[0].mxu0
        %v4214 = vadd.f32 0.0, %v4213
        %v4215 = vpop.f32.mrb[0].mxu0
        %4216 = vmatprep.mubr.f32.mxu0 0.0
        %4217 = vmatmul.mubr.f32.gmra.mrb[0].mxu0 %v3995
        %v4218 = vpop.f32.mrb[0].mxu0
        %v4219 = vadd.f32 0.0, %v4218
        %v4220 = vpop.f32.mrb[0].mxu0
        %4221 = vdwg.mxu0
        %v4222 = vadd.f32 %v3832, %v4064
        %v4223 = vadd.f32 %v3833, %v4069
        %v4224 = vadd.f32 %v3834, %v4074
        %v4225 = vadd.f32 %v3835, %v4079
        %v4226 = vadd.f32 %v3836, %v4084
        %v4227 = vadd.f32 %v3837, %v4089
        %v4228 = vadd.f32 %v3838, %v4094
        %v4229 = vadd.f32 %v3839, %v4099
        %v4230 = vadd.f32 %v3840, %v4104
        %v4231 = vadd.f32 %v3841, %v4109
        %v4232 = vadd.f32 %v3842, %v4114
        %v4233 = vadd.f32 %v3843, %v4119
        %v4234 = vadd.f32 %v3844, %v4124
        %v4235 = vadd.f32 %v3845, %v4129
        %v4236 = vadd.f32 %v3846, %v4134
        %v4237 = vadd.f32 %v3847, %v4139
        %v4238 = vadd.f32 %v3848, %v4144
        %v4239 = vadd.f32 %v3849, %v4149
        %v4240 = vadd.f32 %v3850, %v4154
        %v4241 = vadd.f32 %v3851, %v4159
        %v4242 = vadd.f32 %v3852, %v4164
        %v4243 = vadd.f32 %v3853, %v4169
        %v4244 = vadd.f32 %v3854, %v4174
        %v4245 = vadd.f32 %v3855, %v4179
        %v4246 = vadd.f32 %v3856, %v4184
        %v4247 = vadd.f32 %v3857, %v4189
        %v4248 = vadd.f32 %v3858, %v4194
        %v4249 = vadd.f32 %v3859, %v4199
        %v4250 = vadd.f32 %v3860, %v4204
        %v4251 = vadd.f32 %v3861, %v4209
        %v4252 = vadd.f32 %v3862, %v4214
        %v4253 = vadd.f32 %v3863, %v4219
        %v4254 = vld [vmem:[%s7] sm:$0x1]
        %v4256 = vlaneseq
        %v4257 = vshrl.u32 %v4256, 7
        %v4258 = vsub.s32 0, %v4257
        %v4259 = vrot.slane %v4254, %v4258
        %v4261 = vadd.f32 %v4222, %v4259
        %v4262 = vadd.f32 %v4223, %v4259
        %v4263 = vadd.f32 %v4224, %v4259
        %v4264 = vadd.f32 %v4225, %v4259
        %v4265 = vadd.f32 %v4226, %v4259
        %v4266 = vadd.f32 %v4227, %v4259
        %v4267 = vadd.f32 %v4228, %v4259
        %v4268 = vadd.f32 %v4229, %v4259
        %v4269 = vadd.f32 %v4230, %v4259
        %v4270 = vadd.f32 %v4231, %v4259
        %v4271 = vadd.f32 %v4232, %v4259
        %v4272 = vadd.f32 %v4233, %v4259
        %v4273 = vadd.f32 %v4234, %v4259
        %v4274 = vadd.f32 %v4235, %v4259
        %v4275 = vadd.f32 %v4236, %v4259
        %v4276 = vadd.f32 %v4237, %v4259
        %v4277 = vadd.f32 %v4238, %v4259
        %v4278 = vadd.f32 %v4239, %v4259
        %v4279 = vadd.f32 %v4240, %v4259
        %v4280 = vadd.f32 %v4241, %v4259
        %v4281 = vadd.f32 %v4242, %v4259
        %v4282 = vadd.f32 %v4243, %v4259
        %v4283 = vadd.f32 %v4244, %v4259
        %v4284 = vadd.f32 %v4245, %v4259
        %v4285 = vadd.f32 %v4246, %v4259
        %v4286 = vadd.f32 %v4247, %v4259
        %v4287 = vadd.f32 %v4248, %v4259
        %v4288 = vadd.f32 %v4249, %v4259
        %v4289 = vadd.f32 %v4250, %v4259
        %v4290 = vadd.f32 %v4251, %v4259
        %v4291 = vadd.f32 %v4252, %v4259
        %v4292 = vadd.f32 %v4253, %v4259
        %4293 = vst.msk [vmem:[%s313] sm:$0xff] %vm356, %v4261
        %4294 = vst.msk [vmem:[%s313 + $0x8] sm:$0xff] %vm356, %v4262
        %4295 = vst.msk [vmem:[%s313 + $0x10] sm:$0xff] %vm356, %v4263
        %4296 = vst.msk [vmem:[%s313 + $0x18] sm:$0xff] %vm356, %v4264
        %4297 = vst.msk [vmem:[%s313 + $0x20] sm:$0xff] %vm356, %v4265
        %4298 = vst.msk [vmem:[%s313 + $0x28] sm:$0xff] %vm356, %v4266
        %4299 = vst.msk [vmem:[%s313 + $0x30] sm:$0xff] %vm356, %v4267
        %4300 = vst.msk [vmem:[%s313 + $0x38] sm:$0xff] %vm356, %v4268
        %4301 = vst.msk [vmem:[%s313 + $0x40] sm:$0xff] %vm356, %v4269
        %4302 = vst.msk [vmem:[%s313 + $0x48] sm:$0xff] %vm356, %v4270
        %4303 = vst.msk [vmem:[%s313 + $0x50] sm:$0xff] %vm356, %v4271
        %4304 = vst.msk [vmem:[%s313 + $0x58] sm:$0xff] %vm356, %v4272
        %4305 = vst.msk [vmem:[%s313 + $0x60] sm:$0xff] %vm356, %v4273
        %4306 = vst.msk [vmem:[%s313 + $0x68] sm:$0xff] %vm356, %v4274
        %4307 = vst.msk [vmem:[%s313 + $0x70] sm:$0xff] %vm356, %v4275
        %4308 = vst.msk [vmem:[%s313 + $0x78] sm:$0xff] %vm356, %v4276
        %4309 = vst.msk [vmem:[%s313 + $0x80] sm:$0xff] %vm356, %v4277
        %4310 = vst.msk [vmem:[%s313 + $0x88] sm:$0xff] %vm356, %v4278
        %4311 = vst.msk [vmem:[%s313 + $0x90] sm:$0xff] %vm356, %v4279
        %4312 = vst.msk [vmem:[%s313 + $0x98] sm:$0xff] %vm356, %v4280
        %4313 = vst.msk [vmem:[%s313 + $0xa0] sm:$0xff] %vm356, %v4281
        %4314 = vst.msk [vmem:[%s313 + $0xa8] sm:$0xff] %vm356, %v4282
        %4315 = vst.msk [vmem:[%s313 + $0xb0] sm:$0xff] %vm356, %v4283
        %4316 = vst.msk [vmem:[%s313 + $0xb8] sm:$0xff] %vm356, %v4284
        %4317 = vst.msk [vmem:[%s313 + $0xc0] sm:$0xff] %vm356, %v4285
        %4318 = vst.msk [vmem:[%s313 + $0xc8] sm:$0xff] %vm356, %v4286
        %4319 = vst.msk [vmem:[%s313 + $0xd0] sm:$0xff] %vm356, %v4287
        %4320 = vst.msk [vmem:[%s313 + $0xd8] sm:$0xff] %vm356, %v4288
        %4321 = vst.msk [vmem:[%s313 + $0xe0] sm:$0xff] %vm356, %v4289
        %4322 = vst.msk [vmem:[%s313 + $0xe8] sm:$0xff] %vm356, %v4290
        %4323 = vst.msk [vmem:[%s313 + $0xf0] sm:$0xff] %vm356, %v4291
        %4324 = vst.msk [vmem:[%s313 + $0xf8] sm:$0xff] %vm356, %v4292
        %s4325 = sand.u32 %s208, 1
        %s4326 = scalar_lea.sflag [#allocation4], %s4325
        %s4327 = sand.u32 %s208, 1
        %s4328 = smul.addr %s4327, 256
        %s4329 = scalar_lea.vmem [#allocation3], %s4328
        // Predicated region
        $region53: #{residual_block_forward.3} parent=51 // pred_check
          %p4330 = pneg %p218
        $region54: #{residual_block_forward.3} parent=51 // pred_check_branch
          %4332 = sbr.rel (%p4330) target = $region56
        $region55: #{residual_block_forward.3} parent=51 // pred_region
          %s4334 = ssub.s32 4096, 4096
          %4335 = vsyncadd %s4326, %s4334
          %s4336 = smul.addr %s22, 32
          %s4337 = smul.addr %s4336, 128
          %s4338 = scalar_lea.hbm %s8, %s4337
          %s4339 = sshll.u32 %s4329, 4
          %s4340 = int_to_ptr.vmem [resolvable:$true] %s4339
          %4345 = dma.vmem_to_hbm [thread:$0]  %s4340, 4096, %s4338, %s4326, 128, 128, 8
        $region56: #{residual_block_forward.3} parent=51 // pred_fallthru
          _
      $region52: #{residual_block_forward.3} parent=5 // pred_fallthru
        _
      %p4346 = scmp.le.s32.totalorder 2, %s17
      // Predicated region
      $region57: #{residual_block_forward.3} parent=5 // pred_check
        %p4347 = pneg %p4346
      $region58: #{residual_block_forward.3} parent=5 // pred_check_branch
        %4349 = sbr.rel (%p4347) target = $region60
      $region59: #{residual_block_forward.3} parent=5 // pred_region
        %s4350 = ssub.s32 %s17, 2
        // Predicated region
        $region61: #{residual_block_forward.3} parent=59 // pred_check
          %p4351 = pneg %p224
        $region62: #{residual_block_forward.3} parent=59 // pred_check_branch
          %4353 = sbr.rel (%p4351) target = $region64
        $region63: #{residual_block_forward.3} parent=59 // pred_region
          %s4354 = sand.u32 %s209, 1
          %s4355 = scalar_lea.sflag [#allocation4], %s4354
          %s4356 = sand.u32 %s209, 1
          %s4357 = smul.addr %s4356, 256
          %s4358 = scalar_lea.vmem [#allocation3], %s4357
          %4359 = dma.done %s4355, 4096
        $region64: #{residual_block_forward.3} parent=59 // pred_fallthru
          _
      $region60: #{residual_block_forward.3} parent=5 // pred_fallthru
        _
    $region6: #{residual_block_forward.3} parent=1 // loop_footer
      %s21 = sadd.s32 1, %s17
    $region7: #{residual_block_forward.3} parent=1 // loop_footer_branch
      %16 = sbr.rel target = $region3
    $region8: #{residual_block_forward.3} parent=1 // loop_exit
      _
    %4360 = vsyncpa [#allocation4], 1
    %s4361 = scalar_lea.sflag [#allocation4], 1
    %4362 = vsyncpa %s4361, 1

</llo_original>
